<compile_context>
chip_gen: v6e
topology: v6e:2x2x1
jax: 0.10.0
libtpu: 0.0.40
codegen_flags: <defaults>
</compile_context>

<pallas_src>
import functools

import jax
import jax.numpy as jnp
from jax.experimental import pallas as pl
from jax.experimental.pallas import tpu as pltpu

BN_EPS = 1e-5


def _round_up(n, m):
    return ((n + m - 1) // m) * m


# ----------------------------- in-kernel helpers -----------------------------

def _put_tap(xs_ref, row0, v, shift, W):
    """Write `v` shifted by `shift` lanes (zero fill at the edge) into
    xs_ref[row0:row0+C, :].  Static offsets only; every written row is fully
    defined (no stale-VMEM reads downstream)."""
    C = v.shape[0]
    if shift == 0:
        xs_ref[row0:row0 + C, :] = v
    elif shift == -1:   # Xs[., o] = v[., o-1]
        xs_ref[row0:row0 + C, 1:W] = v[:, 0:W - 1]
        xs_ref[row0:row0 + C, 0:1] = jnp.zeros((C, 1), v.dtype)
    elif shift == 1:    # Xs[., o] = v[., o+1]
        xs_ref[row0:row0 + C, 0:W - 1] = v[:, 1:W]
        xs_ref[row0:row0 + C, W - 1:W] = jnp.zeros((C, 1), v.dtype)
    else:
        raise ValueError(f"unsupported tap shift {shift}")


def _conv_taps(xs_ref, w_packed, inputs, shifts, W):
    """K-tap 1-D conv (over the flat, per-sample-padded lane axis) as ONE MXU
    matmul.  `inputs` is a list of (Ci, W) values whose channel order matches
    the packed weight; `shifts[k]` is the lane shift of tap k."""
    ctot = sum(int(v.shape[0]) for v in inputs)
    for k, s in enumerate(shifts):
        off = k * ctot
        for v in inputs:
            _put_tap(xs_ref, off, v, s, W)
            off += int(v.shape[0])
    xs = xs_ref[0:len(shifts) * ctot, :]
    return jnp.dot(w_packed, xs, preferred_element_type=jnp.float32)


def _bn_tanh(y, gamma, beta, mask, inv_n):
    """Training-mode BatchNorm over the valid (non-halo, non-pad) columns +
    tanh, re-zeroing the invalid columns afterwards.
    gamma/beta: (C,1), mask: (1,W)."""
    ym = y * mask
    mean = jnp.sum(ym, axis=1, keepdims=True) * inv_n
    d = (y - mean) * mask
    var = jnp.sum(d * d, axis=1, keepdims=True) * inv_n
    inv = jax.lax.rsqrt(var + BN_EPS)
    return jnp.tanh(d * (inv * gamma) + beta) * mask


# ------------------------------ Pallas kernels -------------------------------

def _block_kernel(x_ref, mask_ref, w1_ref, g1_ref, b1_ref,
                  w2_ref, g2_ref, b2_ref, o_ref, xs_ref, *, inv_n):
    """Fused UNet1d._block: conv3(no bias) -> BN -> tanh -> conv3 -> BN -> tanh."""
    W = x_ref.shape[1]
    mask = mask_ref[...]
    y = _conv_taps(xs_ref, w1_ref[...], [x_ref[...]], (-1, 0, 1), W)
    y = _bn_tanh(y, g1_ref[...], b1_ref[...], mask, inv_n)
    y = _conv_taps(xs_ref, w2_ref[...], [y], (-1, 0, 1), W)
    o_ref[...] = _bn_tanh(y, g2_ref[...], b2_ref[...], mask, inv_n)


def _dec_block_kernel(xd_ref, enc_ref, mask_ref, wu_ref, bu_ref,
                      w1_ref, g1_ref, b1_ref, w2_ref, g2_ref, b2_ref,
                      *rest, inv_n, k_up, fuse_head):
    """Fused decoder level: ConvTranspose1d (valid conv over pre-dilated input,
    + bias) -> [concat with skip] -> conv3 -> BN -> tanh -> conv3 -> BN -> tanh
    [-> optional fused 1x1 Conv1d head].  The concat is realized as a two-input
    accumulating matmul (split weights)."""
    if fuse_head:
        wh_ref, bh_ref, o_ref, xs_ref = rest
    else:
        o_ref, xs_ref = rest
    W = enc_ref.shape[1]
    mask = mask_ref[...]
    up_shifts = tuple(k - 1 for k in range(k_up))
    d = _conv_taps(xs_ref, wu_ref[...], [xd_ref[...]], up_shifts, W)
    d = (d + bu_ref[...]) * mask                       # zero halos before conv1
    y = _conv_taps(xs_ref, w1_ref[...], [d, enc_ref[...]], (-1, 0, 1), W)
    y = _bn_tanh(y, g1_ref[...], b1_ref[...], mask, inv_n)
    y = _conv_taps(xs_ref, w2_ref[...], [y], (-1, 0, 1), W)
    y = _bn_tanh(y, g2_ref[...], b2_ref[...], mask, inv_n)
    if fuse_head:
        o_ref[...] = (jnp.dot(wh_ref[...], y, preferred_element_type=jnp.float32)
                      + bh_ref[...])
    else:
        o_ref[...] = y


# --------------------------- layout glue (XLA side) ---------------------------

def _to_flat(x, c_pad, Wp):
    """(N, C, L) -> (c_pad, Wp) padded-flat layout (zero halos, zero pad
    channels, lane width padded to a multiple of 128)."""
    N, C, L = x.shape
    xt = jnp.transpose(x, (1, 0, 2)).astype(jnp.float32)          # (C, N, L)
    xt = jnp.pad(xt, ((0, c_pad - C), (0, 0), (1, 1)))
    xf = xt.reshape(c_pad, N * (L + 2))
    return jnp.pad(xf, ((0, 0), (0, Wp - xf.shape[1])))


def _from_flat(y, N, L):
    """(C, Wp) -> (N, C, L) (drop halos / lane padding, back to NCL)."""
    C = y.shape[0]
    y3 = y[:, :N * (L + 2)].reshape(C, N, L + 2)[:, :, 1:L + 1]
    return jnp.transpose(y3, (1, 0, 2))


def _valid_mask(N, Lc, Wp):
    m = jnp.zeros((1, N, Lc + 2), jnp.float32).at[:, :, 1:Lc + 1].set(1.0)
    m = m.reshape(1, N * (Lc + 2))
    return jnp.pad(m, ((0, 0), (0, Wp - m.shape[1])))


def _pool_flat(a, N, Lc, Wp_out):
    """MaxPool1d(2,2) in padded-flat layout: (C, Wp_in) -> (C, Wp_out)."""
    C = a.shape[0]
    a3 = a[:, :N * (Lc + 2)].reshape(C, N, Lc + 2)
    Lh = Lc // 2
    p = jnp.maximum(a3[:, :, 1:1 + 2 * Lh:2], a3[:, :, 2:2 + 2 * Lh:2])
    p = jnp.pad(p, ((0, 0), (0, 0), (1, 1))).reshape(C, N * (Lh + 2))
    return jnp.pad(p, ((0, 0), (0, Wp_out - p.shape[1])))


def _dilate_flat(a, N, Lb, k_up, Wp_out):
    """Prepare the ConvTranspose1d(stride=2, kernel=k_up) input: zero-dilate the
    valid region and place it so a plain valid k_up-tap conv (taps at shifts
    k-1) inside the decoder kernel reproduces the transposed conv.  Output is
    in padded-flat layout at the up-sampled length."""
    C = a.shape[0]
    a3 = a[:, :N * (Lb + 2)].reshape(C, N, Lb + 2)
    v = a3[:, :, 1:Lb + 1]
    Lbig = 2 * (Lb - 1) + k_up
    Wrow = Lbig + 2
    xd = jnp.zeros((C, N, Wrow), a.dtype)
    xd = xd.at[:, :, k_up - 1:k_up - 1 + 2 * Lb - 1:2].set(v)
    xd = xd.reshape(C, N * Wrow)
    return jnp.pad(xd, ((0, 0), (0, Wp_out - xd.shape[1])))


# ------------------------------ Pallas wrappers -------------------------------

def _enc_block(xf, mask, p, N, Lc):
    cout = p['w1'].shape[0]
    W = xf.shape[1]
    rows = max(p['w1'].shape[1], 3 * cout)
    kern = functools.partial(_block_kernel, inv_n=1.0 / float(N * Lc))
    return pl.pallas_call(
        kern,
        out_shape=jax.ShapeDtypeStruct((cout, W), jnp.float32),
        scratch_shapes=[pltpu.VMEM((rows, W), jnp.float32)],
    )(xf, mask, p['w1'], p['g1'], p['b1'], p['w2'], p['g2'], p['b2'])


def _dec_block(xd, enc, mask, p, N, Lc, k_up, head=None):
    cout = p['w1'].shape[0]
    W = enc.shape[1]
    rows = max(p['wu'].shape[1], p['w1'].shape[1], 3 * cout)
    kern = functools.partial(_dec_block_kernel, inv_n=1.0 / float(N * Lc),
                             k_up=k_up, fuse_head=head is not None)
    args = [xd, enc, mask, p['wu'], p['bu'],
            p['w1'], p['g1'], p['b1'], p['w2'], p['g2'], p['b2']]
    out_rows = cout
    if head is not None:
        hw, hb = head
        args += [hw, hb]
        out_rows = hw.shape[0]
    return pl.pallas_call(
        kern,
        out_shape=jax.ShapeDtypeStruct((out_rows, W), jnp.float32),
        scratch_shapes=[pltpu.VMEM((rows, W), jnp.float32)],
    )(*args)


# ------------------------------ model forward ---------------------------------

def unet1d_forward(x, Q):
    """x: (N, Cin, L) float32; Q: packed parameter pytree (see pack_params)."""
    N, Cin, L = x.shape
    assert L % 8 == 0 and (L // 8) % 2 == 1, \
        "UNet1d with k=3/s=2 upconv4 needs L divisible by 8 and L/8 odd"
    L1, L2, L3, L4 = L, L // 2, L // 4, L // 8
    L5 = L4 // 2
    Ls = (L1, L2, L3, L4, L5)

    Wp = [_round_up(N * (Lc + 2), 128) for Lc in Ls]          # lane-dense widths
    mk = [_valid_mask(N, Lc, w) for Lc, w in zip(Ls, Wp)]     # hoisted masks

    xf = _to_flat(x, _round_up(Cin, 8), Wp[0])
    e1 = _enc_block(xf, mk[0], Q['enc1'], N, L1)
    e2 = _enc_block(_pool_flat(e1, N, L1, Wp[1]), mk[1], Q['enc2'], N, L2)
    e3 = _enc_block(_pool_flat(e2, N, L2, Wp[2]), mk[2], Q['enc3'], N, L3)
    e4 = _enc_block(_pool_flat(e3, N, L3, Wp[3]), mk[3], Q['enc4'], N, L4)
    bt = _enc_block(_pool_flat(e4, N, L4, Wp[4]), mk[4], Q['bottleneck'], N, L5)

    d4 = _dec_block(_dilate_flat(bt, N, L5, 3, Wp[3]), e4, mk[3], Q['dec4'], N, L4, 3)
    d3 = _dec_block(_dilate_flat(d4, N, L4, 2, Wp[2]), e3, mk[2], Q['dec3'], N, L3, 2)
    d2 = _dec_block(_dilate_flat(d3, N, L3, 2, Wp[1]), e2, mk[1], Q['dec2'], N, L2, 2)
    y = _dec_block(_dilate_flat(d2, N, L2, 2, Wp[0]), e1, mk[0], Q['dec1'], N, L1, 2,
                   head=(Q['head_w'], Q['head_b']))           # fused 1x1 head
    return _from_flat(y, N, L)


# --------------------------- parameters + packing -----------------------------

def init_params(key, in_channels=20, out_channels=20, init_features=32):
    """Raw parameters in PyTorch layouts."""
    f = init_features
    keys = iter(jax.random.split(key, 96))

    def block_p(cin, cout):
        return (0.1 * jax.random.normal(next(keys), (cout, cin, 3), jnp.float32),
                1.0 + 0.05 * jax.random.normal(next(keys), (cout,), jnp.float32),
                0.05 * jax.random.normal(next(keys), (cout,), jnp.float32),
                0.1 * jax.random.normal(next(keys), (cout, cout, 3), jnp.float32),
                1.0 + 0.05 * jax.random.normal(next(keys), (cout,), jnp.float32),
                0.05 * jax.random.normal(next(keys), (cout,), jnp.float32))

    def up_p(cin, cout, k):
        return (0.1 * jax.random.normal(next(keys), (cin, cout, k), jnp.float32),
                0.05 * jax.random.normal(next(keys), (cout,), jnp.float32))

    P = {}
    P['enc1'] = block_p(in_channels, f)
    P['enc2'] = block_p(f, 2 * f)
    P['enc3'] = block_p(2 * f, 4 * f)
    P['enc4'] = block_p(4 * f, 8 * f)
    P['bottleneck'] = block_p(8 * f, 16 * f)
    P['up4_w'], P['up4_b'] = up_p(16 * f, 8 * f, 3)
    P['dec4'] = block_p(16 * f, 8 * f)
    P['up3_w'], P['up3_b'] = up_p(8 * f, 4 * f, 2)
    P['dec3'] = block_p(8 * f, 4 * f)
    P['up2_w'], P['up2_b'] = up_p(4 * f, 2 * f, 2)
    P['dec2'] = block_p(4 * f, 2 * f)
    P['up1_w'], P['up1_b'] = up_p(2 * f, f, 2)
    P['dec1'] = block_p(2 * f, f)
    P['conv_w'] = 0.1 * jax.random.normal(next(keys), (out_channels, f, 1), jnp.float32)
    P['conv_b'] = 0.05 * jax.random.normal(next(keys), (out_channels,), jnp.float32)
    return P


def pack_params(P):
    """One-time weight packing for the Pallas kernels:
       conv3 (Cout,Cin,3)        -> (Cout, 3*Cin_pad8)      [tap-major, pad Cin->x8]
       upconv (Cin,Cout,K)       -> flipped/transposed (Cout, K*Cin)
       BN / biases               -> (C, 1) columns."""
    def pack_block(p):
        w1, g1, b1, w2, g2, b2 = p
        co, cin = w1.shape[0], w1.shape[1]
        cin_pad = _round_up(cin, 8)
        w1p = jnp.pad(w1, ((0, 0), (0, cin_pad - cin), (0, 0)))
        return dict(
            w1=jnp.transpose(w1p, (0, 2, 1)).reshape(co, -1),
            g1=g1.reshape(co, 1), b1=b1.reshape(co, 1),
            w2=jnp.transpose(w2, (0, 2, 1)).reshape(co, -1),
            g2=g2.reshape(co, 1), b2=b2.reshape(co, 1))

    def pack_up(w, b):
        cu = w.shape[1]
        wu = jnp.transpose(w[:, :, ::-1], (1, 2, 0)).reshape(cu, -1)
        return wu, b.reshape(cu, 1)

    Q = {}
    for name in ('enc1', 'enc2', 'enc3', 'enc4', 'bottleneck'):
        Q[name] = pack_block(P[name])
    for lvl in ('4', '3', '2', '1'):
        blk = pack_block(P['dec' + lvl])
        blk['wu'], blk['bu'] = pack_up(P['up%s_w' % lvl], P['up%s_b' % lvl])
        Q['dec' + lvl] = blk
    Q['head_w'] = P['conv_w'][:, :, 0]
    Q['head_b'] = P['conv_b'].reshape(-1, 1)
    return Q


# --------------------- pure-JAX reference (for validation) --------------------

_DN = ('NCH', 'OIH', 'NCH')
_HI = jax.lax.Precision.HIGHEST


def _ref_bn_tanh(x, g, b):
    m = jnp.mean(x, axis=(0, 2), keepdims=True)
    v = jnp.mean((x - m) ** 2, axis=(0, 2), keepdims=True)
    return jnp.tanh((x - m) * jax.lax.rsqrt(v + BN_EPS)
                    * g.reshape(1, -1, 1) + b.reshape(1, -1, 1))


def _ref_block(x, p):
    w1, g1, b1, w2, g2, b2 = p
    y = jax.lax.conv_general_dilated(x, w1, (1,), ((1, 1),),
                                     dimension_numbers=_DN, precision=_HI)
    y = _ref_bn_tanh(y, g1, b1)
    y = jax.lax.conv_general_dilated(y, w2, (1,), ((1, 1),),
                                     dimension_numbers=_DN, precision=_HI)
    return _ref_bn_tanh(y, g2, b2)


def _ref_pool(x):
    Lh = x.shape[2] // 2
    return jnp.maximum(x[:, :, 0:2 * Lh:2], x[:, :, 1:2 * Lh:2])


def _ref_convT(x, w, b, stride):
    K = w.shape[2]
    wf = jnp.transpose(w[:, :, ::-1], (1, 0, 2))       # (Cout, Cin, K)
    y = jax.lax.conv_general_dilated(x, wf, (1,), ((K - 1, K - 1),),
                                     lhs_dilation=(stride,),
                                     dimension_numbers=_DN, precision=_HI)
    return y + b.reshape(1, -1, 1)


def reference_forward(x, P):
    e1 = _ref_block(x, P['enc1'])
    e2 = _ref_block(_ref_pool(e1), P['enc2'])
    e3 = _ref_block(_ref_pool(e2), P['enc3'])
    e4 = _ref_block(_ref_pool(e3), P['enc4'])
    bt = _ref_block(_ref_pool(e4), P['bottleneck'])
    d4 = _ref_block(jnp.concatenate([_ref_convT(bt, P['up4_w'], P['up4_b'], 2), e4], 1), P['dec4'])
    d3 = _ref_block(jnp.concatenate([_ref_convT(d4, P['up3_w'], P['up3_b'], 2), e3], 1), P['dec3'])
    d2 = _ref_block(jnp.concatenate([_ref_convT(d3, P['up2_w'], P['up2_b'], 2), e2], 1), P['dec2'])
    d1 = _ref_block(jnp.concatenate([_ref_convT(d2, P['up1_w'], P['up1_b'], 2), e1], 1), P['dec1'])
    return (jnp.einsum('oc,ncl->nol', P['conv_w'][:, :, 0], d1, precision=_HI)
            + P['conv_b'].reshape(1, -1, 1))


# ----------------------------------- main --------------------------------------

if __name__ == "__main__":
    key = jax.random.PRNGKey(0)
    pkey, xkey = jax.random.split(key)

    # Small-shape instantiation of the same architecture.
    # upconv4 is kernel_size=3 / stride=2 => the module needs L/8 odd.
    in_ch, out_ch, feats = 4, 4, 8
    N, L = 2, 40

    P = init_params(pkey, in_channels=in_ch, out_channels=out_ch, init_features=feats)
    Q = pack_params(P)              # one-time packing, outside the jitted forward
    x = jax.random.normal(xkey, (N, in_ch, L), jnp.float32)

    fwd = jax.jit(unet1d_forward)
    out = jax.block_until_ready(fwd(x, Q))

    ref = jax.block_until_ready(reference_forward(x, P))
    assert out.shape == (N, out_ch, L), out.shape
    err = float(jnp.max(jnp.abs(out - ref)))
    assert err < 5e-3, f"max abs err {err}"

    print("KERNEL_OK")
</pallas_src>

<mosaic_0001>
module attributes {stable_mosaic.version = 11 : i64} {
  func.func @_block_kernel(%arg0: memref<8x128xf32, #tpu.memory_space<vmem>>, %arg1: memref<1x128xf32, #tpu.memory_space<vmem>>, %arg2: memref<8x24xf32, #tpu.memory_space<vmem>>, %arg3: memref<8x1xf32, #tpu.memory_space<vmem>>, %arg4: memref<8x1xf32, #tpu.memory_space<vmem>>, %arg5: memref<8x24xf32, #tpu.memory_space<vmem>>, %arg6: memref<8x1xf32, #tpu.memory_space<vmem>>, %arg7: memref<8x1xf32, #tpu.memory_space<vmem>>, %arg8: memref<8x128xf32, #tpu.memory_space<vmem>>, %arg9: memref<24x128xf32, #tpu.memory_space<vmem>>) attributes {dimension_semantics = [], scalar_prefetch = 0 : i64, scratch_operands = 1 : i64, tpu.core_type = #tpu.core_type<tc>} {
    %c0 = arith.constant 0 : index
    %c0_0 = arith.constant 0 : index
    %0 = vector.load %arg1[%c0, %c0_0] : memref<1x128xf32, #tpu.memory_space<vmem>>, vector<1x128xf32>
    %c0_1 = arith.constant 0 : index
    %c0_2 = arith.constant 0 : index
    %1 = vector.load %arg2[%c0_1, %c0_2] : memref<8x24xf32, #tpu.memory_space<vmem>>, vector<8x24xf32>
    %c0_3 = arith.constant 0 : index
    %c0_4 = arith.constant 0 : index
    %2 = vector.load %arg0[%c0_3, %c0_4] : memref<8x128xf32, #tpu.memory_space<vmem>>, vector<8x128xf32>
    %3 = vector.extract_strided_slice %2 {offsets = [0, 0], sizes = [8, 127], strides = [1, 1]} : vector<8x128xf32> to vector<8x127xf32>
    %c0_5 = arith.constant 0 : index
    %c1 = arith.constant 1 : index
    %4 = vector.load %arg9[%c0_5, %c1] : memref<24x128xf32, #tpu.memory_space<vmem>>, vector<8x127xf32>
    tpu.vector_store %arg9[%c0_5, %c1], %3 {strides = array<i32>} : memref<24x128xf32, #tpu.memory_space<vmem>>, vector<8x127xf32>,
    %cst = arith.constant 0.000000e+00 : f32
    %5 = vector.broadcast %cst : f32 to vector<8x1xf32>
    %c0_6 = arith.constant 0 : index
    %c0_7 = arith.constant 0 : index
    %6 = vector.load %arg9[%c0_6, %c0_7] : memref<24x128xf32, #tpu.memory_space<vmem>>, vector<8x1xf32>
    tpu.vector_store %arg9[%c0_6, %c0_7], %5 {strides = array<i32>} : memref<24x128xf32, #tpu.memory_space<vmem>>, vector<8x1xf32>,
    %c8 = arith.constant 8 : index
    %c0_8 = arith.constant 0 : index
    %7 = vector.load %arg9[%c8, %c0_8] : memref<24x128xf32, #tpu.memory_space<vmem>>, vector<8x128xf32>
    tpu.vector_store %arg9[%c8, %c0_8], %2 {strides = array<i32>} : memref<24x128xf32, #tpu.memory_space<vmem>>, vector<8x128xf32>,
    %8 = vector.extract_strided_slice %2 {offsets = [0, 1], sizes = [8, 127], strides = [1, 1]} : vector<8x128xf32> to vector<8x127xf32>
    %c16 = arith.constant 16 : index
    %c0_9 = arith.constant 0 : index
    %9 = vector.load %arg9[%c16, %c0_9] : memref<24x128xf32, #tpu.memory_space<vmem>>, vector<8x127xf32>
    tpu.vector_store %arg9[%c16, %c0_9], %8 {strides = array<i32>} : memref<24x128xf32, #tpu.memory_space<vmem>>, vector<8x127xf32>,
    %cst_10 = arith.constant 0.000000e+00 : f32
    %10 = vector.broadcast %cst_10 : f32 to vector<8x1xf32>
    %c16_11 = arith.constant 16 : index
    %c127 = arith.constant 127 : index
    %11 = vector.load %arg9[%c16_11, %c127] : memref<24x128xf32, #tpu.memory_space<vmem>>, vector<8x1xf32>
    tpu.vector_store %arg9[%c16_11, %c127], %10 {strides = array<i32>} : memref<24x128xf32, #tpu.memory_space<vmem>>, vector<8x1xf32>,
    %c0_12 = arith.constant 0 : index
    %c0_13 = arith.constant 0 : index
    %12 = vector.load %arg9[%c0_12, %c0_13] : memref<24x128xf32, #tpu.memory_space<vmem>>, vector<24x128xf32>
    %cst_14 = arith.constant dense<0.000000e+00> : vector<8x128xf32>
    %13 = tpu.matmul %1, %12, %cst_14 {dimension_numbers = #tpu.dot_dimension_numbers<[1], [0], [0], [1], [0, 0, 1, 1], [], []>} : vector<8x24xf32>, vector<24x128xf32>, vector<8x128xf32> -> vector<8x128xf32>
    %c0_15 = arith.constant 0 : index
    %c0_16 = arith.constant 0 : index
    %14 = vector.load %arg3[%c0_15, %c0_16] : memref<8x1xf32, #tpu.memory_space<vmem>>, vector<8x1xf32>
    %c0_17 = arith.constant 0 : index
    %c0_18 = arith.constant 0 : index
    %15 = vector.load %arg4[%c0_17, %c0_18] : memref<8x1xf32, #tpu.memory_space<vmem>>, vector<8x1xf32>
    %16 = vector.broadcast %0 : vector<1x128xf32> to vector<8x128xf32>
    %17 = arith.mulf %13, %16 : vector<8x128xf32>
    %cst_19 = arith.constant dense<0.000000e+00> : vector<8xf32>
    %18 = vector.multi_reduction <add>, %17, %cst_19 [1] : vector<8x128xf32> to vector<8xf32>
    %19 = vector.shape_cast %18 : vector<8xf32> to vector<8x1xf32>
    %cst_20 = arith.constant 1.250000e-02 : f32
    %20 = vector.broadcast %cst_20 : f32 to vector<8x1xf32>
    %21 = arith.mulf %19, %20 : vector<8x1xf32>
    %22 = vector.broadcast %21 : vector<8x1xf32> to vector<8x128xf32>
    %23 = arith.subf %13, %22 : vector<8x128xf32>
    %24 = vector.broadcast %0 : vector<1x128xf32> to vector<8x128xf32>
    %25 = arith.mulf %23, %24 : vector<8x128xf32>
    %26 = arith.mulf %25, %25 : vector<8x128xf32>
    %cst_21 = arith.constant dense<0.000000e+00> : vector<8xf32>
    %27 = vector.multi_reduction <add>, %26, %cst_21 [1] : vector<8x128xf32> to vector<8xf32>
    %28 = vector.shape_cast %27 : vector<8xf32> to vector<8x1xf32>
    %cst_22 = arith.constant 1.250000e-02 : f32
    %29 = vector.broadcast %cst_22 : f32 to vector<8x1xf32>
    %30 = arith.mulf %28, %29 : vector<8x1xf32>
    %cst_23 = arith.constant 9.99999974E-6 : f32
    %31 = vector.broadcast %cst_23 : f32 to vector<8x1xf32>
    %32 = arith.addf %30, %31 : vector<8x1xf32>
    %33 = math.rsqrt %32 : vector<8x1xf32>
    %34 = arith.mulf %33, %14 : vector<8x1xf32>
    %35 = vector.broadcast %34 : vector<8x1xf32> to vector<8x128xf32>
    %36 = arith.mulf %25, %35 : vector<8x128xf32>
    %37 = vector.broadcast %15 : vector<8x1xf32> to vector<8x128xf32>
    %38 = arith.addf %36, %37 : vector<8x128xf32>
    %39 = math.tanh %38 : vector<8x128xf32>
    %40 = vector.broadcast %0 : vector<1x128xf32> to vector<8x128xf32>
    %41 = arith.mulf %39, %40 : vector<8x128xf32>
    %c0_24 = arith.constant 0 : index
    %c0_25 = arith.constant 0 : index
    %42 = vector.load %arg5[%c0_24, %c0_25] : memref<8x24xf32, #tpu.memory_space<vmem>>, vector<8x24xf32>
    %43 = vector.extract_strided_slice %41 {offsets = [0, 0], sizes = [8, 127], strides = [1, 1]} : vector<8x128xf32> to vector<8x127xf32>
    %c0_26 = arith.constant 0 : index
    %c1_27 = arith.constant 1 : index
    %44 = vector.load %arg9[%c0_26, %c1_27] : memref<24x128xf32, #tpu.memory_space<vmem>>, vector<8x127xf32>
    tpu.vector_store %arg9[%c0_26, %c1_27], %43 {strides = array<i32>} : memref<24x128xf32, #tpu.memory_space<vmem>>, vector<8x127xf32>,
    %cst_28 = arith.constant 0.000000e+00 : f32
    %45 = vector.broadcast %cst_28 : f32 to vector<8x1xf32>
    %c0_29 = arith.constant 0 : index
    %c0_30 = arith.constant 0 : index
    %46 = vector.load %arg9[%c0_29, %c0_30] : memref<24x128xf32, #tpu.memory_space<vmem>>, vector<8x1xf32>
    tpu.vector_store %arg9[%c0_29, %c0_30], %45 {strides = array<i32>} : memref<24x128xf32, #tpu.memory_space<vmem>>, vector<8x1xf32>,
    %c8_31 = arith.constant 8 : index
    %c0_32 = arith.constant 0 : index
    %47 = vector.load %arg9[%c8_31, %c0_32] : memref<24x128xf32, #tpu.memory_space<vmem>>, vector<8x128xf32>
    tpu.vector_store %arg9[%c8_31, %c0_32], %41 {strides = array<i32>} : memref<24x128xf32, #tpu.memory_space<vmem>>, vector<8x128xf32>,
    %48 = vector.extract_strided_slice %41 {offsets = [0, 1], sizes = [8, 127], strides = [1, 1]} : vector<8x128xf32> to vector<8x127xf32>
    %c16_33 = arith.constant 16 : index
    %c0_34 = arith.constant 0 : index
    %49 = vector.load %arg9[%c16_33, %c0_34] : memref<24x128xf32, #tpu.memory_space<vmem>>, vector<8x127xf32>
    tpu.vector_store %arg9[%c16_33, %c0_34], %48 {strides = array<i32>} : memref<24x128xf32, #tpu.memory_space<vmem>>, vector<8x127xf32>,
    %cst_35 = arith.constant 0.000000e+00 : f32
    %50 = vector.broadcast %cst_35 : f32 to vector<8x1xf32>
    %c16_36 = arith.constant 16 : index
    %c127_37 = arith.constant 127 : index
    %51 = vector.load %arg9[%c16_36, %c127_37] : memref<24x128xf32, #tpu.memory_space<vmem>>, vector<8x1xf32>
    tpu.vector_store %arg9[%c16_36, %c127_37], %50 {strides = array<i32>} : memref<24x128xf32, #tpu.memory_space<vmem>>, vector<8x1xf32>,
    %c0_38 = arith.constant 0 : index
    %c0_39 = arith.constant 0 : index
    %52 = vector.load %arg9[%c0_38, %c0_39] : memref<24x128xf32, #tpu.memory_space<vmem>>, vector<24x128xf32>
    %cst_40 = arith.constant dense<0.000000e+00> : vector<8x128xf32>
    %53 = tpu.matmul %42, %52, %cst_40 {dimension_numbers = #tpu.dot_dimension_numbers<[1], [0], [0], [1], [0, 0, 1, 1], [], []>} : vector<8x24xf32>, vector<24x128xf32>, vector<8x128xf32> -> vector<8x128xf32>
    %c0_41 = arith.constant 0 : index
    %c0_42 = arith.constant 0 : index
    %54 = vector.load %arg6[%c0_41, %c0_42] : memref<8x1xf32, #tpu.memory_space<vmem>>, vector<8x1xf32>
    %c0_43 = arith.constant 0 : index
    %c0_44 = arith.constant 0 : index
    %55 = vector.load %arg7[%c0_43, %c0_44] : memref<8x1xf32, #tpu.memory_space<vmem>>, vector<8x1xf32>
    %56 = vector.broadcast %0 : vector<1x128xf32> to vector<8x128xf32>
    %57 = arith.mulf %53, %56 : vector<8x128xf32>
    %cst_45 = arith.constant dense<0.000000e+00> : vector<8xf32>
    %58 = vector.multi_reduction <add>, %57, %cst_45 [1] : vector<8x128xf32> to vector<8xf32>
    %59 = vector.shape_cast %58 : vector<8xf32> to vector<8x1xf32>
    %cst_46 = arith.constant 1.250000e-02 : f32
    %60 = vector.broadcast %cst_46 : f32 to vector<8x1xf32>
    %61 = arith.mulf %59, %60 : vector<8x1xf32>
    %62 = vector.broadcast %61 : vector<8x1xf32> to vector<8x128xf32>
    %63 = arith.subf %53, %62 : vector<8x128xf32>
    %64 = vector.broadcast %0 : vector<1x128xf32> to vector<8x128xf32>
    %65 = arith.mulf %63, %64 : vector<8x128xf32>
    %66 = arith.mulf %65, %65 : vector<8x128xf32>
    %cst_47 = arith.constant dense<0.000000e+00> : vector<8xf32>
    %67 = vector.multi_reduction <add>, %66, %cst_47 [1] : vector<8x128xf32> to vector<8xf32>
    %68 = vector.shape_cast %67 : vector<8xf32> to vector<8x1xf32>
    %cst_48 = arith.constant 1.250000e-02 : f32
    %69 = vector.broadcast %cst_48 : f32 to vector<8x1xf32>
    %70 = arith.mulf %68, %69 : vector<8x1xf32>
    %cst_49 = arith.constant 9.99999974E-6 : f32
    %71 = vector.broadcast %cst_49 : f32 to vector<8x1xf32>
    %72 = arith.addf %70, %71 : vector<8x1xf32>
    %73 = math.rsqrt %72 : vector<8x1xf32>
    %74 = arith.mulf %73, %54 : vector<8x1xf32>
    %75 = vector.broadcast %74 : vector<8x1xf32> to vector<8x128xf32>
    %76 = arith.mulf %65, %75 : vector<8x128xf32>
    %77 = vector.broadcast %55 : vector<8x1xf32> to vector<8x128xf32>
    %78 = arith.addf %76, %77 : vector<8x128xf32>
    %79 = math.tanh %78 : vector<8x128xf32>
    %80 = vector.broadcast %0 : vector<1x128xf32> to vector<8x128xf32>
    %81 = arith.mulf %79, %80 : vector<8x128xf32>
    %c0_50 = arith.constant 0 : index
    %c0_51 = arith.constant 0 : index
    %82 = vector.load %arg8[%c0_50, %c0_51] : memref<8x128xf32, #tpu.memory_space<vmem>>, vector<8x128xf32>
    tpu.vector_store %arg8[%c0_50, %c0_51], %81 {strides = array<i32>} : memref<8x128xf32, #tpu.memory_space<vmem>>, vector<8x128xf32>,
    return
  }
}

module attributes {stable_mosaic.version = 11 : i64} {
  func.func @_block_kernel(%arg0: memref<8x128xf32, #tpu.memory_space<vmem>>, %arg1: memref<1x128xf32, #tpu.memory_space<vmem>>, %arg2: memref<16x24xf32, #tpu.memory_space<vmem>>, %arg3: memref<16x1xf32, #tpu.memory_space<vmem>>, %arg4: memref<16x1xf32, #tpu.memory_space<vmem>>, %arg5: memref<16x48xf32, #tpu.memory_space<vmem>>, %arg6: memref<16x1xf32, #tpu.memory_space<vmem>>, %arg7: memref<16x1xf32, #tpu.memory_space<vmem>>, %arg8: memref<16x128xf32, #tpu.memory_space<vmem>>, %arg9: memref<48x128xf32, #tpu.memory_space<vmem>>) attributes {dimension_semantics = [], scalar_prefetch = 0 : i64, scratch_operands = 1 : i64, tpu.core_type = #tpu.core_type<tc>} {
    %c0 = arith.constant 0 : index
    %c0_0 = arith.constant 0 : index
    %0 = vector.load %arg1[%c0, %c0_0] : memref<1x128xf32, #tpu.memory_space<vmem>>, vector<1x128xf32>
    %c0_1 = arith.constant 0 : index
    %c0_2 = arith.constant 0 : index
    %1 = vector.load %arg2[%c0_1, %c0_2] : memref<16x24xf32, #tpu.memory_space<vmem>>, vector<16x24xf32>
    %c0_3 = arith.constant 0 : index
    %c0_4 = arith.constant 0 : index
    %2 = vector.load %arg0[%c0_3, %c0_4] : memref<8x128xf32, #tpu.memory_space<vmem>>, vector<8x128xf32>
    %3 = vector.extract_strided_slice %2 {offsets = [0, 0], sizes = [8, 127], strides = [1, 1]} : vector<8x128xf32> to vector<8x127xf32>
    %c0_5 = arith.constant 0 : index
    %c1 = arith.constant 1 : index
    %4 = vector.load %arg9[%c0_5, %c1] : memref<48x128xf32, #tpu.memory_space<vmem>>, vector<8x127xf32>
    tpu.vector_store %arg9[%c0_5, %c1], %3 {strides = array<i32>} : memref<48x128xf32, #tpu.memory_space<vmem>>, vector<8x127xf32>,
    %cst = arith.constant 0.000000e+00 : f32
    %5 = vector.broadcast %cst : f32 to vector<8x1xf32>
    %c0_6 = arith.constant 0 : index
    %c0_7 = arith.constant 0 : index
    %6 = vector.load %arg9[%c0_6, %c0_7] : memref<48x128xf32, #tpu.memory_space<vmem>>, vector<8x1xf32>
    tpu.vector_store %arg9[%c0_6, %c0_7], %5 {strides = array<i32>} : memref<48x128xf32, #tpu.memory_space<vmem>>, vector<8x1xf32>,
    %c8 = arith.constant 8 : index
    %c0_8 = arith.constant 0 : index
    %7 = vector.load %arg9[%c8, %c0_8] : memref<48x128xf32, #tpu.memory_space<vmem>>, vector<8x128xf32>
    tpu.vector_store %arg9[%c8, %c0_8], %2 {strides = array<i32>} : memref<48x128xf32, #tpu.memory_space<vmem>>, vector<8x128xf32>,
    %8 = vector.extract_strided_slice %2 {offsets = [0, 1], sizes = [8, 127], strides = [1, 1]} : vector<8x128xf32> to vector<8x127xf32>
    %c16 = arith.constant 16 : index
    %c0_9 = arith.constant 0 : index
    %9 = vector.load %arg9[%c16, %c0_9] : memref<48x128xf32, #tpu.memory_space<vmem>>, vector<8x127xf32>
    tpu.vector_store %arg9[%c16, %c0_9], %8 {strides = array<i32>} : memref<48x128xf32, #tpu.memory_space<vmem>>, vector<8x127xf32>,
    %cst_10 = arith.constant 0.000000e+00 : f32
    %10 = vector.broadcast %cst_10 : f32 to vector<8x1xf32>
    %c16_11 = arith.constant 16 : index
    %c127 = arith.constant 127 : index
    %11 = vector.load %arg9[%c16_11, %c127] : memref<48x128xf32, #tpu.memory_space<vmem>>, vector<8x1xf32>
    tpu.vector_store %arg9[%c16_11, %c127], %10 {strides = array<i32>} : memref<48x128xf32, #tpu.memory_space<vmem>>, vector<8x1xf32>,
    %c0_12 = arith.constant 0 : index
    %c0_13 = arith.constant 0 : index
    %12 = vector.load %arg9[%c0_12, %c0_13] : memref<48x128xf32, #tpu.memory_space<vmem>>, vector<24x128xf32>
    %cst_14 = arith.constant dense<0.000000e+00> : vector<16x128xf32>
    %13 = tpu.matmul %1, %12, %cst_14 {dimension_numbers = #tpu.dot_dimension_numbers<[1], [0], [0], [1], [0, 0, 1, 1], [], []>} : vector<16x24xf32>, vector<24x128xf32>, vector<16x128xf32> -> vector<16x128xf32>
    %c0_15 = arith.constant 0 : index
    %c0_16 = arith.constant 0 : index
    %14 = vector.load %arg3[%c0_15, %c0_16] : memref<16x1xf32, #tpu.memory_space<vmem>>, vector<16x1xf32>
    %c0_17 = arith.constant 0 : index
    %c0_18 = arith.constant 0 : index
    %15 = vector.load %arg4[%c0_17, %c0_18] : memref<16x1xf32, #tpu.memory_space<vmem>>, vector<16x1xf32>
    %16 = vector.broadcast %0 : vector<1x128xf32> to vector<16x128xf32>
    %17 = arith.mulf %13, %16 : vector<16x128xf32>
    %cst_19 = arith.constant dense<0.000000e+00> : vector<16xf32>
    %18 = vector.multi_reduction <add>, %17, %cst_19 [1] : vector<16x128xf32> to vector<16xf32>
    %19 = vector.shape_cast %18 : vector<16xf32> to vector<16x1xf32>
    %cst_20 = arith.constant 2.500000e-02 : f32
    %20 = vector.broadcast %cst_20 : f32 to vector<16x1xf32>
    %21 = arith.mulf %19, %20 : vector<16x1xf32>
    %22 = vector.broadcast %21 : vector<16x1xf32> to vector<16x128xf32>
    %23 = arith.subf %13, %22 : vector<16x128xf32>
    %24 = vector.broadcast %0 : vector<1x128xf32> to vector<16x128xf32>
    %25 = arith.mulf %23, %24 : vector<16x128xf32>
    %26 = arith.mulf %25, %25 : vector<16x128xf32>
    %cst_21 = arith.constant dense<0.000000e+00> : vector<16xf32>
    %27 = vector.multi_reduction <add>, %26, %cst_21 [1] : vector<16x128xf32> to vector<16xf32>
    %28 = vector.shape_cast %27 : vector<16xf32> to vector<16x1xf32>
    %cst_22 = arith.constant 2.500000e-02 : f32
    %29 = vector.broadcast %cst_22 : f32 to vector<16x1xf32>
    %30 = arith.mulf %28, %29 : vector<16x1xf32>
    %cst_23 = arith.constant 9.99999974E-6 : f32
    %31 = vector.broadcast %cst_23 : f32 to vector<16x1xf32>
    %32 = arith.addf %30, %31 : vector<16x1xf32>
    %33 = math.rsqrt %32 : vector<16x1xf32>
    %34 = arith.mulf %33, %14 : vector<16x1xf32>
    %35 = vector.broadcast %34 : vector<16x1xf32> to vector<16x128xf32>
    %36 = arith.mulf %25, %35 : vector<16x128xf32>
    %37 = vector.broadcast %15 : vector<16x1xf32> to vector<16x128xf32>
    %38 = arith.addf %36, %37 : vector<16x128xf32>
    %39 = math.tanh %38 : vector<16x128xf32>
    %40 = vector.broadcast %0 : vector<1x128xf32> to vector<16x128xf32>
    %41 = arith.mulf %39, %40 : vector<16x128xf32>
    %c0_24 = arith.constant 0 : index
    %c0_25 = arith.constant 0 : index
    %42 = vector.load %arg5[%c0_24, %c0_25] : memref<16x48xf32, #tpu.memory_space<vmem>>, vector<16x48xf32>
    %43 = vector.extract_strided_slice %41 {offsets = [0, 0], sizes = [16, 127], strides = [1, 1]} : vector<16x128xf32> to vector<16x127xf32>
    %c0_26 = arith.constant 0 : index
    %c1_27 = arith.constant 1 : index
    %44 = vector.load %arg9[%c0_26, %c1_27] : memref<48x128xf32, #tpu.memory_space<vmem>>, vector<16x127xf32>
    tpu.vector_store %arg9[%c0_26, %c1_27], %43 {strides = array<i32>} : memref<48x128xf32, #tpu.memory_space<vmem>>, vector<16x127xf32>,
    %cst_28 = arith.constant 0.000000e+00 : f32
    %45 = vector.broadcast %cst_28 : f32 to vector<16x1xf32>
    %c0_29 = arith.constant 0 : index
    %c0_30 = arith.constant 0 : index
    %46 = vector.load %arg9[%c0_29, %c0_30] : memref<48x128xf32, #tpu.memory_space<vmem>>, vector<16x1xf32>
    tpu.vector_store %arg9[%c0_29, %c0_30], %45 {strides = array<i32>} : memref<48x128xf32, #tpu.memory_space<vmem>>, vector<16x1xf32>,
    %c16_31 = arith.constant 16 : index
    %c0_32 = arith.constant 0 : index
    %47 = vector.load %arg9[%c16_31, %c0_32] : memref<48x128xf32, #tpu.memory_space<vmem>>, vector<16x128xf32>
    tpu.vector_store %arg9[%c16_31, %c0_32], %41 {strides = array<i32>} : memref<48x128xf32, #tpu.memory_space<vmem>>, vector<16x128xf32>,
    %48 = vector.extract_strided_slice %41 {offsets = [0, 1], sizes = [16, 127], strides = [1, 1]} : vector<16x128xf32> to vector<16x127xf32>
    %c32 = arith.constant 32 : index
    %c0_33 = arith.constant 0 : index
    %49 = vector.load %arg9[%c32, %c0_33] : memref<48x128xf32, #tpu.memory_space<vmem>>, vector<16x127xf32>
    tpu.vector_store %arg9[%c32, %c0_33], %48 {strides = array<i32>} : memref<48x128xf32, #tpu.memory_space<vmem>>, vector<16x127xf32>,
    %cst_34 = arith.constant 0.000000e+00 : f32
    %50 = vector.broadcast %cst_34 : f32 to vector<16x1xf32>
    %c32_35 = arith.constant 32 : index
    %c127_36 = arith.constant 127 : index
    %51 = vector.load %arg9[%c32_35, %c127_36] : memref<48x128xf32, #tpu.memory_space<vmem>>, vector<16x1xf32>
    tpu.vector_store %arg9[%c32_35, %c127_36], %50 {strides = array<i32>} : memref<48x128xf32, #tpu.memory_space<vmem>>, vector<16x1xf32>,
    %c0_37 = arith.constant 0 : index
    %c0_38 = arith.constant 0 : index
    %52 = vector.load %arg9[%c0_37, %c0_38] : memref<48x128xf32, #tpu.memory_space<vmem>>, vector<48x128xf32>
    %cst_39 = arith.constant dense<0.000000e+00> : vector<16x128xf32>
    %53 = tpu.matmul %42, %52, %cst_39 {dimension_numbers = #tpu.dot_dimension_numbers<[1], [0], [0], [1], [0, 0, 1, 1], [], []>} : vector<16x48xf32>, vector<48x128xf32>, vector<16x128xf32> -> vector<16x128xf32>
    %c0_40 = arith.constant 0 : index
    %c0_41 = arith.constant 0 : index
    %54 = vector.load %arg6[%c0_40, %c0_41] : memref<16x1xf32, #tpu.memory_space<vmem>>, vector<16x1xf32>
    %c0_42 = arith.constant 0 : index
    %c0_43 = arith.constant 0 : index
    %55 = vector.load %arg7[%c0_42, %c0_43] : memref<16x1xf32, #tpu.memory_space<vmem>>, vector<16x1xf32>
    %56 = vector.broadcast %0 : vector<1x128xf32> to vector<16x128xf32>
    %57 = arith.mulf %53, %56 : vector<16x128xf32>
    %cst_44 = arith.constant dense<0.000000e+00> : vector<16xf32>
    %58 = vector.multi_reduction <add>, %57, %cst_44 [1] : vector<16x128xf32> to vector<16xf32>
    %59 = vector.shape_cast %58 : vector<16xf32> to vector<16x1xf32>
    %cst_45 = arith.constant 2.500000e-02 : f32
    %60 = vector.broadcast %cst_45 : f32 to vector<16x1xf32>
    %61 = arith.mulf %59, %60 : vector<16x1xf32>
    %62 = vector.broadcast %61 : vector<16x1xf32> to vector<16x128xf32>
    %63 = arith.subf %53, %62 : vector<16x128xf32>
    %64 = vector.broadcast %0 : vector<1x128xf32> to vector<16x128xf32>
    %65 = arith.mulf %63, %64 : vector<16x128xf32>
    %66 = arith.mulf %65, %65 : vector<16x128xf32>
    %cst_46 = arith.constant dense<0.000000e+00> : vector<16xf32>
    %67 = vector.multi_reduction <add>, %66, %cst_46 [1] : vector<16x128xf32> to vector<16xf32>
    %68 = vector.shape_cast %67 : vector<16xf32> to vector<16x1xf32>
    %cst_47 = arith.constant 2.500000e-02 : f32
    %69 = vector.broadcast %cst_47 : f32 to vector<16x1xf32>
    %70 = arith.mulf %68, %69 : vector<16x1xf32>
    %cst_48 = arith.constant 9.99999974E-6 : f32
    %71 = vector.broadcast %cst_48 : f32 to vector<16x1xf32>
    %72 = arith.addf %70, %71 : vector<16x1xf32>
    %73 = math.rsqrt %72 : vector<16x1xf32>
    %74 = arith.mulf %73, %54 : vector<16x1xf32>
    %75 = vector.broadcast %74 : vector<16x1xf32> to vector<16x128xf32>
    %76 = arith.mulf %65, %75 : vector<16x128xf32>
    %77 = vector.broadcast %55 : vector<16x1xf32> to vector<16x128xf32>
    %78 = arith.addf %76, %77 : vector<16x128xf32>
    %79 = math.tanh %78 : vector<16x128xf32>
    %80 = vector.broadcast %0 : vector<1x128xf32> to vector<16x128xf32>
    %81 = arith.mulf %79, %80 : vector<16x128xf32>
    %c0_49 = arith.constant 0 : index
    %c0_50 = arith.constant 0 : index
    %82 = vector.load %arg8[%c0_49, %c0_50] : memref<16x128xf32, #tpu.memory_space<vmem>>, vector<16x128xf32>
    tpu.vector_store %arg8[%c0_49, %c0_50], %81 {strides = array<i32>} : memref<16x128xf32, #tpu.memory_space<vmem>>, vector<16x128xf32>,
    return
  }
}

module attributes {stable_mosaic.version = 11 : i64} {
  func.func @_block_kernel(%arg0: memref<16x128xf32, #tpu.memory_space<vmem>>, %arg1: memref<1x128xf32, #tpu.memory_space<vmem>>, %arg2: memref<32x48xf32, #tpu.memory_space<vmem>>, %arg3: memref<32x1xf32, #tpu.memory_space<vmem>>, %arg4: memref<32x1xf32, #tpu.memory_space<vmem>>, %arg5: memref<32x96xf32, #tpu.memory_space<vmem>>, %arg6: memref<32x1xf32, #tpu.memory_space<vmem>>, %arg7: memref<32x1xf32, #tpu.memory_space<vmem>>, %arg8: memref<32x128xf32, #tpu.memory_space<vmem>>, %arg9: memref<96x128xf32, #tpu.memory_space<vmem>>) attributes {dimension_semantics = [], scalar_prefetch = 0 : i64, scratch_operands = 1 : i64, tpu.core_type = #tpu.core_type<tc>} {
    %c0 = arith.constant 0 : index
    %c0_0 = arith.constant 0 : index
    %0 = vector.load %arg1[%c0, %c0_0] : memref<1x128xf32, #tpu.memory_space<vmem>>, vector<1x128xf32>
    %c0_1 = arith.constant 0 : index
    %c0_2 = arith.constant 0 : index
    %1 = vector.load %arg2[%c0_1, %c0_2] : memref<32x48xf32, #tpu.memory_space<vmem>>, vector<32x48xf32>
    %c0_3 = arith.constant 0 : index
    %c0_4 = arith.constant 0 : index
    %2 = vector.load %arg0[%c0_3, %c0_4] : memref<16x128xf32, #tpu.memory_space<vmem>>, vector<16x128xf32>
    %3 = vector.extract_strided_slice %2 {offsets = [0, 0], sizes = [16, 127], strides = [1, 1]} : vector<16x128xf32> to vector<16x127xf32>
    %c0_5 = arith.constant 0 : index
    %c1 = arith.constant 1 : index
    %4 = vector.load %arg9[%c0_5, %c1] : memref<96x128xf32, #tpu.memory_space<vmem>>, vector<16x127xf32>
    tpu.vector_store %arg9[%c0_5, %c1], %3 {strides = array<i32>} : memref<96x128xf32, #tpu.memory_space<vmem>>, vector<16x127xf32>,
    %cst = arith.constant 0.000000e+00 : f32
    %5 = vector.broadcast %cst : f32 to vector<16x1xf32>
    %c0_6 = arith.constant 0 : index
    %c0_7 = arith.constant 0 : index
    %6 = vector.load %arg9[%c0_6, %c0_7] : memref<96x128xf32, #tpu.memory_space<vmem>>, vector<16x1xf32>
    tpu.vector_store %arg9[%c0_6, %c0_7], %5 {strides = array<i32>} : memref<96x128xf32, #tpu.memory_space<vmem>>, vector<16x1xf32>,
    %c16 = arith.constant 16 : index
    %c0_8 = arith.constant 0 : index
    %7 = vector.load %arg9[%c16, %c0_8] : memref<96x128xf32, #tpu.memory_space<vmem>>, vector<16x128xf32>
    tpu.vector_store %arg9[%c16, %c0_8], %2 {strides = array<i32>} : memref<96x128xf32, #tpu.memory_space<vmem>>, vector<16x128xf32>,
    %8 = vector.extract_strided_slice %2 {offsets = [0, 1], sizes = [16, 127], strides = [1, 1]} : vector<16x128xf32> to vector<16x127xf32>
    %c32 = arith.constant 32 : index
    %c0_9 = arith.constant 0 : index
    %9 = vector.load %arg9[%c32, %c0_9] : memref<96x128xf32, #tpu.memory_space<vmem>>, vector<16x127xf32>
    tpu.vector_store %arg9[%c32, %c0_9], %8 {strides = array<i32>} : memref<96x128xf32, #tpu.memory_space<vmem>>, vector<16x127xf32>,
    %cst_10 = arith.constant 0.000000e+00 : f32
    %10 = vector.broadcast %cst_10 : f32 to vector<16x1xf32>
    %c32_11 = arith.constant 32 : index
    %c127 = arith.constant 127 : index
    %11 = vector.load %arg9[%c32_11, %c127] : memref<96x128xf32, #tpu.memory_space<vmem>>, vector<16x1xf32>
    tpu.vector_store %arg9[%c32_11, %c127], %10 {strides = array<i32>} : memref<96x128xf32, #tpu.memory_space<vmem>>, vector<16x1xf32>,
    %c0_12 = arith.constant 0 : index
    %c0_13 = arith.constant 0 : index
    %12 = vector.load %arg9[%c0_12, %c0_13] : memref<96x128xf32, #tpu.memory_space<vmem>>, vector<48x128xf32>
    %cst_14 = arith.constant dense<0.000000e+00> : vector<32x128xf32>
    %13 = tpu.matmul %1, %12, %cst_14 {dimension_numbers = #tpu.dot_dimension_numbers<[1], [0], [0], [1], [0, 0, 1, 1], [], []>} : vector<32x48xf32>, vector<48x128xf32>, vector<32x128xf32> -> vector<32x128xf32>
    %c0_15 = arith.constant 0 : index
    %c0_16 = arith.constant 0 : index
    %14 = vector.load %arg3[%c0_15, %c0_16] : memref<32x1xf32, #tpu.memory_space<vmem>>, vector<32x1xf32>
    %c0_17 = arith.constant 0 : index
    %c0_18 = arith.constant 0 : index
    %15 = vector.load %arg4[%c0_17, %c0_18] : memref<32x1xf32, #tpu.memory_space<vmem>>, vector<32x1xf32>
    %16 = vector.broadcast %0 : vector<1x128xf32> to vector<32x128xf32>
    %17 = arith.mulf %13, %16 : vector<32x128xf32>
    %cst_19 = arith.constant dense<0.000000e+00> : vector<32xf32>
    %18 = vector.multi_reduction <add>, %17, %cst_19 [1] : vector<32x128xf32> to vector<32xf32>
    %19 = vector.shape_cast %18 : vector<32xf32> to vector<32x1xf32>
    %cst_20 = arith.constant 5.000000e-02 : f32
    %20 = vector.broadcast %cst_20 : f32 to vector<32x1xf32>
    %21 = arith.mulf %19, %20 : vector<32x1xf32>
    %22 = vector.broadcast %21 : vector<32x1xf32> to vector<32x128xf32>
    %23 = arith.subf %13, %22 : vector<32x128xf32>
    %24 = vector.broadcast %0 : vector<1x128xf32> to vector<32x128xf32>
    %25 = arith.mulf %23, %24 : vector<32x128xf32>
    %26 = arith.mulf %25, %25 : vector<32x128xf32>
    %cst_21 = arith.constant dense<0.000000e+00> : vector<32xf32>
    %27 = vector.multi_reduction <add>, %26, %cst_21 [1] : vector<32x128xf32> to vector<32xf32>
    %28 = vector.shape_cast %27 : vector<32xf32> to vector<32x1xf32>
    %cst_22 = arith.constant 5.000000e-02 : f32
    %29 = vector.broadcast %cst_22 : f32 to vector<32x1xf32>
    %30 = arith.mulf %28, %29 : vector<32x1xf32>
    %cst_23 = arith.constant 9.99999974E-6 : f32
    %31 = vector.broadcast %cst_23 : f32 to vector<32x1xf32>
    %32 = arith.addf %30, %31 : vector<32x1xf32>
    %33 = math.rsqrt %32 : vector<32x1xf32>
    %34 = arith.mulf %33, %14 : vector<32x1xf32>
    %35 = vector.broadcast %34 : vector<32x1xf32> to vector<32x128xf32>
    %36 = arith.mulf %25, %35 : vector<32x128xf32>
    %37 = vector.broadcast %15 : vector<32x1xf32> to vector<32x128xf32>
    %38 = arith.addf %36, %37 : vector<32x128xf32>
    %39 = math.tanh %38 : vector<32x128xf32>
    %40 = vector.broadcast %0 : vector<1x128xf32> to vector<32x128xf32>
    %41 = arith.mulf %39, %40 : vector<32x128xf32>
    %c0_24 = arith.constant 0 : index
    %c0_25 = arith.constant 0 : index
    %42 = vector.load %arg5[%c0_24, %c0_25] : memref<32x96xf32, #tpu.memory_space<vmem>>, vector<32x96xf32>
    %43 = vector.extract_strided_slice %41 {offsets = [0, 0], sizes = [32, 127], strides = [1, 1]} : vector<32x128xf32> to vector<32x127xf32>
    %c0_26 = arith.constant 0 : index
    %c1_27 = arith.constant 1 : index
    %44 = vector.load %arg9[%c0_26, %c1_27] : memref<96x128xf32, #tpu.memory_space<vmem>>, vector<32x127xf32>
    tpu.vector_store %arg9[%c0_26, %c1_27], %43 {strides = array<i32>} : memref<96x128xf32, #tpu.memory_space<vmem>>, vector<32x127xf32>,
    %cst_28 = arith.constant 0.000000e+00 : f32
    %45 = vector.broadcast %cst_28 : f32 to vector<32x1xf32>
    %c0_29 = arith.constant 0 : index
    %c0_30 = arith.constant 0 : index
    %46 = vector.load %arg9[%c0_29, %c0_30] : memref<96x128xf32, #tpu.memory_space<vmem>>, vector<32x1xf32>
    tpu.vector_store %arg9[%c0_29, %c0_30], %45 {strides = array<i32>} : memref<96x128xf32, #tpu.memory_space<vmem>>, vector<32x1xf32>,
    %c32_31 = arith.constant 32 : index
    %c0_32 = arith.constant 0 : index
    %47 = vector.load %arg9[%c32_31, %c0_32] : memref<96x128xf32, #tpu.memory_space<vmem>>, vector<32x128xf32>
    tpu.vector_store %arg9[%c32_31, %c0_32], %41 {strides = array<i32>} : memref<96x128xf32, #tpu.memory_space<vmem>>, vector<32x128xf32>,
    %48 = vector.extract_strided_slice %41 {offsets = [0, 1], sizes = [32, 127], strides = [1, 1]} : vector<32x128xf32> to vector<32x127xf32>
    %c64 = arith.constant 64 : index
    %c0_33 = arith.constant 0 : index
    %49 = vector.load %arg9[%c64, %c0_33] : memref<96x128xf32, #tpu.memory_space<vmem>>, vector<32x127xf32>
    tpu.vector_store %arg9[%c64, %c0_33], %48 {strides = array<i32>} : memref<96x128xf32, #tpu.memory_space<vmem>>, vector<32x127xf32>,
    %cst_34 = arith.constant 0.000000e+00 : f32
    %50 = vector.broadcast %cst_34 : f32 to vector<32x1xf32>
    %c64_35 = arith.constant 64 : index
    %c127_36 = arith.constant 127 : index
    %51 = vector.load %arg9[%c64_35, %c127_36] : memref<96x128xf32, #tpu.memory_space<vmem>>, vector<32x1xf32>
    tpu.vector_store %arg9[%c64_35, %c127_36], %50 {strides = array<i32>} : memref<96x128xf32, #tpu.memory_space<vmem>>, vector<32x1xf32>,
    %c0_37 = arith.constant 0 : index
    %c0_38 = arith.constant 0 : index
    %52 = vector.load %arg9[%c0_37, %c0_38] : memref<96x128xf32, #tpu.memory_space<vmem>>, vector<96x128xf32>
    %cst_39 = arith.constant dense<0.000000e+00> : vector<32x128xf32>
    %53 = tpu.matmul %42, %52, %cst_39 {dimension_numbers = #tpu.dot_dimension_numbers<[1], [0], [0], [1], [0, 0, 1, 1], [], []>} : vector<32x96xf32>, vector<96x128xf32>, vector<32x128xf32> -> vector<32x128xf32>
    %c0_40 = arith.constant 0 : index
    %c0_41 = arith.constant 0 : index
    %54 = vector.load %arg6[%c0_40, %c0_41] : memref<32x1xf32, #tpu.memory_space<vmem>>, vector<32x1xf32>
    %c0_42 = arith.constant 0 : index
    %c0_43 = arith.constant 0 : index
    %55 = vector.load %arg7[%c0_42, %c0_43] : memref<32x1xf32, #tpu.memory_space<vmem>>, vector<32x1xf32>
    %56 = vector.broadcast %0 : vector<1x128xf32> to vector<32x128xf32>
    %57 = arith.mulf %53, %56 : vector<32x128xf32>
    %cst_44 = arith.constant dense<0.000000e+00> : vector<32xf32>
    %58 = vector.multi_reduction <add>, %57, %cst_44 [1] : vector<32x128xf32> to vector<32xf32>
    %59 = vector.shape_cast %58 : vector<32xf32> to vector<32x1xf32>
    %cst_45 = arith.constant 5.000000e-02 : f32
    %60 = vector.broadcast %cst_45 : f32 to vector<32x1xf32>
    %61 = arith.mulf %59, %60 : vector<32x1xf32>
    %62 = vector.broadcast %61 : vector<32x1xf32> to vector<32x128xf32>
    %63 = arith.subf %53, %62 : vector<32x128xf32>
    %64 = vector.broadcast %0 : vector<1x128xf32> to vector<32x128xf32>
    %65 = arith.mulf %63, %64 : vector<32x128xf32>
    %66 = arith.mulf %65, %65 : vector<32x128xf32>
    %cst_46 = arith.constant dense<0.000000e+00> : vector<32xf32>
    %67 = vector.multi_reduction <add>, %66, %cst_46 [1] : vector<32x128xf32> to vector<32xf32>
    %68 = vector.shape_cast %67 : vector<32xf32> to vector<32x1xf32>
    %cst_47 = arith.constant 5.000000e-02 : f32
    %69 = vector.broadcast %cst_47 : f32 to vector<32x1xf32>
    %70 = arith.mulf %68, %69 : vector<32x1xf32>
    %cst_48 = arith.constant 9.99999974E-6 : f32
    %71 = vector.broadcast %cst_48 : f32 to vector<32x1xf32>
    %72 = arith.addf %70, %71 : vector<32x1xf32>
    %73 = math.rsqrt %72 : vector<32x1xf32>
    %74 = arith.mulf %73, %54 : vector<32x1xf32>
    %75 = vector.broadcast %74 : vector<32x1xf32> to vector<32x128xf32>
    %76 = arith.mulf %65, %75 : vector<32x128xf32>
    %77 = vector.broadcast %55 : vector<32x1xf32> to vector<32x128xf32>
    %78 = arith.addf %76, %77 : vector<32x128xf32>
    %79 = math.tanh %78 : vector<32x128xf32>
    %80 = vector.broadcast %0 : vector<1x128xf32> to vector<32x128xf32>
    %81 = arith.mulf %79, %80 : vector<32x128xf32>
    %c0_49 = arith.constant 0 : index
    %c0_50 = arith.constant 0 : index
    %82 = vector.load %arg8[%c0_49, %c0_50] : memref<32x128xf32, #tpu.memory_space<vmem>>, vector<32x128xf32>
    tpu.vector_store %arg8[%c0_49, %c0_50], %81 {strides = array<i32>} : memref<32x128xf32, #tpu.memory_space<vmem>>, vector<32x128xf32>,
    return
  }
}

module attributes {stable_mosaic.version = 11 : i64} {
  func.func @_block_kernel(%arg0: memref<32x128xf32, #tpu.memory_space<vmem>>, %arg1: memref<1x128xf32, #tpu.memory_space<vmem>>, %arg2: memref<64x96xf32, #tpu.memory_space<vmem>>, %arg3: memref<64x1xf32, #tpu.memory_space<vmem>>, %arg4: memref<64x1xf32, #tpu.memory_space<vmem>>, %arg5: memref<64x192xf32, #tpu.memory_space<vmem>>, %arg6: memref<64x1xf32, #tpu.memory_space<vmem>>, %arg7: memref<64x1xf32, #tpu.memory_space<vmem>>, %arg8: memref<64x128xf32, #tpu.memory_space<vmem>>, %arg9: memref<192x128xf32, #tpu.memory_space<vmem>>) attributes {dimension_semantics = [], scalar_prefetch = 0 : i64, scratch_operands = 1 : i64, tpu.core_type = #tpu.core_type<tc>} {
    %c0 = arith.constant 0 : index
    %c0_0 = arith.constant 0 : index
    %0 = vector.load %arg1[%c0, %c0_0] : memref<1x128xf32, #tpu.memory_space<vmem>>, vector<1x128xf32>
    %c0_1 = arith.constant 0 : index
    %c0_2 = arith.constant 0 : index
    %1 = vector.load %arg2[%c0_1, %c0_2] : memref<64x96xf32, #tpu.memory_space<vmem>>, vector<64x96xf32>
    %c0_3 = arith.constant 0 : index
    %c0_4 = arith.constant 0 : index
    %2 = vector.load %arg0[%c0_3, %c0_4] : memref<32x128xf32, #tpu.memory_space<vmem>>, vector<32x128xf32>
    %3 = vector.extract_strided_slice %2 {offsets = [0, 0], sizes = [32, 127], strides = [1, 1]} : vector<32x128xf32> to vector<32x127xf32>
    %c0_5 = arith.constant 0 : index
    %c1 = arith.constant 1 : index
    %4 = vector.load %arg9[%c0_5, %c1] : memref<192x128xf32, #tpu.memory_space<vmem>>, vector<32x127xf32>
    tpu.vector_store %arg9[%c0_5, %c1], %3 {strides = array<i32>} : memref<192x128xf32, #tpu.memory_space<vmem>>, vector<32x127xf32>,
    %cst = arith.constant 0.000000e+00 : f32
    %5 = vector.broadcast %cst : f32 to vector<32x1xf32>
    %c0_6 = arith.constant 0 : index
    %c0_7 = arith.constant 0 : index
    %6 = vector.load %arg9[%c0_6, %c0_7] : memref<192x128xf32, #tpu.memory_space<vmem>>, vector<32x1xf32>
    tpu.vector_store %arg9[%c0_6, %c0_7], %5 {strides = array<i32>} : memref<192x128xf32, #tpu.memory_space<vmem>>, vector<32x1xf32>,
    %c32 = arith.constant 32 : index
    %c0_8 = arith.constant 0 : index
    %7 = vector.load %arg9[%c32, %c0_8] : memref<192x128xf32, #tpu.memory_space<vmem>>, vector<32x128xf32>
    tpu.vector_store %arg9[%c32, %c0_8], %2 {strides = array<i32>} : memref<192x128xf32, #tpu.memory_space<vmem>>, vector<32x128xf32>,
    %8 = vector.extract_strided_slice %2 {offsets = [0, 1], sizes = [32, 127], strides = [1, 1]} : vector<32x128xf32> to vector<32x127xf32>
    %c64 = arith.constant 64 : index
    %c0_9 = arith.constant 0 : index
    %9 = vector.load %arg9[%c64, %c0_9] : memref<192x128xf32, #tpu.memory_space<vmem>>, vector<32x127xf32>
    tpu.vector_store %arg9[%c64, %c0_9], %8 {strides = array<i32>} : memref<192x128xf32, #tpu.memory_space<vmem>>, vector<32x127xf32>,
    %cst_10 = arith.constant 0.000000e+00 : f32
    %10 = vector.broadcast %cst_10 : f32 to vector<32x1xf32>
    %c64_11 = arith.constant 64 : index
    %c127 = arith.constant 127 : index
    %11 = vector.load %arg9[%c64_11, %c127] : memref<192x128xf32, #tpu.memory_space<vmem>>, vector<32x1xf32>
    tpu.vector_store %arg9[%c64_11, %c127], %10 {strides = array<i32>} : memref<192x128xf32, #tpu.memory_space<vmem>>, vector<32x1xf32>,
    %c0_12 = arith.constant 0 : index
    %c0_13 = arith.constant 0 : index
    %12 = vector.load %arg9[%c0_12, %c0_13] : memref<192x128xf32, #tpu.memory_space<vmem>>, vector<96x128xf32>
    %cst_14 = arith.constant dense<0.000000e+00> : vector<64x128xf32>
    %13 = tpu.matmul %1, %12, %cst_14 {dimension_numbers = #tpu.dot_dimension_numbers<[1], [0], [0], [1], [0, 0, 1, 1], [], []>} : vector<64x96xf32>, vector<96x128xf32>, vector<64x128xf32> -> vector<64x128xf32>
    %c0_15 = arith.constant 0 : index
    %c0_16 = arith.constant 0 : index
    %14 = vector.load %arg3[%c0_15, %c0_16] : memref<64x1xf32, #tpu.memory_space<vmem>>, vector<64x1xf32>
    %c0_17 = arith.constant 0 : index
    %c0_18 = arith.constant 0 : index
    %15 = vector.load %arg4[%c0_17, %c0_18] : memref<64x1xf32, #tpu.memory_space<vmem>>, vector<64x1xf32>
    %16 = vector.broadcast %0 : vector<1x128xf32> to vector<64x128xf32>
    %17 = arith.mulf %13, %16 : vector<64x128xf32>
    %cst_19 = arith.constant dense<0.000000e+00> : vector<64xf32>
    %18 = vector.multi_reduction <add>, %17, %cst_19 [1] : vector<64x128xf32> to vector<64xf32>
    %19 = vector.shape_cast %18 : vector<64xf32> to vector<64x1xf32>
    %cst_20 = arith.constant 1.000000e-01 : f32
    %20 = vector.broadcast %cst_20 : f32 to vector<64x1xf32>
    %21 = arith.mulf %19, %20 : vector<64x1xf32>
    %22 = vector.broadcast %21 : vector<64x1xf32> to vector<64x128xf32>
    %23 = arith.subf %13, %22 : vector<64x128xf32>
    %24 = vector.broadcast %0 : vector<1x128xf32> to vector<64x128xf32>
    %25 = arith.mulf %23, %24 : vector<64x128xf32>
    %26 = arith.mulf %25, %25 : vector<64x128xf32>
    %cst_21 = arith.constant dense<0.000000e+00> : vector<64xf32>
    %27 = vector.multi_reduction <add>, %26, %cst_21 [1] : vector<64x128xf32> to vector<64xf32>
    %28 = vector.shape_cast %27 : vector<64xf32> to vector<64x1xf32>
    %cst_22 = arith.constant 1.000000e-01 : f32
    %29 = vector.broadcast %cst_22 : f32 to vector<64x1xf32>
    %30 = arith.mulf %28, %29 : vector<64x1xf32>
    %cst_23 = arith.constant 9.99999974E-6 : f32
    %31 = vector.broadcast %cst_23 : f32 to vector<64x1xf32>
    %32 = arith.addf %30, %31 : vector<64x1xf32>
    %33 = math.rsqrt %32 : vector<64x1xf32>
    %34 = arith.mulf %33, %14 : vector<64x1xf32>
    %35 = vector.broadcast %34 : vector<64x1xf32> to vector<64x128xf32>
    %36 = arith.mulf %25, %35 : vector<64x128xf32>
    %37 = vector.broadcast %15 : vector<64x1xf32> to vector<64x128xf32>
    %38 = arith.addf %36, %37 : vector<64x128xf32>
    %39 = math.tanh %38 : vector<64x128xf32>
    %40 = vector.broadcast %0 : vector<1x128xf32> to vector<64x128xf32>
    %41 = arith.mulf %39, %40 : vector<64x128xf32>
    %c0_24 = arith.constant 0 : index
    %c0_25 = arith.constant 0 : index
    %42 = vector.load %arg5[%c0_24, %c0_25] : memref<64x192xf32, #tpu.memory_space<vmem>>, vector<64x192xf32>
    %43 = vector.extract_strided_slice %41 {offsets = [0, 0], sizes = [64, 127], strides = [1, 1]} : vector<64x128xf32> to vector<64x127xf32>
    %c0_26 = arith.constant 0 : index
    %c1_27 = arith.constant 1 : index
    %44 = vector.load %arg9[%c0_26, %c1_27] : memref<192x128xf32, #tpu.memory_space<vmem>>, vector<64x127xf32>
    tpu.vector_store %arg9[%c0_26, %c1_27], %43 {strides = array<i32>} : memref<192x128xf32, #tpu.memory_space<vmem>>, vector<64x127xf32>,
    %cst_28 = arith.constant 0.000000e+00 : f32
    %45 = vector.broadcast %cst_28 : f32 to vector<64x1xf32>
    %c0_29 = arith.constant 0 : index
    %c0_30 = arith.constant 0 : index
    %46 = vector.load %arg9[%c0_29, %c0_30] : memref<192x128xf32, #tpu.memory_space<vmem>>, vector<64x1xf32>
    tpu.vector_store %arg9[%c0_29, %c0_30], %45 {strides = array<i32>} : memref<192x128xf32, #tpu.memory_space<vmem>>, vector<64x1xf32>,
    %c64_31 = arith.constant 64 : index
    %c0_32 = arith.constant 0 : index
    %47 = vector.load %arg9[%c64_31, %c0_32] : memref<192x128xf32, #tpu.memory_space<vmem>>, vector<64x128xf32>
    tpu.vector_store %arg9[%c64_31, %c0_32], %41 {strides = array<i32>} : memref<192x128xf32, #tpu.memory_space<vmem>>, vector<64x128xf32>,
    %48 = vector.extract_strided_slice %41 {offsets = [0, 1], sizes = [64, 127], strides = [1, 1]} : vector<64x128xf32> to vector<64x127xf32>
    %c128 = arith.constant 128 : index
    %c0_33 = arith.constant 0 : index
    %49 = vector.load %arg9[%c128, %c0_33] : memref<192x128xf32, #tpu.memory_space<vmem>>, vector<64x127xf32>
    tpu.vector_store %arg9[%c128, %c0_33], %48 {strides = array<i32>} : memref<192x128xf32, #tpu.memory_space<vmem>>, vector<64x127xf32>,
    %cst_34 = arith.constant 0.000000e+00 : f32
    %50 = vector.broadcast %cst_34 : f32 to vector<64x1xf32>
    %c128_35 = arith.constant 128 : index
    %c127_36 = arith.constant 127 : index
    %51 = vector.load %arg9[%c128_35, %c127_36] : memref<192x128xf32, #tpu.memory_space<vmem>>, vector<64x1xf32>
    tpu.vector_store %arg9[%c128_35, %c127_36], %50 {strides = array<i32>} : memref<192x128xf32, #tpu.memory_space<vmem>>, vector<64x1xf32>,
    %c0_37 = arith.constant 0 : index
    %c0_38 = arith.constant 0 : index
    %52 = vector.load %arg9[%c0_37, %c0_38] : memref<192x128xf32, #tpu.memory_space<vmem>>, vector<192x128xf32>
    %cst_39 = arith.constant dense<0.000000e+00> : vector<64x128xf32>
    %53 = tpu.matmul %42, %52, %cst_39 {dimension_numbers = #tpu.dot_dimension_numbers<[1], [0], [0], [1], [0, 0, 1, 1], [], []>} : vector<64x192xf32>, vector<192x128xf32>, vector<64x128xf32> -> vector<64x128xf32>
    %c0_40 = arith.constant 0 : index
    %c0_41 = arith.constant 0 : index
    %54 = vector.load %arg6[%c0_40, %c0_41] : memref<64x1xf32, #tpu.memory_space<vmem>>, vector<64x1xf32>
    %c0_42 = arith.constant 0 : index
    %c0_43 = arith.constant 0 : index
    %55 = vector.load %arg7[%c0_42, %c0_43] : memref<64x1xf32, #tpu.memory_space<vmem>>, vector<64x1xf32>
    %56 = vector.broadcast %0 : vector<1x128xf32> to vector<64x128xf32>
    %57 = arith.mulf %53, %56 : vector<64x128xf32>
    %cst_44 = arith.constant dense<0.000000e+00> : vector<64xf32>
    %58 = vector.multi_reduction <add>, %57, %cst_44 [1] : vector<64x128xf32> to vector<64xf32>
    %59 = vector.shape_cast %58 : vector<64xf32> to vector<64x1xf32>
    %cst_45 = arith.constant 1.000000e-01 : f32
    %60 = vector.broadcast %cst_45 : f32 to vector<64x1xf32>
    %61 = arith.mulf %59, %60 : vector<64x1xf32>
    %62 = vector.broadcast %61 : vector<64x1xf32> to vector<64x128xf32>
    %63 = arith.subf %53, %62 : vector<64x128xf32>
    %64 = vector.broadcast %0 : vector<1x128xf32> to vector<64x128xf32>
    %65 = arith.mulf %63, %64 : vector<64x128xf32>
    %66 = arith.mulf %65, %65 : vector<64x128xf32>
    %cst_46 = arith.constant dense<0.000000e+00> : vector<64xf32>
    %67 = vector.multi_reduction <add>, %66, %cst_46 [1] : vector<64x128xf32> to vector<64xf32>
    %68 = vector.shape_cast %67 : vector<64xf32> to vector<64x1xf32>
    %cst_47 = arith.constant 1.000000e-01 : f32
    %69 = vector.broadcast %cst_47 : f32 to vector<64x1xf32>
    %70 = arith.mulf %68, %69 : vector<64x1xf32>
    %cst_48 = arith.constant 9.99999974E-6 : f32
    %71 = vector.broadcast %cst_48 : f32 to vector<64x1xf32>
    %72 = arith.addf %70, %71 : vector<64x1xf32>
    %73 = math.rsqrt %72 : vector<64x1xf32>
    %74 = arith.mulf %73, %54 : vector<64x1xf32>
    %75 = vector.broadcast %74 : vector<64x1xf32> to vector<64x128xf32>
    %76 = arith.mulf %65, %75 : vector<64x128xf32>
    %77 = vector.broadcast %55 : vector<64x1xf32> to vector<64x128xf32>
    %78 = arith.addf %76, %77 : vector<64x128xf32>
    %79 = math.tanh %78 : vector<64x128xf32>
    %80 = vector.broadcast %0 : vector<1x128xf32> to vector<64x128xf32>
    %81 = arith.mulf %79, %80 : vector<64x128xf32>
    %c0_49 = arith.constant 0 : index
    %c0_50 = arith.constant 0 : index
    %82 = vector.load %arg8[%c0_49, %c0_50] : memref<64x128xf32, #tpu.memory_space<vmem>>, vector<64x128xf32>
    tpu.vector_store %arg8[%c0_49, %c0_50], %81 {strides = array<i32>} : memref<64x128xf32, #tpu.memory_space<vmem>>, vector<64x128xf32>,
    return
  }
}

module attributes {stable_mosaic.version = 11 : i64} {
  func.func @_block_kernel(%arg0: memref<64x128xf32, #tpu.memory_space<vmem>>, %arg1: memref<1x128xf32, #tpu.memory_space<vmem>>, %arg2: memref<128x192xf32, #tpu.memory_space<vmem>>, %arg3: memref<128x1xf32, #tpu.memory_space<vmem>>, %arg4: memref<128x1xf32, #tpu.memory_space<vmem>>, %arg5: memref<128x384xf32, #tpu.memory_space<vmem>>, %arg6: memref<128x1xf32, #tpu.memory_space<vmem>>, %arg7: memref<128x1xf32, #tpu.memory_space<vmem>>, %arg8: memref<128x128xf32, #tpu.memory_space<vmem>>, %arg9: memref<384x128xf32, #tpu.memory_space<vmem>>) attributes {dimension_semantics = [], scalar_prefetch = 0 : i64, scratch_operands = 1 : i64, tpu.core_type = #tpu.core_type<tc>} {
    %c0 = arith.constant 0 : index
    %c0_0 = arith.constant 0 : index
    %0 = vector.load %arg1[%c0, %c0_0] : memref<1x128xf32, #tpu.memory_space<vmem>>, vector<1x128xf32>
    %c0_1 = arith.constant 0 : index
    %c0_2 = arith.constant 0 : index
    %1 = vector.load %arg2[%c0_1, %c0_2] : memref<128x192xf32, #tpu.memory_space<vmem>>, vector<128x192xf32>
    %c0_3 = arith.constant 0 : index
    %c0_4 = arith.constant 0 : index
    %2 = vector.load %arg0[%c0_3, %c0_4] : memref<64x128xf32, #tpu.memory_space<vmem>>, vector<64x128xf32>
    %3 = vector.extract_strided_slice %2 {offsets = [0, 0], sizes = [64, 127], strides = [1, 1]} : vector<64x128xf32> to vector<64x127xf32>
    %c0_5 = arith.constant 0 : index
    %c1 = arith.constant 1 : index
    %4 = vector.load %arg9[%c0_5, %c1] : memref<384x128xf32, #tpu.memory_space<vmem>>, vector<64x127xf32>
    tpu.vector_store %arg9[%c0_5, %c1], %3 {strides = array<i32>} : memref<384x128xf32, #tpu.memory_space<vmem>>, vector<64x127xf32>,
    %cst = arith.constant 0.000000e+00 : f32
    %5 = vector.broadcast %cst : f32 to vector<64x1xf32>
    %c0_6 = arith.constant 0 : index
    %c0_7 = arith.constant 0 : index
    %6 = vector.load %arg9[%c0_6, %c0_7] : memref<384x128xf32, #tpu.memory_space<vmem>>, vector<64x1xf32>
    tpu.vector_store %arg9[%c0_6, %c0_7], %5 {strides = array<i32>} : memref<384x128xf32, #tpu.memory_space<vmem>>, vector<64x1xf32>,
    %c64 = arith.constant 64 : index
    %c0_8 = arith.constant 0 : index
    %7 = vector.load %arg9[%c64, %c0_8] : memref<384x128xf32, #tpu.memory_space<vmem>>, vector<64x128xf32>
    tpu.vector_store %arg9[%c64, %c0_8], %2 {strides = array<i32>} : memref<384x128xf32, #tpu.memory_space<vmem>>, vector<64x128xf32>,
    %8 = vector.extract_strided_slice %2 {offsets = [0, 1], sizes = [64, 127], strides = [1, 1]} : vector<64x128xf32> to vector<64x127xf32>
    %c128 = arith.constant 128 : index
    %c0_9 = arith.constant 0 : index
    %9 = vector.load %arg9[%c128, %c0_9] : memref<384x128xf32, #tpu.memory_space<vmem>>, vector<64x127xf32>
    tpu.vector_store %arg9[%c128, %c0_9], %8 {strides = array<i32>} : memref<384x128xf32, #tpu.memory_space<vmem>>, vector<64x127xf32>,
    %cst_10 = arith.constant 0.000000e+00 : f32
    %10 = vector.broadcast %cst_10 : f32 to vector<64x1xf32>
    %c128_11 = arith.constant 128 : index
    %c127 = arith.constant 127 : index
    %11 = vector.load %arg9[%c128_11, %c127] : memref<384x128xf32, #tpu.memory_space<vmem>>, vector<64x1xf32>
    tpu.vector_store %arg9[%c128_11, %c127], %10 {strides = array<i32>} : memref<384x128xf32, #tpu.memory_space<vmem>>, vector<64x1xf32>,
    %c0_12 = arith.constant 0 : index
    %c0_13 = arith.constant 0 : index
    %12 = vector.load %arg9[%c0_12, %c0_13] : memref<384x128xf32, #tpu.memory_space<vmem>>, vector<192x128xf32>
    %cst_14 = arith.constant dense<0.000000e+00> : vector<128x128xf32>
    %13 = tpu.matmul %1, %12, %cst_14 {dimension_numbers = #tpu.dot_dimension_numbers<[1], [0], [0], [1], [0, 0, 1, 1], [], []>} : vector<128x192xf32>, vector<192x128xf32>, vector<128x128xf32> -> vector<128x128xf32>
    %c0_15 = arith.constant 0 : index
    %c0_16 = arith.constant 0 : index
    %14 = vector.load %arg3[%c0_15, %c0_16] : memref<128x1xf32, #tpu.memory_space<vmem>>, vector<128x1xf32>
    %c0_17 = arith.constant 0 : index
    %c0_18 = arith.constant 0 : index
    %15 = vector.load %arg4[%c0_17, %c0_18] : memref<128x1xf32, #tpu.memory_space<vmem>>, vector<128x1xf32>
    %16 = vector.broadcast %0 : vector<1x128xf32> to vector<128x128xf32>
    %17 = arith.mulf %13, %16 : vector<128x128xf32>
    %cst_19 = arith.constant dense<0.000000e+00> : vector<128xf32>
    %18 = vector.multi_reduction <add>, %17, %cst_19 [1] : vector<128x128xf32> to vector<128xf32>
    %19 = vector.shape_cast %18 : vector<128xf32> to vector<128x1xf32>
    %cst_20 = arith.constant 2.500000e-01 : f32
    %20 = vector.broadcast %cst_20 : f32 to vector<128x1xf32>
    %21 = arith.mulf %19, %20 : vector<128x1xf32>
    %22 = vector.broadcast %21 : vector<128x1xf32> to vector<128x128xf32>
    %23 = arith.subf %13, %22 : vector<128x128xf32>
    %24 = vector.broadcast %0 : vector<1x128xf32> to vector<128x128xf32>
    %25 = arith.mulf %23, %24 : vector<128x128xf32>
    %26 = arith.mulf %25, %25 : vector<128x128xf32>
    %cst_21 = arith.constant dense<0.000000e+00> : vector<128xf32>
    %27 = vector.multi_reduction <add>, %26, %cst_21 [1] : vector<128x128xf32> to vector<128xf32>
    %28 = vector.shape_cast %27 : vector<128xf32> to vector<128x1xf32>
    %cst_22 = arith.constant 2.500000e-01 : f32
    %29 = vector.broadcast %cst_22 : f32 to vector<128x1xf32>
    %30 = arith.mulf %28, %29 : vector<128x1xf32>
    %cst_23 = arith.constant 9.99999974E-6 : f32
    %31 = vector.broadcast %cst_23 : f32 to vector<128x1xf32>
    %32 = arith.addf %30, %31 : vector<128x1xf32>
    %33 = math.rsqrt %32 : vector<128x1xf32>
    %34 = arith.mulf %33, %14 : vector<128x1xf32>
    %35 = vector.broadcast %34 : vector<128x1xf32> to vector<128x128xf32>
    %36 = arith.mulf %25, %35 : vector<128x128xf32>
    %37 = vector.broadcast %15 : vector<128x1xf32> to vector<128x128xf32>
    %38 = arith.addf %36, %37 : vector<128x128xf32>
    %39 = math.tanh %38 : vector<128x128xf32>
    %40 = vector.broadcast %0 : vector<1x128xf32> to vector<128x128xf32>
    %41 = arith.mulf %39, %40 : vector<128x128xf32>
    %c0_24 = arith.constant 0 : index
    %c0_25 = arith.constant 0 : index
    %42 = vector.load %arg5[%c0_24, %c0_25] : memref<128x384xf32, #tpu.memory_space<vmem>>, vector<128x384xf32>
    %43 = vector.extract_strided_slice %41 {offsets = [0, 0], sizes = [128, 127], strides = [1, 1]} : vector<128x128xf32> to vector<128x127xf32>
    %c0_26 = arith.constant 0 : index
    %c1_27 = arith.constant 1 : index
    %44 = vector.load %arg9[%c0_26, %c1_27] : memref<384x128xf32, #tpu.memory_space<vmem>>, vector<128x127xf32>
    tpu.vector_store %arg9[%c0_26, %c1_27], %43 {strides = array<i32>} : memref<384x128xf32, #tpu.memory_space<vmem>>, vector<128x127xf32>,
    %cst_28 = arith.constant 0.000000e+00 : f32
    %45 = vector.broadcast %cst_28 : f32 to vector<128x1xf32>
    %c0_29 = arith.constant 0 : index
    %c0_30 = arith.constant 0 : index
    %46 = vector.load %arg9[%c0_29, %c0_30] : memref<384x128xf32, #tpu.memory_space<vmem>>, vector<128x1xf32>
    tpu.vector_store %arg9[%c0_29, %c0_30], %45 {strides = array<i32>} : memref<384x128xf32, #tpu.memory_space<vmem>>, vector<128x1xf32>,
    %c128_31 = arith.constant 128 : index
    %c0_32 = arith.constant 0 : index
    %47 = vector.load %arg9[%c128_31, %c0_32] : memref<384x128xf32, #tpu.memory_space<vmem>>, vector<128x128xf32>
    tpu.vector_store %arg9[%c128_31, %c0_32], %41 {strides = array<i32>} : memref<384x128xf32, #tpu.memory_space<vmem>>, vector<128x128xf32>,
    %48 = vector.extract_strided_slice %41 {offsets = [0, 1], sizes = [128, 127], strides = [1, 1]} : vector<128x128xf32> to vector<128x127xf32>
    %c256 = arith.constant 256 : index
    %c0_33 = arith.constant 0 : index
    %49 = vector.load %arg9[%c256, %c0_33] : memref<384x128xf32, #tpu.memory_space<vmem>>, vector<128x127xf32>
    tpu.vector_store %arg9[%c256, %c0_33], %48 {strides = array<i32>} : memref<384x128xf32, #tpu.memory_space<vmem>>, vector<128x127xf32>,
    %cst_34 = arith.constant 0.000000e+00 : f32
    %50 = vector.broadcast %cst_34 : f32 to vector<128x1xf32>
    %c256_35 = arith.constant 256 : index
    %c127_36 = arith.constant 127 : index
    %51 = vector.load %arg9[%c256_35, %c127_36] : memref<384x128xf32, #tpu.memory_space<vmem>>, vector<128x1xf32>
    tpu.vector_store %arg9[%c256_35, %c127_36], %50 {strides = array<i32>} : memref<384x128xf32, #tpu.memory_space<vmem>>, vector<128x1xf32>,
    %c0_37 = arith.constant 0 : index
    %c0_38 = arith.constant 0 : index
    %52 = vector.load %arg9[%c0_37, %c0_38] : memref<384x128xf32, #tpu.memory_space<vmem>>, vector<384x128xf32>
    %cst_39 = arith.constant dense<0.000000e+00> : vector<128x128xf32>
    %53 = tpu.matmul %42, %52, %cst_39 {dimension_numbers = #tpu.dot_dimension_numbers<[1], [0], [0], [1], [0, 0, 1, 1], [], []>} : vector<128x384xf32>, vector<384x128xf32>, vector<128x128xf32> -> vector<128x128xf32>
    %c0_40 = arith.constant 0 : index
    %c0_41 = arith.constant 0 : index
    %54 = vector.load %arg6[%c0_40, %c0_41] : memref<128x1xf32, #tpu.memory_space<vmem>>, vector<128x1xf32>
    %c0_42 = arith.constant 0 : index
    %c0_43 = arith.constant 0 : index
    %55 = vector.load %arg7[%c0_42, %c0_43] : memref<128x1xf32, #tpu.memory_space<vmem>>, vector<128x1xf32>
    %56 = vector.broadcast %0 : vector<1x128xf32> to vector<128x128xf32>
    %57 = arith.mulf %53, %56 : vector<128x128xf32>
    %cst_44 = arith.constant dense<0.000000e+00> : vector<128xf32>
    %58 = vector.multi_reduction <add>, %57, %cst_44 [1] : vector<128x128xf32> to vector<128xf32>
    %59 = vector.shape_cast %58 : vector<128xf32> to vector<128x1xf32>
    %cst_45 = arith.constant 2.500000e-01 : f32
    %60 = vector.broadcast %cst_45 : f32 to vector<128x1xf32>
    %61 = arith.mulf %59, %60 : vector<128x1xf32>
    %62 = vector.broadcast %61 : vector<128x1xf32> to vector<128x128xf32>
    %63 = arith.subf %53, %62 : vector<128x128xf32>
    %64 = vector.broadcast %0 : vector<1x128xf32> to vector<128x128xf32>
    %65 = arith.mulf %63, %64 : vector<128x128xf32>
    %66 = arith.mulf %65, %65 : vector<128x128xf32>
    %cst_46 = arith.constant dense<0.000000e+00> : vector<128xf32>
    %67 = vector.multi_reduction <add>, %66, %cst_46 [1] : vector<128x128xf32> to vector<128xf32>
    %68 = vector.shape_cast %67 : vector<128xf32> to vector<128x1xf32>
    %cst_47 = arith.constant 2.500000e-01 : f32
    %69 = vector.broadcast %cst_47 : f32 to vector<128x1xf32>
    %70 = arith.mulf %68, %69 : vector<128x1xf32>
    %cst_48 = arith.constant 9.99999974E-6 : f32
    %71 = vector.broadcast %cst_48 : f32 to vector<128x1xf32>
    %72 = arith.addf %70, %71 : vector<128x1xf32>
    %73 = math.rsqrt %72 : vector<128x1xf32>
    %74 = arith.mulf %73, %54 : vector<128x1xf32>
    %75 = vector.broadcast %74 : vector<128x1xf32> to vector<128x128xf32>
    %76 = arith.mulf %65, %75 : vector<128x128xf32>
    %77 = vector.broadcast %55 : vector<128x1xf32> to vector<128x128xf32>
    %78 = arith.addf %76, %77 : vector<128x128xf32>
    %79 = math.tanh %78 : vector<128x128xf32>
    %80 = vector.broadcast %0 : vector<1x128xf32> to vector<128x128xf32>
    %81 = arith.mulf %79, %80 : vector<128x128xf32>
    %c0_49 = arith.constant 0 : index
    %c0_50 = arith.constant 0 : index
    %82 = vector.load %arg8[%c0_49, %c0_50] : memref<128x128xf32, #tpu.memory_space<vmem>>, vector<128x128xf32>
    tpu.vector_store %arg8[%c0_49, %c0_50], %81 {strides = array<i32>} : memref<128x128xf32, #tpu.memory_space<vmem>>, vector<128x128xf32>,
    return
  }
}

module attributes {stable_mosaic.version = 11 : i64} {
  func.func @_dec_block_kernel(%arg0: memref<128x128xf32, #tpu.memory_space<vmem>>, %arg1: memref<64x128xf32, #tpu.memory_space<vmem>>, %arg2: memref<1x128xf32, #tpu.memory_space<vmem>>, %arg3: memref<64x384xf32, #tpu.memory_space<vmem>>, %arg4: memref<64x1xf32, #tpu.memory_space<vmem>>, %arg5: memref<64x384xf32, #tpu.memory_space<vmem>>, %arg6: memref<64x1xf32, #tpu.memory_space<vmem>>, %arg7: memref<64x1xf32, #tpu.memory_space<vmem>>, %arg8: memref<64x192xf32, #tpu.memory_space<vmem>>, %arg9: memref<64x1xf32, #tpu.memory_space<vmem>>, %arg10: memref<64x1xf32, #tpu.memory_space<vmem>>, %arg11: memref<64x128xf32, #tpu.memory_space<vmem>>, %arg12: memref<384x128xf32, #tpu.memory_space<vmem>>) attributes {dimension_semantics = [], scalar_prefetch = 0 : i64, scratch_operands = 1 : i64, tpu.core_type = #tpu.core_type<tc>} {
    %c0 = arith.constant 0 : index
    %c0_0 = arith.constant 0 : index
    %0 = vector.load %arg2[%c0, %c0_0] : memref<1x128xf32, #tpu.memory_space<vmem>>, vector<1x128xf32>
    %c0_1 = arith.constant 0 : index
    %c0_2 = arith.constant 0 : index
    %1 = vector.load %arg3[%c0_1, %c0_2] : memref<64x384xf32, #tpu.memory_space<vmem>>, vector<64x384xf32>
    %c0_3 = arith.constant 0 : index
    %c0_4 = arith.constant 0 : index
    %2 = vector.load %arg0[%c0_3, %c0_4] : memref<128x128xf32, #tpu.memory_space<vmem>>, vector<128x128xf32>
    %3 = vector.extract_strided_slice %2 {offsets = [0, 0], sizes = [128, 127], strides = [1, 1]} : vector<128x128xf32> to vector<128x127xf32>
    %c0_5 = arith.constant 0 : index
    %c1 = arith.constant 1 : index
    %4 = vector.load %arg12[%c0_5, %c1] : memref<384x128xf32, #tpu.memory_space<vmem>>, vector<128x127xf32>
    tpu.vector_store %arg12[%c0_5, %c1], %3 {strides = array<i32>} : memref<384x128xf32, #tpu.memory_space<vmem>>, vector<128x127xf32>,
    %cst = arith.constant 0.000000e+00 : f32
    %5 = vector.broadcast %cst : f32 to vector<128x1xf32>
    %c0_6 = arith.constant 0 : index
    %c0_7 = arith.constant 0 : index
    %6 = vector.load %arg12[%c0_6, %c0_7] : memref<384x128xf32, #tpu.memory_space<vmem>>, vector<128x1xf32>
    tpu.vector_store %arg12[%c0_6, %c0_7], %5 {strides = array<i32>} : memref<384x128xf32, #tpu.memory_space<vmem>>, vector<128x1xf32>,
    %c128 = arith.constant 128 : index
    %c0_8 = arith.constant 0 : index
    %7 = vector.load %arg12[%c128, %c0_8] : memref<384x128xf32, #tpu.memory_space<vmem>>, vector<128x128xf32>
    tpu.vector_store %arg12[%c128, %c0_8], %2 {strides = array<i32>} : memref<384x128xf32, #tpu.memory_space<vmem>>, vector<128x128xf32>,
    %8 = vector.extract_strided_slice %2 {offsets = [0, 1], sizes = [128, 127], strides = [1, 1]} : vector<128x128xf32> to vector<128x127xf32>
    %c256 = arith.constant 256 : index
    %c0_9 = arith.constant 0 : index
    %9 = vector.load %arg12[%c256, %c0_9] : memref<384x128xf32, #tpu.memory_space<vmem>>, vector<128x127xf32>
    tpu.vector_store %arg12[%c256, %c0_9], %8 {strides = array<i32>} : memref<384x128xf32, #tpu.memory_space<vmem>>, vector<128x127xf32>,
    %cst_10 = arith.constant 0.000000e+00 : f32
    %10 = vector.broadcast %cst_10 : f32 to vector<128x1xf32>
    %c256_11 = arith.constant 256 : index
    %c127 = arith.constant 127 : index
    %11 = vector.load %arg12[%c256_11, %c127] : memref<384x128xf32, #tpu.memory_space<vmem>>, vector<128x1xf32>
    tpu.vector_store %arg12[%c256_11, %c127], %10 {strides = array<i32>} : memref<384x128xf32, #tpu.memory_space<vmem>>, vector<128x1xf32>,
    %c0_12 = arith.constant 0 : index
    %c0_13 = arith.constant 0 : index
    %12 = vector.load %arg12[%c0_12, %c0_13] : memref<384x128xf32, #tpu.memory_space<vmem>>, vector<384x128xf32>
    %cst_14 = arith.constant dense<0.000000e+00> : vector<64x128xf32>
    %13 = tpu.matmul %1, %12, %cst_14 {dimension_numbers = #tpu.dot_dimension_numbers<[1], [0], [0], [1], [0, 0, 1, 1], [], []>} : vector<64x384xf32>, vector<384x128xf32>, vector<64x128xf32> -> vector<64x128xf32>
    %c0_15 = arith.constant 0 : index
    %c0_16 = arith.constant 0 : index
    %14 = vector.load %arg4[%c0_15, %c0_16] : memref<64x1xf32, #tpu.memory_space<vmem>>, vector<64x1xf32>
    %15 = vector.broadcast %14 : vector<64x1xf32> to vector<64x128xf32>
    %16 = arith.addf %13, %15 : vector<64x128xf32>
    %17 = vector.broadcast %0 : vector<1x128xf32> to vector<64x128xf32>
    %18 = arith.mulf %16, %17 : vector<64x128xf32>
    %c0_17 = arith.constant 0 : index
    %c0_18 = arith.constant 0 : index
    %19 = vector.load %arg5[%c0_17, %c0_18] : memref<64x384xf32, #tpu.memory_space<vmem>>, vector<64x384xf32>
    %c0_19 = arith.constant 0 : index
    %c0_20 = arith.constant 0 : index
    %20 = vector.load %arg1[%c0_19, %c0_20] : memref<64x128xf32, #tpu.memory_space<vmem>>, vector<64x128xf32>
    %21 = vector.extract_strided_slice %18 {offsets = [0, 0], sizes = [64, 127], strides = [1, 1]} : vector<64x128xf32> to vector<64x127xf32>
    %c0_21 = arith.constant 0 : index
    %c1_22 = arith.constant 1 : index
    %22 = vector.load %arg12[%c0_21, %c1_22] : memref<384x128xf32, #tpu.memory_space<vmem>>, vector<64x127xf32>
    tpu.vector_store %arg12[%c0_21, %c1_22], %21 {strides = array<i32>} : memref<384x128xf32, #tpu.memory_space<vmem>>, vector<64x127xf32>,
    %cst_23 = arith.constant 0.000000e+00 : f32
    %23 = vector.broadcast %cst_23 : f32 to vector<64x1xf32>
    %c0_24 = arith.constant 0 : index
    %c0_25 = arith.constant 0 : index
    %24 = vector.load %arg12[%c0_24, %c0_25] : memref<384x128xf32, #tpu.memory_space<vmem>>, vector<64x1xf32>
    tpu.vector_store %arg12[%c0_24, %c0_25], %23 {strides = array<i32>} : memref<384x128xf32, #tpu.memory_space<vmem>>, vector<64x1xf32>,
    %25 = vector.extract_strided_slice %20 {offsets = [0, 0], sizes = [64, 127], strides = [1, 1]} : vector<64x128xf32> to vector<64x127xf32>
    %c64 = arith.constant 64 : index
    %c1_26 = arith.constant 1 : index
    %26 = vector.load %arg12[%c64, %c1_26] : memref<384x128xf32, #tpu.memory_space<vmem>>, vector<64x127xf32>
    tpu.vector_store %arg12[%c64, %c1_26], %25 {strides = array<i32>} : memref<384x128xf32, #tpu.memory_space<vmem>>, vector<64x127xf32>,
    %cst_27 = arith.constant 0.000000e+00 : f32
    %27 = vector.broadcast %cst_27 : f32 to vector<64x1xf32>
    %c64_28 = arith.constant 64 : index
    %c0_29 = arith.constant 0 : index
    %28 = vector.load %arg12[%c64_28, %c0_29] : memref<384x128xf32, #tpu.memory_space<vmem>>, vector<64x1xf32>
    tpu.vector_store %arg12[%c64_28, %c0_29], %27 {strides = array<i32>} : memref<384x128xf32, #tpu.memory_space<vmem>>, vector<64x1xf32>,
    %c128_30 = arith.constant 128 : index
    %c0_31 = arith.constant 0 : index
    %29 = vector.load %arg12[%c128_30, %c0_31] : memref<384x128xf32, #tpu.memory_space<vmem>>, vector<64x128xf32>
    tpu.vector_store %arg12[%c128_30, %c0_31], %18 {strides = array<i32>} : memref<384x128xf32, #tpu.memory_space<vmem>>, vector<64x128xf32>,
    %c192 = arith.constant 192 : index
    %c0_32 = arith.constant 0 : index
    %30 = vector.load %arg12[%c192, %c0_32] : memref<384x128xf32, #tpu.memory_space<vmem>>, vector<64x128xf32>
    tpu.vector_store %arg12[%c192, %c0_32], %20 {strides = array<i32>} : memref<384x128xf32, #tpu.memory_space<vmem>>, vector<64x128xf32>,
    %31 = vector.extract_strided_slice %18 {offsets = [0, 1], sizes = [64, 127], strides = [1, 1]} : vector<64x128xf32> to vector<64x127xf32>
    %c256_33 = arith.constant 256 : index
    %c0_34 = arith.constant 0 : index
    %32 = vector.load %arg12[%c256_33, %c0_34] : memref<384x128xf32, #tpu.memory_space<vmem>>, vector<64x127xf32>
    tpu.vector_store %arg12[%c256_33, %c0_34], %31 {strides = array<i32>} : memref<384x128xf32, #tpu.memory_space<vmem>>, vector<64x127xf32>,
    %cst_35 = arith.constant 0.000000e+00 : f32
    %33 = vector.broadcast %cst_35 : f32 to vector<64x1xf32>
    %c256_36 = arith.constant 256 : index
    %c127_37 = arith.constant 127 : index
    %34 = vector.load %arg12[%c256_36, %c127_37] : memref<384x128xf32, #tpu.memory_space<vmem>>, vector<64x1xf32>
    tpu.vector_store %arg12[%c256_36, %c127_37], %33 {strides = array<i32>} : memref<384x128xf32, #tpu.memory_space<vmem>>, vector<64x1xf32>,
    %35 = vector.extract_strided_slice %20 {offsets = [0, 1], sizes = [64, 127], strides = [1, 1]} : vector<64x128xf32> to vector<64x127xf32>
    %c320 = arith.constant 320 : index
    %c0_38 = arith.constant 0 : index
    %36 = vector.load %arg12[%c320, %c0_38] : memref<384x128xf32, #tpu.memory_space<vmem>>, vector<64x127xf32>
    tpu.vector_store %arg12[%c320, %c0_38], %35 {strides = array<i32>} : memref<384x128xf32, #tpu.memory_space<vmem>>, vector<64x127xf32>,
    %cst_39 = arith.constant 0.000000e+00 : f32
    %37 = vector.broadcast %cst_39 : f32 to vector<64x1xf32>
    %c320_40 = arith.constant 320 : index
    %c127_41 = arith.constant 127 : index
    %38 = vector.load %arg12[%c320_40, %c127_41] : memref<384x128xf32, #tpu.memory_space<vmem>>, vector<64x1xf32>
    tpu.vector_store %arg12[%c320_40, %c127_41], %37 {strides = array<i32>} : memref<384x128xf32, #tpu.memory_space<vmem>>, vector<64x1xf32>,
    %c0_42 = arith.constant 0 : index
    %c0_43 = arith.constant 0 : index
    %39 = vector.load %arg12[%c0_42, %c0_43] : memref<384x128xf32, #tpu.memory_space<vmem>>, vector<384x128xf32>
    %cst_44 = arith.constant dense<0.000000e+00> : vector<64x128xf32>
    %40 = tpu.matmul %19, %39, %cst_44 {dimension_numbers = #tpu.dot_dimension_numbers<[1], [0], [0], [1], [0, 0, 1, 1], [], []>} : vector<64x384xf32>, vector<384x128xf32>, vector<64x128xf32> -> vector<64x128xf32>
    %c0_45 = arith.constant 0 : index
    %c0_46 = arith.constant 0 : index
    %41 = vector.load %arg6[%c0_45, %c0_46] : memref<64x1xf32, #tpu.memory_space<vmem>>, vector<64x1xf32>
    %c0_47 = arith.constant 0 : index
    %c0_48 = arith.constant 0 : index
    %42 = vector.load %arg7[%c0_47, %c0_48] : memref<64x1xf32, #tpu.memory_space<vmem>>, vector<64x1xf32>
    %43 = vector.broadcast %0 : vector<1x128xf32> to vector<64x128xf32>
    %44 = arith.mulf %40, %43 : vector<64x128xf32>
    %cst_49 = arith.constant dense<0.000000e+00> : vector<64xf32>
    %45 = vector.multi_reduction <add>, %44, %cst_49 [1] : vector<64x128xf32> to vector<64xf32>
    %46 = vector.shape_cast %45 : vector<64xf32> to vector<64x1xf32>
    %cst_50 = arith.constant 1.000000e-01 : f32
    %47 = vector.broadcast %cst_50 : f32 to vector<64x1xf32>
    %48 = arith.mulf %46, %47 : vector<64x1xf32>
    %49 = vector.broadcast %48 : vector<64x1xf32> to vector<64x128xf32>
    %50 = arith.subf %40, %49 : vector<64x128xf32>
    %51 = vector.broadcast %0 : vector<1x128xf32> to vector<64x128xf32>
    %52 = arith.mulf %50, %51 : vector<64x128xf32>
    %53 = arith.mulf %52, %52 : vector<64x128xf32>
    %cst_51 = arith.constant dense<0.000000e+00> : vector<64xf32>
    %54 = vector.multi_reduction <add>, %53, %cst_51 [1] : vector<64x128xf32> to vector<64xf32>
    %55 = vector.shape_cast %54 : vector<64xf32> to vector<64x1xf32>
    %cst_52 = arith.constant 1.000000e-01 : f32
    %56 = vector.broadcast %cst_52 : f32 to vector<64x1xf32>
    %57 = arith.mulf %55, %56 : vector<64x1xf32>
    %cst_53 = arith.constant 9.99999974E-6 : f32
    %58 = vector.broadcast %cst_53 : f32 to vector<64x1xf32>
    %59 = arith.addf %57, %58 : vector<64x1xf32>
    %60 = math.rsqrt %59 : vector<64x1xf32>
    %61 = arith.mulf %60, %41 : vector<64x1xf32>
    %62 = vector.broadcast %61 : vector<64x1xf32> to vector<64x128xf32>
    %63 = arith.mulf %52, %62 : vector<64x128xf32>
    %64 = vector.broadcast %42 : vector<64x1xf32> to vector<64x128xf32>
    %65 = arith.addf %63, %64 : vector<64x128xf32>
    %66 = math.tanh %65 : vector<64x128xf32>
    %67 = vector.broadcast %0 : vector<1x128xf32> to vector<64x128xf32>
    %68 = arith.mulf %66, %67 : vector<64x128xf32>
    %c0_54 = arith.constant 0 : index
    %c0_55 = arith.constant 0 : index
    %69 = vector.load %arg8[%c0_54, %c0_55] : memref<64x192xf32, #tpu.memory_space<vmem>>, vector<64x192xf32>
    %70 = vector.extract_strided_slice %68 {offsets = [0, 0], sizes = [64, 127], strides = [1, 1]} : vector<64x128xf32> to vector<64x127xf32>
    %c0_56 = arith.constant 0 : index
    %c1_57 = arith.constant 1 : index
    %71 = vector.load %arg12[%c0_56, %c1_57] : memref<384x128xf32, #tpu.memory_space<vmem>>, vector<64x127xf32>
    tpu.vector_store %arg12[%c0_56, %c1_57], %70 {strides = array<i32>} : memref<384x128xf32, #tpu.memory_space<vmem>>, vector<64x127xf32>,
    %cst_58 = arith.constant 0.000000e+00 : f32
    %72 = vector.broadcast %cst_58 : f32 to vector<64x1xf32>
    %c0_59 = arith.constant 0 : index
    %c0_60 = arith.constant 0 : index
    %73 = vector.load %arg12[%c0_59, %c0_60] : memref<384x128xf32, #tpu.memory_space<vmem>>, vector<64x1xf32>
    tpu.vector_store %arg12[%c0_59, %c0_60], %72 {strides = array<i32>} : memref<384x128xf32, #tpu.memory_space<vmem>>, vector<64x1xf32>,
    %c64_61 = arith.constant 64 : index
    %c0_62 = arith.constant 0 : index
    %74 = vector.load %arg12[%c64_61, %c0_62] : memref<384x128xf32, #tpu.memory_space<vmem>>, vector<64x128xf32>
    tpu.vector_store %arg12[%c64_61, %c0_62], %68 {strides = array<i32>} : memref<384x128xf32, #tpu.memory_space<vmem>>, vector<64x128xf32>,
    %75 = vector.extract_strided_slice %68 {offsets = [0, 1], sizes = [64, 127], strides = [1, 1]} : vector<64x128xf32> to vector<64x127xf32>
    %c128_63 = arith.constant 128 : index
    %c0_64 = arith.constant 0 : index
    %76 = vector.load %arg12[%c128_63, %c0_64] : memref<384x128xf32, #tpu.memory_space<vmem>>, vector<64x127xf32>
    tpu.vector_store %arg12[%c128_63, %c0_64], %75 {strides = array<i32>} : memref<384x128xf32, #tpu.memory_space<vmem>>, vector<64x127xf32>,
    %cst_65 = arith.constant 0.000000e+00 : f32
    %77 = vector.broadcast %cst_65 : f32 to vector<64x1xf32>
    %c128_66 = arith.constant 128 : index
    %c127_67 = arith.constant 127 : index
    %78 = vector.load %arg12[%c128_66, %c127_67] : memref<384x128xf32, #tpu.memory_space<vmem>>, vector<64x1xf32>
    tpu.vector_store %arg12[%c128_66, %c127_67], %77 {strides = array<i32>} : memref<384x128xf32, #tpu.memory_space<vmem>>, vector<64x1xf32>,
    %c0_68 = arith.constant 0 : index
    %c0_69 = arith.constant 0 : index
    %79 = vector.load %arg12[%c0_68, %c0_69] : memref<384x128xf32, #tpu.memory_space<vmem>>, vector<192x128xf32>
    %cst_70 = arith.constant dense<0.000000e+00> : vector<64x128xf32>
    %80 = tpu.matmul %69, %79, %cst_70 {dimension_numbers = #tpu.dot_dimension_numbers<[1], [0], [0], [1], [0, 0, 1, 1], [], []>} : vector<64x192xf32>, vector<192x128xf32>, vector<64x128xf32> -> vector<64x128xf32>
    %c0_71 = arith.constant 0 : index
    %c0_72 = arith.constant 0 : index
    %81 = vector.load %arg9[%c0_71, %c0_72] : memref<64x1xf32, #tpu.memory_space<vmem>>, vector<64x1xf32>
    %c0_73 = arith.constant 0 : index
    %c0_74 = arith.constant 0 : index
    %82 = vector.load %arg10[%c0_73, %c0_74] : memref<64x1xf32, #tpu.memory_space<vmem>>, vector<64x1xf32>
    %83 = vector.broadcast %0 : vector<1x128xf32> to vector<64x128xf32>
    %84 = arith.mulf %80, %83 : vector<64x128xf32>
    %cst_75 = arith.constant dense<0.000000e+00> : vector<64xf32>
    %85 = vector.multi_reduction <add>, %84, %cst_75 [1] : vector<64x128xf32> to vector<64xf32>
    %86 = vector.shape_cast %85 : vector<64xf32> to vector<64x1xf32>
    %cst_76 = arith.constant 1.000000e-01 : f32
    %87 = vector.broadcast %cst_76 : f32 to vector<64x1xf32>
    %88 = arith.mulf %86, %87 : vector<64x1xf32>
    %89 = vector.broadcast %88 : vector<64x1xf32> to vector<64x128xf32>
    %90 = arith.subf %80, %89 : vector<64x128xf32>
    %91 = vector.broadcast %0 : vector<1x128xf32> to vector<64x128xf32>
    %92 = arith.mulf %90, %91 : vector<64x128xf32>
    %93 = arith.mulf %92, %92 : vector<64x128xf32>
    %cst_77 = arith.constant dense<0.000000e+00> : vector<64xf32>
    %94 = vector.multi_reduction <add>, %93, %cst_77 [1] : vector<64x128xf32> to vector<64xf32>
    %95 = vector.shape_cast %94 : vector<64xf32> to vector<64x1xf32>
    %cst_78 = arith.constant 1.000000e-01 : f32
    %96 = vector.broadcast %cst_78 : f32 to vector<64x1xf32>
    %97 = arith.mulf %95, %96 : vector<64x1xf32>
    %cst_79 = arith.constant 9.99999974E-6 : f32
    %98 = vector.broadcast %cst_79 : f32 to vector<64x1xf32>
    %99 = arith.addf %97, %98 : vector<64x1xf32>
    %100 = math.rsqrt %99 : vector<64x1xf32>
    %101 = arith.mulf %100, %81 : vector<64x1xf32>
    %102 = vector.broadcast %101 : vector<64x1xf32> to vector<64x128xf32>
    %103 = arith.mulf %92, %102 : vector<64x128xf32>
    %104 = vector.broadcast %82 : vector<64x1xf32> to vector<64x128xf32>
    %105 = arith.addf %103, %104 : vector<64x128xf32>
    %106 = math.tanh %105 : vector<64x128xf32>
    %107 = vector.broadcast %0 : vector<1x128xf32> to vector<64x128xf32>
    %108 = arith.mulf %106, %107 : vector<64x128xf32>
    %c0_80 = arith.constant 0 : index
    %c0_81 = arith.constant 0 : index
    %109 = vector.load %arg11[%c0_80, %c0_81] : memref<64x128xf32, #tpu.memory_space<vmem>>, vector<64x128xf32>
    tpu.vector_store %arg11[%c0_80, %c0_81], %108 {strides = array<i32>} : memref<64x128xf32, #tpu.memory_space<vmem>>, vector<64x128xf32>,
    return
  }
}

module attributes {stable_mosaic.version = 11 : i64} {
  func.func @_dec_block_kernel(%arg0: memref<64x128xf32, #tpu.memory_space<vmem>>, %arg1: memref<32x128xf32, #tpu.memory_space<vmem>>, %arg2: memref<1x128xf32, #tpu.memory_space<vmem>>, %arg3: memref<32x128xf32, #tpu.memory_space<vmem>>, %arg4: memref<32x1xf32, #tpu.memory_space<vmem>>, %arg5: memref<32x192xf32, #tpu.memory_space<vmem>>, %arg6: memref<32x1xf32, #tpu.memory_space<vmem>>, %arg7: memref<32x1xf32, #tpu.memory_space<vmem>>, %arg8: memref<32x96xf32, #tpu.memory_space<vmem>>, %arg9: memref<32x1xf32, #tpu.memory_space<vmem>>, %arg10: memref<32x1xf32, #tpu.memory_space<vmem>>, %arg11: memref<32x128xf32, #tpu.memory_space<vmem>>, %arg12: memref<192x128xf32, #tpu.memory_space<vmem>>) attributes {dimension_semantics = [], scalar_prefetch = 0 : i64, scratch_operands = 1 : i64, tpu.core_type = #tpu.core_type<tc>} {
    %c0 = arith.constant 0 : index
    %c0_0 = arith.constant 0 : index
    %0 = vector.load %arg2[%c0, %c0_0] : memref<1x128xf32, #tpu.memory_space<vmem>>, vector<1x128xf32>
    %c0_1 = arith.constant 0 : index
    %c0_2 = arith.constant 0 : index
    %1 = vector.load %arg3[%c0_1, %c0_2] : memref<32x128xf32, #tpu.memory_space<vmem>>, vector<32x128xf32>
    %c0_3 = arith.constant 0 : index
    %c0_4 = arith.constant 0 : index
    %2 = vector.load %arg0[%c0_3, %c0_4] : memref<64x128xf32, #tpu.memory_space<vmem>>, vector<64x128xf32>
    %3 = vector.extract_strided_slice %2 {offsets = [0, 0], sizes = [64, 127], strides = [1, 1]} : vector<64x128xf32> to vector<64x127xf32>
    %c0_5 = arith.constant 0 : index
    %c1 = arith.constant 1 : index
    %4 = vector.load %arg12[%c0_5, %c1] : memref<192x128xf32, #tpu.memory_space<vmem>>, vector<64x127xf32>
    tpu.vector_store %arg12[%c0_5, %c1], %3 {strides = array<i32>} : memref<192x128xf32, #tpu.memory_space<vmem>>, vector<64x127xf32>,
    %cst = arith.constant 0.000000e+00 : f32
    %5 = vector.broadcast %cst : f32 to vector<64x1xf32>
    %c0_6 = arith.constant 0 : index
    %c0_7 = arith.constant 0 : index
    %6 = vector.load %arg12[%c0_6, %c0_7] : memref<192x128xf32, #tpu.memory_space<vmem>>, vector<64x1xf32>
    tpu.vector_store %arg12[%c0_6, %c0_7], %5 {strides = array<i32>} : memref<192x128xf32, #tpu.memory_space<vmem>>, vector<64x1xf32>,
    %c64 = arith.constant 64 : index
    %c0_8 = arith.constant 0 : index
    %7 = vector.load %arg12[%c64, %c0_8] : memref<192x128xf32, #tpu.memory_space<vmem>>, vector<64x128xf32>
    tpu.vector_store %arg12[%c64, %c0_8], %2 {strides = array<i32>} : memref<192x128xf32, #tpu.memory_space<vmem>>, vector<64x128xf32>,
    %c0_9 = arith.constant 0 : index
    %c0_10 = arith.constant 0 : index
    %8 = vector.load %arg12[%c0_9, %c0_10] : memref<192x128xf32, #tpu.memory_space<vmem>>, vector<128x128xf32>
    %cst_11 = arith.constant dense<0.000000e+00> : vector<32x128xf32>
    %9 = tpu.matmul %1, %8, %cst_11 {dimension_numbers = #tpu.dot_dimension_numbers<[1], [0], [0], [1], [0, 0, 1, 1], [], []>} : vector<32x128xf32>, vector<128x128xf32>, vector<32x128xf32> -> vector<32x128xf32>
    %c0_12 = arith.constant 0 : index
    %c0_13 = arith.constant 0 : index
    %10 = vector.load %arg4[%c0_12, %c0_13] : memref<32x1xf32, #tpu.memory_space<vmem>>, vector<32x1xf32>
    %11 = vector.broadcast %10 : vector<32x1xf32> to vector<32x128xf32>
    %12 = arith.addf %9, %11 : vector<32x128xf32>
    %13 = vector.broadcast %0 : vector<1x128xf32> to vector<32x128xf32>
    %14 = arith.mulf %12, %13 : vector<32x128xf32>
    %c0_14 = arith.constant 0 : index
    %c0_15 = arith.constant 0 : index
    %15 = vector.load %arg5[%c0_14, %c0_15] : memref<32x192xf32, #tpu.memory_space<vmem>>, vector<32x192xf32>
    %c0_16 = arith.constant 0 : index
    %c0_17 = arith.constant 0 : index
    %16 = vector.load %arg1[%c0_16, %c0_17] : memref<32x128xf32, #tpu.memory_space<vmem>>, vector<32x128xf32>
    %17 = vector.extract_strided_slice %14 {offsets = [0, 0], sizes = [32, 127], strides = [1, 1]} : vector<32x128xf32> to vector<32x127xf32>
    %c0_18 = arith.constant 0 : index
    %c1_19 = arith.constant 1 : index
    %18 = vector.load %arg12[%c0_18, %c1_19] : memref<192x128xf32, #tpu.memory_space<vmem>>, vector<32x127xf32>
    tpu.vector_store %arg12[%c0_18, %c1_19], %17 {strides = array<i32>} : memref<192x128xf32, #tpu.memory_space<vmem>>, vector<32x127xf32>,
    %cst_20 = arith.constant 0.000000e+00 : f32
    %19 = vector.broadcast %cst_20 : f32 to vector<32x1xf32>
    %c0_21 = arith.constant 0 : index
    %c0_22 = arith.constant 0 : index
    %20 = vector.load %arg12[%c0_21, %c0_22] : memref<192x128xf32, #tpu.memory_space<vmem>>, vector<32x1xf32>
    tpu.vector_store %arg12[%c0_21, %c0_22], %19 {strides = array<i32>} : memref<192x128xf32, #tpu.memory_space<vmem>>, vector<32x1xf32>,
    %21 = vector.extract_strided_slice %16 {offsets = [0, 0], sizes = [32, 127], strides = [1, 1]} : vector<32x128xf32> to vector<32x127xf32>
    %c32 = arith.constant 32 : index
    %c1_23 = arith.constant 1 : index
    %22 = vector.load %arg12[%c32, %c1_23] : memref<192x128xf32, #tpu.memory_space<vmem>>, vector<32x127xf32>
    tpu.vector_store %arg12[%c32, %c1_23], %21 {strides = array<i32>} : memref<192x128xf32, #tpu.memory_space<vmem>>, vector<32x127xf32>,
    %cst_24 = arith.constant 0.000000e+00 : f32
    %23 = vector.broadcast %cst_24 : f32 to vector<32x1xf32>
    %c32_25 = arith.constant 32 : index
    %c0_26 = arith.constant 0 : index
    %24 = vector.load %arg12[%c32_25, %c0_26] : memref<192x128xf32, #tpu.memory_space<vmem>>, vector<32x1xf32>
    tpu.vector_store %arg12[%c32_25, %c0_26], %23 {strides = array<i32>} : memref<192x128xf32, #tpu.memory_space<vmem>>, vector<32x1xf32>,
    %c64_27 = arith.constant 64 : index
    %c0_28 = arith.constant 0 : index
    %25 = vector.load %arg12[%c64_27, %c0_28] : memref<192x128xf32, #tpu.memory_space<vmem>>, vector<32x128xf32>
    tpu.vector_store %arg12[%c64_27, %c0_28], %14 {strides = array<i32>} : memref<192x128xf32, #tpu.memory_space<vmem>>, vector<32x128xf32>,
    %c96 = arith.constant 96 : index
    %c0_29 = arith.constant 0 : index
    %26 = vector.load %arg12[%c96, %c0_29] : memref<192x128xf32, #tpu.memory_space<vmem>>, vector<32x128xf32>
    tpu.vector_store %arg12[%c96, %c0_29], %16 {strides = array<i32>} : memref<192x128xf32, #tpu.memory_space<vmem>>, vector<32x128xf32>,
    %27 = vector.extract_strided_slice %14 {offsets = [0, 1], sizes = [32, 127], strides = [1, 1]} : vector<32x128xf32> to vector<32x127xf32>
    %c128 = arith.constant 128 : index
    %c0_30 = arith.constant 0 : index
    %28 = vector.load %arg12[%c128, %c0_30] : memref<192x128xf32, #tpu.memory_space<vmem>>, vector<32x127xf32>
    tpu.vector_store %arg12[%c128, %c0_30], %27 {strides = array<i32>} : memref<192x128xf32, #tpu.memory_space<vmem>>, vector<32x127xf32>,
    %cst_31 = arith.constant 0.000000e+00 : f32
    %29 = vector.broadcast %cst_31 : f32 to vector<32x1xf32>
    %c128_32 = arith.constant 128 : index
    %c127 = arith.constant 127 : index
    %30 = vector.load %arg12[%c128_32, %c127] : memref<192x128xf32, #tpu.memory_space<vmem>>, vector<32x1xf32>
    tpu.vector_store %arg12[%c128_32, %c127], %29 {strides = array<i32>} : memref<192x128xf32, #tpu.memory_space<vmem>>, vector<32x1xf32>,
    %31 = vector.extract_strided_slice %16 {offsets = [0, 1], sizes = [32, 127], strides = [1, 1]} : vector<32x128xf32> to vector<32x127xf32>
    %c160 = arith.constant 160 : index
    %c0_33 = arith.constant 0 : index
    %32 = vector.load %arg12[%c160, %c0_33] : memref<192x128xf32, #tpu.memory_space<vmem>>, vector<32x127xf32>
    tpu.vector_store %arg12[%c160, %c0_33], %31 {strides = array<i32>} : memref<192x128xf32, #tpu.memory_space<vmem>>, vector<32x127xf32>,
    %cst_34 = arith.constant 0.000000e+00 : f32
    %33 = vector.broadcast %cst_34 : f32 to vector<32x1xf32>
    %c160_35 = arith.constant 160 : index
    %c127_36 = arith.constant 127 : index
    %34 = vector.load %arg12[%c160_35, %c127_36] : memref<192x128xf32, #tpu.memory_space<vmem>>, vector<32x1xf32>
    tpu.vector_store %arg12[%c160_35, %c127_36], %33 {strides = array<i32>} : memref<192x128xf32, #tpu.memory_space<vmem>>, vector<32x1xf32>,
    %c0_37 = arith.constant 0 : index
    %c0_38 = arith.constant 0 : index
    %35 = vector.load %arg12[%c0_37, %c0_38] : memref<192x128xf32, #tpu.memory_space<vmem>>, vector<192x128xf32>
    %cst_39 = arith.constant dense<0.000000e+00> : vector<32x128xf32>
    %36 = tpu.matmul %15, %35, %cst_39 {dimension_numbers = #tpu.dot_dimension_numbers<[1], [0], [0], [1], [0, 0, 1, 1], [], []>} : vector<32x192xf32>, vector<192x128xf32>, vector<32x128xf32> -> vector<32x128xf32>
    %c0_40 = arith.constant 0 : index
    %c0_41 = arith.constant 0 : index
    %37 = vector.load %arg6[%c0_40, %c0_41] : memref<32x1xf32, #tpu.memory_space<vmem>>, vector<32x1xf32>
    %c0_42 = arith.constant 0 : index
    %c0_43 = arith.constant 0 : index
    %38 = vector.load %arg7[%c0_42, %c0_43] : memref<32x1xf32, #tpu.memory_space<vmem>>, vector<32x1xf32>
    %39 = vector.broadcast %0 : vector<1x128xf32> to vector<32x128xf32>
    %40 = arith.mulf %36, %39 : vector<32x128xf32>
    %cst_44 = arith.constant dense<0.000000e+00> : vector<32xf32>
    %41 = vector.multi_reduction <add>, %40, %cst_44 [1] : vector<32x128xf32> to vector<32xf32>
    %42 = vector.shape_cast %41 : vector<32xf32> to vector<32x1xf32>
    %cst_45 = arith.constant 5.000000e-02 : f32
    %43 = vector.broadcast %cst_45 : f32 to vector<32x1xf32>
    %44 = arith.mulf %42, %43 : vector<32x1xf32>
    %45 = vector.broadcast %44 : vector<32x1xf32> to vector<32x128xf32>
    %46 = arith.subf %36, %45 : vector<32x128xf32>
    %47 = vector.broadcast %0 : vector<1x128xf32> to vector<32x128xf32>
    %48 = arith.mulf %46, %47 : vector<32x128xf32>
    %49 = arith.mulf %48, %48 : vector<32x128xf32>
    %cst_46 = arith.constant dense<0.000000e+00> : vector<32xf32>
    %50 = vector.multi_reduction <add>, %49, %cst_46 [1] : vector<32x128xf32> to vector<32xf32>
    %51 = vector.shape_cast %50 : vector<32xf32> to vector<32x1xf32>
    %cst_47 = arith.constant 5.000000e-02 : f32
    %52 = vector.broadcast %cst_47 : f32 to vector<32x1xf32>
    %53 = arith.mulf %51, %52 : vector<32x1xf32>
    %cst_48 = arith.constant 9.99999974E-6 : f32
    %54 = vector.broadcast %cst_48 : f32 to vector<32x1xf32>
    %55 = arith.addf %53, %54 : vector<32x1xf32>
    %56 = math.rsqrt %55 : vector<32x1xf32>
    %57 = arith.mulf %56, %37 : vector<32x1xf32>
    %58 = vector.broadcast %57 : vector<32x1xf32> to vector<32x128xf32>
    %59 = arith.mulf %48, %58 : vector<32x128xf32>
    %60 = vector.broadcast %38 : vector<32x1xf32> to vector<32x128xf32>
    %61 = arith.addf %59, %60 : vector<32x128xf32>
    %62 = math.tanh %61 : vector<32x128xf32>
    %63 = vector.broadcast %0 : vector<1x128xf32> to vector<32x128xf32>
    %64 = arith.mulf %62, %63 : vector<32x128xf32>
    %c0_49 = arith.constant 0 : index
    %c0_50 = arith.constant 0 : index
    %65 = vector.load %arg8[%c0_49, %c0_50] : memref<32x96xf32, #tpu.memory_space<vmem>>, vector<32x96xf32>
    %66 = vector.extract_strided_slice %64 {offsets = [0, 0], sizes = [32, 127], strides = [1, 1]} : vector<32x128xf32> to vector<32x127xf32>
    %c0_51 = arith.constant 0 : index
    %c1_52 = arith.constant 1 : index
    %67 = vector.load %arg12[%c0_51, %c1_52] : memref<192x128xf32, #tpu.memory_space<vmem>>, vector<32x127xf32>
    tpu.vector_store %arg12[%c0_51, %c1_52], %66 {strides = array<i32>} : memref<192x128xf32, #tpu.memory_space<vmem>>, vector<32x127xf32>,
    %cst_53 = arith.constant 0.000000e+00 : f32
    %68 = vector.broadcast %cst_53 : f32 to vector<32x1xf32>
    %c0_54 = arith.constant 0 : index
    %c0_55 = arith.constant 0 : index
    %69 = vector.load %arg12[%c0_54, %c0_55] : memref<192x128xf32, #tpu.memory_space<vmem>>, vector<32x1xf32>
    tpu.vector_store %arg12[%c0_54, %c0_55], %68 {strides = array<i32>} : memref<192x128xf32, #tpu.memory_space<vmem>>, vector<32x1xf32>,
    %c32_56 = arith.constant 32 : index
    %c0_57 = arith.constant 0 : index
    %70 = vector.load %arg12[%c32_56, %c0_57] : memref<192x128xf32, #tpu.memory_space<vmem>>, vector<32x128xf32>
    tpu.vector_store %arg12[%c32_56, %c0_57], %64 {strides = array<i32>} : memref<192x128xf32, #tpu.memory_space<vmem>>, vector<32x128xf32>,
    %71 = vector.extract_strided_slice %64 {offsets = [0, 1], sizes = [32, 127], strides = [1, 1]} : vector<32x128xf32> to vector<32x127xf32>
    %c64_58 = arith.constant 64 : index
    %c0_59 = arith.constant 0 : index
    %72 = vector.load %arg12[%c64_58, %c0_59] : memref<192x128xf32, #tpu.memory_space<vmem>>, vector<32x127xf32>
    tpu.vector_store %arg12[%c64_58, %c0_59], %71 {strides = array<i32>} : memref<192x128xf32, #tpu.memory_space<vmem>>, vector<32x127xf32>,
    %cst_60 = arith.constant 0.000000e+00 : f32
    %73 = vector.broadcast %cst_60 : f32 to vector<32x1xf32>
    %c64_61 = arith.constant 64 : index
    %c127_62 = arith.constant 127 : index
    %74 = vector.load %arg12[%c64_61, %c127_62] : memref<192x128xf32, #tpu.memory_space<vmem>>, vector<32x1xf32>
    tpu.vector_store %arg12[%c64_61, %c127_62], %73 {strides = array<i32>} : memref<192x128xf32, #tpu.memory_space<vmem>>, vector<32x1xf32>,
    %c0_63 = arith.constant 0 : index
    %c0_64 = arith.constant 0 : index
    %75 = vector.load %arg12[%c0_63, %c0_64] : memref<192x128xf32, #tpu.memory_space<vmem>>, vector<96x128xf32>
    %cst_65 = arith.constant dense<0.000000e+00> : vector<32x128xf32>
    %76 = tpu.matmul %65, %75, %cst_65 {dimension_numbers = #tpu.dot_dimension_numbers<[1], [0], [0], [1], [0, 0, 1, 1], [], []>} : vector<32x96xf32>, vector<96x128xf32>, vector<32x128xf32> -> vector<32x128xf32>
    %c0_66 = arith.constant 0 : index
    %c0_67 = arith.constant 0 : index
    %77 = vector.load %arg9[%c0_66, %c0_67] : memref<32x1xf32, #tpu.memory_space<vmem>>, vector<32x1xf32>
    %c0_68 = arith.constant 0 : index
    %c0_69 = arith.constant 0 : index
    %78 = vector.load %arg10[%c0_68, %c0_69] : memref<32x1xf32, #tpu.memory_space<vmem>>, vector<32x1xf32>
    %79 = vector.broadcast %0 : vector<1x128xf32> to vector<32x128xf32>
    %80 = arith.mulf %76, %79 : vector<32x128xf32>
    %cst_70 = arith.constant dense<0.000000e+00> : vector<32xf32>
    %81 = vector.multi_reduction <add>, %80, %cst_70 [1] : vector<32x128xf32> to vector<32xf32>
    %82 = vector.shape_cast %81 : vector<32xf32> to vector<32x1xf32>
    %cst_71 = arith.constant 5.000000e-02 : f32
    %83 = vector.broadcast %cst_71 : f32 to vector<32x1xf32>
    %84 = arith.mulf %82, %83 : vector<32x1xf32>
    %85 = vector.broadcast %84 : vector<32x1xf32> to vector<32x128xf32>
    %86 = arith.subf %76, %85 : vector<32x128xf32>
    %87 = vector.broadcast %0 : vector<1x128xf32> to vector<32x128xf32>
    %88 = arith.mulf %86, %87 : vector<32x128xf32>
    %89 = arith.mulf %88, %88 : vector<32x128xf32>
    %cst_72 = arith.constant dense<0.000000e+00> : vector<32xf32>
    %90 = vector.multi_reduction <add>, %89, %cst_72 [1] : vector<32x128xf32> to vector<32xf32>
    %91 = vector.shape_cast %90 : vector<32xf32> to vector<32x1xf32>
    %cst_73 = arith.constant 5.000000e-02 : f32
    %92 = vector.broadcast %cst_73 : f32 to vector<32x1xf32>
    %93 = arith.mulf %91, %92 : vector<32x1xf32>
    %cst_74 = arith.constant 9.99999974E-6 : f32
    %94 = vector.broadcast %cst_74 : f32 to vector<32x1xf32>
    %95 = arith.addf %93, %94 : vector<32x1xf32>
    %96 = math.rsqrt %95 : vector<32x1xf32>
    %97 = arith.mulf %96, %77 : vector<32x1xf32>
    %98 = vector.broadcast %97 : vector<32x1xf32> to vector<32x128xf32>
    %99 = arith.mulf %88, %98 : vector<32x128xf32>
    %100 = vector.broadcast %78 : vector<32x1xf32> to vector<32x128xf32>
    %101 = arith.addf %99, %100 : vector<32x128xf32>
    %102 = math.tanh %101 : vector<32x128xf32>
    %103 = vector.broadcast %0 : vector<1x128xf32> to vector<32x128xf32>
    %104 = arith.mulf %102, %103 : vector<32x128xf32>
    %c0_75 = arith.constant 0 : index
    %c0_76 = arith.constant 0 : index
    %105 = vector.load %arg11[%c0_75, %c0_76] : memref<32x128xf32, #tpu.memory_space<vmem>>, vector<32x128xf32>
    tpu.vector_store %arg11[%c0_75, %c0_76], %104 {strides = array<i32>} : memref<32x128xf32, #tpu.memory_space<vmem>>, vector<32x128xf32>,
    return
  }
}

module attributes {stable_mosaic.version = 11 : i64} {
  func.func @_dec_block_kernel(%arg0: memref<32x128xf32, #tpu.memory_space<vmem>>, %arg1: memref<16x128xf32, #tpu.memory_space<vmem>>, %arg2: memref<1x128xf32, #tpu.memory_space<vmem>>, %arg3: memref<16x64xf32, #tpu.memory_space<vmem>>, %arg4: memref<16x1xf32, #tpu.memory_space<vmem>>, %arg5: memref<16x96xf32, #tpu.memory_space<vmem>>, %arg6: memref<16x1xf32, #tpu.memory_space<vmem>>, %arg7: memref<16x1xf32, #tpu.memory_space<vmem>>, %arg8: memref<16x48xf32, #tpu.memory_space<vmem>>, %arg9: memref<16x1xf32, #tpu.memory_space<vmem>>, %arg10: memref<16x1xf32, #tpu.memory_space<vmem>>, %arg11: memref<16x128xf32, #tpu.memory_space<vmem>>, %arg12: memref<96x128xf32, #tpu.memory_space<vmem>>) attributes {dimension_semantics = [], scalar_prefetch = 0 : i64, scratch_operands = 1 : i64, tpu.core_type = #tpu.core_type<tc>} {
    %c0 = arith.constant 0 : index
    %c0_0 = arith.constant 0 : index
    %0 = vector.load %arg2[%c0, %c0_0] : memref<1x128xf32, #tpu.memory_space<vmem>>, vector<1x128xf32>
    %c0_1 = arith.constant 0 : index
    %c0_2 = arith.constant 0 : index
    %1 = vector.load %arg3[%c0_1, %c0_2] : memref<16x64xf32, #tpu.memory_space<vmem>>, vector<16x64xf32>
    %c0_3 = arith.constant 0 : index
    %c0_4 = arith.constant 0 : index
    %2 = vector.load %arg0[%c0_3, %c0_4] : memref<32x128xf32, #tpu.memory_space<vmem>>, vector<32x128xf32>
    %3 = vector.extract_strided_slice %2 {offsets = [0, 0], sizes = [32, 127], strides = [1, 1]} : vector<32x128xf32> to vector<32x127xf32>
    %c0_5 = arith.constant 0 : index
    %c1 = arith.constant 1 : index
    %4 = vector.load %arg12[%c0_5, %c1] : memref<96x128xf32, #tpu.memory_space<vmem>>, vector<32x127xf32>
    tpu.vector_store %arg12[%c0_5, %c1], %3 {strides = array<i32>} : memref<96x128xf32, #tpu.memory_space<vmem>>, vector<32x127xf32>,
    %cst = arith.constant 0.000000e+00 : f32
    %5 = vector.broadcast %cst : f32 to vector<32x1xf32>
    %c0_6 = arith.constant 0 : index
    %c0_7 = arith.constant 0 : index
    %6 = vector.load %arg12[%c0_6, %c0_7] : memref<96x128xf32, #tpu.memory_space<vmem>>, vector<32x1xf32>
    tpu.vector_store %arg12[%c0_6, %c0_7], %5 {strides = array<i32>} : memref<96x128xf32, #tpu.memory_space<vmem>>, vector<32x1xf32>,
    %c32 = arith.constant 32 : index
    %c0_8 = arith.constant 0 : index
    %7 = vector.load %arg12[%c32, %c0_8] : memref<96x128xf32, #tpu.memory_space<vmem>>, vector<32x128xf32>
    tpu.vector_store %arg12[%c32, %c0_8], %2 {strides = array<i32>} : memref<96x128xf32, #tpu.memory_space<vmem>>, vector<32x128xf32>,
    %c0_9 = arith.constant 0 : index
    %c0_10 = arith.constant 0 : index
    %8 = vector.load %arg12[%c0_9, %c0_10] : memref<96x128xf32, #tpu.memory_space<vmem>>, vector<64x128xf32>
    %cst_11 = arith.constant dense<0.000000e+00> : vector<16x128xf32>
    %9 = tpu.matmul %1, %8, %cst_11 {dimension_numbers = #tpu.dot_dimension_numbers<[1], [0], [0], [1], [0, 0, 1, 1], [], []>} : vector<16x64xf32>, vector<64x128xf32>, vector<16x128xf32> -> vector<16x128xf32>
    %c0_12 = arith.constant 0 : index
    %c0_13 = arith.constant 0 : index
    %10 = vector.load %arg4[%c0_12, %c0_13] : memref<16x1xf32, #tpu.memory_space<vmem>>, vector<16x1xf32>
    %11 = vector.broadcast %10 : vector<16x1xf32> to vector<16x128xf32>
    %12 = arith.addf %9, %11 : vector<16x128xf32>
    %13 = vector.broadcast %0 : vector<1x128xf32> to vector<16x128xf32>
    %14 = arith.mulf %12, %13 : vector<16x128xf32>
    %c0_14 = arith.constant 0 : index
    %c0_15 = arith.constant 0 : index
    %15 = vector.load %arg5[%c0_14, %c0_15] : memref<16x96xf32, #tpu.memory_space<vmem>>, vector<16x96xf32>
    %c0_16 = arith.constant 0 : index
    %c0_17 = arith.constant 0 : index
    %16 = vector.load %arg1[%c0_16, %c0_17] : memref<16x128xf32, #tpu.memory_space<vmem>>, vector<16x128xf32>
    %17 = vector.extract_strided_slice %14 {offsets = [0, 0], sizes = [16, 127], strides = [1, 1]} : vector<16x128xf32> to vector<16x127xf32>
    %c0_18 = arith.constant 0 : index
    %c1_19 = arith.constant 1 : index
    %18 = vector.load %arg12[%c0_18, %c1_19] : memref<96x128xf32, #tpu.memory_space<vmem>>, vector<16x127xf32>
    tpu.vector_store %arg12[%c0_18, %c1_19], %17 {strides = array<i32>} : memref<96x128xf32, #tpu.memory_space<vmem>>, vector<16x127xf32>,
    %cst_20 = arith.constant 0.000000e+00 : f32
    %19 = vector.broadcast %cst_20 : f32 to vector<16x1xf32>
    %c0_21 = arith.constant 0 : index
    %c0_22 = arith.constant 0 : index
    %20 = vector.load %arg12[%c0_21, %c0_22] : memref<96x128xf32, #tpu.memory_space<vmem>>, vector<16x1xf32>
    tpu.vector_store %arg12[%c0_21, %c0_22], %19 {strides = array<i32>} : memref<96x128xf32, #tpu.memory_space<vmem>>, vector<16x1xf32>,
    %21 = vector.extract_strided_slice %16 {offsets = [0, 0], sizes = [16, 127], strides = [1, 1]} : vector<16x128xf32> to vector<16x127xf32>
    %c16 = arith.constant 16 : index
    %c1_23 = arith.constant 1 : index
    %22 = vector.load %arg12[%c16, %c1_23] : memref<96x128xf32, #tpu.memory_space<vmem>>, vector<16x127xf32>
    tpu.vector_store %arg12[%c16, %c1_23], %21 {strides = array<i32>} : memref<96x128xf32, #tpu.memory_space<vmem>>, vector<16x127xf32>,
    %cst_24 = arith.constant 0.000000e+00 : f32
    %23 = vector.broadcast %cst_24 : f32 to vector<16x1xf32>
    %c16_25 = arith.constant 16 : index
    %c0_26 = arith.constant 0 : index
    %24 = vector.load %arg12[%c16_25, %c0_26] : memref<96x128xf32, #tpu.memory_space<vmem>>, vector<16x1xf32>
    tpu.vector_store %arg12[%c16_25, %c0_26], %23 {strides = array<i32>} : memref<96x128xf32, #tpu.memory_space<vmem>>, vector<16x1xf32>,
    %c32_27 = arith.constant 32 : index
    %c0_28 = arith.constant 0 : index
    %25 = vector.load %arg12[%c32_27, %c0_28] : memref<96x128xf32, #tpu.memory_space<vmem>>, vector<16x128xf32>
    tpu.vector_store %arg12[%c32_27, %c0_28], %14 {strides = array<i32>} : memref<96x128xf32, #tpu.memory_space<vmem>>, vector<16x128xf32>,
    %c48 = arith.constant 48 : index
    %c0_29 = arith.constant 0 : index
    %26 = vector.load %arg12[%c48, %c0_29] : memref<96x128xf32, #tpu.memory_space<vmem>>, vector<16x128xf32>
    tpu.vector_store %arg12[%c48, %c0_29], %16 {strides = array<i32>} : memref<96x128xf32, #tpu.memory_space<vmem>>, vector<16x128xf32>,
    %27 = vector.extract_strided_slice %14 {offsets = [0, 1], sizes = [16, 127], strides = [1, 1]} : vector<16x128xf32> to vector<16x127xf32>
    %c64 = arith.constant 64 : index
    %c0_30 = arith.constant 0 : index
    %28 = vector.load %arg12[%c64, %c0_30] : memref<96x128xf32, #tpu.memory_space<vmem>>, vector<16x127xf32>
    tpu.vector_store %arg12[%c64, %c0_30], %27 {strides = array<i32>} : memref<96x128xf32, #tpu.memory_space<vmem>>, vector<16x127xf32>,
    %cst_31 = arith.constant 0.000000e+00 : f32
    %29 = vector.broadcast %cst_31 : f32 to vector<16x1xf32>
    %c64_32 = arith.constant 64 : index
    %c127 = arith.constant 127 : index
    %30 = vector.load %arg12[%c64_32, %c127] : memref<96x128xf32, #tpu.memory_space<vmem>>, vector<16x1xf32>
    tpu.vector_store %arg12[%c64_32, %c127], %29 {strides = array<i32>} : memref<96x128xf32, #tpu.memory_space<vmem>>, vector<16x1xf32>,
    %31 = vector.extract_strided_slice %16 {offsets = [0, 1], sizes = [16, 127], strides = [1, 1]} : vector<16x128xf32> to vector<16x127xf32>
    %c80 = arith.constant 80 : index
    %c0_33 = arith.constant 0 : index
    %32 = vector.load %arg12[%c80, %c0_33] : memref<96x128xf32, #tpu.memory_space<vmem>>, vector<16x127xf32>
    tpu.vector_store %arg12[%c80, %c0_33], %31 {strides = array<i32>} : memref<96x128xf32, #tpu.memory_space<vmem>>, vector<16x127xf32>,
    %cst_34 = arith.constant 0.000000e+00 : f32
    %33 = vector.broadcast %cst_34 : f32 to vector<16x1xf32>
    %c80_35 = arith.constant 80 : index
    %c127_36 = arith.constant 127 : index
    %34 = vector.load %arg12[%c80_35, %c127_36] : memref<96x128xf32, #tpu.memory_space<vmem>>, vector<16x1xf32>
    tpu.vector_store %arg12[%c80_35, %c127_36], %33 {strides = array<i32>} : memref<96x128xf32, #tpu.memory_space<vmem>>, vector<16x1xf32>,
    %c0_37 = arith.constant 0 : index
    %c0_38 = arith.constant 0 : index
    %35 = vector.load %arg12[%c0_37, %c0_38] : memref<96x128xf32, #tpu.memory_space<vmem>>, vector<96x128xf32>
    %cst_39 = arith.constant dense<0.000000e+00> : vector<16x128xf32>
    %36 = tpu.matmul %15, %35, %cst_39 {dimension_numbers = #tpu.dot_dimension_numbers<[1], [0], [0], [1], [0, 0, 1, 1], [], []>} : vector<16x96xf32>, vector<96x128xf32>, vector<16x128xf32> -> vector<16x128xf32>
    %c0_40 = arith.constant 0 : index
    %c0_41 = arith.constant 0 : index
    %37 = vector.load %arg6[%c0_40, %c0_41] : memref<16x1xf32, #tpu.memory_space<vmem>>, vector<16x1xf32>
    %c0_42 = arith.constant 0 : index
    %c0_43 = arith.constant 0 : index
    %38 = vector.load %arg7[%c0_42, %c0_43] : memref<16x1xf32, #tpu.memory_space<vmem>>, vector<16x1xf32>
    %39 = vector.broadcast %0 : vector<1x128xf32> to vector<16x128xf32>
    %40 = arith.mulf %36, %39 : vector<16x128xf32>
    %cst_44 = arith.constant dense<0.000000e+00> : vector<16xf32>
    %41 = vector.multi_reduction <add>, %40, %cst_44 [1] : vector<16x128xf32> to vector<16xf32>
    %42 = vector.shape_cast %41 : vector<16xf32> to vector<16x1xf32>
    %cst_45 = arith.constant 2.500000e-02 : f32
    %43 = vector.broadcast %cst_45 : f32 to vector<16x1xf32>
    %44 = arith.mulf %42, %43 : vector<16x1xf32>
    %45 = vector.broadcast %44 : vector<16x1xf32> to vector<16x128xf32>
    %46 = arith.subf %36, %45 : vector<16x128xf32>
    %47 = vector.broadcast %0 : vector<1x128xf32> to vector<16x128xf32>
    %48 = arith.mulf %46, %47 : vector<16x128xf32>
    %49 = arith.mulf %48, %48 : vector<16x128xf32>
    %cst_46 = arith.constant dense<0.000000e+00> : vector<16xf32>
    %50 = vector.multi_reduction <add>, %49, %cst_46 [1] : vector<16x128xf32> to vector<16xf32>
    %51 = vector.shape_cast %50 : vector<16xf32> to vector<16x1xf32>
    %cst_47 = arith.constant 2.500000e-02 : f32
    %52 = vector.broadcast %cst_47 : f32 to vector<16x1xf32>
    %53 = arith.mulf %51, %52 : vector<16x1xf32>
    %cst_48 = arith.constant 9.99999974E-6 : f32
    %54 = vector.broadcast %cst_48 : f32 to vector<16x1xf32>
    %55 = arith.addf %53, %54 : vector<16x1xf32>
    %56 = math.rsqrt %55 : vector<16x1xf32>
    %57 = arith.mulf %56, %37 : vector<16x1xf32>
    %58 = vector.broadcast %57 : vector<16x1xf32> to vector<16x128xf32>
    %59 = arith.mulf %48, %58 : vector<16x128xf32>
    %60 = vector.broadcast %38 : vector<16x1xf32> to vector<16x128xf32>
    %61 = arith.addf %59, %60 : vector<16x128xf32>
    %62 = math.tanh %61 : vector<16x128xf32>
    %63 = vector.broadcast %0 : vector<1x128xf32> to vector<16x128xf32>
    %64 = arith.mulf %62, %63 : vector<16x128xf32>
    %c0_49 = arith.constant 0 : index
    %c0_50 = arith.constant 0 : index
    %65 = vector.load %arg8[%c0_49, %c0_50] : memref<16x48xf32, #tpu.memory_space<vmem>>, vector<16x48xf32>
    %66 = vector.extract_strided_slice %64 {offsets = [0, 0], sizes = [16, 127], strides = [1, 1]} : vector<16x128xf32> to vector<16x127xf32>
    %c0_51 = arith.constant 0 : index
    %c1_52 = arith.constant 1 : index
    %67 = vector.load %arg12[%c0_51, %c1_52] : memref<96x128xf32, #tpu.memory_space<vmem>>, vector<16x127xf32>
    tpu.vector_store %arg12[%c0_51, %c1_52], %66 {strides = array<i32>} : memref<96x128xf32, #tpu.memory_space<vmem>>, vector<16x127xf32>,
    %cst_53 = arith.constant 0.000000e+00 : f32
    %68 = vector.broadcast %cst_53 : f32 to vector<16x1xf32>
    %c0_54 = arith.constant 0 : index
    %c0_55 = arith.constant 0 : index
    %69 = vector.load %arg12[%c0_54, %c0_55] : memref<96x128xf32, #tpu.memory_space<vmem>>, vector<16x1xf32>
    tpu.vector_store %arg12[%c0_54, %c0_55], %68 {strides = array<i32>} : memref<96x128xf32, #tpu.memory_space<vmem>>, vector<16x1xf32>,
    %c16_56 = arith.constant 16 : index
    %c0_57 = arith.constant 0 : index
    %70 = vector.load %arg12[%c16_56, %c0_57] : memref<96x128xf32, #tpu.memory_space<vmem>>, vector<16x128xf32>
    tpu.vector_store %arg12[%c16_56, %c0_57], %64 {strides = array<i32>} : memref<96x128xf32, #tpu.memory_space<vmem>>, vector<16x128xf32>,
    %71 = vector.extract_strided_slice %64 {offsets = [0, 1], sizes = [16, 127], strides = [1, 1]} : vector<16x128xf32> to vector<16x127xf32>
    %c32_58 = arith.constant 32 : index
    %c0_59 = arith.constant 0 : index
    %72 = vector.load %arg12[%c32_58, %c0_59] : memref<96x128xf32, #tpu.memory_space<vmem>>, vector<16x127xf32>
    tpu.vector_store %arg12[%c32_58, %c0_59], %71 {strides = array<i32>} : memref<96x128xf32, #tpu.memory_space<vmem>>, vector<16x127xf32>,
    %cst_60 = arith.constant 0.000000e+00 : f32
    %73 = vector.broadcast %cst_60 : f32 to vector<16x1xf32>
    %c32_61 = arith.constant 32 : index
    %c127_62 = arith.constant 127 : index
    %74 = vector.load %arg12[%c32_61, %c127_62] : memref<96x128xf32, #tpu.memory_space<vmem>>, vector<16x1xf32>
    tpu.vector_store %arg12[%c32_61, %c127_62], %73 {strides = array<i32>} : memref<96x128xf32, #tpu.memory_space<vmem>>, vector<16x1xf32>,
    %c0_63 = arith.constant 0 : index
    %c0_64 = arith.constant 0 : index
    %75 = vector.load %arg12[%c0_63, %c0_64] : memref<96x128xf32, #tpu.memory_space<vmem>>, vector<48x128xf32>
    %cst_65 = arith.constant dense<0.000000e+00> : vector<16x128xf32>
    %76 = tpu.matmul %65, %75, %cst_65 {dimension_numbers = #tpu.dot_dimension_numbers<[1], [0], [0], [1], [0, 0, 1, 1], [], []>} : vector<16x48xf32>, vector<48x128xf32>, vector<16x128xf32> -> vector<16x128xf32>
    %c0_66 = arith.constant 0 : index
    %c0_67 = arith.constant 0 : index
    %77 = vector.load %arg9[%c0_66, %c0_67] : memref<16x1xf32, #tpu.memory_space<vmem>>, vector<16x1xf32>
    %c0_68 = arith.constant 0 : index
    %c0_69 = arith.constant 0 : index
    %78 = vector.load %arg10[%c0_68, %c0_69] : memref<16x1xf32, #tpu.memory_space<vmem>>, vector<16x1xf32>
    %79 = vector.broadcast %0 : vector<1x128xf32> to vector<16x128xf32>
    %80 = arith.mulf %76, %79 : vector<16x128xf32>
    %cst_70 = arith.constant dense<0.000000e+00> : vector<16xf32>
    %81 = vector.multi_reduction <add>, %80, %cst_70 [1] : vector<16x128xf32> to vector<16xf32>
    %82 = vector.shape_cast %81 : vector<16xf32> to vector<16x1xf32>
    %cst_71 = arith.constant 2.500000e-02 : f32
    %83 = vector.broadcast %cst_71 : f32 to vector<16x1xf32>
    %84 = arith.mulf %82, %83 : vector<16x1xf32>
    %85 = vector.broadcast %84 : vector<16x1xf32> to vector<16x128xf32>
    %86 = arith.subf %76, %85 : vector<16x128xf32>
    %87 = vector.broadcast %0 : vector<1x128xf32> to vector<16x128xf32>
    %88 = arith.mulf %86, %87 : vector<16x128xf32>
    %89 = arith.mulf %88, %88 : vector<16x128xf32>
    %cst_72 = arith.constant dense<0.000000e+00> : vector<16xf32>
    %90 = vector.multi_reduction <add>, %89, %cst_72 [1] : vector<16x128xf32> to vector<16xf32>
    %91 = vector.shape_cast %90 : vector<16xf32> to vector<16x1xf32>
    %cst_73 = arith.constant 2.500000e-02 : f32
    %92 = vector.broadcast %cst_73 : f32 to vector<16x1xf32>
    %93 = arith.mulf %91, %92 : vector<16x1xf32>
    %cst_74 = arith.constant 9.99999974E-6 : f32
    %94 = vector.broadcast %cst_74 : f32 to vector<16x1xf32>
    %95 = arith.addf %93, %94 : vector<16x1xf32>
    %96 = math.rsqrt %95 : vector<16x1xf32>
    %97 = arith.mulf %96, %77 : vector<16x1xf32>
    %98 = vector.broadcast %97 : vector<16x1xf32> to vector<16x128xf32>
    %99 = arith.mulf %88, %98 : vector<16x128xf32>
    %100 = vector.broadcast %78 : vector<16x1xf32> to vector<16x128xf32>
    %101 = arith.addf %99, %100 : vector<16x128xf32>
    %102 = math.tanh %101 : vector<16x128xf32>
    %103 = vector.broadcast %0 : vector<1x128xf32> to vector<16x128xf32>
    %104 = arith.mulf %102, %103 : vector<16x128xf32>
    %c0_75 = arith.constant 0 : index
    %c0_76 = arith.constant 0 : index
    %105 = vector.load %arg11[%c0_75, %c0_76] : memref<16x128xf32, #tpu.memory_space<vmem>>, vector<16x128xf32>
    tpu.vector_store %arg11[%c0_75, %c0_76], %104 {strides = array<i32>} : memref<16x128xf32, #tpu.memory_space<vmem>>, vector<16x128xf32>,
    return
  }
}

module attributes {stable_mosaic.version = 11 : i64} {
  func.func @_dec_block_kernel(%arg0: memref<16x128xf32, #tpu.memory_space<vmem>>, %arg1: memref<8x128xf32, #tpu.memory_space<vmem>>, %arg2: memref<1x128xf32, #tpu.memory_space<vmem>>, %arg3: memref<8x32xf32, #tpu.memory_space<vmem>>, %arg4: memref<8x1xf32, #tpu.memory_space<vmem>>, %arg5: memref<8x48xf32, #tpu.memory_space<vmem>>, %arg6: memref<8x1xf32, #tpu.memory_space<vmem>>, %arg7: memref<8x1xf32, #tpu.memory_space<vmem>>, %arg8: memref<8x24xf32, #tpu.memory_space<vmem>>, %arg9: memref<8x1xf32, #tpu.memory_space<vmem>>, %arg10: memref<8x1xf32, #tpu.memory_space<vmem>>, %arg11: memref<4x8xf32, #tpu.memory_space<vmem>>, %arg12: memref<4x1xf32, #tpu.memory_space<vmem>>, %arg13: memref<4x128xf32, #tpu.memory_space<vmem>>, %arg14: memref<48x128xf32, #tpu.memory_space<vmem>>) attributes {dimension_semantics = [], scalar_prefetch = 0 : i64, scratch_operands = 1 : i64, tpu.core_type = #tpu.core_type<tc>} {
    %c0 = arith.constant 0 : index
    %c0_0 = arith.constant 0 : index
    %0 = vector.load %arg2[%c0, %c0_0] : memref<1x128xf32, #tpu.memory_space<vmem>>, vector<1x128xf32>
    %c0_1 = arith.constant 0 : index
    %c0_2 = arith.constant 0 : index
    %1 = vector.load %arg3[%c0_1, %c0_2] : memref<8x32xf32, #tpu.memory_space<vmem>>, vector<8x32xf32>
    %c0_3 = arith.constant 0 : index
    %c0_4 = arith.constant 0 : index
    %2 = vector.load %arg0[%c0_3, %c0_4] : memref<16x128xf32, #tpu.memory_space<vmem>>, vector<16x128xf32>
    %3 = vector.extract_strided_slice %2 {offsets = [0, 0], sizes = [16, 127], strides = [1, 1]} : vector<16x128xf32> to vector<16x127xf32>
    %c0_5 = arith.constant 0 : index
    %c1 = arith.constant 1 : index
    %4 = vector.load %arg14[%c0_5, %c1] : memref<48x128xf32, #tpu.memory_space<vmem>>, vector<16x127xf32>
    tpu.vector_store %arg14[%c0_5, %c1], %3 {strides = array<i32>} : memref<48x128xf32, #tpu.memory_space<vmem>>, vector<16x127xf32>,
    %cst = arith.constant 0.000000e+00 : f32
    %5 = vector.broadcast %cst : f32 to vector<16x1xf32>
    %c0_6 = arith.constant 0 : index
    %c0_7 = arith.constant 0 : index
    %6 = vector.load %arg14[%c0_6, %c0_7] : memref<48x128xf32, #tpu.memory_space<vmem>>, vector<16x1xf32>
    tpu.vector_store %arg14[%c0_6, %c0_7], %5 {strides = array<i32>} : memref<48x128xf32, #tpu.memory_space<vmem>>, vector<16x1xf32>,
    %c16 = arith.constant 16 : index
    %c0_8 = arith.constant 0 : index
    %7 = vector.load %arg14[%c16, %c0_8] : memref<48x128xf32, #tpu.memory_space<vmem>>, vector<16x128xf32>
    tpu.vector_store %arg14[%c16, %c0_8], %2 {strides = array<i32>} : memref<48x128xf32, #tpu.memory_space<vmem>>, vector<16x128xf32>,
    %c0_9 = arith.constant 0 : index
    %c0_10 = arith.constant 0 : index
    %8 = vector.load %arg14[%c0_9, %c0_10] : memref<48x128xf32, #tpu.memory_space<vmem>>, vector<32x128xf32>
    %cst_11 = arith.constant dense<0.000000e+00> : vector<8x128xf32>
    %9 = tpu.matmul %1, %8, %cst_11 {dimension_numbers = #tpu.dot_dimension_numbers<[1], [0], [0], [1], [0, 0, 1, 1], [], []>} : vector<8x32xf32>, vector<32x128xf32>, vector<8x128xf32> -> vector<8x128xf32>
    %c0_12 = arith.constant 0 : index
    %c0_13 = arith.constant 0 : index
    %10 = vector.load %arg4[%c0_12, %c0_13] : memref<8x1xf32, #tpu.memory_space<vmem>>, vector<8x1xf32>
    %11 = vector.broadcast %10 : vector<8x1xf32> to vector<8x128xf32>
    %12 = arith.addf %9, %11 : vector<8x128xf32>
    %13 = vector.broadcast %0 : vector<1x128xf32> to vector<8x128xf32>
    %14 = arith.mulf %12, %13 : vector<8x128xf32>
    %c0_14 = arith.constant 0 : index
    %c0_15 = arith.constant 0 : index
    %15 = vector.load %arg5[%c0_14, %c0_15] : memref<8x48xf32, #tpu.memory_space<vmem>>, vector<8x48xf32>
    %c0_16 = arith.constant 0 : index
    %c0_17 = arith.constant 0 : index
    %16 = vector.load %arg1[%c0_16, %c0_17] : memref<8x128xf32, #tpu.memory_space<vmem>>, vector<8x128xf32>
    %17 = vector.extract_strided_slice %14 {offsets = [0, 0], sizes = [8, 127], strides = [1, 1]} : vector<8x128xf32> to vector<8x127xf32>
    %c0_18 = arith.constant 0 : index
    %c1_19 = arith.constant 1 : index
    %18 = vector.load %arg14[%c0_18, %c1_19] : memref<48x128xf32, #tpu.memory_space<vmem>>, vector<8x127xf32>
    tpu.vector_store %arg14[%c0_18, %c1_19], %17 {strides = array<i32>} : memref<48x128xf32, #tpu.memory_space<vmem>>, vector<8x127xf32>,
    %cst_20 = arith.constant 0.000000e+00 : f32
    %19 = vector.broadcast %cst_20 : f32 to vector<8x1xf32>
    %c0_21 = arith.constant 0 : index
    %c0_22 = arith.constant 0 : index
    %20 = vector.load %arg14[%c0_21, %c0_22] : memref<48x128xf32, #tpu.memory_space<vmem>>, vector<8x1xf32>
    tpu.vector_store %arg14[%c0_21, %c0_22], %19 {strides = array<i32>} : memref<48x128xf32, #tpu.memory_space<vmem>>, vector<8x1xf32>,
    %21 = vector.extract_strided_slice %16 {offsets = [0, 0], sizes = [8, 127], strides = [1, 1]} : vector<8x128xf32> to vector<8x127xf32>
    %c8 = arith.constant 8 : index
    %c1_23 = arith.constant 1 : index
    %22 = vector.load %arg14[%c8, %c1_23] : memref<48x128xf32, #tpu.memory_space<vmem>>, vector<8x127xf32>
    tpu.vector_store %arg14[%c8, %c1_23], %21 {strides = array<i32>} : memref<48x128xf32, #tpu.memory_space<vmem>>, vector<8x127xf32>,
    %cst_24 = arith.constant 0.000000e+00 : f32
    %23 = vector.broadcast %cst_24 : f32 to vector<8x1xf32>
    %c8_25 = arith.constant 8 : index
    %c0_26 = arith.constant 0 : index
    %24 = vector.load %arg14[%c8_25, %c0_26] : memref<48x128xf32, #tpu.memory_space<vmem>>, vector<8x1xf32>
    tpu.vector_store %arg14[%c8_25, %c0_26], %23 {strides = array<i32>} : memref<48x128xf32, #tpu.memory_space<vmem>>, vector<8x1xf32>,
    %c16_27 = arith.constant 16 : index
    %c0_28 = arith.constant 0 : index
    %25 = vector.load %arg14[%c16_27, %c0_28] : memref<48x128xf32, #tpu.memory_space<vmem>>, vector<8x128xf32>
    tpu.vector_store %arg14[%c16_27, %c0_28], %14 {strides = array<i32>} : memref<48x128xf32, #tpu.memory_space<vmem>>, vector<8x128xf32>,
    %c24 = arith.constant 24 : index
    %c0_29 = arith.constant 0 : index
    %26 = vector.load %arg14[%c24, %c0_29] : memref<48x128xf32, #tpu.memory_space<vmem>>, vector<8x128xf32>
    tpu.vector_store %arg14[%c24, %c0_29], %16 {strides = array<i32>} : memref<48x128xf32, #tpu.memory_space<vmem>>, vector<8x128xf32>,
    %27 = vector.extract_strided_slice %14 {offsets = [0, 1], sizes = [8, 127], strides = [1, 1]} : vector<8x128xf32> to vector<8x127xf32>
    %c32 = arith.constant 32 : index
    %c0_30 = arith.constant 0 : index
    %28 = vector.load %arg14[%c32, %c0_30] : memref<48x128xf32, #tpu.memory_space<vmem>>, vector<8x127xf32>
    tpu.vector_store %arg14[%c32, %c0_30], %27 {strides = array<i32>} : memref<48x128xf32, #tpu.memory_space<vmem>>, vector<8x127xf32>,
    %cst_31 = arith.constant 0.000000e+00 : f32
    %29 = vector.broadcast %cst_31 : f32 to vector<8x1xf32>
    %c32_32 = arith.constant 32 : index
    %c127 = arith.constant 127 : index
    %30 = vector.load %arg14[%c32_32, %c127] : memref<48x128xf32, #tpu.memory_space<vmem>>, vector<8x1xf32>
    tpu.vector_store %arg14[%c32_32, %c127], %29 {strides = array<i32>} : memref<48x128xf32, #tpu.memory_space<vmem>>, vector<8x1xf32>,
    %31 = vector.extract_strided_slice %16 {offsets = [0, 1], sizes = [8, 127], strides = [1, 1]} : vector<8x128xf32> to vector<8x127xf32>
    %c40 = arith.constant 40 : index
    %c0_33 = arith.constant 0 : index
    %32 = vector.load %arg14[%c40, %c0_33] : memref<48x128xf32, #tpu.memory_space<vmem>>, vector<8x127xf32>
    tpu.vector_store %arg14[%c40, %c0_33], %31 {strides = array<i32>} : memref<48x128xf32, #tpu.memory_space<vmem>>, vector<8x127xf32>,
    %cst_34 = arith.constant 0.000000e+00 : f32
    %33 = vector.broadcast %cst_34 : f32 to vector<8x1xf32>
    %c40_35 = arith.constant 40 : index
    %c127_36 = arith.constant 127 : index
    %34 = vector.load %arg14[%c40_35, %c127_36] : memref<48x128xf32, #tpu.memory_space<vmem>>, vector<8x1xf32>
    tpu.vector_store %arg14[%c40_35, %c127_36], %33 {strides = array<i32>} : memref<48x128xf32, #tpu.memory_space<vmem>>, vector<8x1xf32>,
    %c0_37 = arith.constant 0 : index
    %c0_38 = arith.constant 0 : index
    %35 = vector.load %arg14[%c0_37, %c0_38] : memref<48x128xf32, #tpu.memory_space<vmem>>, vector<48x128xf32>
    %cst_39 = arith.constant dense<0.000000e+00> : vector<8x128xf32>
    %36 = tpu.matmul %15, %35, %cst_39 {dimension_numbers = #tpu.dot_dimension_numbers<[1], [0], [0], [1], [0, 0, 1, 1], [], []>} : vector<8x48xf32>, vector<48x128xf32>, vector<8x128xf32> -> vector<8x128xf32>
    %c0_40 = arith.constant 0 : index
    %c0_41 = arith.constant 0 : index
    %37 = vector.load %arg6[%c0_40, %c0_41] : memref<8x1xf32, #tpu.memory_space<vmem>>, vector<8x1xf32>
    %c0_42 = arith.constant 0 : index
    %c0_43 = arith.constant 0 : index
    %38 = vector.load %arg7[%c0_42, %c0_43] : memref<8x1xf32, #tpu.memory_space<vmem>>, vector<8x1xf32>
    %39 = vector.broadcast %0 : vector<1x128xf32> to vector<8x128xf32>
    %40 = arith.mulf %36, %39 : vector<8x128xf32>
    %cst_44 = arith.constant dense<0.000000e+00> : vector<8xf32>
    %41 = vector.multi_reduction <add>, %40, %cst_44 [1] : vector<8x128xf32> to vector<8xf32>
    %42 = vector.shape_cast %41 : vector<8xf32> to vector<8x1xf32>
    %cst_45 = arith.constant 1.250000e-02 : f32
    %43 = vector.broadcast %cst_45 : f32 to vector<8x1xf32>
    %44 = arith.mulf %42, %43 : vector<8x1xf32>
    %45 = vector.broadcast %44 : vector<8x1xf32> to vector<8x128xf32>
    %46 = arith.subf %36, %45 : vector<8x128xf32>
    %47 = vector.broadcast %0 : vector<1x128xf32> to vector<8x128xf32>
    %48 = arith.mulf %46, %47 : vector<8x128xf32>
    %49 = arith.mulf %48, %48 : vector<8x128xf32>
    %cst_46 = arith.constant dense<0.000000e+00> : vector<8xf32>
    %50 = vector.multi_reduction <add>, %49, %cst_46 [1] : vector<8x128xf32> to vector<8xf32>
    %51 = vector.shape_cast %50 : vector<8xf32> to vector<8x1xf32>
    %cst_47 = arith.constant 1.250000e-02 : f32
    %52 = vector.broadcast %cst_47 : f32 to vector<8x1xf32>
    %53 = arith.mulf %51, %52 : vector<8x1xf32>
    %cst_48 = arith.constant 9.99999974E-6 : f32
    %54 = vector.broadcast %cst_48 : f32 to vector<8x1xf32>
    %55 = arith.addf %53, %54 : vector<8x1xf32>
    %56 = math.rsqrt %55 : vector<8x1xf32>
    %57 = arith.mulf %56, %37 : vector<8x1xf32>
    %58 = vector.broadcast %57 : vector<8x1xf32> to vector<8x128xf32>
    %59 = arith.mulf %48, %58 : vector<8x128xf32>
    %60 = vector.broadcast %38 : vector<8x1xf32> to vector<8x128xf32>
    %61 = arith.addf %59, %60 : vector<8x128xf32>
    %62 = math.tanh %61 : vector<8x128xf32>
    %63 = vector.broadcast %0 : vector<1x128xf32> to vector<8x128xf32>
    %64 = arith.mulf %62, %63 : vector<8x128xf32>
    %c0_49 = arith.constant 0 : index
    %c0_50 = arith.constant 0 : index
    %65 = vector.load %arg8[%c0_49, %c0_50] : memref<8x24xf32, #tpu.memory_space<vmem>>, vector<8x24xf32>
    %66 = vector.extract_strided_slice %64 {offsets = [0, 0], sizes = [8, 127], strides = [1, 1]} : vector<8x128xf32> to vector<8x127xf32>
    %c0_51 = arith.constant 0 : index
    %c1_52 = arith.constant 1 : index
    %67 = vector.load %arg14[%c0_51, %c1_52] : memref<48x128xf32, #tpu.memory_space<vmem>>, vector<8x127xf32>
    tpu.vector_store %arg14[%c0_51, %c1_52], %66 {strides = array<i32>} : memref<48x128xf32, #tpu.memory_space<vmem>>, vector<8x127xf32>,
    %cst_53 = arith.constant 0.000000e+00 : f32
    %68 = vector.broadcast %cst_53 : f32 to vector<8x1xf32>
    %c0_54 = arith.constant 0 : index
    %c0_55 = arith.constant 0 : index
    %69 = vector.load %arg14[%c0_54, %c0_55] : memref<48x128xf32, #tpu.memory_space<vmem>>, vector<8x1xf32>
    tpu.vector_store %arg14[%c0_54, %c0_55], %68 {strides = array<i32>} : memref<48x128xf32, #tpu.memory_space<vmem>>, vector<8x1xf32>,
    %c8_56 = arith.constant 8 : index
    %c0_57 = arith.constant 0 : index
    %70 = vector.load %arg14[%c8_56, %c0_57] : memref<48x128xf32, #tpu.memory_space<vmem>>, vector<8x128xf32>
    tpu.vector_store %arg14[%c8_56, %c0_57], %64 {strides = array<i32>} : memref<48x128xf32, #tpu.memory_space<vmem>>, vector<8x128xf32>,
    %71 = vector.extract_strided_slice %64 {offsets = [0, 1], sizes = [8, 127], strides = [1, 1]} : vector<8x128xf32> to vector<8x127xf32>
    %c16_58 = arith.constant 16 : index
    %c0_59 = arith.constant 0 : index
    %72 = vector.load %arg14[%c16_58, %c0_59] : memref<48x128xf32, #tpu.memory_space<vmem>>, vector<8x127xf32>
    tpu.vector_store %arg14[%c16_58, %c0_59], %71 {strides = array<i32>} : memref<48x128xf32, #tpu.memory_space<vmem>>, vector<8x127xf32>,
    %cst_60 = arith.constant 0.000000e+00 : f32
    %73 = vector.broadcast %cst_60 : f32 to vector<8x1xf32>
    %c16_61 = arith.constant 16 : index
    %c127_62 = arith.constant 127 : index
    %74 = vector.load %arg14[%c16_61, %c127_62] : memref<48x128xf32, #tpu.memory_space<vmem>>, vector<8x1xf32>
    tpu.vector_store %arg14[%c16_61, %c127_62], %73 {strides = array<i32>} : memref<48x128xf32, #tpu.memory_space<vmem>>, vector<8x1xf32>,
    %c0_63 = arith.constant 0 : index
    %c0_64 = arith.constant 0 : index
    %75 = vector.load %arg14[%c0_63, %c0_64] : memref<48x128xf32, #tpu.memory_space<vmem>>, vector<24x128xf32>
    %cst_65 = arith.constant dense<0.000000e+00> : vector<8x128xf32>
    %76 = tpu.matmul %65, %75, %cst_65 {dimension_numbers = #tpu.dot_dimension_numbers<[1], [0], [0], [1], [0, 0, 1, 1], [], []>} : vector<8x24xf32>, vector<24x128xf32>, vector<8x128xf32> -> vector<8x128xf32>
    %c0_66 = arith.constant 0 : index
    %c0_67 = arith.constant 0 : index
    %77 = vector.load %arg9[%c0_66, %c0_67] : memref<8x1xf32, #tpu.memory_space<vmem>>, vector<8x1xf32>
    %c0_68 = arith.constant 0 : index
    %c0_69 = arith.constant 0 : index
    %78 = vector.load %arg10[%c0_68, %c0_69] : memref<8x1xf32, #tpu.memory_space<vmem>>, vector<8x1xf32>
    %79 = vector.broadcast %0 : vector<1x128xf32> to vector<8x128xf32>
    %80 = arith.mulf %76, %79 : vector<8x128xf32>
    %cst_70 = arith.constant dense<0.000000e+00> : vector<8xf32>
    %81 = vector.multi_reduction <add>, %80, %cst_70 [1] : vector<8x128xf32> to vector<8xf32>
    %82 = vector.shape_cast %81 : vector<8xf32> to vector<8x1xf32>
    %cst_71 = arith.constant 1.250000e-02 : f32
    %83 = vector.broadcast %cst_71 : f32 to vector<8x1xf32>
    %84 = arith.mulf %82, %83 : vector<8x1xf32>
    %85 = vector.broadcast %84 : vector<8x1xf32> to vector<8x128xf32>
    %86 = arith.subf %76, %85 : vector<8x128xf32>
    %87 = vector.broadcast %0 : vector<1x128xf32> to vector<8x128xf32>
    %88 = arith.mulf %86, %87 : vector<8x128xf32>
    %89 = arith.mulf %88, %88 : vector<8x128xf32>
    %cst_72 = arith.constant dense<0.000000e+00> : vector<8xf32>
    %90 = vector.multi_reduction <add>, %89, %cst_72 [1] : vector<8x128xf32> to vector<8xf32>
    %91 = vector.shape_cast %90 : vector<8xf32> to vector<8x1xf32>
    %cst_73 = arith.constant 1.250000e-02 : f32
    %92 = vector.broadcast %cst_73 : f32 to vector<8x1xf32>
    %93 = arith.mulf %91, %92 : vector<8x1xf32>
    %cst_74 = arith.constant 9.99999974E-6 : f32
    %94 = vector.broadcast %cst_74 : f32 to vector<8x1xf32>
    %95 = arith.addf %93, %94 : vector<8x1xf32>
    %96 = math.rsqrt %95 : vector<8x1xf32>
    %97 = arith.mulf %96, %77 : vector<8x1xf32>
    %98 = vector.broadcast %97 : vector<8x1xf32> to vector<8x128xf32>
    %99 = arith.mulf %88, %98 : vector<8x128xf32>
    %100 = vector.broadcast %78 : vector<8x1xf32> to vector<8x128xf32>
    %101 = arith.addf %99, %100 : vector<8x128xf32>
    %102 = math.tanh %101 : vector<8x128xf32>
    %103 = vector.broadcast %0 : vector<1x128xf32> to vector<8x128xf32>
    %104 = arith.mulf %102, %103 : vector<8x128xf32>
    %c0_75 = arith.constant 0 : index
    %c0_76 = arith.constant 0 : index
    %105 = vector.load %arg11[%c0_75, %c0_76] : memref<4x8xf32, #tpu.memory_space<vmem>>, vector<4x8xf32>
    %cst_77 = arith.constant dense<0.000000e+00> : vector<4x128xf32>
    %106 = tpu.matmul %105, %104, %cst_77 {dimension_numbers = #tpu.dot_dimension_numbers<[1], [0], [0], [1], [0, 0, 1, 1], [], []>} : vector<4x8xf32>, vector<8x128xf32>, vector<4x128xf32> -> vector<4x128xf32>
    %c0_78 = arith.constant 0 : index
    %c0_79 = arith.constant 0 : index
    %107 = vector.load %arg12[%c0_78, %c0_79] : memref<4x1xf32, #tpu.memory_space<vmem>>, vector<4x1xf32>
    %108 = vector.broadcast %107 : vector<4x1xf32> to vector<4x128xf32>
    %109 = arith.addf %106, %108 : vector<4x128xf32>
    %c0_80 = arith.constant 0 : index
    %c0_81 = arith.constant 0 : index
    %110 = vector.load %arg13[%c0_80, %c0_81] : memref<4x128xf32, #tpu.memory_space<vmem>>, vector<4x128xf32>
    tpu.vector_store %arg13[%c0_80, %c0_81], %109 {strides = array<i32>} : memref<4x128xf32, #tpu.memory_space<vmem>>, vector<4x128xf32>,
    return
  }
}

</mosaic_0001>

<llo_original>
// kernel: unet1d_forward.9
$region0: #{unet1d_forward.9}
  #allocation0 [shape = 'u32[]', space=smem, size = 0x4, offset = 0x4, fixed_abs, tag = 'smem constant byte address 0x4 - core index']
  #allocation1 [shape = 'u32[144,128]{1,0:T(1,128)}', space=vmem, size = 0x12000, scoped, tag = 'internal scratch']
  #allocation2 [shape = 'f32[24,128]{1,0:T(8,128)}', space=vmem, size = 0x3000, scoped, tag = 'scratch operand']
  %s0 = inlined_call_operand.vmem [shape: f32[8,128], index: 0, kind: input, shape index: {}]
  %s1 = inlined_call_operand.vmem [shape: f32[1,128], index: 1, kind: input, shape index: {}]
  %s2 = inlined_call_operand.vmem [shape: f32[8,24], index: 2, kind: input, shape index: {}]
  %s3 = inlined_call_operand.vmem [shape: f32[8,1], index: 3, kind: input, shape index: {}]
  %s4 = inlined_call_operand.vmem [shape: f32[8,1], index: 4, kind: input, shape index: {}]
  %s5 = inlined_call_operand.vmem [shape: f32[8,24], index: 5, kind: input, shape index: {}]
  %s6 = inlined_call_operand.vmem [shape: f32[8,1], index: 6, kind: input, shape index: {}]
  %s7 = inlined_call_operand.vmem [shape: f32[8,1], index: 7, kind: input, shape index: {}]
  %s8 = inlined_call_operand.vmem [shape: f32[8,128], index: 8, kind: output, shape index: {}]
  %s9 = sld [smem:[#allocation0]]
  $region42: #{unet1d_forward.9} parent=0
    _
  %s11 = ssub.s32 1, %s9
  %s12 = scalar_select 0, %s11, %s9
  // Predicated region
  $region2: #{unet1d_forward.9} parent=0 // pred_check
    _
  $region3: #{unet1d_forward.9} parent=0 // pred_check_branch
    %14 = sbr.rel (0) target = $region5
  $region4: #{unet1d_forward.9} parent=0 // pred_region
    _
  $region5: #{unet1d_forward.9} parent=0 // pred_fallthru
    _
  // Predicated region
  $region6: #{unet1d_forward.9} parent=0 // pred_check
    _
  $region7: #{unet1d_forward.9} parent=0 // pred_check_branch
    %16 = sbr.rel (0) target = $region9
  $region8: #{unet1d_forward.9} parent=0 // pred_region
    _
  $region9: #{unet1d_forward.9} parent=0 // pred_fallthru
    _
  // Predicated region
  $region10: #{unet1d_forward.9} parent=0 // pred_check
    _
  $region11: #{unet1d_forward.9} parent=0 // pred_check_branch
    %18 = sbr.rel (0) target = $region13
  $region12: #{unet1d_forward.9} parent=0 // pred_region
    _
  $region13: #{unet1d_forward.9} parent=0 // pred_fallthru
    _
  // Predicated region
  $region14: #{unet1d_forward.9} parent=0 // pred_check
    _
  $region15: #{unet1d_forward.9} parent=0 // pred_check_branch
    %20 = sbr.rel (0) target = $region17
  $region16: #{unet1d_forward.9} parent=0 // pred_region
    _
  $region17: #{unet1d_forward.9} parent=0 // pred_fallthru
    _
  // Predicated region
  $region18: #{unet1d_forward.9} parent=0 // pred_check
    _
  $region19: #{unet1d_forward.9} parent=0 // pred_check_branch
    %22 = sbr.rel (0) target = $region21
  $region20: #{unet1d_forward.9} parent=0 // pred_region
    _
  $region21: #{unet1d_forward.9} parent=0 // pred_fallthru
    _
  // Predicated region
  $region22: #{unet1d_forward.9} parent=0 // pred_check
    _
  $region23: #{unet1d_forward.9} parent=0 // pred_check_branch
    %24 = sbr.rel (0) target = $region25
  $region24: #{unet1d_forward.9} parent=0 // pred_region
    _
  $region25: #{unet1d_forward.9} parent=0 // pred_fallthru
    _
  // Predicated region
  $region26: #{unet1d_forward.9} parent=0 // pred_check
    _
  $region27: #{unet1d_forward.9} parent=0 // pred_check_branch
    %26 = sbr.rel (0) target = $region29
  $region28: #{unet1d_forward.9} parent=0 // pred_region
    _
  $region29: #{unet1d_forward.9} parent=0 // pred_fallthru
    _
  // Predicated region
  $region30: #{unet1d_forward.9} parent=0 // pred_check
    _
  $region31: #{unet1d_forward.9} parent=0 // pred_check_branch
    %28 = sbr.rel (0) target = $region33
  $region32: #{unet1d_forward.9} parent=0 // pred_region
    _
  $region33: #{unet1d_forward.9} parent=0 // pred_fallthru
    _
  %v29 = vld [vmem:[%s1] sm:$0x1]
  %v30 = vld [vmem:[%s2] sm:$0xff]
  %v31 = vld [vmem:[%s0] sm:$0xff]
  %33 = vrot.lane.b32.xlu0 %v31, 1
  %v34 = vpop.permute.xlu0 %33
  %vm36 = vcmask 1047560
  %37 = vst.msk [vmem:[#allocation2] sm:$0xff] %vm36, %v34
  %vm38 = vcmask 7168
  %39 = vst.msk [vmem:[#allocation2] sm:$0xff] %vm38, 0.0
  %40 = vst [vmem:[#allocation2 + $0x8] sm:$0xff] %v31
  %41 = vrot.lane.b32.xlu0 %v31, 127
  %v42 = vpop.permute.xlu0 %41
  %vm44 = vcmask 1039360
  %45 = vst.msk [vmem:[#allocation2 + $0x10] sm:$0xff] %vm44, %v42
  %vm46 = vcmask 1048568
  %47 = vst.msk [vmem:[#allocation2 + $0x10] sm:$0xff] %vm46, 0.0
  %v48 = vld [vmem:[#allocation2] sm:$0xff]
  %v49 = vld [vmem:[#allocation2 + $0x8] sm:$0xff]
  %v50 = vld [vmem:[#allocation2 + $0x10] sm:$0xff]
  %vm51 = vcmask 195584
  %v53 = vsel %vm51, %v30, 0
  %55 = vmatprep.subr.mxu0 0.0
  %56 = vmatpush1.msra.mxu0 0.0
  %57 = vmatprep.subr.mxu0 0.0
  %58 = vmatpush1.msra.mxu0 0.0
  %59 = vmatprep.subr.mxu0 0.0
  %60 = vmatpush1.msra.mxu0 0.0
  %61 = vmatprep.subr.mxu0 0.0
  %62 = vmatpush1.msra.mxu0 0.0
  %63 = vmatprep.subr.mxu0 0.0
  %64 = vmatpush1.msra.mxu0 0.0
  %65 = vmatprep.subr.mxu0 0.0
  %66 = vmatpush1.msra.mxu0 0.0
  %67 = vmatprep.subr.mxu0 0.0
  %68 = vmatpush1.msra.mxu0 0.0
  %69 = vmatprep.subr.mxu0 0.0
  %70 = vmatpush1.msra.mxu0 0.0
  %71 = vmatprep.subr.mxu0 0.0
  %72 = vmatpush1.msra.mxu0 0.0
  %73 = vmatprep.subr.mxu0 0.0
  %74 = vmatpush1.msra.mxu0 0.0
  %75 = vmatprep.subr.mxu0 0.0
  %76 = vmatpush1.msra.mxu0 0.0
  %77 = vmatprep.subr.mxu0 0.0
  %78 = vmatpush1.msra.mxu0 0.0
  %79 = vmatprep.subr.mxu0 0.0
  %80 = vmatpush1.msra.mxu0 0.0
  %81 = vmatprep.subr.mxu0 0.0
  %82 = vmatpush1.msra.mxu0 %v50
  %83 = vmatprep.subr.mxu0 0.0
  %84 = vmatpush1.msra.mxu0 %v49
  %85 = vmatprep.subr.mxu0 0.0
  %86 = vmatpush1.msra.mxu0 %v48
  %87 = vmatprep.subr.mxu0 0.0
  %88 = vmatpush2.msra.mxu0 0.0
  %89 = vmatprep.subr.mxu0 0.0
  %90 = vmatpush2.msra.mxu0 0.0
  %91 = vmatprep.subr.mxu0 0.0
  %92 = vmatpush2.msra.mxu0 0.0
  %93 = vmatprep.subr.mxu0 0.0
  %94 = vmatpush2.msra.mxu0 0.0
  %95 = vmatprep.subr.mxu0 0.0
  %96 = vmatpush2.msra.mxu0 0.0
  %97 = vmatprep.subr.mxu0 0.0
  %98 = vmatpush2.msra.mxu0 0.0
  %99 = vmatprep.subr.mxu0 0.0
  %100 = vmatpush2.msra.mxu0 0.0
  %101 = vmatprep.subr.mxu0 0.0
  %102 = vmatpush2.msra.mxu0 0.0
  %103 = vmatprep.subr.mxu0 0.0
  %104 = vmatpush2.msra.mxu0 0.0
  %105 = vmatprep.subr.mxu0 0.0
  %106 = vmatpush2.msra.mxu0 0.0
  %107 = vmatprep.subr.mxu0 0.0
  %108 = vmatpush2.msra.mxu0 0.0
  %109 = vmatprep.subr.mxu0 0.0
  %110 = vmatpush2.msra.mxu0 0.0
  %111 = vmatprep.subr.mxu0 0.0
  %112 = vmatpush2.msra.mxu0 0.0
  %113 = vmatprep.subr.mxu0 0.0
  %114 = vmatpush2.msra.mxu0 0.0
  %115 = vmatprep.subr.mxu0 0.0
  %116 = vmatpush2.msra.mxu0 0.0
  %117 = vmatprep.subr.mxu0 0.0
  %118 = vmatpush2.msra.mxu0 0.0
  %119 = vmatprep.mubr.f32.mxu0 0.0
  %120 = vmatmul.mubr.f32.gmra.mxu0 %v53
  %v121 = vpop.f32.mrf.mxu0
  %v122 = vadd.f32 0.0, %v121
  %v123 = vpop.f32.mrf.mxu0
  %124 = vdwg.mxu0
  %v125 = vld [vmem:[%s3] sm:$0xff]
  %v126 = vld [vmem:[%s4] sm:$0xff]
  %v128 = vlaneseq
  %v129 = vshrl.u32 %v128, 7
  %v130 = vsub.s32 0, %v129
  %v131 = vrot.slane %v29, %v130
  %v133 = vmul.f32 %v122, %v131
  %134 = vadd.xlane.f32.xlu0 %v133
  %v135 = vpop.xlane.xlu0 %134
  %v136 = vmul.f32 %v135, 0.0125
  %v137 = vsub.f32 %v122, %v136
  %v138 = vmul.f32 %v137, %v131
  %v139 = vmul.f32 %v138, %v138
  %140 = vadd.xlane.f32.xlu0 %v139
  %v141 = vpop.xlane.xlu0 %140
  %v142 = vmul.f32 %v141, 0.0125
  %v143 = vadd.f32 %v142, 1e-05
  %v144 = vrsqrt.pop %v143
  %v145 = vmul.f32 %v144, %v125
  %147 = vset.pattern.permute.xlu0 0
  %148 = vperm.xlu0 %147, %v145
  %v149 = vpop.permute.xlu0 %148
  %v151 = vmul.f32 %v138, %v149
  %153 = vset.pattern.permute.xlu0 0
  %154 = vperm.xlu0 %153, %v126
  %v155 = vpop.permute.xlu0 %154
  %v157 = vadd.f32 %v151, %v155
  %v158 = vtanh.pop %v157
  %v159 = vmul.f32 %v158, %v131
  %v160 = vld [vmem:[%s5] sm:$0xff]
  %162 = vrot.lane.b32.xlu0 %v159, 1
  %v163 = vpop.permute.xlu0 %162
  %165 = vst.msk [vmem:[#allocation2] sm:$0xff] %vm36, %v163
  %166 = vst.msk [vmem:[#allocation2] sm:$0xff] %vm38, 0.0
  %167 = vst [vmem:[#allocation2 + $0x8] sm:$0xff] %v159
  %168 = vrot.lane.b32.xlu0 %v159, 127
  %v169 = vpop.permute.xlu0 %168
  %171 = vst.msk [vmem:[#allocation2 + $0x10] sm:$0xff] %vm44, %v169
  %172 = vst.msk [vmem:[#allocation2 + $0x10] sm:$0xff] %vm46, 0.0
  %v173 = vld [vmem:[#allocation2] sm:$0xff]
  %v174 = vld [vmem:[#allocation2 + $0x8] sm:$0xff]
  %v175 = vld [vmem:[#allocation2 + $0x10] sm:$0xff]
  %v177 = vsel %vm51, %v160, 0
  %179 = vmatprep.subr.mxu0 0.0
  %180 = vmatpush1.msra.mxu0 0.0
  %181 = vmatprep.subr.mxu0 0.0
  %182 = vmatpush1.msra.mxu0 0.0
  %183 = vmatprep.subr.mxu0 0.0
  %184 = vmatpush1.msra.mxu0 0.0
  %185 = vmatprep.subr.mxu0 0.0
  %186 = vmatpush1.msra.mxu0 0.0
  %187 = vmatprep.subr.mxu0 0.0
  %188 = vmatpush1.msra.mxu0 0.0
  %189 = vmatprep.subr.mxu0 0.0
  %190 = vmatpush1.msra.mxu0 0.0
  %191 = vmatprep.subr.mxu0 0.0
  %192 = vmatpush1.msra.mxu0 0.0
  %193 = vmatprep.subr.mxu0 0.0
  %194 = vmatpush1.msra.mxu0 0.0
  %195 = vmatprep.subr.mxu0 0.0
  %196 = vmatpush1.msra.mxu0 0.0
  %197 = vmatprep.subr.mxu0 0.0
  %198 = vmatpush1.msra.mxu0 0.0
  %199 = vmatprep.subr.mxu0 0.0
  %200 = vmatpush1.msra.mxu0 0.0
  %201 = vmatprep.subr.mxu0 0.0
  %202 = vmatpush1.msra.mxu0 0.0
  %203 = vmatprep.subr.mxu0 0.0
  %204 = vmatpush1.msra.mxu0 0.0
  %205 = vmatprep.subr.mxu0 0.0
  %206 = vmatpush1.msra.mxu0 %v175
  %207 = vmatprep.subr.mxu0 0.0
  %208 = vmatpush1.msra.mxu0 %v174
  %209 = vmatprep.subr.mxu0 0.0
  %210 = vmatpush1.msra.mxu0 %v173
  %211 = vmatprep.subr.mxu0 0.0
  %212 = vmatpush2.msra.mxu0 0.0
  %213 = vmatprep.subr.mxu0 0.0
  %214 = vmatpush2.msra.mxu0 0.0
  %215 = vmatprep.subr.mxu0 0.0
  %216 = vmatpush2.msra.mxu0 0.0
  %217 = vmatprep.subr.mxu0 0.0
  %218 = vmatpush2.msra.mxu0 0.0
  %219 = vmatprep.subr.mxu0 0.0
  %220 = vmatpush2.msra.mxu0 0.0
  %221 = vmatprep.subr.mxu0 0.0
  %222 = vmatpush2.msra.mxu0 0.0
  %223 = vmatprep.subr.mxu0 0.0
  %224 = vmatpush2.msra.mxu0 0.0
  %225 = vmatprep.subr.mxu0 0.0
  %226 = vmatpush2.msra.mxu0 0.0
  %227 = vmatprep.subr.mxu0 0.0
  %228 = vmatpush2.msra.mxu0 0.0
  %229 = vmatprep.subr.mxu0 0.0
  %230 = vmatpush2.msra.mxu0 0.0
  %231 = vmatprep.subr.mxu0 0.0
  %232 = vmatpush2.msra.mxu0 0.0
  %233 = vmatprep.subr.mxu0 0.0
  %234 = vmatpush2.msra.mxu0 0.0
  %235 = vmatprep.subr.mxu0 0.0
  %236 = vmatpush2.msra.mxu0 0.0
  %237 = vmatprep.subr.mxu0 0.0
  %238 = vmatpush2.msra.mxu0 0.0
  %239 = vmatprep.subr.mxu0 0.0
  %240 = vmatpush2.msra.mxu0 0.0
  %241 = vmatprep.subr.mxu0 0.0
  %242 = vmatpush2.msra.mxu0 0.0
  %243 = vmatprep.mubr.f32.mxu0 0.0
  %244 = vmatmul.mubr.f32.gmra.mxu0 %v177
  %v245 = vpop.f32.mrf.mxu0
  %v246 = vadd.f32 0.0, %v245
  %v247 = vpop.f32.mrf.mxu0
  %248 = vdwg.mxu0
  %v249 = vld [vmem:[%s6] sm:$0xff]
  %v250 = vld [vmem:[%s7] sm:$0xff]
  %v251 = vmul.f32 %v246, %v131
  %252 = vadd.xlane.f32.xlu0 %v251
  %v253 = vpop.xlane.xlu0 %252
  %v254 = vmul.f32 %v253, 0.0125
  %v255 = vsub.f32 %v246, %v254
  %v256 = vmul.f32 %v255, %v131
  %v257 = vmul.f32 %v256, %v256
  %258 = vadd.xlane.f32.xlu0 %v257
  %v259 = vpop.xlane.xlu0 %258
  %v260 = vmul.f32 %v259, 0.0125
  %v261 = vadd.f32 %v260, 1e-05
  %v262 = vrsqrt.pop %v261
  %v263 = vmul.f32 %v262, %v249
  %265 = vset.pattern.permute.xlu0 0
  %266 = vperm.xlu0 %265, %v263
  %v267 = vpop.permute.xlu0 %266
  %v269 = vmul.f32 %v256, %v267
  %271 = vset.pattern.permute.xlu0 0
  %272 = vperm.xlu0 %271, %v250
  %v273 = vpop.permute.xlu0 %272
  %v275 = vadd.f32 %v269, %v273
  %v276 = vtanh.pop %v275
  %v277 = vmul.f32 %v276, %v131
  %278 = vst [vmem:[%s8] sm:$0xff] %v277
  // Predicated region
  $region34: #{unet1d_forward.9} parent=0 // pred_check
    _
  $region35: #{unet1d_forward.9} parent=0 // pred_check_branch
    %280 = sbr.rel (0) target = $region37
  $region36: #{unet1d_forward.9} parent=0 // pred_region
    _
  $region37: #{unet1d_forward.9} parent=0 // pred_fallthru
    _
  // Predicated region
  $region38: #{unet1d_forward.9} parent=0 // pred_check
    _
  $region39: #{unet1d_forward.9} parent=0 // pred_check_branch
    %282 = sbr.rel (0) target = $region41
  $region40: #{unet1d_forward.9} parent=0 // pred_region
    _
  $region41: #{unet1d_forward.9} parent=0 // pred_fallthru
    _

// kernel: unet1d_forward.10
$region0: #{unet1d_forward.10}
  #allocation0 [shape = 'u32[]', space=smem, size = 0x4, offset = 0x4, fixed_abs, tag = 'smem constant byte address 0x4 - core index']
  #allocation1 [shape = 'u32[144,128]{1,0:T(1,128)}', space=vmem, size = 0x12000, scoped, tag = 'internal scratch']
  #allocation2 [shape = 'f32[48,128]{1,0:T(8,128)}', space=vmem, size = 0x6000, scoped, tag = 'scratch operand']
  %s0 = inlined_call_operand.vmem [shape: f32[8,128], index: 0, kind: input, shape index: {}]
  %s1 = inlined_call_operand.vmem [shape: f32[1,128], index: 1, kind: input, shape index: {}]
  %s2 = inlined_call_operand.vmem [shape: f32[16,24], index: 2, kind: input, shape index: {}]
  %s3 = inlined_call_operand.vmem [shape: f32[16,1], index: 3, kind: input, shape index: {}]
  %s4 = inlined_call_operand.vmem [shape: f32[16,1], index: 4, kind: input, shape index: {}]
  %s5 = inlined_call_operand.vmem [shape: f32[16,48], index: 5, kind: input, shape index: {}]
  %s6 = inlined_call_operand.vmem [shape: f32[16,1], index: 6, kind: input, shape index: {}]
  %s7 = inlined_call_operand.vmem [shape: f32[16,1], index: 7, kind: input, shape index: {}]
  %s8 = inlined_call_operand.vmem [shape: f32[16,128], index: 8, kind: output, shape index: {}]
  %s9 = sld [smem:[#allocation0]]
  $region42: #{unet1d_forward.10} parent=0
    _
  %s11 = ssub.s32 1, %s9
  %s12 = scalar_select 0, %s11, %s9
  // Predicated region
  $region2: #{unet1d_forward.10} parent=0 // pred_check
    _
  $region3: #{unet1d_forward.10} parent=0 // pred_check_branch
    %14 = sbr.rel (0) target = $region5
  $region4: #{unet1d_forward.10} parent=0 // pred_region
    _
  $region5: #{unet1d_forward.10} parent=0 // pred_fallthru
    _
  // Predicated region
  $region6: #{unet1d_forward.10} parent=0 // pred_check
    _
  $region7: #{unet1d_forward.10} parent=0 // pred_check_branch
    %16 = sbr.rel (0) target = $region9
  $region8: #{unet1d_forward.10} parent=0 // pred_region
    _
  $region9: #{unet1d_forward.10} parent=0 // pred_fallthru
    _
  // Predicated region
  $region10: #{unet1d_forward.10} parent=0 // pred_check
    _
  $region11: #{unet1d_forward.10} parent=0 // pred_check_branch
    %18 = sbr.rel (0) target = $region13
  $region12: #{unet1d_forward.10} parent=0 // pred_region
    _
  $region13: #{unet1d_forward.10} parent=0 // pred_fallthru
    _
  // Predicated region
  $region14: #{unet1d_forward.10} parent=0 // pred_check
    _
  $region15: #{unet1d_forward.10} parent=0 // pred_check_branch
    %20 = sbr.rel (0) target = $region17
  $region16: #{unet1d_forward.10} parent=0 // pred_region
    _
  $region17: #{unet1d_forward.10} parent=0 // pred_fallthru
    _
  // Predicated region
  $region18: #{unet1d_forward.10} parent=0 // pred_check
    _
  $region19: #{unet1d_forward.10} parent=0 // pred_check_branch
    %22 = sbr.rel (0) target = $region21
  $region20: #{unet1d_forward.10} parent=0 // pred_region
    _
  $region21: #{unet1d_forward.10} parent=0 // pred_fallthru
    _
  // Predicated region
  $region22: #{unet1d_forward.10} parent=0 // pred_check
    _
  $region23: #{unet1d_forward.10} parent=0 // pred_check_branch
    %24 = sbr.rel (0) target = $region25
  $region24: #{unet1d_forward.10} parent=0 // pred_region
    _
  $region25: #{unet1d_forward.10} parent=0 // pred_fallthru
    _
  // Predicated region
  $region26: #{unet1d_forward.10} parent=0 // pred_check
    _
  $region27: #{unet1d_forward.10} parent=0 // pred_check_branch
    %26 = sbr.rel (0) target = $region29
  $region28: #{unet1d_forward.10} parent=0 // pred_region
    _
  $region29: #{unet1d_forward.10} parent=0 // pred_fallthru
    _
  // Predicated region
  $region30: #{unet1d_forward.10} parent=0 // pred_check
    _
  $region31: #{unet1d_forward.10} parent=0 // pred_check_branch
    %28 = sbr.rel (0) target = $region33
  $region32: #{unet1d_forward.10} parent=0 // pred_region
    _
  $region33: #{unet1d_forward.10} parent=0 // pred_fallthru
    _
  %v29 = vld [vmem:[%s1] sm:$0x1]
  %v30 = vld [vmem:[%s2] sm:$0xff]
  %v31 = vld [vmem:[%s2 + $0x8] sm:$0xff]
  %v32 = vld [vmem:[%s0] sm:$0xff]
  %34 = vrot.lane.b32.xlu0 %v32, 1
  %v35 = vpop.permute.xlu0 %34
  %vm37 = vcmask 1047560
  %38 = vst.msk [vmem:[#allocation2] sm:$0xff] %vm37, %v35
  %vm39 = vcmask 7168
  %40 = vst.msk [vmem:[#allocation2] sm:$0xff] %vm39, 0.0
  %41 = vst [vmem:[#allocation2 + $0x8] sm:$0xff] %v32
  %42 = vrot.lane.b32.xlu0 %v32, 127
  %v43 = vpop.permute.xlu0 %42
  %vm45 = vcmask 1039360
  %46 = vst.msk [vmem:[#allocation2 + $0x10] sm:$0xff] %vm45, %v43
  %vm47 = vcmask 1048568
  %48 = vst.msk [vmem:[#allocation2 + $0x10] sm:$0xff] %vm47, 0.0
  %v49 = vld [vmem:[#allocation2] sm:$0xff]
  %v50 = vld [vmem:[#allocation2 + $0x8] sm:$0xff]
  %v51 = vld [vmem:[#allocation2 + $0x10] sm:$0xff]
  %vm52 = vcmask 195584
  %v54 = vsel %vm52, %v30, 0
  %v57 = vsel %vm52, %v31, 0
  %59 = vmatprep.subr.mxu0 0.0
  %60 = vmatpush1.msra.mxu0 0.0
  %61 = vmatprep.subr.mxu0 0.0
  %62 = vmatpush1.msra.mxu0 0.0
  %63 = vmatprep.subr.mxu0 0.0
  %64 = vmatpush1.msra.mxu0 0.0
  %65 = vmatprep.subr.mxu0 0.0
  %66 = vmatpush1.msra.mxu0 0.0
  %67 = vmatprep.subr.mxu0 0.0
  %68 = vmatpush1.msra.mxu0 0.0
  %69 = vmatprep.subr.mxu0 0.0
  %70 = vmatpush1.msra.mxu0 0.0
  %71 = vmatprep.subr.mxu0 0.0
  %72 = vmatpush1.msra.mxu0 0.0
  %73 = vmatprep.subr.mxu0 0.0
  %74 = vmatpush1.msra.mxu0 0.0
  %75 = vmatprep.subr.mxu0 0.0
  %76 = vmatpush1.msra.mxu0 0.0
  %77 = vmatprep.subr.mxu0 0.0
  %78 = vmatpush1.msra.mxu0 0.0
  %79 = vmatprep.subr.mxu0 0.0
  %80 = vmatpush1.msra.mxu0 0.0
  %81 = vmatprep.subr.mxu0 0.0
  %82 = vmatpush1.msra.mxu0 0.0
  %83 = vmatprep.subr.mxu0 0.0
  %84 = vmatpush1.msra.mxu0 0.0
  %85 = vmatprep.subr.mxu0 0.0
  %86 = vmatpush1.msra.mxu0 %v51
  %87 = vmatprep.subr.mxu0 0.0
  %88 = vmatpush1.msra.mxu0 %v50
  %89 = vmatprep.subr.mxu0 0.0
  %90 = vmatpush1.msra.mxu0 %v49
  %91 = vmatprep.subr.mxu0 0.0
  %92 = vmatpush2.msra.mxu0 0.0
  %93 = vmatprep.subr.mxu0 0.0
  %94 = vmatpush2.msra.mxu0 0.0
  %95 = vmatprep.subr.mxu0 0.0
  %96 = vmatpush2.msra.mxu0 0.0
  %97 = vmatprep.subr.mxu0 0.0
  %98 = vmatpush2.msra.mxu0 0.0
  %99 = vmatprep.subr.mxu0 0.0
  %100 = vmatpush2.msra.mxu0 0.0
  %101 = vmatprep.subr.mxu0 0.0
  %102 = vmatpush2.msra.mxu0 0.0
  %103 = vmatprep.subr.mxu0 0.0
  %104 = vmatpush2.msra.mxu0 0.0
  %105 = vmatprep.subr.mxu0 0.0
  %106 = vmatpush2.msra.mxu0 0.0
  %107 = vmatprep.subr.mxu0 0.0
  %108 = vmatpush2.msra.mxu0 0.0
  %109 = vmatprep.subr.mxu0 0.0
  %110 = vmatpush2.msra.mxu0 0.0
  %111 = vmatprep.subr.mxu0 0.0
  %112 = vmatpush2.msra.mxu0 0.0
  %113 = vmatprep.subr.mxu0 0.0
  %114 = vmatpush2.msra.mxu0 0.0
  %115 = vmatprep.subr.mxu0 0.0
  %116 = vmatpush2.msra.mxu0 0.0
  %117 = vmatprep.subr.mxu0 0.0
  %118 = vmatpush2.msra.mxu0 0.0
  %119 = vmatprep.subr.mxu0 0.0
  %120 = vmatpush2.msra.mxu0 0.0
  %121 = vmatprep.subr.mxu0 0.0
  %122 = vmatpush2.msra.mxu0 0.0
  %123 = vmatprep.mubr.f32.mxu0 0.0
  %124 = vmatmul.mubr.f32.gmra.mxu0 %v54
  %v125 = vpop.f32.mrf.mxu0
  %v126 = vadd.f32 0.0, %v125
  %v127 = vpop.f32.mrf.mxu0
  %128 = vmatprep.mubr.f32.mxu0 0.0
  %129 = vmatmul.mubr.f32.gmra.mxu0 %v57
  %v130 = vpop.f32.mrf.mxu0
  %v131 = vadd.f32 0.0, %v130
  %v132 = vpop.f32.mrf.mxu0
  %133 = vdwg.mxu0
  %v134 = vld [vmem:[%s3] sm:$0xff]
  %v135 = vld [vmem:[%s3 + $0x8] sm:$0xff]
  %v136 = vld [vmem:[%s4] sm:$0xff]
  %v137 = vld [vmem:[%s4 + $0x8] sm:$0xff]
  %v139 = vlaneseq
  %v140 = vshrl.u32 %v139, 7
  %v141 = vsub.s32 0, %v140
  %v142 = vrot.slane %v29, %v141
  %v144 = vmul.f32 %v126, %v142
  %v145 = vmul.f32 %v131, %v142
  %146 = vadd.xlane.f32.xlu0 %v144
  %v147 = vpop.xlane.xlu0 %146
  %148 = vadd.xlane.f32.xlu0 %v145
  %v149 = vpop.xlane.xlu0 %148
  %v150 = vmul.f32 %v147, 0.025
  %v151 = vmul.f32 %v149, 0.025
  %v152 = vsub.f32 %v126, %v150
  %v153 = vsub.f32 %v131, %v151
  %v154 = vmul.f32 %v152, %v142
  %v155 = vmul.f32 %v153, %v142
  %v156 = vmul.f32 %v154, %v154
  %v157 = vmul.f32 %v155, %v155
  %158 = vadd.xlane.f32.xlu0 %v156
  %v159 = vpop.xlane.xlu0 %158
  %160 = vadd.xlane.f32.xlu0 %v157
  %v161 = vpop.xlane.xlu0 %160
  %v162 = vmul.f32 %v159, 0.025
  %v163 = vmul.f32 %v161, 0.025
  %v164 = vadd.f32 %v162, 1e-05
  %v165 = vadd.f32 %v163, 1e-05
  %v166 = vrsqrt.pop %v164
  %v167 = vrsqrt.pop %v165
  %v168 = vmul.f32 %v166, %v134
  %v169 = vmul.f32 %v167, %v135
  %171 = vset.pattern.permute.xlu0 0
  %172 = vperm.xlu0 %171, %v168
  %v173 = vpop.permute.xlu0 %172
  %176 = vset.pattern.permute.xlu0 0
  %177 = vperm.xlu0 %176, %v169
  %v178 = vpop.permute.xlu0 %177
  %v180 = vmul.f32 %v154, %v173
  %v181 = vmul.f32 %v155, %v178
  %183 = vset.pattern.permute.xlu0 0
  %184 = vperm.xlu0 %183, %v136
  %v185 = vpop.permute.xlu0 %184
  %188 = vset.pattern.permute.xlu0 0
  %189 = vperm.xlu0 %188, %v137
  %v190 = vpop.permute.xlu0 %189
  %v192 = vadd.f32 %v180, %v185
  %v193 = vadd.f32 %v181, %v190
  %v194 = vtanh.pop %v192
  %v195 = vtanh.pop %v193
  %v196 = vmul.f32 %v194, %v142
  %v197 = vmul.f32 %v195, %v142
  %v198 = vld [vmem:[%s5] sm:$0xff]
  %v199 = vld [vmem:[%s5 + $0x8] sm:$0xff]
  %202 = vrot.lane.b32.xlu0 %v196, 1
  %v203 = vpop.permute.xlu0 %202
  %204 = vrot.lane.b32.xlu0 %v197, 1
  %v205 = vpop.permute.xlu0 %204
  %208 = vst.msk [vmem:[#allocation2] sm:$0xff] %vm37, %v203
  %209 = vst.msk [vmem:[#allocation2 + $0x8] sm:$0xff] %vm37, %v205
  %210 = vst.msk [vmem:[#allocation2] sm:$0xff] %vm39, 0.0
  %211 = vst.msk [vmem:[#allocation2 + $0x8] sm:$0xff] %vm39, 0.0
  %212 = vst [vmem:[#allocation2 + $0x10] sm:$0xff] %v196
  %213 = vst [vmem:[#allocation2 + $0x18] sm:$0xff] %v197
  %214 = vrot.lane.b32.xlu0 %v196, 127
  %v215 = vpop.permute.xlu0 %214
  %216 = vrot.lane.b32.xlu0 %v197, 127
  %v217 = vpop.permute.xlu0 %216
  %220 = vst.msk [vmem:[#allocation2 + $0x20] sm:$0xff] %vm45, %v215
  %221 = vst.msk [vmem:[#allocation2 + $0x28] sm:$0xff] %vm45, %v217
  %222 = vst.msk [vmem:[#allocation2 + $0x20] sm:$0xff] %vm47, 0.0
  %223 = vst.msk [vmem:[#allocation2 + $0x28] sm:$0xff] %vm47, 0.0
  %v224 = vld [vmem:[#allocation2] sm:$0xff]
  %v225 = vld [vmem:[#allocation2 + $0x8] sm:$0xff]
  %v226 = vld [vmem:[#allocation2 + $0x10] sm:$0xff]
  %v227 = vld [vmem:[#allocation2 + $0x18] sm:$0xff]
  %v228 = vld [vmem:[#allocation2 + $0x20] sm:$0xff]
  %v229 = vld [vmem:[#allocation2 + $0x28] sm:$0xff]
  %vm230 = vcmask 392192
  %v232 = vsel %vm230, %v198, 0
  %v235 = vsel %vm230, %v199, 0
  %237 = vmatprep.subr.mxu0 0.0
  %238 = vmatpush1.msra.mxu0 0.0
  %239 = vmatprep.subr.mxu0 0.0
  %240 = vmatpush1.msra.mxu0 0.0
  %241 = vmatprep.subr.mxu0 0.0
  %242 = vmatpush1.msra.mxu0 0.0
  %243 = vmatprep.subr.mxu0 0.0
  %244 = vmatpush1.msra.mxu0 0.0
  %245 = vmatprep.subr.mxu0 0.0
  %246 = vmatpush1.msra.mxu0 0.0
  %247 = vmatprep.subr.mxu0 0.0
  %248 = vmatpush1.msra.mxu0 0.0
  %249 = vmatprep.subr.mxu0 0.0
  %250 = vmatpush1.msra.mxu0 0.0
  %251 = vmatprep.subr.mxu0 0.0
  %252 = vmatpush1.msra.mxu0 0.0
  %253 = vmatprep.subr.mxu0 0.0
  %254 = vmatpush1.msra.mxu0 0.0
  %255 = vmatprep.subr.mxu0 0.0
  %256 = vmatpush1.msra.mxu0 0.0
  %257 = vmatprep.subr.mxu0 0.0
  %258 = vmatpush1.msra.mxu0 %v229
  %259 = vmatprep.subr.mxu0 0.0
  %260 = vmatpush1.msra.mxu0 %v228
  %261 = vmatprep.subr.mxu0 0.0
  %262 = vmatpush1.msra.mxu0 %v227
  %263 = vmatprep.subr.mxu0 0.0
  %264 = vmatpush1.msra.mxu0 %v226
  %265 = vmatprep.subr.mxu0 0.0
  %266 = vmatpush1.msra.mxu0 %v225
  %267 = vmatprep.subr.mxu0 0.0
  %268 = vmatpush1.msra.mxu0 %v224
  %269 = vmatprep.subr.mxu0 0.0
  %270 = vmatpush2.msra.mxu0 0.0
  %271 = vmatprep.subr.mxu0 0.0
  %272 = vmatpush2.msra.mxu0 0.0
  %273 = vmatprep.subr.mxu0 0.0
  %274 = vmatpush2.msra.mxu0 0.0
  %275 = vmatprep.subr.mxu0 0.0
  %276 = vmatpush2.msra.mxu0 0.0
  %277 = vmatprep.subr.mxu0 0.0
  %278 = vmatpush2.msra.mxu0 0.0
  %279 = vmatprep.subr.mxu0 0.0
  %280 = vmatpush2.msra.mxu0 0.0
  %281 = vmatprep.subr.mxu0 0.0
  %282 = vmatpush2.msra.mxu0 0.0
  %283 = vmatprep.subr.mxu0 0.0
  %284 = vmatpush2.msra.mxu0 0.0
  %285 = vmatprep.subr.mxu0 0.0
  %286 = vmatpush2.msra.mxu0 0.0
  %287 = vmatprep.subr.mxu0 0.0
  %288 = vmatpush2.msra.mxu0 0.0
  %289 = vmatprep.subr.mxu0 0.0
  %290 = vmatpush2.msra.mxu0 0.0
  %291 = vmatprep.subr.mxu0 0.0
  %292 = vmatpush2.msra.mxu0 0.0
  %293 = vmatprep.subr.mxu0 0.0
  %294 = vmatpush2.msra.mxu0 0.0
  %295 = vmatprep.subr.mxu0 0.0
  %296 = vmatpush2.msra.mxu0 0.0
  %297 = vmatprep.subr.mxu0 0.0
  %298 = vmatpush2.msra.mxu0 0.0
  %299 = vmatprep.subr.mxu0 0.0
  %300 = vmatpush2.msra.mxu0 0.0
  %301 = vmatprep.mubr.f32.mxu0 0.0
  %302 = vmatmul.mubr.f32.gmra.mxu0 %v232
  %v303 = vpop.f32.mrf.mxu0
  %v304 = vadd.f32 0.0, %v303
  %v305 = vpop.f32.mrf.mxu0
  %306 = vmatprep.mubr.f32.mxu0 0.0
  %307 = vmatmul.mubr.f32.gmra.mxu0 %v235
  %v308 = vpop.f32.mrf.mxu0
  %v309 = vadd.f32 0.0, %v308
  %v310 = vpop.f32.mrf.mxu0
  %311 = vdwg.mxu0
  %v312 = vld [vmem:[%s6] sm:$0xff]
  %v313 = vld [vmem:[%s6 + $0x8] sm:$0xff]
  %v314 = vld [vmem:[%s7] sm:$0xff]
  %v315 = vld [vmem:[%s7 + $0x8] sm:$0xff]
  %v316 = vmul.f32 %v304, %v142
  %v317 = vmul.f32 %v309, %v142
  %318 = vadd.xlane.f32.xlu0 %v316
  %v319 = vpop.xlane.xlu0 %318
  %320 = vadd.xlane.f32.xlu0 %v317
  %v321 = vpop.xlane.xlu0 %320
  %v322 = vmul.f32 %v319, 0.025
  %v323 = vmul.f32 %v321, 0.025
  %v324 = vsub.f32 %v304, %v322
  %v325 = vsub.f32 %v309, %v323
  %v326 = vmul.f32 %v324, %v142
  %v327 = vmul.f32 %v325, %v142
  %v328 = vmul.f32 %v326, %v326
  %v329 = vmul.f32 %v327, %v327
  %330 = vadd.xlane.f32.xlu0 %v328
  %v331 = vpop.xlane.xlu0 %330
  %332 = vadd.xlane.f32.xlu0 %v329
  %v333 = vpop.xlane.xlu0 %332
  %v334 = vmul.f32 %v331, 0.025
  %v335 = vmul.f32 %v333, 0.025
  %v336 = vadd.f32 %v334, 1e-05
  %v337 = vadd.f32 %v335, 1e-05
  %v338 = vrsqrt.pop %v336
  %v339 = vrsqrt.pop %v337
  %v340 = vmul.f32 %v338, %v312
  %v341 = vmul.f32 %v339, %v313
  %343 = vset.pattern.permute.xlu0 0
  %344 = vperm.xlu0 %343, %v340
  %v345 = vpop.permute.xlu0 %344
  %348 = vset.pattern.permute.xlu0 0
  %349 = vperm.xlu0 %348, %v341
  %v350 = vpop.permute.xlu0 %349
  %v352 = vmul.f32 %v326, %v345
  %v353 = vmul.f32 %v327, %v350
  %355 = vset.pattern.permute.xlu0 0
  %356 = vperm.xlu0 %355, %v314
  %v357 = vpop.permute.xlu0 %356
  %360 = vset.pattern.permute.xlu0 0
  %361 = vperm.xlu0 %360, %v315
  %v362 = vpop.permute.xlu0 %361
  %v364 = vadd.f32 %v352, %v357
  %v365 = vadd.f32 %v353, %v362
  %v366 = vtanh.pop %v364
  %v367 = vtanh.pop %v365
  %v368 = vmul.f32 %v366, %v142
  %v369 = vmul.f32 %v367, %v142
  %370 = vst [vmem:[%s8] sm:$0xff] %v368
  %371 = vst [vmem:[%s8 + $0x8] sm:$0xff] %v369
  // Predicated region
  $region34: #{unet1d_forward.10} parent=0 // pred_check
    _
  $region35: #{unet1d_forward.10} parent=0 // pred_check_branch
    %373 = sbr.rel (0) target = $region37
  $region36: #{unet1d_forward.10} parent=0 // pred_region
    _
  $region37: #{unet1d_forward.10} parent=0 // pred_fallthru
    _
  // Predicated region
  $region38: #{unet1d_forward.10} parent=0 // pred_check
    _
  $region39: #{unet1d_forward.10} parent=0 // pred_check_branch
    %375 = sbr.rel (0) target = $region41
  $region40: #{unet1d_forward.10} parent=0 // pred_region
    _
  $region41: #{unet1d_forward.10} parent=0 // pred_fallthru
    _

// kernel: unet1d_forward.11
$region0: #{unet1d_forward.11}
  #allocation0 [shape = 'u32[]', space=smem, size = 0x4, offset = 0x4, fixed_abs, tag = 'smem constant byte address 0x4 - core index']
  #allocation1 [shape = 'u32[144,128]{1,0:T(1,128)}', space=vmem, size = 0x12000, scoped, tag = 'internal scratch']
  #allocation2 [shape = 'f32[96,128]{1,0:T(8,128)}', space=vmem, size = 0xc000, scoped, tag = 'scratch operand']
  %s0 = inlined_call_operand.vmem [shape: f32[16,128], index: 0, kind: input, shape index: {}]
  %s1 = inlined_call_operand.vmem [shape: f32[1,128], index: 1, kind: input, shape index: {}]
  %s2 = inlined_call_operand.vmem [shape: f32[32,48], index: 2, kind: input, shape index: {}]
  %s3 = inlined_call_operand.vmem [shape: f32[32,1], index: 3, kind: input, shape index: {}]
  %s4 = inlined_call_operand.vmem [shape: f32[32,1], index: 4, kind: input, shape index: {}]
  %s5 = inlined_call_operand.vmem [shape: f32[32,96], index: 5, kind: input, shape index: {}]
  %s6 = inlined_call_operand.vmem [shape: f32[32,1], index: 6, kind: input, shape index: {}]
  %s7 = inlined_call_operand.vmem [shape: f32[32,1], index: 7, kind: input, shape index: {}]
  %s8 = inlined_call_operand.vmem [shape: f32[32,128], index: 8, kind: output, shape index: {}]
  %s9 = sld [smem:[#allocation0]]
  $region42: #{unet1d_forward.11} parent=0
    _
  %s11 = ssub.s32 1, %s9
  %s12 = scalar_select 0, %s11, %s9
  // Predicated region
  $region2: #{unet1d_forward.11} parent=0 // pred_check
    _
  $region3: #{unet1d_forward.11} parent=0 // pred_check_branch
    %14 = sbr.rel (0) target = $region5
  $region4: #{unet1d_forward.11} parent=0 // pred_region
    _
  $region5: #{unet1d_forward.11} parent=0 // pred_fallthru
    _
  // Predicated region
  $region6: #{unet1d_forward.11} parent=0 // pred_check
    _
  $region7: #{unet1d_forward.11} parent=0 // pred_check_branch
    %16 = sbr.rel (0) target = $region9
  $region8: #{unet1d_forward.11} parent=0 // pred_region
    _
  $region9: #{unet1d_forward.11} parent=0 // pred_fallthru
    _
  // Predicated region
  $region10: #{unet1d_forward.11} parent=0 // pred_check
    _
  $region11: #{unet1d_forward.11} parent=0 // pred_check_branch
    %18 = sbr.rel (0) target = $region13
  $region12: #{unet1d_forward.11} parent=0 // pred_region
    _
  $region13: #{unet1d_forward.11} parent=0 // pred_fallthru
    _
  // Predicated region
  $region14: #{unet1d_forward.11} parent=0 // pred_check
    _
  $region15: #{unet1d_forward.11} parent=0 // pred_check_branch
    %20 = sbr.rel (0) target = $region17
  $region16: #{unet1d_forward.11} parent=0 // pred_region
    _
  $region17: #{unet1d_forward.11} parent=0 // pred_fallthru
    _
  // Predicated region
  $region18: #{unet1d_forward.11} parent=0 // pred_check
    _
  $region19: #{unet1d_forward.11} parent=0 // pred_check_branch
    %22 = sbr.rel (0) target = $region21
  $region20: #{unet1d_forward.11} parent=0 // pred_region
    _
  $region21: #{unet1d_forward.11} parent=0 // pred_fallthru
    _
  // Predicated region
  $region22: #{unet1d_forward.11} parent=0 // pred_check
    _
  $region23: #{unet1d_forward.11} parent=0 // pred_check_branch
    %24 = sbr.rel (0) target = $region25
  $region24: #{unet1d_forward.11} parent=0 // pred_region
    _
  $region25: #{unet1d_forward.11} parent=0 // pred_fallthru
    _
  // Predicated region
  $region26: #{unet1d_forward.11} parent=0 // pred_check
    _
  $region27: #{unet1d_forward.11} parent=0 // pred_check_branch
    %26 = sbr.rel (0) target = $region29
  $region28: #{unet1d_forward.11} parent=0 // pred_region
    _
  $region29: #{unet1d_forward.11} parent=0 // pred_fallthru
    _
  // Predicated region
  $region30: #{unet1d_forward.11} parent=0 // pred_check
    _
  $region31: #{unet1d_forward.11} parent=0 // pred_check_branch
    %28 = sbr.rel (0) target = $region33
  $region32: #{unet1d_forward.11} parent=0 // pred_region
    _
  $region33: #{unet1d_forward.11} parent=0 // pred_fallthru
    _
  %v29 = vld [vmem:[%s1] sm:$0x1]
  %v30 = vld [vmem:[%s2] sm:$0xff]
  %v31 = vld [vmem:[%s2 + $0x8] sm:$0xff]
  %v32 = vld [vmem:[%s2 + $0x10] sm:$0xff]
  %v33 = vld [vmem:[%s2 + $0x18] sm:$0xff]
  %v34 = vld [vmem:[%s0] sm:$0xff]
  %v35 = vld [vmem:[%s0 + $0x8] sm:$0xff]
  %38 = vrot.lane.b32.xlu0 %v34, 1
  %v39 = vpop.permute.xlu0 %38
  %40 = vrot.lane.b32.xlu0 %v35, 1
  %v41 = vpop.permute.xlu0 %40
  %vm44 = vcmask 1047560
  %45 = vst.msk [vmem:[#allocation2] sm:$0xff] %vm44, %v39
  %46 = vst.msk [vmem:[#allocation2 + $0x8] sm:$0xff] %vm44, %v41
  %vm47 = vcmask 7168
  %48 = vst.msk [vmem:[#allocation2] sm:$0xff] %vm47, 0.0
  %49 = vst.msk [vmem:[#allocation2 + $0x8] sm:$0xff] %vm47, 0.0
  %50 = vst [vmem:[#allocation2 + $0x10] sm:$0xff] %v34
  %51 = vst [vmem:[#allocation2 + $0x18] sm:$0xff] %v35
  %52 = vrot.lane.b32.xlu0 %v34, 127
  %v53 = vpop.permute.xlu0 %52
  %54 = vrot.lane.b32.xlu0 %v35, 127
  %v55 = vpop.permute.xlu0 %54
  %vm58 = vcmask 1039360
  %59 = vst.msk [vmem:[#allocation2 + $0x20] sm:$0xff] %vm58, %v53
  %60 = vst.msk [vmem:[#allocation2 + $0x28] sm:$0xff] %vm58, %v55
  %vm61 = vcmask 1048568
  %62 = vst.msk [vmem:[#allocation2 + $0x20] sm:$0xff] %vm61, 0.0
  %63 = vst.msk [vmem:[#allocation2 + $0x28] sm:$0xff] %vm61, 0.0
  %v64 = vld [vmem:[#allocation2] sm:$0xff]
  %v65 = vld [vmem:[#allocation2 + $0x8] sm:$0xff]
  %v66 = vld [vmem:[#allocation2 + $0x10] sm:$0xff]
  %v67 = vld [vmem:[#allocation2 + $0x18] sm:$0xff]
  %v68 = vld [vmem:[#allocation2 + $0x20] sm:$0xff]
  %v69 = vld [vmem:[#allocation2 + $0x28] sm:$0xff]
  %vm70 = vcmask 392192
  %v72 = vsel %vm70, %v30, 0
  %v75 = vsel %vm70, %v31, 0
  %v78 = vsel %vm70, %v32, 0
  %v81 = vsel %vm70, %v33, 0
  %83 = vmatprep.subr.mxu0 0.0
  %84 = vmatpush1.msra.mxu0 0.0
  %85 = vmatprep.subr.mxu0 0.0
  %86 = vmatpush1.msra.mxu0 0.0
  %87 = vmatprep.subr.mxu0 0.0
  %88 = vmatpush1.msra.mxu0 0.0
  %89 = vmatprep.subr.mxu0 0.0
  %90 = vmatpush1.msra.mxu0 0.0
  %91 = vmatprep.subr.mxu0 0.0
  %92 = vmatpush1.msra.mxu0 0.0
  %93 = vmatprep.subr.mxu0 0.0
  %94 = vmatpush1.msra.mxu0 0.0
  %95 = vmatprep.subr.mxu0 0.0
  %96 = vmatpush1.msra.mxu0 0.0
  %97 = vmatprep.subr.mxu0 0.0
  %98 = vmatpush1.msra.mxu0 0.0
  %99 = vmatprep.subr.mxu0 0.0
  %100 = vmatpush1.msra.mxu0 0.0
  %101 = vmatprep.subr.mxu0 0.0
  %102 = vmatpush1.msra.mxu0 0.0
  %103 = vmatprep.subr.mxu0 0.0
  %104 = vmatpush1.msra.mxu0 %v69
  %105 = vmatprep.subr.mxu0 0.0
  %106 = vmatpush1.msra.mxu0 %v68
  %107 = vmatprep.subr.mxu0 0.0
  %108 = vmatpush1.msra.mxu0 %v67
  %109 = vmatprep.subr.mxu0 0.0
  %110 = vmatpush1.msra.mxu0 %v66
  %111 = vmatprep.subr.mxu0 0.0
  %112 = vmatpush1.msra.mxu0 %v65
  %113 = vmatprep.subr.mxu0 0.0
  %114 = vmatpush1.msra.mxu0 %v64
  %115 = vmatprep.subr.mxu0 0.0
  %116 = vmatpush2.msra.mxu0 0.0
  %117 = vmatprep.subr.mxu0 0.0
  %118 = vmatpush2.msra.mxu0 0.0
  %119 = vmatprep.subr.mxu0 0.0
  %120 = vmatpush2.msra.mxu0 0.0
  %121 = vmatprep.subr.mxu0 0.0
  %122 = vmatpush2.msra.mxu0 0.0
  %123 = vmatprep.subr.mxu0 0.0
  %124 = vmatpush2.msra.mxu0 0.0
  %125 = vmatprep.subr.mxu0 0.0
  %126 = vmatpush2.msra.mxu0 0.0
  %127 = vmatprep.subr.mxu0 0.0
  %128 = vmatpush2.msra.mxu0 0.0
  %129 = vmatprep.subr.mxu0 0.0
  %130 = vmatpush2.msra.mxu0 0.0
  %131 = vmatprep.subr.mxu0 0.0
  %132 = vmatpush2.msra.mxu0 0.0
  %133 = vmatprep.subr.mxu0 0.0
  %134 = vmatpush2.msra.mxu0 0.0
  %135 = vmatprep.subr.mxu0 0.0
  %136 = vmatpush2.msra.mxu0 0.0
  %137 = vmatprep.subr.mxu0 0.0
  %138 = vmatpush2.msra.mxu0 0.0
  %139 = vmatprep.subr.mxu0 0.0
  %140 = vmatpush2.msra.mxu0 0.0
  %141 = vmatprep.subr.mxu0 0.0
  %142 = vmatpush2.msra.mxu0 0.0
  %143 = vmatprep.subr.mxu0 0.0
  %144 = vmatpush2.msra.mxu0 0.0
  %145 = vmatprep.subr.mxu0 0.0
  %146 = vmatpush2.msra.mxu0 0.0
  %147 = vmatprep.mubr.f32.mxu0 0.0
  %148 = vmatmul.mubr.f32.gmra.mxu0 %v72
  %v149 = vpop.f32.mrf.mxu0
  %v150 = vadd.f32 0.0, %v149
  %v151 = vpop.f32.mrf.mxu0
  %152 = vmatprep.mubr.f32.mxu0 0.0
  %153 = vmatmul.mubr.f32.gmra.mxu0 %v75
  %v154 = vpop.f32.mrf.mxu0
  %v155 = vadd.f32 0.0, %v154
  %v156 = vpop.f32.mrf.mxu0
  %157 = vmatprep.mubr.f32.mxu0 0.0
  %158 = vmatmul.mubr.f32.gmra.mxu0 %v78
  %v159 = vpop.f32.mrf.mxu0
  %v160 = vadd.f32 0.0, %v159
  %v161 = vpop.f32.mrf.mxu0
  %162 = vmatprep.mubr.f32.mxu0 0.0
  %163 = vmatmul.mubr.f32.gmra.mxu0 %v81
  %v164 = vpop.f32.mrf.mxu0
  %v165 = vadd.f32 0.0, %v164
  %v166 = vpop.f32.mrf.mxu0
  %167 = vdwg.mxu0
  %v168 = vld [vmem:[%s3] sm:$0xff]
  %v169 = vld [vmem:[%s3 + $0x8] sm:$0xff]
  %v170 = vld [vmem:[%s3 + $0x10] sm:$0xff]
  %v171 = vld [vmem:[%s3 + $0x18] sm:$0xff]
  %v172 = vld [vmem:[%s4] sm:$0xff]
  %v173 = vld [vmem:[%s4 + $0x8] sm:$0xff]
  %v174 = vld [vmem:[%s4 + $0x10] sm:$0xff]
  %v175 = vld [vmem:[%s4 + $0x18] sm:$0xff]
  %v177 = vlaneseq
  %v178 = vshrl.u32 %v177, 7
  %v179 = vsub.s32 0, %v178
  %v180 = vrot.slane %v29, %v179
  %v182 = vmul.f32 %v150, %v180
  %v183 = vmul.f32 %v155, %v180
  %v184 = vmul.f32 %v160, %v180
  %v185 = vmul.f32 %v165, %v180
  %186 = vadd.xlane.f32.xlu0 %v182
  %v187 = vpop.xlane.xlu0 %186
  %188 = vadd.xlane.f32.xlu0 %v183
  %v189 = vpop.xlane.xlu0 %188
  %190 = vadd.xlane.f32.xlu0 %v184
  %v191 = vpop.xlane.xlu0 %190
  %192 = vadd.xlane.f32.xlu0 %v185
  %v193 = vpop.xlane.xlu0 %192
  %v194 = vmul.f32 %v187, 0.05
  %v195 = vmul.f32 %v189, 0.05
  %v196 = vmul.f32 %v191, 0.05
  %v197 = vmul.f32 %v193, 0.05
  %v198 = vsub.f32 %v150, %v194
  %v199 = vsub.f32 %v155, %v195
  %v200 = vsub.f32 %v160, %v196
  %v201 = vsub.f32 %v165, %v197
  %v202 = vmul.f32 %v198, %v180
  %v203 = vmul.f32 %v199, %v180
  %v204 = vmul.f32 %v200, %v180
  %v205 = vmul.f32 %v201, %v180
  %v206 = vmul.f32 %v202, %v202
  %v207 = vmul.f32 %v203, %v203
  %v208 = vmul.f32 %v204, %v204
  %v209 = vmul.f32 %v205, %v205
  %210 = vadd.xlane.f32.xlu0 %v206
  %v211 = vpop.xlane.xlu0 %210
  %212 = vadd.xlane.f32.xlu0 %v207
  %v213 = vpop.xlane.xlu0 %212
  %214 = vadd.xlane.f32.xlu0 %v208
  %v215 = vpop.xlane.xlu0 %214
  %216 = vadd.xlane.f32.xlu0 %v209
  %v217 = vpop.xlane.xlu0 %216
  %v218 = vmul.f32 %v211, 0.05
  %v219 = vmul.f32 %v213, 0.05
  %v220 = vmul.f32 %v215, 0.05
  %v221 = vmul.f32 %v217, 0.05
  %v222 = vadd.f32 %v218, 1e-05
  %v223 = vadd.f32 %v219, 1e-05
  %v224 = vadd.f32 %v220, 1e-05
  %v225 = vadd.f32 %v221, 1e-05
  %v226 = vrsqrt.pop %v222
  %v227 = vrsqrt.pop %v223
  %v228 = vrsqrt.pop %v224
  %v229 = vrsqrt.pop %v225
  %v230 = vmul.f32 %v226, %v168
  %v231 = vmul.f32 %v227, %v169
  %v232 = vmul.f32 %v228, %v170
  %v233 = vmul.f32 %v229, %v171
  %235 = vset.pattern.permute.xlu0 0
  %236 = vperm.xlu0 %235, %v230
  %v237 = vpop.permute.xlu0 %236
  %240 = vset.pattern.permute.xlu0 0
  %241 = vperm.xlu0 %240, %v231
  %v242 = vpop.permute.xlu0 %241
  %245 = vset.pattern.permute.xlu0 0
  %246 = vperm.xlu0 %245, %v232
  %v247 = vpop.permute.xlu0 %246
  %250 = vset.pattern.permute.xlu0 0
  %251 = vperm.xlu0 %250, %v233
  %v252 = vpop.permute.xlu0 %251
  %v254 = vmul.f32 %v202, %v237
  %v255 = vmul.f32 %v203, %v242
  %v256 = vmul.f32 %v204, %v247
  %v257 = vmul.f32 %v205, %v252
  %259 = vset.pattern.permute.xlu0 0
  %260 = vperm.xlu0 %259, %v172
  %v261 = vpop.permute.xlu0 %260
  %264 = vset.pattern.permute.xlu0 0
  %265 = vperm.xlu0 %264, %v173
  %v266 = vpop.permute.xlu0 %265
  %269 = vset.pattern.permute.xlu0 0
  %270 = vperm.xlu0 %269, %v174
  %v271 = vpop.permute.xlu0 %270
  %274 = vset.pattern.permute.xlu0 0
  %275 = vperm.xlu0 %274, %v175
  %v276 = vpop.permute.xlu0 %275
  %v278 = vadd.f32 %v254, %v261
  %v279 = vadd.f32 %v255, %v266
  %v280 = vadd.f32 %v256, %v271
  %v281 = vadd.f32 %v257, %v276
  %v282 = vtanh.pop %v278
  %v283 = vtanh.pop %v279
  %v284 = vtanh.pop %v280
  %v285 = vtanh.pop %v281
  %v286 = vmul.f32 %v282, %v180
  %v287 = vmul.f32 %v283, %v180
  %v288 = vmul.f32 %v284, %v180
  %v289 = vmul.f32 %v285, %v180
  %v290 = vld [vmem:[%s5] sm:$0xff]
  %v291 = vld [vmem:[%s5 + $0x8] sm:$0xff]
  %v292 = vld [vmem:[%s5 + $0x10] sm:$0xff]
  %v293 = vld [vmem:[%s5 + $0x18] sm:$0xff]
  %298 = vrot.lane.b32.xlu0 %v286, 1
  %v299 = vpop.permute.xlu0 %298
  %300 = vrot.lane.b32.xlu0 %v287, 1
  %v301 = vpop.permute.xlu0 %300
  %302 = vrot.lane.b32.xlu0 %v288, 1
  %v303 = vpop.permute.xlu0 %302
  %304 = vrot.lane.b32.xlu0 %v289, 1
  %v305 = vpop.permute.xlu0 %304
  %310 = vst.msk [vmem:[#allocation2] sm:$0xff] %vm44, %v299
  %311 = vst.msk [vmem:[#allocation2 + $0x8] sm:$0xff] %vm44, %v301
  %312 = vst.msk [vmem:[#allocation2 + $0x10] sm:$0xff] %vm44, %v303
  %313 = vst.msk [vmem:[#allocation2 + $0x18] sm:$0xff] %vm44, %v305
  %314 = vst.msk [vmem:[#allocation2] sm:$0xff] %vm47, 0.0
  %315 = vst.msk [vmem:[#allocation2 + $0x8] sm:$0xff] %vm47, 0.0
  %316 = vst.msk [vmem:[#allocation2 + $0x10] sm:$0xff] %vm47, 0.0
  %317 = vst.msk [vmem:[#allocation2 + $0x18] sm:$0xff] %vm47, 0.0
  %318 = vst [vmem:[#allocation2 + $0x20] sm:$0xff] %v286
  %319 = vst [vmem:[#allocation2 + $0x28] sm:$0xff] %v287
  %320 = vst [vmem:[#allocation2 + $0x30] sm:$0xff] %v288
  %321 = vst [vmem:[#allocation2 + $0x38] sm:$0xff] %v289
  %322 = vrot.lane.b32.xlu0 %v286, 127
  %v323 = vpop.permute.xlu0 %322
  %324 = vrot.lane.b32.xlu0 %v287, 127
  %v325 = vpop.permute.xlu0 %324
  %326 = vrot.lane.b32.xlu0 %v288, 127
  %v327 = vpop.permute.xlu0 %326
  %328 = vrot.lane.b32.xlu0 %v289, 127
  %v329 = vpop.permute.xlu0 %328
  %334 = vst.msk [vmem:[#allocation2 + $0x40] sm:$0xff] %vm58, %v323
  %335 = vst.msk [vmem:[#allocation2 + $0x48] sm:$0xff] %vm58, %v325
  %336 = vst.msk [vmem:[#allocation2 + $0x50] sm:$0xff] %vm58, %v327
  %337 = vst.msk [vmem:[#allocation2 + $0x58] sm:$0xff] %vm58, %v329
  %338 = vst.msk [vmem:[#allocation2 + $0x40] sm:$0xff] %vm61, 0.0
  %339 = vst.msk [vmem:[#allocation2 + $0x48] sm:$0xff] %vm61, 0.0
  %340 = vst.msk [vmem:[#allocation2 + $0x50] sm:$0xff] %vm61, 0.0
  %341 = vst.msk [vmem:[#allocation2 + $0x58] sm:$0xff] %vm61, 0.0
  %v342 = vld [vmem:[#allocation2] sm:$0xff]
  %v343 = vld [vmem:[#allocation2 + $0x8] sm:$0xff]
  %v344 = vld [vmem:[#allocation2 + $0x10] sm:$0xff]
  %v345 = vld [vmem:[#allocation2 + $0x18] sm:$0xff]
  %v346 = vld [vmem:[#allocation2 + $0x20] sm:$0xff]
  %v347 = vld [vmem:[#allocation2 + $0x28] sm:$0xff]
  %v348 = vld [vmem:[#allocation2 + $0x30] sm:$0xff]
  %v349 = vld [vmem:[#allocation2 + $0x38] sm:$0xff]
  %v350 = vld [vmem:[#allocation2 + $0x40] sm:$0xff]
  %v351 = vld [vmem:[#allocation2 + $0x48] sm:$0xff]
  %v352 = vld [vmem:[#allocation2 + $0x50] sm:$0xff]
  %v353 = vld [vmem:[#allocation2 + $0x58] sm:$0xff]
  %vm354 = vcmask 785408
  %v356 = vsel %vm354, %v290, 0
  %v359 = vsel %vm354, %v291, 0
  %v362 = vsel %vm354, %v292, 0
  %v365 = vsel %vm354, %v293, 0
  %367 = vmatprep.subr.mxu0 0.0
  %368 = vmatpush1.msra.mxu0 0.0
  %369 = vmatprep.subr.mxu0 0.0
  %370 = vmatpush1.msra.mxu0 0.0
  %371 = vmatprep.subr.mxu0 0.0
  %372 = vmatpush1.msra.mxu0 0.0
  %373 = vmatprep.subr.mxu0 0.0
  %374 = vmatpush1.msra.mxu0 0.0
  %375 = vmatprep.subr.mxu0 0.0
  %376 = vmatpush1.msra.mxu0 %v353
  %377 = vmatprep.subr.mxu0 0.0
  %378 = vmatpush1.msra.mxu0 %v352
  %379 = vmatprep.subr.mxu0 0.0
  %380 = vmatpush1.msra.mxu0 %v351
  %381 = vmatprep.subr.mxu0 0.0
  %382 = vmatpush1.msra.mxu0 %v350
  %383 = vmatprep.subr.mxu0 0.0
  %384 = vmatpush1.msra.mxu0 %v349
  %385 = vmatprep.subr.mxu0 0.0
  %386 = vmatpush1.msra.mxu0 %v348
  %387 = vmatprep.subr.mxu0 0.0
  %388 = vmatpush1.msra.mxu0 %v347
  %389 = vmatprep.subr.mxu0 0.0
  %390 = vmatpush1.msra.mxu0 %v346
  %391 = vmatprep.subr.mxu0 0.0
  %392 = vmatpush1.msra.mxu0 %v345
  %393 = vmatprep.subr.mxu0 0.0
  %394 = vmatpush1.msra.mxu0 %v344
  %395 = vmatprep.subr.mxu0 0.0
  %396 = vmatpush1.msra.mxu0 %v343
  %397 = vmatprep.subr.mxu0 0.0
  %398 = vmatpush1.msra.mxu0 %v342
  %399 = vmatprep.subr.mxu0 0.0
  %400 = vmatpush2.msra.mxu0 0.0
  %401 = vmatprep.subr.mxu0 0.0
  %402 = vmatpush2.msra.mxu0 0.0
  %403 = vmatprep.subr.mxu0 0.0
  %404 = vmatpush2.msra.mxu0 0.0
  %405 = vmatprep.subr.mxu0 0.0
  %406 = vmatpush2.msra.mxu0 0.0
  %407 = vmatprep.subr.mxu0 0.0
  %408 = vmatpush2.msra.mxu0 0.0
  %409 = vmatprep.subr.mxu0 0.0
  %410 = vmatpush2.msra.mxu0 0.0
  %411 = vmatprep.subr.mxu0 0.0
  %412 = vmatpush2.msra.mxu0 0.0
  %413 = vmatprep.subr.mxu0 0.0
  %414 = vmatpush2.msra.mxu0 0.0
  %415 = vmatprep.subr.mxu0 0.0
  %416 = vmatpush2.msra.mxu0 0.0
  %417 = vmatprep.subr.mxu0 0.0
  %418 = vmatpush2.msra.mxu0 0.0
  %419 = vmatprep.subr.mxu0 0.0
  %420 = vmatpush2.msra.mxu0 0.0
  %421 = vmatprep.subr.mxu0 0.0
  %422 = vmatpush2.msra.mxu0 0.0
  %423 = vmatprep.subr.mxu0 0.0
  %424 = vmatpush2.msra.mxu0 0.0
  %425 = vmatprep.subr.mxu0 0.0
  %426 = vmatpush2.msra.mxu0 0.0
  %427 = vmatprep.subr.mxu0 0.0
  %428 = vmatpush2.msra.mxu0 0.0
  %429 = vmatprep.subr.mxu0 0.0
  %430 = vmatpush2.msra.mxu0 0.0
  %431 = vmatprep.mubr.f32.mxu0 0.0
  %432 = vmatmul.mubr.f32.gmra.mxu0 %v356
  %v433 = vpop.f32.mrf.mxu0
  %v434 = vadd.f32 0.0, %v433
  %v435 = vpop.f32.mrf.mxu0
  %436 = vmatprep.mubr.f32.mxu0 0.0
  %437 = vmatmul.mubr.f32.gmra.mxu0 %v359
  %v438 = vpop.f32.mrf.mxu0
  %v439 = vadd.f32 0.0, %v438
  %v440 = vpop.f32.mrf.mxu0
  %441 = vmatprep.mubr.f32.mxu0 0.0
  %442 = vmatmul.mubr.f32.gmra.mxu0 %v362
  %v443 = vpop.f32.mrf.mxu0
  %v444 = vadd.f32 0.0, %v443
  %v445 = vpop.f32.mrf.mxu0
  %446 = vmatprep.mubr.f32.mxu0 0.0
  %447 = vmatmul.mubr.f32.gmra.mxu0 %v365
  %v448 = vpop.f32.mrf.mxu0
  %v449 = vadd.f32 0.0, %v448
  %v450 = vpop.f32.mrf.mxu0
  %451 = vdwg.mxu0
  %v452 = vld [vmem:[%s6] sm:$0xff]
  %v453 = vld [vmem:[%s6 + $0x8] sm:$0xff]
  %v454 = vld [vmem:[%s6 + $0x10] sm:$0xff]
  %v455 = vld [vmem:[%s6 + $0x18] sm:$0xff]
  %v456 = vld [vmem:[%s7] sm:$0xff]
  %v457 = vld [vmem:[%s7 + $0x8] sm:$0xff]
  %v458 = vld [vmem:[%s7 + $0x10] sm:$0xff]
  %v459 = vld [vmem:[%s7 + $0x18] sm:$0xff]
  %v460 = vmul.f32 %v434, %v180
  %v461 = vmul.f32 %v439, %v180
  %v462 = vmul.f32 %v444, %v180
  %v463 = vmul.f32 %v449, %v180
  %464 = vadd.xlane.f32.xlu0 %v460
  %v465 = vpop.xlane.xlu0 %464
  %466 = vadd.xlane.f32.xlu0 %v461
  %v467 = vpop.xlane.xlu0 %466
  %468 = vadd.xlane.f32.xlu0 %v462
  %v469 = vpop.xlane.xlu0 %468
  %470 = vadd.xlane.f32.xlu0 %v463
  %v471 = vpop.xlane.xlu0 %470
  %v472 = vmul.f32 %v465, 0.05
  %v473 = vmul.f32 %v467, 0.05
  %v474 = vmul.f32 %v469, 0.05
  %v475 = vmul.f32 %v471, 0.05
  %v476 = vsub.f32 %v434, %v472
  %v477 = vsub.f32 %v439, %v473
  %v478 = vsub.f32 %v444, %v474
  %v479 = vsub.f32 %v449, %v475
  %v480 = vmul.f32 %v476, %v180
  %v481 = vmul.f32 %v477, %v180
  %v482 = vmul.f32 %v478, %v180
  %v483 = vmul.f32 %v479, %v180
  %v484 = vmul.f32 %v480, %v480
  %v485 = vmul.f32 %v481, %v481
  %v486 = vmul.f32 %v482, %v482
  %v487 = vmul.f32 %v483, %v483
  %488 = vadd.xlane.f32.xlu0 %v484
  %v489 = vpop.xlane.xlu0 %488
  %490 = vadd.xlane.f32.xlu0 %v485
  %v491 = vpop.xlane.xlu0 %490
  %492 = vadd.xlane.f32.xlu0 %v486
  %v493 = vpop.xlane.xlu0 %492
  %494 = vadd.xlane.f32.xlu0 %v487
  %v495 = vpop.xlane.xlu0 %494
  %v496 = vmul.f32 %v489, 0.05
  %v497 = vmul.f32 %v491, 0.05
  %v498 = vmul.f32 %v493, 0.05
  %v499 = vmul.f32 %v495, 0.05
  %v500 = vadd.f32 %v496, 1e-05
  %v501 = vadd.f32 %v497, 1e-05
  %v502 = vadd.f32 %v498, 1e-05
  %v503 = vadd.f32 %v499, 1e-05
  %v504 = vrsqrt.pop %v500
  %v505 = vrsqrt.pop %v501
  %v506 = vrsqrt.pop %v502
  %v507 = vrsqrt.pop %v503
  %v508 = vmul.f32 %v504, %v452
  %v509 = vmul.f32 %v505, %v453
  %v510 = vmul.f32 %v506, %v454
  %v511 = vmul.f32 %v507, %v455
  %513 = vset.pattern.permute.xlu0 0
  %514 = vperm.xlu0 %513, %v508
  %v515 = vpop.permute.xlu0 %514
  %518 = vset.pattern.permute.xlu0 0
  %519 = vperm.xlu0 %518, %v509
  %v520 = vpop.permute.xlu0 %519
  %523 = vset.pattern.permute.xlu0 0
  %524 = vperm.xlu0 %523, %v510
  %v525 = vpop.permute.xlu0 %524
  %528 = vset.pattern.permute.xlu0 0
  %529 = vperm.xlu0 %528, %v511
  %v530 = vpop.permute.xlu0 %529
  %v532 = vmul.f32 %v480, %v515
  %v533 = vmul.f32 %v481, %v520
  %v534 = vmul.f32 %v482, %v525
  %v535 = vmul.f32 %v483, %v530
  %537 = vset.pattern.permute.xlu0 0
  %538 = vperm.xlu0 %537, %v456
  %v539 = vpop.permute.xlu0 %538
  %542 = vset.pattern.permute.xlu0 0
  %543 = vperm.xlu0 %542, %v457
  %v544 = vpop.permute.xlu0 %543
  %547 = vset.pattern.permute.xlu0 0
  %548 = vperm.xlu0 %547, %v458
  %v549 = vpop.permute.xlu0 %548
  %552 = vset.pattern.permute.xlu0 0
  %553 = vperm.xlu0 %552, %v459
  %v554 = vpop.permute.xlu0 %553
  %v556 = vadd.f32 %v532, %v539
  %v557 = vadd.f32 %v533, %v544
  %v558 = vadd.f32 %v534, %v549
  %v559 = vadd.f32 %v535, %v554
  %v560 = vtanh.pop %v556
  %v561 = vtanh.pop %v557
  %v562 = vtanh.pop %v558
  %v563 = vtanh.pop %v559
  %v564 = vmul.f32 %v560, %v180
  %v565 = vmul.f32 %v561, %v180
  %v566 = vmul.f32 %v562, %v180
  %v567 = vmul.f32 %v563, %v180
  %568 = vst [vmem:[%s8] sm:$0xff] %v564
  %569 = vst [vmem:[%s8 + $0x8] sm:$0xff] %v565
  %570 = vst [vmem:[%s8 + $0x10] sm:$0xff] %v566
  %571 = vst [vmem:[%s8 + $0x18] sm:$0xff] %v567
  // Predicated region
  $region34: #{unet1d_forward.11} parent=0 // pred_check
    _
  $region35: #{unet1d_forward.11} parent=0 // pred_check_branch
    %573 = sbr.rel (0) target = $region37
  $region36: #{unet1d_forward.11} parent=0 // pred_region
    _
  $region37: #{unet1d_forward.11} parent=0 // pred_fallthru
    _
  // Predicated region
  $region38: #{unet1d_forward.11} parent=0 // pred_check
    _
  $region39: #{unet1d_forward.11} parent=0 // pred_check_branch
    %575 = sbr.rel (0) target = $region41
  $region40: #{unet1d_forward.11} parent=0 // pred_region
    _
  $region41: #{unet1d_forward.11} parent=0 // pred_fallthru
    _

// kernel: unet1d_forward.12
$region0: #{unet1d_forward.12}
  #allocation0 [shape = 'u32[]', space=smem, size = 0x4, offset = 0x4, fixed_abs, tag = 'smem constant byte address 0x4 - core index']
  #allocation1 [shape = 'u32[144,128]{1,0:T(1,128)}', space=vmem, size = 0x12000, scoped, tag = 'internal scratch']
  #allocation2 [shape = 'f32[192,128]{1,0:T(8,128)}', space=vmem, size = 0x18000, scoped, tag = 'scratch operand']
  %s0 = inlined_call_operand.vmem [shape: f32[32,128], index: 0, kind: input, shape index: {}]
  %s1 = inlined_call_operand.vmem [shape: f32[1,128], index: 1, kind: input, shape index: {}]
  %s2 = inlined_call_operand.vmem [shape: f32[64,96], index: 2, kind: input, shape index: {}]
  %s3 = inlined_call_operand.vmem [shape: f32[64,1], index: 3, kind: input, shape index: {}]
  %s4 = inlined_call_operand.vmem [shape: f32[64,1], index: 4, kind: input, shape index: {}]
  %s5 = inlined_call_operand.vmem [shape: f32[64,192], index: 5, kind: input, shape index: {}]
  %s6 = inlined_call_operand.vmem [shape: f32[64,1], index: 6, kind: input, shape index: {}]
  %s7 = inlined_call_operand.vmem [shape: f32[64,1], index: 7, kind: input, shape index: {}]
  %s8 = inlined_call_operand.vmem [shape: f32[64,128], index: 8, kind: output, shape index: {}]
  %s9 = sld [smem:[#allocation0]]
  $region42: #{unet1d_forward.12} parent=0
    _
  %s11 = ssub.s32 1, %s9
  %s12 = scalar_select 0, %s11, %s9
  // Predicated region
  $region2: #{unet1d_forward.12} parent=0 // pred_check
    _
  $region3: #{unet1d_forward.12} parent=0 // pred_check_branch
    %14 = sbr.rel (0) target = $region5
  $region4: #{unet1d_forward.12} parent=0 // pred_region
    _
  $region5: #{unet1d_forward.12} parent=0 // pred_fallthru
    _
  // Predicated region
  $region6: #{unet1d_forward.12} parent=0 // pred_check
    _
  $region7: #{unet1d_forward.12} parent=0 // pred_check_branch
    %16 = sbr.rel (0) target = $region9
  $region8: #{unet1d_forward.12} parent=0 // pred_region
    _
  $region9: #{unet1d_forward.12} parent=0 // pred_fallthru
    _
  // Predicated region
  $region10: #{unet1d_forward.12} parent=0 // pred_check
    _
  $region11: #{unet1d_forward.12} parent=0 // pred_check_branch
    %18 = sbr.rel (0) target = $region13
  $region12: #{unet1d_forward.12} parent=0 // pred_region
    _
  $region13: #{unet1d_forward.12} parent=0 // pred_fallthru
    _
  // Predicated region
  $region14: #{unet1d_forward.12} parent=0 // pred_check
    _
  $region15: #{unet1d_forward.12} parent=0 // pred_check_branch
    %20 = sbr.rel (0) target = $region17
  $region16: #{unet1d_forward.12} parent=0 // pred_region
    _
  $region17: #{unet1d_forward.12} parent=0 // pred_fallthru
    _
  // Predicated region
  $region18: #{unet1d_forward.12} parent=0 // pred_check
    _
  $region19: #{unet1d_forward.12} parent=0 // pred_check_branch
    %22 = sbr.rel (0) target = $region21
  $region20: #{unet1d_forward.12} parent=0 // pred_region
    _
  $region21: #{unet1d_forward.12} parent=0 // pred_fallthru
    _
  // Predicated region
  $region22: #{unet1d_forward.12} parent=0 // pred_check
    _
  $region23: #{unet1d_forward.12} parent=0 // pred_check_branch
    %24 = sbr.rel (0) target = $region25
  $region24: #{unet1d_forward.12} parent=0 // pred_region
    _
  $region25: #{unet1d_forward.12} parent=0 // pred_fallthru
    _
  // Predicated region
  $region26: #{unet1d_forward.12} parent=0 // pred_check
    _
  $region27: #{unet1d_forward.12} parent=0 // pred_check_branch
    %26 = sbr.rel (0) target = $region29
  $region28: #{unet1d_forward.12} parent=0 // pred_region
    _
  $region29: #{unet1d_forward.12} parent=0 // pred_fallthru
    _
  // Predicated region
  $region30: #{unet1d_forward.12} parent=0 // pred_check
    _
  $region31: #{unet1d_forward.12} parent=0 // pred_check_branch
    %28 = sbr.rel (0) target = $region33
  $region32: #{unet1d_forward.12} parent=0 // pred_region
    _
  $region33: #{unet1d_forward.12} parent=0 // pred_fallthru
    _
  %v29 = vld [vmem:[%s1] sm:$0x1]
  %v30 = vld [vmem:[%s2] sm:$0xff]
  %v31 = vld [vmem:[%s2 + $0x8] sm:$0xff]
  %v32 = vld [vmem:[%s2 + $0x10] sm:$0xff]
  %v33 = vld [vmem:[%s2 + $0x18] sm:$0xff]
  %v34 = vld [vmem:[%s2 + $0x20] sm:$0xff]
  %v35 = vld [vmem:[%s2 + $0x28] sm:$0xff]
  %v36 = vld [vmem:[%s2 + $0x30] sm:$0xff]
  %v37 = vld [vmem:[%s2 + $0x38] sm:$0xff]
  %v38 = vld [vmem:[%s0] sm:$0xff]
  %v39 = vld [vmem:[%s0 + $0x8] sm:$0xff]
  %v40 = vld [vmem:[%s0 + $0x10] sm:$0xff]
  %v41 = vld [vmem:[%s0 + $0x18] sm:$0xff]
  %46 = vrot.lane.b32.xlu0 %v38, 1
  %v47 = vpop.permute.xlu0 %46
  %48 = vrot.lane.b32.xlu0 %v39, 1
  %v49 = vpop.permute.xlu0 %48
  %50 = vrot.lane.b32.xlu0 %v40, 1
  %v51 = vpop.permute.xlu0 %50
  %52 = vrot.lane.b32.xlu0 %v41, 1
  %v53 = vpop.permute.xlu0 %52
  %vm58 = vcmask 1047560
  %59 = vst.msk [vmem:[#allocation2] sm:$0xff] %vm58, %v47
  %60 = vst.msk [vmem:[#allocation2 + $0x8] sm:$0xff] %vm58, %v49
  %61 = vst.msk [vmem:[#allocation2 + $0x10] sm:$0xff] %vm58, %v51
  %62 = vst.msk [vmem:[#allocation2 + $0x18] sm:$0xff] %vm58, %v53
  %vm63 = vcmask 7168
  %64 = vst.msk [vmem:[#allocation2] sm:$0xff] %vm63, 0.0
  %65 = vst.msk [vmem:[#allocation2 + $0x8] sm:$0xff] %vm63, 0.0
  %66 = vst.msk [vmem:[#allocation2 + $0x10] sm:$0xff] %vm63, 0.0
  %67 = vst.msk [vmem:[#allocation2 + $0x18] sm:$0xff] %vm63, 0.0
  %68 = vst [vmem:[#allocation2 + $0x20] sm:$0xff] %v38
  %69 = vst [vmem:[#allocation2 + $0x28] sm:$0xff] %v39
  %70 = vst [vmem:[#allocation2 + $0x30] sm:$0xff] %v40
  %71 = vst [vmem:[#allocation2 + $0x38] sm:$0xff] %v41
  %72 = vrot.lane.b32.xlu0 %v38, 127
  %v73 = vpop.permute.xlu0 %72
  %74 = vrot.lane.b32.xlu0 %v39, 127
  %v75 = vpop.permute.xlu0 %74
  %76 = vrot.lane.b32.xlu0 %v40, 127
  %v77 = vpop.permute.xlu0 %76
  %78 = vrot.lane.b32.xlu0 %v41, 127
  %v79 = vpop.permute.xlu0 %78
  %vm84 = vcmask 1039360
  %85 = vst.msk [vmem:[#allocation2 + $0x40] sm:$0xff] %vm84, %v73
  %86 = vst.msk [vmem:[#allocation2 + $0x48] sm:$0xff] %vm84, %v75
  %87 = vst.msk [vmem:[#allocation2 + $0x50] sm:$0xff] %vm84, %v77
  %88 = vst.msk [vmem:[#allocation2 + $0x58] sm:$0xff] %vm84, %v79
  %vm89 = vcmask 1048568
  %90 = vst.msk [vmem:[#allocation2 + $0x40] sm:$0xff] %vm89, 0.0
  %91 = vst.msk [vmem:[#allocation2 + $0x48] sm:$0xff] %vm89, 0.0
  %92 = vst.msk [vmem:[#allocation2 + $0x50] sm:$0xff] %vm89, 0.0
  %93 = vst.msk [vmem:[#allocation2 + $0x58] sm:$0xff] %vm89, 0.0
  %v94 = vld [vmem:[#allocation2] sm:$0xff]
  %v95 = vld [vmem:[#allocation2 + $0x8] sm:$0xff]
  %v96 = vld [vmem:[#allocation2 + $0x10] sm:$0xff]
  %v97 = vld [vmem:[#allocation2 + $0x18] sm:$0xff]
  %v98 = vld [vmem:[#allocation2 + $0x20] sm:$0xff]
  %v99 = vld [vmem:[#allocation2 + $0x28] sm:$0xff]
  %v100 = vld [vmem:[#allocation2 + $0x30] sm:$0xff]
  %v101 = vld [vmem:[#allocation2 + $0x38] sm:$0xff]
  %v102 = vld [vmem:[#allocation2 + $0x40] sm:$0xff]
  %v103 = vld [vmem:[#allocation2 + $0x48] sm:$0xff]
  %v104 = vld [vmem:[#allocation2 + $0x50] sm:$0xff]
  %v105 = vld [vmem:[#allocation2 + $0x58] sm:$0xff]
  %vm106 = vcmask 785408
  %v108 = vsel %vm106, %v30, 0
  %v111 = vsel %vm106, %v31, 0
  %v114 = vsel %vm106, %v32, 0
  %v117 = vsel %vm106, %v33, 0
  %v120 = vsel %vm106, %v34, 0
  %v123 = vsel %vm106, %v35, 0
  %v126 = vsel %vm106, %v36, 0
  %v129 = vsel %vm106, %v37, 0
  %131 = vmatprep.subr.mxu0 0.0
  %132 = vmatpush1.msra.mxu0 0.0
  %133 = vmatprep.subr.mxu0 0.0
  %134 = vmatpush1.msra.mxu0 0.0
  %135 = vmatprep.subr.mxu0 0.0
  %136 = vmatpush1.msra.mxu0 0.0
  %137 = vmatprep.subr.mxu0 0.0
  %138 = vmatpush1.msra.mxu0 0.0
  %139 = vmatprep.subr.mxu0 0.0
  %140 = vmatpush1.msra.mxu0 %v105
  %141 = vmatprep.subr.mxu0 0.0
  %142 = vmatpush1.msra.mxu0 %v104
  %143 = vmatprep.subr.mxu0 0.0
  %144 = vmatpush1.msra.mxu0 %v103
  %145 = vmatprep.subr.mxu0 0.0
  %146 = vmatpush1.msra.mxu0 %v102
  %147 = vmatprep.subr.mxu0 0.0
  %148 = vmatpush1.msra.mxu0 %v101
  %149 = vmatprep.subr.mxu0 0.0
  %150 = vmatpush1.msra.mxu0 %v100
  %151 = vmatprep.subr.mxu0 0.0
  %152 = vmatpush1.msra.mxu0 %v99
  %153 = vmatprep.subr.mxu0 0.0
  %154 = vmatpush1.msra.mxu0 %v98
  %155 = vmatprep.subr.mxu0 0.0
  %156 = vmatpush1.msra.mxu0 %v97
  %157 = vmatprep.subr.mxu0 0.0
  %158 = vmatpush1.msra.mxu0 %v96
  %159 = vmatprep.subr.mxu0 0.0
  %160 = vmatpush1.msra.mxu0 %v95
  %161 = vmatprep.subr.mxu0 0.0
  %162 = vmatpush1.msra.mxu0 %v94
  %163 = vmatprep.subr.mxu0 0.0
  %164 = vmatpush2.msra.mxu0 0.0
  %165 = vmatprep.subr.mxu0 0.0
  %166 = vmatpush2.msra.mxu0 0.0
  %167 = vmatprep.subr.mxu0 0.0
  %168 = vmatpush2.msra.mxu0 0.0
  %169 = vmatprep.subr.mxu0 0.0
  %170 = vmatpush2.msra.mxu0 0.0
  %171 = vmatprep.subr.mxu0 0.0
  %172 = vmatpush2.msra.mxu0 0.0
  %173 = vmatprep.subr.mxu0 0.0
  %174 = vmatpush2.msra.mxu0 0.0
  %175 = vmatprep.subr.mxu0 0.0
  %176 = vmatpush2.msra.mxu0 0.0
  %177 = vmatprep.subr.mxu0 0.0
  %178 = vmatpush2.msra.mxu0 0.0
  %179 = vmatprep.subr.mxu0 0.0
  %180 = vmatpush2.msra.mxu0 0.0
  %181 = vmatprep.subr.mxu0 0.0
  %182 = vmatpush2.msra.mxu0 0.0
  %183 = vmatprep.subr.mxu0 0.0
  %184 = vmatpush2.msra.mxu0 0.0
  %185 = vmatprep.subr.mxu0 0.0
  %186 = vmatpush2.msra.mxu0 0.0
  %187 = vmatprep.subr.mxu0 0.0
  %188 = vmatpush2.msra.mxu0 0.0
  %189 = vmatprep.subr.mxu0 0.0
  %190 = vmatpush2.msra.mxu0 0.0
  %191 = vmatprep.subr.mxu0 0.0
  %192 = vmatpush2.msra.mxu0 0.0
  %193 = vmatprep.subr.mxu0 0.0
  %194 = vmatpush2.msra.mxu0 0.0
  %195 = vmatprep.mubr.f32.mxu0 0.0
  %196 = vmatmul.mubr.f32.gmra.mxu0 %v108
  %v197 = vpop.f32.mrf.mxu0
  %v198 = vadd.f32 0.0, %v197
  %v199 = vpop.f32.mrf.mxu0
  %200 = vmatprep.mubr.f32.mxu0 0.0
  %201 = vmatmul.mubr.f32.gmra.mxu0 %v111
  %v202 = vpop.f32.mrf.mxu0
  %v203 = vadd.f32 0.0, %v202
  %v204 = vpop.f32.mrf.mxu0
  %205 = vmatprep.mubr.f32.mxu0 0.0
  %206 = vmatmul.mubr.f32.gmra.mxu0 %v114
  %v207 = vpop.f32.mrf.mxu0
  %v208 = vadd.f32 0.0, %v207
  %v209 = vpop.f32.mrf.mxu0
  %210 = vmatprep.mubr.f32.mxu0 0.0
  %211 = vmatmul.mubr.f32.gmra.mxu0 %v117
  %v212 = vpop.f32.mrf.mxu0
  %v213 = vadd.f32 0.0, %v212
  %v214 = vpop.f32.mrf.mxu0
  %215 = vmatprep.mubr.f32.mxu0 0.0
  %216 = vmatmul.mubr.f32.gmra.mxu0 %v120
  %v217 = vpop.f32.mrf.mxu0
  %v218 = vadd.f32 0.0, %v217
  %v219 = vpop.f32.mrf.mxu0
  %220 = vmatprep.mubr.f32.mxu0 0.0
  %221 = vmatmul.mubr.f32.gmra.mxu0 %v123
  %v222 = vpop.f32.mrf.mxu0
  %v223 = vadd.f32 0.0, %v222
  %v224 = vpop.f32.mrf.mxu0
  %225 = vmatprep.mubr.f32.mxu0 0.0
  %226 = vmatmul.mubr.f32.gmra.mxu0 %v126
  %v227 = vpop.f32.mrf.mxu0
  %v228 = vadd.f32 0.0, %v227
  %v229 = vpop.f32.mrf.mxu0
  %230 = vmatprep.mubr.f32.mxu0 0.0
  %231 = vmatmul.mubr.f32.gmra.mxu0 %v129
  %v232 = vpop.f32.mrf.mxu0
  %v233 = vadd.f32 0.0, %v232
  %v234 = vpop.f32.mrf.mxu0
  %235 = vdwg.mxu0
  %v236 = vld [vmem:[%s3] sm:$0xff]
  %v237 = vld [vmem:[%s3 + $0x8] sm:$0xff]
  %v238 = vld [vmem:[%s3 + $0x10] sm:$0xff]
  %v239 = vld [vmem:[%s3 + $0x18] sm:$0xff]
  %v240 = vld [vmem:[%s3 + $0x20] sm:$0xff]
  %v241 = vld [vmem:[%s3 + $0x28] sm:$0xff]
  %v242 = vld [vmem:[%s3 + $0x30] sm:$0xff]
  %v243 = vld [vmem:[%s3 + $0x38] sm:$0xff]
  %v244 = vld [vmem:[%s4] sm:$0xff]
  %v245 = vld [vmem:[%s4 + $0x8] sm:$0xff]
  %v246 = vld [vmem:[%s4 + $0x10] sm:$0xff]
  %v247 = vld [vmem:[%s4 + $0x18] sm:$0xff]
  %v248 = vld [vmem:[%s4 + $0x20] sm:$0xff]
  %v249 = vld [vmem:[%s4 + $0x28] sm:$0xff]
  %v250 = vld [vmem:[%s4 + $0x30] sm:$0xff]
  %v251 = vld [vmem:[%s4 + $0x38] sm:$0xff]
  %v253 = vlaneseq
  %v254 = vshrl.u32 %v253, 7
  %v255 = vsub.s32 0, %v254
  %v256 = vrot.slane %v29, %v255
  %v258 = vmul.f32 %v198, %v256
  %v259 = vmul.f32 %v203, %v256
  %v260 = vmul.f32 %v208, %v256
  %v261 = vmul.f32 %v213, %v256
  %v262 = vmul.f32 %v218, %v256
  %v263 = vmul.f32 %v223, %v256
  %v264 = vmul.f32 %v228, %v256
  %v265 = vmul.f32 %v233, %v256
  %266 = vadd.xlane.f32.xlu0 %v258
  %v267 = vpop.xlane.xlu0 %266
  %268 = vadd.xlane.f32.xlu0 %v259
  %v269 = vpop.xlane.xlu0 %268
  %270 = vadd.xlane.f32.xlu0 %v260
  %v271 = vpop.xlane.xlu0 %270
  %272 = vadd.xlane.f32.xlu0 %v261
  %v273 = vpop.xlane.xlu0 %272
  %274 = vadd.xlane.f32.xlu0 %v262
  %v275 = vpop.xlane.xlu0 %274
  %276 = vadd.xlane.f32.xlu0 %v263
  %v277 = vpop.xlane.xlu0 %276
  %278 = vadd.xlane.f32.xlu0 %v264
  %v279 = vpop.xlane.xlu0 %278
  %280 = vadd.xlane.f32.xlu0 %v265
  %v281 = vpop.xlane.xlu0 %280
  %v282 = vmul.f32 %v267, 0.1
  %v283 = vmul.f32 %v269, 0.1
  %v284 = vmul.f32 %v271, 0.1
  %v285 = vmul.f32 %v273, 0.1
  %v286 = vmul.f32 %v275, 0.1
  %v287 = vmul.f32 %v277, 0.1
  %v288 = vmul.f32 %v279, 0.1
  %v289 = vmul.f32 %v281, 0.1
  %v290 = vsub.f32 %v198, %v282
  %v291 = vsub.f32 %v203, %v283
  %v292 = vsub.f32 %v208, %v284
  %v293 = vsub.f32 %v213, %v285
  %v294 = vsub.f32 %v218, %v286
  %v295 = vsub.f32 %v223, %v287
  %v296 = vsub.f32 %v228, %v288
  %v297 = vsub.f32 %v233, %v289
  %v298 = vmul.f32 %v290, %v256
  %v299 = vmul.f32 %v291, %v256
  %v300 = vmul.f32 %v292, %v256
  %v301 = vmul.f32 %v293, %v256
  %v302 = vmul.f32 %v294, %v256
  %v303 = vmul.f32 %v295, %v256
  %v304 = vmul.f32 %v296, %v256
  %v305 = vmul.f32 %v297, %v256
  %v306 = vmul.f32 %v298, %v298
  %v307 = vmul.f32 %v299, %v299
  %v308 = vmul.f32 %v300, %v300
  %v309 = vmul.f32 %v301, %v301
  %v310 = vmul.f32 %v302, %v302
  %v311 = vmul.f32 %v303, %v303
  %v312 = vmul.f32 %v304, %v304
  %v313 = vmul.f32 %v305, %v305
  %314 = vadd.xlane.f32.xlu0 %v306
  %v315 = vpop.xlane.xlu0 %314
  %316 = vadd.xlane.f32.xlu0 %v307
  %v317 = vpop.xlane.xlu0 %316
  %318 = vadd.xlane.f32.xlu0 %v308
  %v319 = vpop.xlane.xlu0 %318
  %320 = vadd.xlane.f32.xlu0 %v309
  %v321 = vpop.xlane.xlu0 %320
  %322 = vadd.xlane.f32.xlu0 %v310
  %v323 = vpop.xlane.xlu0 %322
  %324 = vadd.xlane.f32.xlu0 %v311
  %v325 = vpop.xlane.xlu0 %324
  %326 = vadd.xlane.f32.xlu0 %v312
  %v327 = vpop.xlane.xlu0 %326
  %328 = vadd.xlane.f32.xlu0 %v313
  %v329 = vpop.xlane.xlu0 %328
  %v330 = vmul.f32 %v315, 0.1
  %v331 = vmul.f32 %v317, 0.1
  %v332 = vmul.f32 %v319, 0.1
  %v333 = vmul.f32 %v321, 0.1
  %v334 = vmul.f32 %v323, 0.1
  %v335 = vmul.f32 %v325, 0.1
  %v336 = vmul.f32 %v327, 0.1
  %v337 = vmul.f32 %v329, 0.1
  %v338 = vadd.f32 %v330, 1e-05
  %v339 = vadd.f32 %v331, 1e-05
  %v340 = vadd.f32 %v332, 1e-05
  %v341 = vadd.f32 %v333, 1e-05
  %v342 = vadd.f32 %v334, 1e-05
  %v343 = vadd.f32 %v335, 1e-05
  %v344 = vadd.f32 %v336, 1e-05
  %v345 = vadd.f32 %v337, 1e-05
  %v346 = vrsqrt.pop %v338
  %v347 = vrsqrt.pop %v339
  %v348 = vrsqrt.pop %v340
  %v349 = vrsqrt.pop %v341
  %v350 = vrsqrt.pop %v342
  %v351 = vrsqrt.pop %v343
  %v352 = vrsqrt.pop %v344
  %v353 = vrsqrt.pop %v345
  %v354 = vmul.f32 %v346, %v236
  %v355 = vmul.f32 %v347, %v237
  %v356 = vmul.f32 %v348, %v238
  %v357 = vmul.f32 %v349, %v239
  %v358 = vmul.f32 %v350, %v240
  %v359 = vmul.f32 %v351, %v241
  %v360 = vmul.f32 %v352, %v242
  %v361 = vmul.f32 %v353, %v243
  %363 = vset.pattern.permute.xlu0 0
  %364 = vperm.xlu0 %363, %v354
  %v365 = vpop.permute.xlu0 %364
  %368 = vset.pattern.permute.xlu0 0
  %369 = vperm.xlu0 %368, %v355
  %v370 = vpop.permute.xlu0 %369
  %373 = vset.pattern.permute.xlu0 0
  %374 = vperm.xlu0 %373, %v356
  %v375 = vpop.permute.xlu0 %374
  %378 = vset.pattern.permute.xlu0 0
  %379 = vperm.xlu0 %378, %v357
  %v380 = vpop.permute.xlu0 %379
  %383 = vset.pattern.permute.xlu0 0
  %384 = vperm.xlu0 %383, %v358
  %v385 = vpop.permute.xlu0 %384
  %388 = vset.pattern.permute.xlu0 0
  %389 = vperm.xlu0 %388, %v359
  %v390 = vpop.permute.xlu0 %389
  %393 = vset.pattern.permute.xlu0 0
  %394 = vperm.xlu0 %393, %v360
  %v395 = vpop.permute.xlu0 %394
  %398 = vset.pattern.permute.xlu0 0
  %399 = vperm.xlu0 %398, %v361
  %v400 = vpop.permute.xlu0 %399
  %v402 = vmul.f32 %v298, %v365
  %v403 = vmul.f32 %v299, %v370
  %v404 = vmul.f32 %v300, %v375
  %v405 = vmul.f32 %v301, %v380
  %v406 = vmul.f32 %v302, %v385
  %v407 = vmul.f32 %v303, %v390
  %v408 = vmul.f32 %v304, %v395
  %v409 = vmul.f32 %v305, %v400
  %411 = vset.pattern.permute.xlu0 0
  %412 = vperm.xlu0 %411, %v244
  %v413 = vpop.permute.xlu0 %412
  %416 = vset.pattern.permute.xlu0 0
  %417 = vperm.xlu0 %416, %v245
  %v418 = vpop.permute.xlu0 %417
  %421 = vset.pattern.permute.xlu0 0
  %422 = vperm.xlu0 %421, %v246
  %v423 = vpop.permute.xlu0 %422
  %426 = vset.pattern.permute.xlu0 0
  %427 = vperm.xlu0 %426, %v247
  %v428 = vpop.permute.xlu0 %427
  %431 = vset.pattern.permute.xlu0 0
  %432 = vperm.xlu0 %431, %v248
  %v433 = vpop.permute.xlu0 %432
  %436 = vset.pattern.permute.xlu0 0
  %437 = vperm.xlu0 %436, %v249
  %v438 = vpop.permute.xlu0 %437
  %441 = vset.pattern.permute.xlu0 0
  %442 = vperm.xlu0 %441, %v250
  %v443 = vpop.permute.xlu0 %442
  %446 = vset.pattern.permute.xlu0 0
  %447 = vperm.xlu0 %446, %v251
  %v448 = vpop.permute.xlu0 %447
  %v450 = vadd.f32 %v402, %v413
  %v451 = vadd.f32 %v403, %v418
  %v452 = vadd.f32 %v404, %v423
  %v453 = vadd.f32 %v405, %v428
  %v454 = vadd.f32 %v406, %v433
  %v455 = vadd.f32 %v407, %v438
  %v456 = vadd.f32 %v408, %v443
  %v457 = vadd.f32 %v409, %v448
  %v458 = vtanh.pop %v450
  %v459 = vtanh.pop %v451
  %v460 = vtanh.pop %v452
  %v461 = vtanh.pop %v453
  %v462 = vtanh.pop %v454
  %v463 = vtanh.pop %v455
  %v464 = vtanh.pop %v456
  %v465 = vtanh.pop %v457
  %v466 = vmul.f32 %v458, %v256
  %v467 = vmul.f32 %v459, %v256
  %v468 = vmul.f32 %v460, %v256
  %v469 = vmul.f32 %v461, %v256
  %v470 = vmul.f32 %v462, %v256
  %v471 = vmul.f32 %v463, %v256
  %v472 = vmul.f32 %v464, %v256
  %v473 = vmul.f32 %v465, %v256
  %v474 = vld [vmem:[%s5] sm:$0xff]
  %v475 = vld [vmem:[%s5 + $0x8] sm:$0xff]
  %v476 = vld [vmem:[%s5 + $0x10] sm:$0xff]
  %v477 = vld [vmem:[%s5 + $0x18] sm:$0xff]
  %v478 = vld [vmem:[%s5 + $0x20] sm:$0xff]
  %v479 = vld [vmem:[%s5 + $0x28] sm:$0xff]
  %v480 = vld [vmem:[%s5 + $0x30] sm:$0xff]
  %v481 = vld [vmem:[%s5 + $0x38] sm:$0xff]
  %v482 = vld [vmem:[%s5 + $0x40] sm:$0xff]
  %v483 = vld [vmem:[%s5 + $0x48] sm:$0xff]
  %v484 = vld [vmem:[%s5 + $0x50] sm:$0xff]
  %v485 = vld [vmem:[%s5 + $0x58] sm:$0xff]
  %v486 = vld [vmem:[%s5 + $0x60] sm:$0xff]
  %v487 = vld [vmem:[%s5 + $0x68] sm:$0xff]
  %v488 = vld [vmem:[%s5 + $0x70] sm:$0xff]
  %v489 = vld [vmem:[%s5 + $0x78] sm:$0xff]
  %498 = vrot.lane.b32.xlu0 %v466, 1
  %v499 = vpop.permute.xlu0 %498
  %500 = vrot.lane.b32.xlu0 %v467, 1
  %v501 = vpop.permute.xlu0 %500
  %502 = vrot.lane.b32.xlu0 %v468, 1
  %v503 = vpop.permute.xlu0 %502
  %504 = vrot.lane.b32.xlu0 %v469, 1
  %v505 = vpop.permute.xlu0 %504
  %506 = vrot.lane.b32.xlu0 %v470, 1
  %v507 = vpop.permute.xlu0 %506
  %508 = vrot.lane.b32.xlu0 %v471, 1
  %v509 = vpop.permute.xlu0 %508
  %510 = vrot.lane.b32.xlu0 %v472, 1
  %v511 = vpop.permute.xlu0 %510
  %512 = vrot.lane.b32.xlu0 %v473, 1
  %v513 = vpop.permute.xlu0 %512
  %522 = vst.msk [vmem:[#allocation2] sm:$0xff] %vm58, %v499
  %523 = vst.msk [vmem:[#allocation2 + $0x8] sm:$0xff] %vm58, %v501
  %524 = vst.msk [vmem:[#allocation2 + $0x10] sm:$0xff] %vm58, %v503
  %525 = vst.msk [vmem:[#allocation2 + $0x18] sm:$0xff] %vm58, %v505
  %526 = vst.msk [vmem:[#allocation2 + $0x20] sm:$0xff] %vm58, %v507
  %527 = vst.msk [vmem:[#allocation2 + $0x28] sm:$0xff] %vm58, %v509
  %528 = vst.msk [vmem:[#allocation2 + $0x30] sm:$0xff] %vm58, %v511
  %529 = vst.msk [vmem:[#allocation2 + $0x38] sm:$0xff] %vm58, %v513
  %530 = vst.msk [vmem:[#allocation2] sm:$0xff] %vm63, 0.0
  %531 = vst.msk [vmem:[#allocation2 + $0x8] sm:$0xff] %vm63, 0.0
  %532 = vst.msk [vmem:[#allocation2 + $0x10] sm:$0xff] %vm63, 0.0
  %533 = vst.msk [vmem:[#allocation2 + $0x18] sm:$0xff] %vm63, 0.0
  %534 = vst.msk [vmem:[#allocation2 + $0x20] sm:$0xff] %vm63, 0.0
  %535 = vst.msk [vmem:[#allocation2 + $0x28] sm:$0xff] %vm63, 0.0
  %536 = vst.msk [vmem:[#allocation2 + $0x30] sm:$0xff] %vm63, 0.0
  %537 = vst.msk [vmem:[#allocation2 + $0x38] sm:$0xff] %vm63, 0.0
  %538 = vst [vmem:[#allocation2 + $0x40] sm:$0xff] %v466
  %539 = vst [vmem:[#allocation2 + $0x48] sm:$0xff] %v467
  %540 = vst [vmem:[#allocation2 + $0x50] sm:$0xff] %v468
  %541 = vst [vmem:[#allocation2 + $0x58] sm:$0xff] %v469
  %542 = vst [vmem:[#allocation2 + $0x60] sm:$0xff] %v470
  %543 = vst [vmem:[#allocation2 + $0x68] sm:$0xff] %v471
  %544 = vst [vmem:[#allocation2 + $0x70] sm:$0xff] %v472
  %545 = vst [vmem:[#allocation2 + $0x78] sm:$0xff] %v473
  %546 = vrot.lane.b32.xlu0 %v466, 127
  %v547 = vpop.permute.xlu0 %546
  %548 = vrot.lane.b32.xlu0 %v467, 127
  %v549 = vpop.permute.xlu0 %548
  %550 = vrot.lane.b32.xlu0 %v468, 127
  %v551 = vpop.permute.xlu0 %550
  %552 = vrot.lane.b32.xlu0 %v469, 127
  %v553 = vpop.permute.xlu0 %552
  %554 = vrot.lane.b32.xlu0 %v470, 127
  %v555 = vpop.permute.xlu0 %554
  %556 = vrot.lane.b32.xlu0 %v471, 127
  %v557 = vpop.permute.xlu0 %556
  %558 = vrot.lane.b32.xlu0 %v472, 127
  %v559 = vpop.permute.xlu0 %558
  %560 = vrot.lane.b32.xlu0 %v473, 127
  %v561 = vpop.permute.xlu0 %560
  %570 = vst.msk [vmem:[#allocation2 + $0x80] sm:$0xff] %vm84, %v547
  %571 = vst.msk [vmem:[#allocation2 + $0x88] sm:$0xff] %vm84, %v549
  %572 = vst.msk [vmem:[#allocation2 + $0x90] sm:$0xff] %vm84, %v551
  %573 = vst.msk [vmem:[#allocation2 + $0x98] sm:$0xff] %vm84, %v553
  %574 = vst.msk [vmem:[#allocation2 + $0xa0] sm:$0xff] %vm84, %v555
  %575 = vst.msk [vmem:[#allocation2 + $0xa8] sm:$0xff] %vm84, %v557
  %576 = vst.msk [vmem:[#allocation2 + $0xb0] sm:$0xff] %vm84, %v559
  %577 = vst.msk [vmem:[#allocation2 + $0xb8] sm:$0xff] %vm84, %v561
  %578 = vst.msk [vmem:[#allocation2 + $0x80] sm:$0xff] %vm89, 0.0
  %579 = vst.msk [vmem:[#allocation2 + $0x88] sm:$0xff] %vm89, 0.0
  %580 = vst.msk [vmem:[#allocation2 + $0x90] sm:$0xff] %vm89, 0.0
  %581 = vst.msk [vmem:[#allocation2 + $0x98] sm:$0xff] %vm89, 0.0
  %582 = vst.msk [vmem:[#allocation2 + $0xa0] sm:$0xff] %vm89, 0.0
  %583 = vst.msk [vmem:[#allocation2 + $0xa8] sm:$0xff] %vm89, 0.0
  %584 = vst.msk [vmem:[#allocation2 + $0xb0] sm:$0xff] %vm89, 0.0
  %585 = vst.msk [vmem:[#allocation2 + $0xb8] sm:$0xff] %vm89, 0.0
  %v586 = vld [vmem:[#allocation2] sm:$0xff]
  %v587 = vld [vmem:[#allocation2 + $0x8] sm:$0xff]
  %v588 = vld [vmem:[#allocation2 + $0x10] sm:$0xff]
  %v589 = vld [vmem:[#allocation2 + $0x18] sm:$0xff]
  %v590 = vld [vmem:[#allocation2 + $0x20] sm:$0xff]
  %v591 = vld [vmem:[#allocation2 + $0x28] sm:$0xff]
  %v592 = vld [vmem:[#allocation2 + $0x30] sm:$0xff]
  %v593 = vld [vmem:[#allocation2 + $0x38] sm:$0xff]
  %v594 = vld [vmem:[#allocation2 + $0x40] sm:$0xff]
  %v595 = vld [vmem:[#allocation2 + $0x48] sm:$0xff]
  %v596 = vld [vmem:[#allocation2 + $0x50] sm:$0xff]
  %v597 = vld [vmem:[#allocation2 + $0x58] sm:$0xff]
  %v598 = vld [vmem:[#allocation2 + $0x60] sm:$0xff]
  %v599 = vld [vmem:[#allocation2 + $0x68] sm:$0xff]
  %v600 = vld [vmem:[#allocation2 + $0x70] sm:$0xff]
  %v601 = vld [vmem:[#allocation2 + $0x78] sm:$0xff]
  %v602 = vld [vmem:[#allocation2 + $0x80] sm:$0xff]
  %v603 = vld [vmem:[#allocation2 + $0x88] sm:$0xff]
  %v604 = vld [vmem:[#allocation2 + $0x90] sm:$0xff]
  %v605 = vld [vmem:[#allocation2 + $0x98] sm:$0xff]
  %v606 = vld [vmem:[#allocation2 + $0xa0] sm:$0xff]
  %v607 = vld [vmem:[#allocation2 + $0xa8] sm:$0xff]
  %v608 = vld [vmem:[#allocation2 + $0xb0] sm:$0xff]
  %v609 = vld [vmem:[#allocation2 + $0xb8] sm:$0xff]
  %vm610 = vcmask 523264
  %v612 = vsel %vm610, %v475, 0
  %v615 = vsel %vm610, %v477, 0
  %v618 = vsel %vm610, %v479, 0
  %v621 = vsel %vm610, %v481, 0
  %v624 = vsel %vm610, %v483, 0
  %v627 = vsel %vm610, %v485, 0
  %v630 = vsel %vm610, %v487, 0
  %v633 = vsel %vm610, %v489, 0
  %635 = vmatprep.subr.mxu0 0.0
  %636 = vmatpush1.msra.mxu0 %v601
  %637 = vmatprep.subr.mxu0 0.0
  %638 = vmatpush1.msra.mxu0 %v600
  %639 = vmatprep.subr.mxu0 0.0
  %640 = vmatpush1.msra.mxu0 %v599
  %641 = vmatprep.subr.mxu0 0.0
  %642 = vmatpush1.msra.mxu0 %v598
  %643 = vmatprep.subr.mxu0 0.0
  %644 = vmatpush1.msra.mxu0 %v597
  %645 = vmatprep.subr.mxu0 0.0
  %646 = vmatpush1.msra.mxu0 %v596
  %647 = vmatprep.subr.mxu0 0.0
  %648 = vmatpush1.msra.mxu0 %v595
  %649 = vmatprep.subr.mxu0 0.0
  %650 = vmatpush1.msra.mxu0 %v594
  %651 = vmatprep.subr.mxu0 0.0
  %652 = vmatpush1.msra.mxu0 %v593
  %653 = vmatprep.subr.mxu0 0.0
  %654 = vmatpush1.msra.mxu0 %v592
  %655 = vmatprep.subr.mxu0 0.0
  %656 = vmatpush1.msra.mxu0 %v591
  %657 = vmatprep.subr.mxu0 0.0
  %658 = vmatpush1.msra.mxu0 %v590
  %659 = vmatprep.subr.mxu0 0.0
  %660 = vmatpush1.msra.mxu0 %v589
  %661 = vmatprep.subr.mxu0 0.0
  %662 = vmatpush1.msra.mxu0 %v588
  %663 = vmatprep.subr.mxu0 0.0
  %664 = vmatpush1.msra.mxu0 %v587
  %665 = vmatprep.subr.mxu0 0.0
  %666 = vmatpush1.msra.mxu0 %v586
  %667 = vmatprep.subr.mxu0 0.0
  %668 = vmatpush2.msra.mxu0 0.0
  %669 = vmatprep.subr.mxu0 0.0
  %670 = vmatpush2.msra.mxu0 0.0
  %671 = vmatprep.subr.mxu0 0.0
  %672 = vmatpush2.msra.mxu0 0.0
  %673 = vmatprep.subr.mxu0 0.0
  %674 = vmatpush2.msra.mxu0 0.0
  %675 = vmatprep.subr.mxu0 0.0
  %676 = vmatpush2.msra.mxu0 0.0
  %677 = vmatprep.subr.mxu0 0.0
  %678 = vmatpush2.msra.mxu0 0.0
  %679 = vmatprep.subr.mxu0 0.0
  %680 = vmatpush2.msra.mxu0 0.0
  %681 = vmatprep.subr.mxu0 0.0
  %682 = vmatpush2.msra.mxu0 0.0
  %683 = vmatprep.subr.mxu0 0.0
  %684 = vmatpush2.msra.mxu0 %v609
  %685 = vmatprep.subr.mxu0 0.0
  %686 = vmatpush2.msra.mxu0 %v608
  %687 = vmatprep.subr.mxu0 0.0
  %688 = vmatpush2.msra.mxu0 %v607
  %689 = vmatprep.subr.mxu0 0.0
  %690 = vmatpush2.msra.mxu0 %v606
  %691 = vmatprep.subr.mxu0 0.0
  %692 = vmatpush2.msra.mxu0 %v605
  %693 = vmatprep.subr.mxu0 0.0
  %694 = vmatpush2.msra.mxu0 %v604
  %695 = vmatprep.subr.mxu0 0.0
  %696 = vmatpush2.msra.mxu0 %v603
  %697 = vmatprep.subr.mxu0 0.0
  %698 = vmatpush2.msra.mxu0 %v602
  %699 = vmatprep.mubr.f32.mxu0 %v612
  %700 = vmatmul.mubr.f32.gmra.mxu0 %v474
  %v701 = vpop.f32.mrf.mxu0
  %v702 = vadd.f32 0.0, %v701
  %v703 = vpop.f32.mrf.mxu0
  %704 = vmatprep.mubr.f32.mxu0 %v615
  %705 = vmatmul.mubr.f32.gmra.mxu0 %v476
  %v706 = vpop.f32.mrf.mxu0
  %v707 = vadd.f32 0.0, %v706
  %v708 = vpop.f32.mrf.mxu0
  %709 = vmatprep.mubr.f32.mxu0 %v618
  %710 = vmatmul.mubr.f32.gmra.mxu0 %v478
  %v711 = vpop.f32.mrf.mxu0
  %v712 = vadd.f32 0.0, %v711
  %v713 = vpop.f32.mrf.mxu0
  %714 = vmatprep.mubr.f32.mxu0 %v621
  %715 = vmatmul.mubr.f32.gmra.mxu0 %v480
  %v716 = vpop.f32.mrf.mxu0
  %v717 = vadd.f32 0.0, %v716
  %v718 = vpop.f32.mrf.mxu0
  %719 = vmatprep.mubr.f32.mxu0 %v624
  %720 = vmatmul.mubr.f32.gmra.mxu0 %v482
  %v721 = vpop.f32.mrf.mxu0
  %v722 = vadd.f32 0.0, %v721
  %v723 = vpop.f32.mrf.mxu0
  %724 = vmatprep.mubr.f32.mxu0 %v627
  %725 = vmatmul.mubr.f32.gmra.mxu0 %v484
  %v726 = vpop.f32.mrf.mxu0
  %v727 = vadd.f32 0.0, %v726
  %v728 = vpop.f32.mrf.mxu0
  %729 = vmatprep.mubr.f32.mxu0 %v630
  %730 = vmatmul.mubr.f32.gmra.mxu0 %v486
  %v731 = vpop.f32.mrf.mxu0
  %v732 = vadd.f32 0.0, %v731
  %v733 = vpop.f32.mrf.mxu0
  %734 = vmatprep.mubr.f32.mxu0 %v633
  %735 = vmatmul.mubr.f32.gmra.mxu0 %v488
  %v736 = vpop.f32.mrf.mxu0
  %v737 = vadd.f32 0.0, %v736
  %v738 = vpop.f32.mrf.mxu0
  %739 = vdwg.mxu0
  %v740 = vld [vmem:[%s6] sm:$0xff]
  %v741 = vld [vmem:[%s6 + $0x8] sm:$0xff]
  %v742 = vld [vmem:[%s6 + $0x10] sm:$0xff]
  %v743 = vld [vmem:[%s6 + $0x18] sm:$0xff]
  %v744 = vld [vmem:[%s6 + $0x20] sm:$0xff]
  %v745 = vld [vmem:[%s6 + $0x28] sm:$0xff]
  %v746 = vld [vmem:[%s6 + $0x30] sm:$0xff]
  %v747 = vld [vmem:[%s6 + $0x38] sm:$0xff]
  %v748 = vld [vmem:[%s7] sm:$0xff]
  %v749 = vld [vmem:[%s7 + $0x8] sm:$0xff]
  %v750 = vld [vmem:[%s7 + $0x10] sm:$0xff]
  %v751 = vld [vmem:[%s7 + $0x18] sm:$0xff]
  %v752 = vld [vmem:[%s7 + $0x20] sm:$0xff]
  %v753 = vld [vmem:[%s7 + $0x28] sm:$0xff]
  %v754 = vld [vmem:[%s7 + $0x30] sm:$0xff]
  %v755 = vld [vmem:[%s7 + $0x38] sm:$0xff]
  %v756 = vmul.f32 %v702, %v256
  %v757 = vmul.f32 %v707, %v256
  %v758 = vmul.f32 %v712, %v256
  %v759 = vmul.f32 %v717, %v256
  %v760 = vmul.f32 %v722, %v256
  %v761 = vmul.f32 %v727, %v256
  %v762 = vmul.f32 %v732, %v256
  %v763 = vmul.f32 %v737, %v256
  %764 = vadd.xlane.f32.xlu0 %v756
  %v765 = vpop.xlane.xlu0 %764
  %766 = vadd.xlane.f32.xlu0 %v757
  %v767 = vpop.xlane.xlu0 %766
  %768 = vadd.xlane.f32.xlu0 %v758
  %v769 = vpop.xlane.xlu0 %768
  %770 = vadd.xlane.f32.xlu0 %v759
  %v771 = vpop.xlane.xlu0 %770
  %772 = vadd.xlane.f32.xlu0 %v760
  %v773 = vpop.xlane.xlu0 %772
  %774 = vadd.xlane.f32.xlu0 %v761
  %v775 = vpop.xlane.xlu0 %774
  %776 = vadd.xlane.f32.xlu0 %v762
  %v777 = vpop.xlane.xlu0 %776
  %778 = vadd.xlane.f32.xlu0 %v763
  %v779 = vpop.xlane.xlu0 %778
  %v780 = vmul.f32 %v765, 0.1
  %v781 = vmul.f32 %v767, 0.1
  %v782 = vmul.f32 %v769, 0.1
  %v783 = vmul.f32 %v771, 0.1
  %v784 = vmul.f32 %v773, 0.1
  %v785 = vmul.f32 %v775, 0.1
  %v786 = vmul.f32 %v777, 0.1
  %v787 = vmul.f32 %v779, 0.1
  %v788 = vsub.f32 %v702, %v780
  %v789 = vsub.f32 %v707, %v781
  %v790 = vsub.f32 %v712, %v782
  %v791 = vsub.f32 %v717, %v783
  %v792 = vsub.f32 %v722, %v784
  %v793 = vsub.f32 %v727, %v785
  %v794 = vsub.f32 %v732, %v786
  %v795 = vsub.f32 %v737, %v787
  %v796 = vmul.f32 %v788, %v256
  %v797 = vmul.f32 %v789, %v256
  %v798 = vmul.f32 %v790, %v256
  %v799 = vmul.f32 %v791, %v256
  %v800 = vmul.f32 %v792, %v256
  %v801 = vmul.f32 %v793, %v256
  %v802 = vmul.f32 %v794, %v256
  %v803 = vmul.f32 %v795, %v256
  %v804 = vmul.f32 %v796, %v796
  %v805 = vmul.f32 %v797, %v797
  %v806 = vmul.f32 %v798, %v798
  %v807 = vmul.f32 %v799, %v799
  %v808 = vmul.f32 %v800, %v800
  %v809 = vmul.f32 %v801, %v801
  %v810 = vmul.f32 %v802, %v802
  %v811 = vmul.f32 %v803, %v803
  %812 = vadd.xlane.f32.xlu0 %v804
  %v813 = vpop.xlane.xlu0 %812
  %814 = vadd.xlane.f32.xlu0 %v805
  %v815 = vpop.xlane.xlu0 %814
  %816 = vadd.xlane.f32.xlu0 %v806
  %v817 = vpop.xlane.xlu0 %816
  %818 = vadd.xlane.f32.xlu0 %v807
  %v819 = vpop.xlane.xlu0 %818
  %820 = vadd.xlane.f32.xlu0 %v808
  %v821 = vpop.xlane.xlu0 %820
  %822 = vadd.xlane.f32.xlu0 %v809
  %v823 = vpop.xlane.xlu0 %822
  %824 = vadd.xlane.f32.xlu0 %v810
  %v825 = vpop.xlane.xlu0 %824
  %826 = vadd.xlane.f32.xlu0 %v811
  %v827 = vpop.xlane.xlu0 %826
  %v828 = vmul.f32 %v813, 0.1
  %v829 = vmul.f32 %v815, 0.1
  %v830 = vmul.f32 %v817, 0.1
  %v831 = vmul.f32 %v819, 0.1
  %v832 = vmul.f32 %v821, 0.1
  %v833 = vmul.f32 %v823, 0.1
  %v834 = vmul.f32 %v825, 0.1
  %v835 = vmul.f32 %v827, 0.1
  %v836 = vadd.f32 %v828, 1e-05
  %v837 = vadd.f32 %v829, 1e-05
  %v838 = vadd.f32 %v830, 1e-05
  %v839 = vadd.f32 %v831, 1e-05
  %v840 = vadd.f32 %v832, 1e-05
  %v841 = vadd.f32 %v833, 1e-05
  %v842 = vadd.f32 %v834, 1e-05
  %v843 = vadd.f32 %v835, 1e-05
  %v844 = vrsqrt.pop %v836
  %v845 = vrsqrt.pop %v837
  %v846 = vrsqrt.pop %v838
  %v847 = vrsqrt.pop %v839
  %v848 = vrsqrt.pop %v840
  %v849 = vrsqrt.pop %v841
  %v850 = vrsqrt.pop %v842
  %v851 = vrsqrt.pop %v843
  %v852 = vmul.f32 %v844, %v740
  %v853 = vmul.f32 %v845, %v741
  %v854 = vmul.f32 %v846, %v742
  %v855 = vmul.f32 %v847, %v743
  %v856 = vmul.f32 %v848, %v744
  %v857 = vmul.f32 %v849, %v745
  %v858 = vmul.f32 %v850, %v746
  %v859 = vmul.f32 %v851, %v747
  %861 = vset.pattern.permute.xlu0 0
  %862 = vperm.xlu0 %861, %v852
  %v863 = vpop.permute.xlu0 %862
  %866 = vset.pattern.permute.xlu0 0
  %867 = vperm.xlu0 %866, %v853
  %v868 = vpop.permute.xlu0 %867
  %871 = vset.pattern.permute.xlu0 0
  %872 = vperm.xlu0 %871, %v854
  %v873 = vpop.permute.xlu0 %872
  %876 = vset.pattern.permute.xlu0 0
  %877 = vperm.xlu0 %876, %v855
  %v878 = vpop.permute.xlu0 %877
  %881 = vset.pattern.permute.xlu0 0
  %882 = vperm.xlu0 %881, %v856
  %v883 = vpop.permute.xlu0 %882
  %886 = vset.pattern.permute.xlu0 0
  %887 = vperm.xlu0 %886, %v857
  %v888 = vpop.permute.xlu0 %887
  %891 = vset.pattern.permute.xlu0 0
  %892 = vperm.xlu0 %891, %v858
  %v893 = vpop.permute.xlu0 %892
  %896 = vset.pattern.permute.xlu0 0
  %897 = vperm.xlu0 %896, %v859
  %v898 = vpop.permute.xlu0 %897
  %v900 = vmul.f32 %v796, %v863
  %v901 = vmul.f32 %v797, %v868
  %v902 = vmul.f32 %v798, %v873
  %v903 = vmul.f32 %v799, %v878
  %v904 = vmul.f32 %v800, %v883
  %v905 = vmul.f32 %v801, %v888
  %v906 = vmul.f32 %v802, %v893
  %v907 = vmul.f32 %v803, %v898
  %909 = vset.pattern.permute.xlu0 0
  %910 = vperm.xlu0 %909, %v748
  %v911 = vpop.permute.xlu0 %910
  %914 = vset.pattern.permute.xlu0 0
  %915 = vperm.xlu0 %914, %v749
  %v916 = vpop.permute.xlu0 %915
  %919 = vset.pattern.permute.xlu0 0
  %920 = vperm.xlu0 %919, %v750
  %v921 = vpop.permute.xlu0 %920
  %924 = vset.pattern.permute.xlu0 0
  %925 = vperm.xlu0 %924, %v751
  %v926 = vpop.permute.xlu0 %925
  %929 = vset.pattern.permute.xlu0 0
  %930 = vperm.xlu0 %929, %v752
  %v931 = vpop.permute.xlu0 %930
  %934 = vset.pattern.permute.xlu0 0
  %935 = vperm.xlu0 %934, %v753
  %v936 = vpop.permute.xlu0 %935
  %939 = vset.pattern.permute.xlu0 0
  %940 = vperm.xlu0 %939, %v754
  %v941 = vpop.permute.xlu0 %940
  %944 = vset.pattern.permute.xlu0 0
  %945 = vperm.xlu0 %944, %v755
  %v946 = vpop.permute.xlu0 %945
  %v948 = vadd.f32 %v900, %v911
  %v949 = vadd.f32 %v901, %v916
  %v950 = vadd.f32 %v902, %v921
  %v951 = vadd.f32 %v903, %v926
  %v952 = vadd.f32 %v904, %v931
  %v953 = vadd.f32 %v905, %v936
  %v954 = vadd.f32 %v906, %v941
  %v955 = vadd.f32 %v907, %v946
  %v956 = vtanh.pop %v948
  %v957 = vtanh.pop %v949
  %v958 = vtanh.pop %v950
  %v959 = vtanh.pop %v951
  %v960 = vtanh.pop %v952
  %v961 = vtanh.pop %v953
  %v962 = vtanh.pop %v954
  %v963 = vtanh.pop %v955
  %v964 = vmul.f32 %v956, %v256
  %v965 = vmul.f32 %v957, %v256
  %v966 = vmul.f32 %v958, %v256
  %v967 = vmul.f32 %v959, %v256
  %v968 = vmul.f32 %v960, %v256
  %v969 = vmul.f32 %v961, %v256
  %v970 = vmul.f32 %v962, %v256
  %v971 = vmul.f32 %v963, %v256
  %972 = vst [vmem:[%s8] sm:$0xff] %v964
  %973 = vst [vmem:[%s8 + $0x8] sm:$0xff] %v965
  %974 = vst [vmem:[%s8 + $0x10] sm:$0xff] %v966
  %975 = vst [vmem:[%s8 + $0x18] sm:$0xff] %v967
  %976 = vst [vmem:[%s8 + $0x20] sm:$0xff] %v968
  %977 = vst [vmem:[%s8 + $0x28] sm:$0xff] %v969
  %978 = vst [vmem:[%s8 + $0x30] sm:$0xff] %v970
  %979 = vst [vmem:[%s8 + $0x38] sm:$0xff] %v971
  // Predicated region
  $region34: #{unet1d_forward.12} parent=0 // pred_check
    _
  $region35: #{unet1d_forward.12} parent=0 // pred_check_branch
    %981 = sbr.rel (0) target = $region37
  $region36: #{unet1d_forward.12} parent=0 // pred_region
    _
  $region37: #{unet1d_forward.12} parent=0 // pred_fallthru
    _
  // Predicated region
  $region38: #{unet1d_forward.12} parent=0 // pred_check
    _
  $region39: #{unet1d_forward.12} parent=0 // pred_check_branch
    %983 = sbr.rel (0) target = $region41
  $region40: #{unet1d_forward.12} parent=0 // pred_region
    _
  $region41: #{unet1d_forward.12} parent=0 // pred_fallthru
    _

// kernel: unet1d_forward.13
$region0: #{unet1d_forward.13}
  #allocation0 [shape = 'u32[]', space=smem, size = 0x4, offset = 0x4, fixed_abs, tag = 'smem constant byte address 0x4 - core index']
  #allocation1 [shape = 'u32[144,128]{1,0:T(1,128)}', space=vmem, size = 0x12000, scoped, tag = 'internal scratch']
  #allocation2 [shape = 'f32[384,128]{1,0:T(8,128)}', space=vmem, size = 0x30000, scoped, tag = 'scratch operand']
  %s0 = inlined_call_operand.vmem [shape: f32[64,128], index: 0, kind: input, shape index: {}]
  %s1 = inlined_call_operand.vmem [shape: f32[1,128], index: 1, kind: input, shape index: {}]
  %s2 = inlined_call_operand.vmem [shape: f32[128,192], index: 2, kind: input, shape index: {}]
  %s3 = inlined_call_operand.vmem [shape: f32[128,1], index: 3, kind: input, shape index: {}]
  %s4 = inlined_call_operand.vmem [shape: f32[128,1], index: 4, kind: input, shape index: {}]
  %s5 = inlined_call_operand.vmem [shape: f32[128,384], index: 5, kind: input, shape index: {}]
  %s6 = inlined_call_operand.vmem [shape: f32[128,1], index: 6, kind: input, shape index: {}]
  %s7 = inlined_call_operand.vmem [shape: f32[128,1], index: 7, kind: input, shape index: {}]
  %s8 = inlined_call_operand.vmem [shape: f32[128,128], index: 8, kind: output, shape index: {}]
  %s9 = sld [smem:[#allocation0]]
  $region42: #{unet1d_forward.13} parent=0
    _
  %s11 = ssub.s32 1, %s9
  %s12 = scalar_select 0, %s11, %s9
  // Predicated region
  $region2: #{unet1d_forward.13} parent=0 // pred_check
    _
  $region3: #{unet1d_forward.13} parent=0 // pred_check_branch
    %14 = sbr.rel (0) target = $region5
  $region4: #{unet1d_forward.13} parent=0 // pred_region
    _
  $region5: #{unet1d_forward.13} parent=0 // pred_fallthru
    _
  // Predicated region
  $region6: #{unet1d_forward.13} parent=0 // pred_check
    _
  $region7: #{unet1d_forward.13} parent=0 // pred_check_branch
    %16 = sbr.rel (0) target = $region9
  $region8: #{unet1d_forward.13} parent=0 // pred_region
    _
  $region9: #{unet1d_forward.13} parent=0 // pred_fallthru
    _
  // Predicated region
  $region10: #{unet1d_forward.13} parent=0 // pred_check
    _
  $region11: #{unet1d_forward.13} parent=0 // pred_check_branch
    %18 = sbr.rel (0) target = $region13
  $region12: #{unet1d_forward.13} parent=0 // pred_region
    _
  $region13: #{unet1d_forward.13} parent=0 // pred_fallthru
    _
  // Predicated region
  $region14: #{unet1d_forward.13} parent=0 // pred_check
    _
  $region15: #{unet1d_forward.13} parent=0 // pred_check_branch
    %20 = sbr.rel (0) target = $region17
  $region16: #{unet1d_forward.13} parent=0 // pred_region
    _
  $region17: #{unet1d_forward.13} parent=0 // pred_fallthru
    _
  // Predicated region
  $region18: #{unet1d_forward.13} parent=0 // pred_check
    _
  $region19: #{unet1d_forward.13} parent=0 // pred_check_branch
    %22 = sbr.rel (0) target = $region21
  $region20: #{unet1d_forward.13} parent=0 // pred_region
    _
  $region21: #{unet1d_forward.13} parent=0 // pred_fallthru
    _
  // Predicated region
  $region22: #{unet1d_forward.13} parent=0 // pred_check
    _
  $region23: #{unet1d_forward.13} parent=0 // pred_check_branch
    %24 = sbr.rel (0) target = $region25
  $region24: #{unet1d_forward.13} parent=0 // pred_region
    _
  $region25: #{unet1d_forward.13} parent=0 // pred_fallthru
    _
  // Predicated region
  $region26: #{unet1d_forward.13} parent=0 // pred_check
    _
  $region27: #{unet1d_forward.13} parent=0 // pred_check_branch
    %26 = sbr.rel (0) target = $region29
  $region28: #{unet1d_forward.13} parent=0 // pred_region
    _
  $region29: #{unet1d_forward.13} parent=0 // pred_fallthru
    _
  // Predicated region
  $region30: #{unet1d_forward.13} parent=0 // pred_check
    _
  $region31: #{unet1d_forward.13} parent=0 // pred_check_branch
    %28 = sbr.rel (0) target = $region33
  $region32: #{unet1d_forward.13} parent=0 // pred_region
    _
  $region33: #{unet1d_forward.13} parent=0 // pred_fallthru
    _
  %v29 = vld [vmem:[%s1] sm:$0x1]
  %v30 = vld [vmem:[%s2] sm:$0xff]
  %v31 = vld [vmem:[%s2 + $0x8] sm:$0xff]
  %v32 = vld [vmem:[%s2 + $0x10] sm:$0xff]
  %v33 = vld [vmem:[%s2 + $0x18] sm:$0xff]
  %v34 = vld [vmem:[%s2 + $0x20] sm:$0xff]
  %v35 = vld [vmem:[%s2 + $0x28] sm:$0xff]
  %v36 = vld [vmem:[%s2 + $0x30] sm:$0xff]
  %v37 = vld [vmem:[%s2 + $0x38] sm:$0xff]
  %v38 = vld [vmem:[%s2 + $0x40] sm:$0xff]
  %v39 = vld [vmem:[%s2 + $0x48] sm:$0xff]
  %v40 = vld [vmem:[%s2 + $0x50] sm:$0xff]
  %v41 = vld [vmem:[%s2 + $0x58] sm:$0xff]
  %v42 = vld [vmem:[%s2 + $0x60] sm:$0xff]
  %v43 = vld [vmem:[%s2 + $0x68] sm:$0xff]
  %v44 = vld [vmem:[%s2 + $0x70] sm:$0xff]
  %v45 = vld [vmem:[%s2 + $0x78] sm:$0xff]
  %v46 = vld [vmem:[%s2 + $0x80] sm:$0xff]
  %v47 = vld [vmem:[%s2 + $0x88] sm:$0xff]
  %v48 = vld [vmem:[%s2 + $0x90] sm:$0xff]
  %v49 = vld [vmem:[%s2 + $0x98] sm:$0xff]
  %v50 = vld [vmem:[%s2 + $0xa0] sm:$0xff]
  %v51 = vld [vmem:[%s2 + $0xa8] sm:$0xff]
  %v52 = vld [vmem:[%s2 + $0xb0] sm:$0xff]
  %v53 = vld [vmem:[%s2 + $0xb8] sm:$0xff]
  %v54 = vld [vmem:[%s2 + $0xc0] sm:$0xff]
  %v55 = vld [vmem:[%s2 + $0xc8] sm:$0xff]
  %v56 = vld [vmem:[%s2 + $0xd0] sm:$0xff]
  %v57 = vld [vmem:[%s2 + $0xd8] sm:$0xff]
  %v58 = vld [vmem:[%s2 + $0xe0] sm:$0xff]
  %v59 = vld [vmem:[%s2 + $0xe8] sm:$0xff]
  %v60 = vld [vmem:[%s2 + $0xf0] sm:$0xff]
  %v61 = vld [vmem:[%s2 + $0xf8] sm:$0xff]
  %v62 = vld [vmem:[%s0] sm:$0xff]
  %v63 = vld [vmem:[%s0 + $0x8] sm:$0xff]
  %v64 = vld [vmem:[%s0 + $0x10] sm:$0xff]
  %v65 = vld [vmem:[%s0 + $0x18] sm:$0xff]
  %v66 = vld [vmem:[%s0 + $0x20] sm:$0xff]
  %v67 = vld [vmem:[%s0 + $0x28] sm:$0xff]
  %v68 = vld [vmem:[%s0 + $0x30] sm:$0xff]
  %v69 = vld [vmem:[%s0 + $0x38] sm:$0xff]
  %78 = vrot.lane.b32.xlu0 %v62, 1
  %v79 = vpop.permute.xlu0 %78
  %80 = vrot.lane.b32.xlu0 %v63, 1
  %v81 = vpop.permute.xlu0 %80
  %82 = vrot.lane.b32.xlu0 %v64, 1
  %v83 = vpop.permute.xlu0 %82
  %84 = vrot.lane.b32.xlu0 %v65, 1
  %v85 = vpop.permute.xlu0 %84
  %86 = vrot.lane.b32.xlu0 %v66, 1
  %v87 = vpop.permute.xlu0 %86
  %88 = vrot.lane.b32.xlu0 %v67, 1
  %v89 = vpop.permute.xlu0 %88
  %90 = vrot.lane.b32.xlu0 %v68, 1
  %v91 = vpop.permute.xlu0 %90
  %92 = vrot.lane.b32.xlu0 %v69, 1
  %v93 = vpop.permute.xlu0 %92
  %vm102 = vcmask 1047560
  %103 = vst.msk [vmem:[#allocation2] sm:$0xff] %vm102, %v79
  %104 = vst.msk [vmem:[#allocation2 + $0x8] sm:$0xff] %vm102, %v81
  %105 = vst.msk [vmem:[#allocation2 + $0x10] sm:$0xff] %vm102, %v83
  %106 = vst.msk [vmem:[#allocation2 + $0x18] sm:$0xff] %vm102, %v85
  %107 = vst.msk [vmem:[#allocation2 + $0x20] sm:$0xff] %vm102, %v87
  %108 = vst.msk [vmem:[#allocation2 + $0x28] sm:$0xff] %vm102, %v89
  %109 = vst.msk [vmem:[#allocation2 + $0x30] sm:$0xff] %vm102, %v91
  %110 = vst.msk [vmem:[#allocation2 + $0x38] sm:$0xff] %vm102, %v93
  %vm111 = vcmask 7168
  %112 = vst.msk [vmem:[#allocation2] sm:$0xff] %vm111, 0.0
  %113 = vst.msk [vmem:[#allocation2 + $0x8] sm:$0xff] %vm111, 0.0
  %114 = vst.msk [vmem:[#allocation2 + $0x10] sm:$0xff] %vm111, 0.0
  %115 = vst.msk [vmem:[#allocation2 + $0x18] sm:$0xff] %vm111, 0.0
  %116 = vst.msk [vmem:[#allocation2 + $0x20] sm:$0xff] %vm111, 0.0
  %117 = vst.msk [vmem:[#allocation2 + $0x28] sm:$0xff] %vm111, 0.0
  %118 = vst.msk [vmem:[#allocation2 + $0x30] sm:$0xff] %vm111, 0.0
  %119 = vst.msk [vmem:[#allocation2 + $0x38] sm:$0xff] %vm111, 0.0
  %120 = vst [vmem:[#allocation2 + $0x40] sm:$0xff] %v62
  %121 = vst [vmem:[#allocation2 + $0x48] sm:$0xff] %v63
  %122 = vst [vmem:[#allocation2 + $0x50] sm:$0xff] %v64
  %123 = vst [vmem:[#allocation2 + $0x58] sm:$0xff] %v65
  %124 = vst [vmem:[#allocation2 + $0x60] sm:$0xff] %v66
  %125 = vst [vmem:[#allocation2 + $0x68] sm:$0xff] %v67
  %126 = vst [vmem:[#allocation2 + $0x70] sm:$0xff] %v68
  %127 = vst [vmem:[#allocation2 + $0x78] sm:$0xff] %v69
  %128 = vrot.lane.b32.xlu0 %v62, 127
  %v129 = vpop.permute.xlu0 %128
  %130 = vrot.lane.b32.xlu0 %v63, 127
  %v131 = vpop.permute.xlu0 %130
  %132 = vrot.lane.b32.xlu0 %v64, 127
  %v133 = vpop.permute.xlu0 %132
  %134 = vrot.lane.b32.xlu0 %v65, 127
  %v135 = vpop.permute.xlu0 %134
  %136 = vrot.lane.b32.xlu0 %v66, 127
  %v137 = vpop.permute.xlu0 %136
  %138 = vrot.lane.b32.xlu0 %v67, 127
  %v139 = vpop.permute.xlu0 %138
  %140 = vrot.lane.b32.xlu0 %v68, 127
  %v141 = vpop.permute.xlu0 %140
  %142 = vrot.lane.b32.xlu0 %v69, 127
  %v143 = vpop.permute.xlu0 %142
  %vm152 = vcmask 1039360
  %153 = vst.msk [vmem:[#allocation2 + $0x80] sm:$0xff] %vm152, %v129
  %154 = vst.msk [vmem:[#allocation2 + $0x88] sm:$0xff] %vm152, %v131
  %155 = vst.msk [vmem:[#allocation2 + $0x90] sm:$0xff] %vm152, %v133
  %156 = vst.msk [vmem:[#allocation2 + $0x98] sm:$0xff] %vm152, %v135
  %157 = vst.msk [vmem:[#allocation2 + $0xa0] sm:$0xff] %vm152, %v137
  %158 = vst.msk [vmem:[#allocation2 + $0xa8] sm:$0xff] %vm152, %v139
  %159 = vst.msk [vmem:[#allocation2 + $0xb0] sm:$0xff] %vm152, %v141
  %160 = vst.msk [vmem:[#allocation2 + $0xb8] sm:$0xff] %vm152, %v143
  %vm161 = vcmask 1048568
  %162 = vst.msk [vmem:[#allocation2 + $0x80] sm:$0xff] %vm161, 0.0
  %163 = vst.msk [vmem:[#allocation2 + $0x88] sm:$0xff] %vm161, 0.0
  %164 = vst.msk [vmem:[#allocation2 + $0x90] sm:$0xff] %vm161, 0.0
  %165 = vst.msk [vmem:[#allocation2 + $0x98] sm:$0xff] %vm161, 0.0
  %166 = vst.msk [vmem:[#allocation2 + $0xa0] sm:$0xff] %vm161, 0.0
  %167 = vst.msk [vmem:[#allocation2 + $0xa8] sm:$0xff] %vm161, 0.0
  %168 = vst.msk [vmem:[#allocation2 + $0xb0] sm:$0xff] %vm161, 0.0
  %169 = vst.msk [vmem:[#allocation2 + $0xb8] sm:$0xff] %vm161, 0.0
  %v170 = vld [vmem:[#allocation2] sm:$0xff]
  %v171 = vld [vmem:[#allocation2 + $0x8] sm:$0xff]
  %v172 = vld [vmem:[#allocation2 + $0x10] sm:$0xff]
  %v173 = vld [vmem:[#allocation2 + $0x18] sm:$0xff]
  %v174 = vld [vmem:[#allocation2 + $0x20] sm:$0xff]
  %v175 = vld [vmem:[#allocation2 + $0x28] sm:$0xff]
  %v176 = vld [vmem:[#allocation2 + $0x30] sm:$0xff]
  %v177 = vld [vmem:[#allocation2 + $0x38] sm:$0xff]
  %v178 = vld [vmem:[#allocation2 + $0x40] sm:$0xff]
  %v179 = vld [vmem:[#allocation2 + $0x48] sm:$0xff]
  %v180 = vld [vmem:[#allocation2 + $0x50] sm:$0xff]
  %v181 = vld [vmem:[#allocation2 + $0x58] sm:$0xff]
  %v182 = vld [vmem:[#allocation2 + $0x60] sm:$0xff]
  %v183 = vld [vmem:[#allocation2 + $0x68] sm:$0xff]
  %v184 = vld [vmem:[#allocation2 + $0x70] sm:$0xff]
  %v185 = vld [vmem:[#allocation2 + $0x78] sm:$0xff]
  %v186 = vld [vmem:[#allocation2 + $0x80] sm:$0xff]
  %v187 = vld [vmem:[#allocation2 + $0x88] sm:$0xff]
  %v188 = vld [vmem:[#allocation2 + $0x90] sm:$0xff]
  %v189 = vld [vmem:[#allocation2 + $0x98] sm:$0xff]
  %v190 = vld [vmem:[#allocation2 + $0xa0] sm:$0xff]
  %v191 = vld [vmem:[#allocation2 + $0xa8] sm:$0xff]
  %v192 = vld [vmem:[#allocation2 + $0xb0] sm:$0xff]
  %v193 = vld [vmem:[#allocation2 + $0xb8] sm:$0xff]
  %vm194 = vcmask 523264
  %v196 = vsel %vm194, %v31, 0
  %v199 = vsel %vm194, %v33, 0
  %v202 = vsel %vm194, %v35, 0
  %v205 = vsel %vm194, %v37, 0
  %v208 = vsel %vm194, %v39, 0
  %v211 = vsel %vm194, %v41, 0
  %v214 = vsel %vm194, %v43, 0
  %v217 = vsel %vm194, %v45, 0
  %v220 = vsel %vm194, %v47, 0
  %v223 = vsel %vm194, %v49, 0
  %v226 = vsel %vm194, %v51, 0
  %v229 = vsel %vm194, %v53, 0
  %v232 = vsel %vm194, %v55, 0
  %v235 = vsel %vm194, %v57, 0
  %v238 = vsel %vm194, %v59, 0
  %v241 = vsel %vm194, %v61, 0
  %243 = vmatprep.subr.mxu0 0.0
  %244 = vmatpush1.msra.mxu0 %v185
  %245 = vmatprep.subr.mxu0 0.0
  %246 = vmatpush1.msra.mxu0 %v184
  %247 = vmatprep.subr.mxu0 0.0
  %248 = vmatpush1.msra.mxu0 %v183
  %249 = vmatprep.subr.mxu0 0.0
  %250 = vmatpush1.msra.mxu0 %v182
  %251 = vmatprep.subr.mxu0 0.0
  %252 = vmatpush1.msra.mxu0 %v181
  %253 = vmatprep.subr.mxu0 0.0
  %254 = vmatpush1.msra.mxu0 %v180
  %255 = vmatprep.subr.mxu0 0.0
  %256 = vmatpush1.msra.mxu0 %v179
  %257 = vmatprep.subr.mxu0 0.0
  %258 = vmatpush1.msra.mxu0 %v178
  %259 = vmatprep.subr.mxu0 0.0
  %260 = vmatpush1.msra.mxu0 %v177
  %261 = vmatprep.subr.mxu0 0.0
  %262 = vmatpush1.msra.mxu0 %v176
  %263 = vmatprep.subr.mxu0 0.0
  %264 = vmatpush1.msra.mxu0 %v175
  %265 = vmatprep.subr.mxu0 0.0
  %266 = vmatpush1.msra.mxu0 %v174
  %267 = vmatprep.subr.mxu0 0.0
  %268 = vmatpush1.msra.mxu0 %v173
  %269 = vmatprep.subr.mxu0 0.0
  %270 = vmatpush1.msra.mxu0 %v172
  %271 = vmatprep.subr.mxu0 0.0
  %272 = vmatpush1.msra.mxu0 %v171
  %273 = vmatprep.subr.mxu0 0.0
  %274 = vmatpush1.msra.mxu0 %v170
  %275 = vmatprep.subr.mxu0 0.0
  %276 = vmatpush2.msra.mxu0 0.0
  %277 = vmatprep.subr.mxu0 0.0
  %278 = vmatpush2.msra.mxu0 0.0
  %279 = vmatprep.subr.mxu0 0.0
  %280 = vmatpush2.msra.mxu0 0.0
  %281 = vmatprep.subr.mxu0 0.0
  %282 = vmatpush2.msra.mxu0 0.0
  %283 = vmatprep.subr.mxu0 0.0
  %284 = vmatpush2.msra.mxu0 0.0
  %285 = vmatprep.subr.mxu0 0.0
  %286 = vmatpush2.msra.mxu0 0.0
  %287 = vmatprep.subr.mxu0 0.0
  %288 = vmatpush2.msra.mxu0 0.0
  %289 = vmatprep.subr.mxu0 0.0
  %290 = vmatpush2.msra.mxu0 0.0
  %291 = vmatprep.subr.mxu0 0.0
  %292 = vmatpush2.msra.mxu0 %v193
  %293 = vmatprep.subr.mxu0 0.0
  %294 = vmatpush2.msra.mxu0 %v192
  %295 = vmatprep.subr.mxu0 0.0
  %296 = vmatpush2.msra.mxu0 %v191
  %297 = vmatprep.subr.mxu0 0.0
  %298 = vmatpush2.msra.mxu0 %v190
  %299 = vmatprep.subr.mxu0 0.0
  %300 = vmatpush2.msra.mxu0 %v189
  %301 = vmatprep.subr.mxu0 0.0
  %302 = vmatpush2.msra.mxu0 %v188
  %303 = vmatprep.subr.mxu0 0.0
  %304 = vmatpush2.msra.mxu0 %v187
  %305 = vmatprep.subr.mxu0 0.0
  %306 = vmatpush2.msra.mxu0 %v186
  %307 = vmatprep.mubr.f32.mxu0 %v196
  %308 = vmatmul.mubr.f32.gmra.mxu0 %v30
  %v309 = vpop.f32.mrf.mxu0
  %v310 = vadd.f32 0.0, %v309
  %v311 = vpop.f32.mrf.mxu0
  %312 = vmatprep.mubr.f32.mxu0 %v199
  %313 = vmatmul.mubr.f32.gmra.mxu0 %v32
  %v314 = vpop.f32.mrf.mxu0
  %v315 = vadd.f32 0.0, %v314
  %v316 = vpop.f32.mrf.mxu0
  %317 = vmatprep.mubr.f32.mxu0 %v202
  %318 = vmatmul.mubr.f32.gmra.mxu0 %v34
  %v319 = vpop.f32.mrf.mxu0
  %v320 = vadd.f32 0.0, %v319
  %v321 = vpop.f32.mrf.mxu0
  %322 = vmatprep.mubr.f32.mxu0 %v205
  %323 = vmatmul.mubr.f32.gmra.mxu0 %v36
  %v324 = vpop.f32.mrf.mxu0
  %v325 = vadd.f32 0.0, %v324
  %v326 = vpop.f32.mrf.mxu0
  %327 = vmatprep.mubr.f32.mxu0 %v208
  %328 = vmatmul.mubr.f32.gmra.mxu0 %v38
  %v329 = vpop.f32.mrf.mxu0
  %v330 = vadd.f32 0.0, %v329
  %v331 = vpop.f32.mrf.mxu0
  %332 = vmatprep.mubr.f32.mxu0 %v211
  %333 = vmatmul.mubr.f32.gmra.mxu0 %v40
  %v334 = vpop.f32.mrf.mxu0
  %v335 = vadd.f32 0.0, %v334
  %v336 = vpop.f32.mrf.mxu0
  %337 = vmatprep.mubr.f32.mxu0 %v214
  %338 = vmatmul.mubr.f32.gmra.mxu0 %v42
  %v339 = vpop.f32.mrf.mxu0
  %v340 = vadd.f32 0.0, %v339
  %v341 = vpop.f32.mrf.mxu0
  %342 = vmatprep.mubr.f32.mxu0 %v217
  %343 = vmatmul.mubr.f32.gmra.mxu0 %v44
  %v344 = vpop.f32.mrf.mxu0
  %v345 = vadd.f32 0.0, %v344
  %v346 = vpop.f32.mrf.mxu0
  %347 = vmatprep.mubr.f32.mxu0 %v220
  %348 = vmatmul.mubr.f32.gmra.mxu0 %v46
  %v349 = vpop.f32.mrf.mxu0
  %v350 = vadd.f32 0.0, %v349
  %v351 = vpop.f32.mrf.mxu0
  %352 = vmatprep.mubr.f32.mxu0 %v223
  %353 = vmatmul.mubr.f32.gmra.mxu0 %v48
  %v354 = vpop.f32.mrf.mxu0
  %v355 = vadd.f32 0.0, %v354
  %v356 = vpop.f32.mrf.mxu0
  %357 = vmatprep.mubr.f32.mxu0 %v226
  %358 = vmatmul.mubr.f32.gmra.mxu0 %v50
  %v359 = vpop.f32.mrf.mxu0
  %v360 = vadd.f32 0.0, %v359
  %v361 = vpop.f32.mrf.mxu0
  %362 = vmatprep.mubr.f32.mxu0 %v229
  %363 = vmatmul.mubr.f32.gmra.mxu0 %v52
  %v364 = vpop.f32.mrf.mxu0
  %v365 = vadd.f32 0.0, %v364
  %v366 = vpop.f32.mrf.mxu0
  %367 = vmatprep.mubr.f32.mxu0 %v232
  %368 = vmatmul.mubr.f32.gmra.mxu0 %v54
  %v369 = vpop.f32.mrf.mxu0
  %v370 = vadd.f32 0.0, %v369
  %v371 = vpop.f32.mrf.mxu0
  %372 = vmatprep.mubr.f32.mxu0 %v235
  %373 = vmatmul.mubr.f32.gmra.mxu0 %v56
  %v374 = vpop.f32.mrf.mxu0
  %v375 = vadd.f32 0.0, %v374
  %v376 = vpop.f32.mrf.mxu0
  %377 = vmatprep.mubr.f32.mxu0 %v238
  %378 = vmatmul.mubr.f32.gmra.mxu0 %v58
  %v379 = vpop.f32.mrf.mxu0
  %v380 = vadd.f32 0.0, %v379
  %v381 = vpop.f32.mrf.mxu0
  %382 = vmatprep.mubr.f32.mxu0 %v241
  %383 = vmatmul.mubr.f32.gmra.mxu0 %v60
  %v384 = vpop.f32.mrf.mxu0
  %v385 = vadd.f32 0.0, %v384
  %v386 = vpop.f32.mrf.mxu0
  %387 = vdwg.mxu0
  %v388 = vld [vmem:[%s3] sm:$0xff]
  %v389 = vld [vmem:[%s3 + $0x8] sm:$0xff]
  %v390 = vld [vmem:[%s3 + $0x10] sm:$0xff]
  %v391 = vld [vmem:[%s3 + $0x18] sm:$0xff]
  %v392 = vld [vmem:[%s3 + $0x20] sm:$0xff]
  %v393 = vld [vmem:[%s3 + $0x28] sm:$0xff]
  %v394 = vld [vmem:[%s3 + $0x30] sm:$0xff]
  %v395 = vld [vmem:[%s3 + $0x38] sm:$0xff]
  %v396 = vld [vmem:[%s3 + $0x40] sm:$0xff]
  %v397 = vld [vmem:[%s3 + $0x48] sm:$0xff]
  %v398 = vld [vmem:[%s3 + $0x50] sm:$0xff]
  %v399 = vld [vmem:[%s3 + $0x58] sm:$0xff]
  %v400 = vld [vmem:[%s3 + $0x60] sm:$0xff]
  %v401 = vld [vmem:[%s3 + $0x68] sm:$0xff]
  %v402 = vld [vmem:[%s3 + $0x70] sm:$0xff]
  %v403 = vld [vmem:[%s3 + $0x78] sm:$0xff]
  %v404 = vld [vmem:[%s4] sm:$0xff]
  %v405 = vld [vmem:[%s4 + $0x8] sm:$0xff]
  %v406 = vld [vmem:[%s4 + $0x10] sm:$0xff]
  %v407 = vld [vmem:[%s4 + $0x18] sm:$0xff]
  %v408 = vld [vmem:[%s4 + $0x20] sm:$0xff]
  %v409 = vld [vmem:[%s4 + $0x28] sm:$0xff]
  %v410 = vld [vmem:[%s4 + $0x30] sm:$0xff]
  %v411 = vld [vmem:[%s4 + $0x38] sm:$0xff]
  %v412 = vld [vmem:[%s4 + $0x40] sm:$0xff]
  %v413 = vld [vmem:[%s4 + $0x48] sm:$0xff]
  %v414 = vld [vmem:[%s4 + $0x50] sm:$0xff]
  %v415 = vld [vmem:[%s4 + $0x58] sm:$0xff]
  %v416 = vld [vmem:[%s4 + $0x60] sm:$0xff]
  %v417 = vld [vmem:[%s4 + $0x68] sm:$0xff]
  %v418 = vld [vmem:[%s4 + $0x70] sm:$0xff]
  %v419 = vld [vmem:[%s4 + $0x78] sm:$0xff]
  %v421 = vlaneseq
  %v422 = vshrl.u32 %v421, 7
  %v423 = vsub.s32 0, %v422
  %v424 = vrot.slane %v29, %v423
  %v426 = vmul.f32 %v310, %v424
  %v427 = vmul.f32 %v315, %v424
  %v428 = vmul.f32 %v320, %v424
  %v429 = vmul.f32 %v325, %v424
  %v430 = vmul.f32 %v330, %v424
  %v431 = vmul.f32 %v335, %v424
  %v432 = vmul.f32 %v340, %v424
  %v433 = vmul.f32 %v345, %v424
  %v434 = vmul.f32 %v350, %v424
  %v435 = vmul.f32 %v355, %v424
  %v436 = vmul.f32 %v360, %v424
  %v437 = vmul.f32 %v365, %v424
  %v438 = vmul.f32 %v370, %v424
  %v439 = vmul.f32 %v375, %v424
  %v440 = vmul.f32 %v380, %v424
  %v441 = vmul.f32 %v385, %v424
  %442 = vadd.xlane.f32.xlu0 %v426
  %v443 = vpop.xlane.xlu0 %442
  %444 = vadd.xlane.f32.xlu0 %v427
  %v445 = vpop.xlane.xlu0 %444
  %446 = vadd.xlane.f32.xlu0 %v428
  %v447 = vpop.xlane.xlu0 %446
  %448 = vadd.xlane.f32.xlu0 %v429
  %v449 = vpop.xlane.xlu0 %448
  %450 = vadd.xlane.f32.xlu0 %v430
  %v451 = vpop.xlane.xlu0 %450
  %452 = vadd.xlane.f32.xlu0 %v431
  %v453 = vpop.xlane.xlu0 %452
  %454 = vadd.xlane.f32.xlu0 %v432
  %v455 = vpop.xlane.xlu0 %454
  %456 = vadd.xlane.f32.xlu0 %v433
  %v457 = vpop.xlane.xlu0 %456
  %458 = vadd.xlane.f32.xlu0 %v434
  %v459 = vpop.xlane.xlu0 %458
  %460 = vadd.xlane.f32.xlu0 %v435
  %v461 = vpop.xlane.xlu0 %460
  %462 = vadd.xlane.f32.xlu0 %v436
  %v463 = vpop.xlane.xlu0 %462
  %464 = vadd.xlane.f32.xlu0 %v437
  %v465 = vpop.xlane.xlu0 %464
  %466 = vadd.xlane.f32.xlu0 %v438
  %v467 = vpop.xlane.xlu0 %466
  %468 = vadd.xlane.f32.xlu0 %v439
  %v469 = vpop.xlane.xlu0 %468
  %470 = vadd.xlane.f32.xlu0 %v440
  %v471 = vpop.xlane.xlu0 %470
  %472 = vadd.xlane.f32.xlu0 %v441
  %v473 = vpop.xlane.xlu0 %472
  %v474 = vmul.f32 %v443, 0.25
  %v475 = vmul.f32 %v445, 0.25
  %v476 = vmul.f32 %v447, 0.25
  %v477 = vmul.f32 %v449, 0.25
  %v478 = vmul.f32 %v451, 0.25
  %v479 = vmul.f32 %v453, 0.25
  %v480 = vmul.f32 %v455, 0.25
  %v481 = vmul.f32 %v457, 0.25
  %v482 = vmul.f32 %v459, 0.25
  %v483 = vmul.f32 %v461, 0.25
  %v484 = vmul.f32 %v463, 0.25
  %v485 = vmul.f32 %v465, 0.25
  %v486 = vmul.f32 %v467, 0.25
  %v487 = vmul.f32 %v469, 0.25
  %v488 = vmul.f32 %v471, 0.25
  %v489 = vmul.f32 %v473, 0.25
  %v490 = vsub.f32 %v310, %v474
  %v491 = vsub.f32 %v315, %v475
  %v492 = vsub.f32 %v320, %v476
  %v493 = vsub.f32 %v325, %v477
  %v494 = vsub.f32 %v330, %v478
  %v495 = vsub.f32 %v335, %v479
  %v496 = vsub.f32 %v340, %v480
  %v497 = vsub.f32 %v345, %v481
  %v498 = vsub.f32 %v350, %v482
  %v499 = vsub.f32 %v355, %v483
  %v500 = vsub.f32 %v360, %v484
  %v501 = vsub.f32 %v365, %v485
  %v502 = vsub.f32 %v370, %v486
  %v503 = vsub.f32 %v375, %v487
  %v504 = vsub.f32 %v380, %v488
  %v505 = vsub.f32 %v385, %v489
  %v506 = vmul.f32 %v490, %v424
  %v507 = vmul.f32 %v491, %v424
  %v508 = vmul.f32 %v492, %v424
  %v509 = vmul.f32 %v493, %v424
  %v510 = vmul.f32 %v494, %v424
  %v511 = vmul.f32 %v495, %v424
  %v512 = vmul.f32 %v496, %v424
  %v513 = vmul.f32 %v497, %v424
  %v514 = vmul.f32 %v498, %v424
  %v515 = vmul.f32 %v499, %v424
  %v516 = vmul.f32 %v500, %v424
  %v517 = vmul.f32 %v501, %v424
  %v518 = vmul.f32 %v502, %v424
  %v519 = vmul.f32 %v503, %v424
  %v520 = vmul.f32 %v504, %v424
  %v521 = vmul.f32 %v505, %v424
  %v522 = vmul.f32 %v506, %v506
  %v523 = vmul.f32 %v507, %v507
  %v524 = vmul.f32 %v508, %v508
  %v525 = vmul.f32 %v509, %v509
  %v526 = vmul.f32 %v510, %v510
  %v527 = vmul.f32 %v511, %v511
  %v528 = vmul.f32 %v512, %v512
  %v529 = vmul.f32 %v513, %v513
  %v530 = vmul.f32 %v514, %v514
  %v531 = vmul.f32 %v515, %v515
  %v532 = vmul.f32 %v516, %v516
  %v533 = vmul.f32 %v517, %v517
  %v534 = vmul.f32 %v518, %v518
  %v535 = vmul.f32 %v519, %v519
  %v536 = vmul.f32 %v520, %v520
  %v537 = vmul.f32 %v521, %v521
  %538 = vadd.xlane.f32.xlu0 %v522
  %v539 = vpop.xlane.xlu0 %538
  %540 = vadd.xlane.f32.xlu0 %v523
  %v541 = vpop.xlane.xlu0 %540
  %542 = vadd.xlane.f32.xlu0 %v524
  %v543 = vpop.xlane.xlu0 %542
  %544 = vadd.xlane.f32.xlu0 %v525
  %v545 = vpop.xlane.xlu0 %544
  %546 = vadd.xlane.f32.xlu0 %v526
  %v547 = vpop.xlane.xlu0 %546
  %548 = vadd.xlane.f32.xlu0 %v527
  %v549 = vpop.xlane.xlu0 %548
  %550 = vadd.xlane.f32.xlu0 %v528
  %v551 = vpop.xlane.xlu0 %550
  %552 = vadd.xlane.f32.xlu0 %v529
  %v553 = vpop.xlane.xlu0 %552
  %554 = vadd.xlane.f32.xlu0 %v530
  %v555 = vpop.xlane.xlu0 %554
  %556 = vadd.xlane.f32.xlu0 %v531
  %v557 = vpop.xlane.xlu0 %556
  %558 = vadd.xlane.f32.xlu0 %v532
  %v559 = vpop.xlane.xlu0 %558
  %560 = vadd.xlane.f32.xlu0 %v533
  %v561 = vpop.xlane.xlu0 %560
  %562 = vadd.xlane.f32.xlu0 %v534
  %v563 = vpop.xlane.xlu0 %562
  %564 = vadd.xlane.f32.xlu0 %v535
  %v565 = vpop.xlane.xlu0 %564
  %566 = vadd.xlane.f32.xlu0 %v536
  %v567 = vpop.xlane.xlu0 %566
  %568 = vadd.xlane.f32.xlu0 %v537
  %v569 = vpop.xlane.xlu0 %568
  %v570 = vmul.f32 %v539, 0.25
  %v571 = vmul.f32 %v541, 0.25
  %v572 = vmul.f32 %v543, 0.25
  %v573 = vmul.f32 %v545, 0.25
  %v574 = vmul.f32 %v547, 0.25
  %v575 = vmul.f32 %v549, 0.25
  %v576 = vmul.f32 %v551, 0.25
  %v577 = vmul.f32 %v553, 0.25
  %v578 = vmul.f32 %v555, 0.25
  %v579 = vmul.f32 %v557, 0.25
  %v580 = vmul.f32 %v559, 0.25
  %v581 = vmul.f32 %v561, 0.25
  %v582 = vmul.f32 %v563, 0.25
  %v583 = vmul.f32 %v565, 0.25
  %v584 = vmul.f32 %v567, 0.25
  %v585 = vmul.f32 %v569, 0.25
  %v586 = vadd.f32 %v570, 1e-05
  %v587 = vadd.f32 %v571, 1e-05
  %v588 = vadd.f32 %v572, 1e-05
  %v589 = vadd.f32 %v573, 1e-05
  %v590 = vadd.f32 %v574, 1e-05
  %v591 = vadd.f32 %v575, 1e-05
  %v592 = vadd.f32 %v576, 1e-05
  %v593 = vadd.f32 %v577, 1e-05
  %v594 = vadd.f32 %v578, 1e-05
  %v595 = vadd.f32 %v579, 1e-05
  %v596 = vadd.f32 %v580, 1e-05
  %v597 = vadd.f32 %v581, 1e-05
  %v598 = vadd.f32 %v582, 1e-05
  %v599 = vadd.f32 %v583, 1e-05
  %v600 = vadd.f32 %v584, 1e-05
  %v601 = vadd.f32 %v585, 1e-05
  %v602 = vrsqrt.pop %v586
  %v603 = vrsqrt.pop %v587
  %v604 = vrsqrt.pop %v588
  %v605 = vrsqrt.pop %v589
  %v606 = vrsqrt.pop %v590
  %v607 = vrsqrt.pop %v591
  %v608 = vrsqrt.pop %v592
  %v609 = vrsqrt.pop %v593
  %v610 = vrsqrt.pop %v594
  %v611 = vrsqrt.pop %v595
  %v612 = vrsqrt.pop %v596
  %v613 = vrsqrt.pop %v597
  %v614 = vrsqrt.pop %v598
  %v615 = vrsqrt.pop %v599
  %v616 = vrsqrt.pop %v600
  %v617 = vrsqrt.pop %v601
  %v618 = vmul.f32 %v602, %v388
  %v619 = vmul.f32 %v603, %v389
  %v620 = vmul.f32 %v604, %v390
  %v621 = vmul.f32 %v605, %v391
  %v622 = vmul.f32 %v606, %v392
  %v623 = vmul.f32 %v607, %v393
  %v624 = vmul.f32 %v608, %v394
  %v625 = vmul.f32 %v609, %v395
  %v626 = vmul.f32 %v610, %v396
  %v627 = vmul.f32 %v611, %v397
  %v628 = vmul.f32 %v612, %v398
  %v629 = vmul.f32 %v613, %v399
  %v630 = vmul.f32 %v614, %v400
  %v631 = vmul.f32 %v615, %v401
  %v632 = vmul.f32 %v616, %v402
  %v633 = vmul.f32 %v617, %v403
  %635 = vset.pattern.permute.xlu0 0
  %636 = vperm.xlu0 %635, %v618
  %v637 = vpop.permute.xlu0 %636
  %640 = vset.pattern.permute.xlu0 0
  %641 = vperm.xlu0 %640, %v619
  %v642 = vpop.permute.xlu0 %641
  %645 = vset.pattern.permute.xlu0 0
  %646 = vperm.xlu0 %645, %v620
  %v647 = vpop.permute.xlu0 %646
  %650 = vset.pattern.permute.xlu0 0
  %651 = vperm.xlu0 %650, %v621
  %v652 = vpop.permute.xlu0 %651
  %655 = vset.pattern.permute.xlu0 0
  %656 = vperm.xlu0 %655, %v622
  %v657 = vpop.permute.xlu0 %656
  %660 = vset.pattern.permute.xlu0 0
  %661 = vperm.xlu0 %660, %v623
  %v662 = vpop.permute.xlu0 %661
  %665 = vset.pattern.permute.xlu0 0
  %666 = vperm.xlu0 %665, %v624
  %v667 = vpop.permute.xlu0 %666
  %670 = vset.pattern.permute.xlu0 0
  %671 = vperm.xlu0 %670, %v625
  %v672 = vpop.permute.xlu0 %671
  %675 = vset.pattern.permute.xlu0 0
  %676 = vperm.xlu0 %675, %v626
  %v677 = vpop.permute.xlu0 %676
  %680 = vset.pattern.permute.xlu0 0
  %681 = vperm.xlu0 %680, %v627
  %v682 = vpop.permute.xlu0 %681
  %685 = vset.pattern.permute.xlu0 0
  %686 = vperm.xlu0 %685, %v628
  %v687 = vpop.permute.xlu0 %686
  %690 = vset.pattern.permute.xlu0 0
  %691 = vperm.xlu0 %690, %v629
  %v692 = vpop.permute.xlu0 %691
  %695 = vset.pattern.permute.xlu0 0
  %696 = vperm.xlu0 %695, %v630
  %v697 = vpop.permute.xlu0 %696
  %700 = vset.pattern.permute.xlu0 0
  %701 = vperm.xlu0 %700, %v631
  %v702 = vpop.permute.xlu0 %701
  %705 = vset.pattern.permute.xlu0 0
  %706 = vperm.xlu0 %705, %v632
  %v707 = vpop.permute.xlu0 %706
  %710 = vset.pattern.permute.xlu0 0
  %711 = vperm.xlu0 %710, %v633
  %v712 = vpop.permute.xlu0 %711
  %v714 = vmul.f32 %v506, %v637
  %v715 = vmul.f32 %v507, %v642
  %v716 = vmul.f32 %v508, %v647
  %v717 = vmul.f32 %v509, %v652
  %v718 = vmul.f32 %v510, %v657
  %v719 = vmul.f32 %v511, %v662
  %v720 = vmul.f32 %v512, %v667
  %v721 = vmul.f32 %v513, %v672
  %v722 = vmul.f32 %v514, %v677
  %v723 = vmul.f32 %v515, %v682
  %v724 = vmul.f32 %v516, %v687
  %v725 = vmul.f32 %v517, %v692
  %v726 = vmul.f32 %v518, %v697
  %v727 = vmul.f32 %v519, %v702
  %v728 = vmul.f32 %v520, %v707
  %v729 = vmul.f32 %v521, %v712
  %731 = vset.pattern.permute.xlu0 0
  %732 = vperm.xlu0 %731, %v404
  %v733 = vpop.permute.xlu0 %732
  %736 = vset.pattern.permute.xlu0 0
  %737 = vperm.xlu0 %736, %v405
  %v738 = vpop.permute.xlu0 %737
  %741 = vset.pattern.permute.xlu0 0
  %742 = vperm.xlu0 %741, %v406
  %v743 = vpop.permute.xlu0 %742
  %746 = vset.pattern.permute.xlu0 0
  %747 = vperm.xlu0 %746, %v407
  %v748 = vpop.permute.xlu0 %747
  %751 = vset.pattern.permute.xlu0 0
  %752 = vperm.xlu0 %751, %v408
  %v753 = vpop.permute.xlu0 %752
  %756 = vset.pattern.permute.xlu0 0
  %757 = vperm.xlu0 %756, %v409
  %v758 = vpop.permute.xlu0 %757
  %761 = vset.pattern.permute.xlu0 0
  %762 = vperm.xlu0 %761, %v410
  %v763 = vpop.permute.xlu0 %762
  %766 = vset.pattern.permute.xlu0 0
  %767 = vperm.xlu0 %766, %v411
  %v768 = vpop.permute.xlu0 %767
  %771 = vset.pattern.permute.xlu0 0
  %772 = vperm.xlu0 %771, %v412
  %v773 = vpop.permute.xlu0 %772
  %776 = vset.pattern.permute.xlu0 0
  %777 = vperm.xlu0 %776, %v413
  %v778 = vpop.permute.xlu0 %777
  %781 = vset.pattern.permute.xlu0 0
  %782 = vperm.xlu0 %781, %v414
  %v783 = vpop.permute.xlu0 %782
  %786 = vset.pattern.permute.xlu0 0
  %787 = vperm.xlu0 %786, %v415
  %v788 = vpop.permute.xlu0 %787
  %791 = vset.pattern.permute.xlu0 0
  %792 = vperm.xlu0 %791, %v416
  %v793 = vpop.permute.xlu0 %792
  %796 = vset.pattern.permute.xlu0 0
  %797 = vperm.xlu0 %796, %v417
  %v798 = vpop.permute.xlu0 %797
  %801 = vset.pattern.permute.xlu0 0
  %802 = vperm.xlu0 %801, %v418
  %v803 = vpop.permute.xlu0 %802
  %806 = vset.pattern.permute.xlu0 0
  %807 = vperm.xlu0 %806, %v419
  %v808 = vpop.permute.xlu0 %807
  %v810 = vadd.f32 %v714, %v733
  %v811 = vadd.f32 %v715, %v738
  %v812 = vadd.f32 %v716, %v743
  %v813 = vadd.f32 %v717, %v748
  %v814 = vadd.f32 %v718, %v753
  %v815 = vadd.f32 %v719, %v758
  %v816 = vadd.f32 %v720, %v763
  %v817 = vadd.f32 %v721, %v768
  %v818 = vadd.f32 %v722, %v773
  %v819 = vadd.f32 %v723, %v778
  %v820 = vadd.f32 %v724, %v783
  %v821 = vadd.f32 %v725, %v788
  %v822 = vadd.f32 %v726, %v793
  %v823 = vadd.f32 %v727, %v798
  %v824 = vadd.f32 %v728, %v803
  %v825 = vadd.f32 %v729, %v808
  %v826 = vtanh.pop %v810
  %v827 = vtanh.pop %v811
  %v828 = vtanh.pop %v812
  %v829 = vtanh.pop %v813
  %v830 = vtanh.pop %v814
  %v831 = vtanh.pop %v815
  %v832 = vtanh.pop %v816
  %v833 = vtanh.pop %v817
  %v834 = vtanh.pop %v818
  %v835 = vtanh.pop %v819
  %v836 = vtanh.pop %v820
  %v837 = vtanh.pop %v821
  %v838 = vtanh.pop %v822
  %v839 = vtanh.pop %v823
  %v840 = vtanh.pop %v824
  %v841 = vtanh.pop %v825
  %v842 = vmul.f32 %v826, %v424
  %v843 = vmul.f32 %v827, %v424
  %v844 = vmul.f32 %v828, %v424
  %v845 = vmul.f32 %v829, %v424
  %v846 = vmul.f32 %v830, %v424
  %v847 = vmul.f32 %v831, %v424
  %v848 = vmul.f32 %v832, %v424
  %v849 = vmul.f32 %v833, %v424
  %v850 = vmul.f32 %v834, %v424
  %v851 = vmul.f32 %v835, %v424
  %v852 = vmul.f32 %v836, %v424
  %v853 = vmul.f32 %v837, %v424
  %v854 = vmul.f32 %v838, %v424
  %v855 = vmul.f32 %v839, %v424
  %v856 = vmul.f32 %v840, %v424
  %v857 = vmul.f32 %v841, %v424
  %v858 = vld [vmem:[%s5] sm:$0xff]
  %v859 = vld [vmem:[%s5 + $0x8] sm:$0xff]
  %v860 = vld [vmem:[%s5 + $0x10] sm:$0xff]
  %v861 = vld [vmem:[%s5 + $0x18] sm:$0xff]
  %v862 = vld [vmem:[%s5 + $0x20] sm:$0xff]
  %v863 = vld [vmem:[%s5 + $0x28] sm:$0xff]
  %v864 = vld [vmem:[%s5 + $0x30] sm:$0xff]
  %v865 = vld [vmem:[%s5 + $0x38] sm:$0xff]
  %v866 = vld [vmem:[%s5 + $0x40] sm:$0xff]
  %v867 = vld [vmem:[%s5 + $0x48] sm:$0xff]
  %v868 = vld [vmem:[%s5 + $0x50] sm:$0xff]
  %v869 = vld [vmem:[%s5 + $0x58] sm:$0xff]
  %v870 = vld [vmem:[%s5 + $0x60] sm:$0xff]
  %v871 = vld [vmem:[%s5 + $0x68] sm:$0xff]
  %v872 = vld [vmem:[%s5 + $0x70] sm:$0xff]
  %v873 = vld [vmem:[%s5 + $0x78] sm:$0xff]
  %v874 = vld [vmem:[%s5 + $0x80] sm:$0xff]
  %v875 = vld [vmem:[%s5 + $0x88] sm:$0xff]
  %v876 = vld [vmem:[%s5 + $0x90] sm:$0xff]
  %v877 = vld [vmem:[%s5 + $0x98] sm:$0xff]
  %v878 = vld [vmem:[%s5 + $0xa0] sm:$0xff]
  %v879 = vld [vmem:[%s5 + $0xa8] sm:$0xff]
  %v880 = vld [vmem:[%s5 + $0xb0] sm:$0xff]
  %v881 = vld [vmem:[%s5 + $0xb8] sm:$0xff]
  %v882 = vld [vmem:[%s5 + $0xc0] sm:$0xff]
  %v883 = vld [vmem:[%s5 + $0xc8] sm:$0xff]
  %v884 = vld [vmem:[%s5 + $0xd0] sm:$0xff]
  %v885 = vld [vmem:[%s5 + $0xd8] sm:$0xff]
  %v886 = vld [vmem:[%s5 + $0xe0] sm:$0xff]
  %v887 = vld [vmem:[%s5 + $0xe8] sm:$0xff]
  %v888 = vld [vmem:[%s5 + $0xf0] sm:$0xff]
  %v889 = vld [vmem:[%s5 + $0xf8] sm:$0xff]
  %v890 = vld [vmem:[%s5 + $0x100] sm:$0xff]
  %v891 = vld [vmem:[%s5 + $0x108] sm:$0xff]
  %v892 = vld [vmem:[%s5 + $0x110] sm:$0xff]
  %v893 = vld [vmem:[%s5 + $0x118] sm:$0xff]
  %v894 = vld [vmem:[%s5 + $0x120] sm:$0xff]
  %v895 = vld [vmem:[%s5 + $0x128] sm:$0xff]
  %v896 = vld [vmem:[%s5 + $0x130] sm:$0xff]
  %v897 = vld [vmem:[%s5 + $0x138] sm:$0xff]
  %v898 = vld [vmem:[%s5 + $0x140] sm:$0xff]
  %v899 = vld [vmem:[%s5 + $0x148] sm:$0xff]
  %v900 = vld [vmem:[%s5 + $0x150] sm:$0xff]
  %v901 = vld [vmem:[%s5 + $0x158] sm:$0xff]
  %v902 = vld [vmem:[%s5 + $0x160] sm:$0xff]
  %v903 = vld [vmem:[%s5 + $0x168] sm:$0xff]
  %v904 = vld [vmem:[%s5 + $0x170] sm:$0xff]
  %v905 = vld [vmem:[%s5 + $0x178] sm:$0xff]
  %922 = vrot.lane.b32.xlu0 %v842, 1
  %v923 = vpop.permute.xlu0 %922
  %924 = vrot.lane.b32.xlu0 %v843, 1
  %v925 = vpop.permute.xlu0 %924
  %926 = vrot.lane.b32.xlu0 %v844, 1
  %v927 = vpop.permute.xlu0 %926
  %928 = vrot.lane.b32.xlu0 %v845, 1
  %v929 = vpop.permute.xlu0 %928
  %930 = vrot.lane.b32.xlu0 %v846, 1
  %v931 = vpop.permute.xlu0 %930
  %932 = vrot.lane.b32.xlu0 %v847, 1
  %v933 = vpop.permute.xlu0 %932
  %934 = vrot.lane.b32.xlu0 %v848, 1
  %v935 = vpop.permute.xlu0 %934
  %936 = vrot.lane.b32.xlu0 %v849, 1
  %v937 = vpop.permute.xlu0 %936
  %938 = vrot.lane.b32.xlu0 %v850, 1
  %v939 = vpop.permute.xlu0 %938
  %940 = vrot.lane.b32.xlu0 %v851, 1
  %v941 = vpop.permute.xlu0 %940
  %942 = vrot.lane.b32.xlu0 %v852, 1
  %v943 = vpop.permute.xlu0 %942
  %944 = vrot.lane.b32.xlu0 %v853, 1
  %v945 = vpop.permute.xlu0 %944
  %946 = vrot.lane.b32.xlu0 %v854, 1
  %v947 = vpop.permute.xlu0 %946
  %948 = vrot.lane.b32.xlu0 %v855, 1
  %v949 = vpop.permute.xlu0 %948
  %950 = vrot.lane.b32.xlu0 %v856, 1
  %v951 = vpop.permute.xlu0 %950
  %952 = vrot.lane.b32.xlu0 %v857, 1
  %v953 = vpop.permute.xlu0 %952
  %970 = vst.msk [vmem:[#allocation2] sm:$0xff] %vm102, %v923
  %971 = vst.msk [vmem:[#allocation2 + $0x8] sm:$0xff] %vm102, %v925
  %972 = vst.msk [vmem:[#allocation2 + $0x10] sm:$0xff] %vm102, %v927
  %973 = vst.msk [vmem:[#allocation2 + $0x18] sm:$0xff] %vm102, %v929
  %974 = vst.msk [vmem:[#allocation2 + $0x20] sm:$0xff] %vm102, %v931
  %975 = vst.msk [vmem:[#allocation2 + $0x28] sm:$0xff] %vm102, %v933
  %976 = vst.msk [vmem:[#allocation2 + $0x30] sm:$0xff] %vm102, %v935
  %977 = vst.msk [vmem:[#allocation2 + $0x38] sm:$0xff] %vm102, %v937
  %978 = vst.msk [vmem:[#allocation2 + $0x40] sm:$0xff] %vm102, %v939
  %979 = vst.msk [vmem:[#allocation2 + $0x48] sm:$0xff] %vm102, %v941
  %980 = vst.msk [vmem:[#allocation2 + $0x50] sm:$0xff] %vm102, %v943
  %981 = vst.msk [vmem:[#allocation2 + $0x58] sm:$0xff] %vm102, %v945
  %982 = vst.msk [vmem:[#allocation2 + $0x60] sm:$0xff] %vm102, %v947
  %983 = vst.msk [vmem:[#allocation2 + $0x68] sm:$0xff] %vm102, %v949
  %984 = vst.msk [vmem:[#allocation2 + $0x70] sm:$0xff] %vm102, %v951
  %985 = vst.msk [vmem:[#allocation2 + $0x78] sm:$0xff] %vm102, %v953
  %986 = vst.msk [vmem:[#allocation2] sm:$0xff] %vm111, 0.0
  %987 = vst.msk [vmem:[#allocation2 + $0x8] sm:$0xff] %vm111, 0.0
  %988 = vst.msk [vmem:[#allocation2 + $0x10] sm:$0xff] %vm111, 0.0
  %989 = vst.msk [vmem:[#allocation2 + $0x18] sm:$0xff] %vm111, 0.0
  %990 = vst.msk [vmem:[#allocation2 + $0x20] sm:$0xff] %vm111, 0.0
  %991 = vst.msk [vmem:[#allocation2 + $0x28] sm:$0xff] %vm111, 0.0
  %992 = vst.msk [vmem:[#allocation2 + $0x30] sm:$0xff] %vm111, 0.0
  %993 = vst.msk [vmem:[#allocation2 + $0x38] sm:$0xff] %vm111, 0.0
  %994 = vst.msk [vmem:[#allocation2 + $0x40] sm:$0xff] %vm111, 0.0
  %995 = vst.msk [vmem:[#allocation2 + $0x48] sm:$0xff] %vm111, 0.0
  %996 = vst.msk [vmem:[#allocation2 + $0x50] sm:$0xff] %vm111, 0.0
  %997 = vst.msk [vmem:[#allocation2 + $0x58] sm:$0xff] %vm111, 0.0
  %998 = vst.msk [vmem:[#allocation2 + $0x60] sm:$0xff] %vm111, 0.0
  %999 = vst.msk [vmem:[#allocation2 + $0x68] sm:$0xff] %vm111, 0.0
  %1000 = vst.msk [vmem:[#allocation2 + $0x70] sm:$0xff] %vm111, 0.0
  %1001 = vst.msk [vmem:[#allocation2 + $0x78] sm:$0xff] %vm111, 0.0
  %1002 = vst [vmem:[#allocation2 + $0x80] sm:$0xff] %v842
  %1003 = vst [vmem:[#allocation2 + $0x88] sm:$0xff] %v843
  %1004 = vst [vmem:[#allocation2 + $0x90] sm:$0xff] %v844
  %1005 = vst [vmem:[#allocation2 + $0x98] sm:$0xff] %v845
  %1006 = vst [vmem:[#allocation2 + $0xa0] sm:$0xff] %v846
  %1007 = vst [vmem:[#allocation2 + $0xa8] sm:$0xff] %v847
  %1008 = vst [vmem:[#allocation2 + $0xb0] sm:$0xff] %v848
  %1009 = vst [vmem:[#allocation2 + $0xb8] sm:$0xff] %v849
  %1010 = vst [vmem:[#allocation2 + $0xc0] sm:$0xff] %v850
  %1011 = vst [vmem:[#allocation2 + $0xc8] sm:$0xff] %v851
  %1012 = vst [vmem:[#allocation2 + $0xd0] sm:$0xff] %v852
  %1013 = vst [vmem:[#allocation2 + $0xd8] sm:$0xff] %v853
  %1014 = vst [vmem:[#allocation2 + $0xe0] sm:$0xff] %v854
  %1015 = vst [vmem:[#allocation2 + $0xe8] sm:$0xff] %v855
  %1016 = vst [vmem:[#allocation2 + $0xf0] sm:$0xff] %v856
  %1017 = vst [vmem:[#allocation2 + $0xf8] sm:$0xff] %v857
  %1018 = vrot.lane.b32.xlu0 %v842, 127
  %v1019 = vpop.permute.xlu0 %1018
  %1020 = vrot.lane.b32.xlu0 %v843, 127
  %v1021 = vpop.permute.xlu0 %1020
  %1022 = vrot.lane.b32.xlu0 %v844, 127
  %v1023 = vpop.permute.xlu0 %1022
  %1024 = vrot.lane.b32.xlu0 %v845, 127
  %v1025 = vpop.permute.xlu0 %1024
  %1026 = vrot.lane.b32.xlu0 %v846, 127
  %v1027 = vpop.permute.xlu0 %1026
  %1028 = vrot.lane.b32.xlu0 %v847, 127
  %v1029 = vpop.permute.xlu0 %1028
  %1030 = vrot.lane.b32.xlu0 %v848, 127
  %v1031 = vpop.permute.xlu0 %1030
  %1032 = vrot.lane.b32.xlu0 %v849, 127
  %v1033 = vpop.permute.xlu0 %1032
  %1034 = vrot.lane.b32.xlu0 %v850, 127
  %v1035 = vpop.permute.xlu0 %1034
  %1036 = vrot.lane.b32.xlu0 %v851, 127
  %v1037 = vpop.permute.xlu0 %1036
  %1038 = vrot.lane.b32.xlu0 %v852, 127
  %v1039 = vpop.permute.xlu0 %1038
  %1040 = vrot.lane.b32.xlu0 %v853, 127
  %v1041 = vpop.permute.xlu0 %1040
  %1042 = vrot.lane.b32.xlu0 %v854, 127
  %v1043 = vpop.permute.xlu0 %1042
  %1044 = vrot.lane.b32.xlu0 %v855, 127
  %v1045 = vpop.permute.xlu0 %1044
  %1046 = vrot.lane.b32.xlu0 %v856, 127
  %v1047 = vpop.permute.xlu0 %1046
  %1048 = vrot.lane.b32.xlu0 %v857, 127
  %v1049 = vpop.permute.xlu0 %1048
  %1066 = vst.msk [vmem:[#allocation2 + $0x100] sm:$0xff] %vm152, %v1019
  %1067 = vst.msk [vmem:[#allocation2 + $0x108] sm:$0xff] %vm152, %v1021
  %1068 = vst.msk [vmem:[#allocation2 + $0x110] sm:$0xff] %vm152, %v1023
  %1069 = vst.msk [vmem:[#allocation2 + $0x118] sm:$0xff] %vm152, %v1025
  %1070 = vst.msk [vmem:[#allocation2 + $0x120] sm:$0xff] %vm152, %v1027
  %1071 = vst.msk [vmem:[#allocation2 + $0x128] sm:$0xff] %vm152, %v1029
  %1072 = vst.msk [vmem:[#allocation2 + $0x130] sm:$0xff] %vm152, %v1031
  %1073 = vst.msk [vmem:[#allocation2 + $0x138] sm:$0xff] %vm152, %v1033
  %1074 = vst.msk [vmem:[#allocation2 + $0x140] sm:$0xff] %vm152, %v1035
  %1075 = vst.msk [vmem:[#allocation2 + $0x148] sm:$0xff] %vm152, %v1037
  %1076 = vst.msk [vmem:[#allocation2 + $0x150] sm:$0xff] %vm152, %v1039
  %1077 = vst.msk [vmem:[#allocation2 + $0x158] sm:$0xff] %vm152, %v1041
  %1078 = vst.msk [vmem:[#allocation2 + $0x160] sm:$0xff] %vm152, %v1043
  %1079 = vst.msk [vmem:[#allocation2 + $0x168] sm:$0xff] %vm152, %v1045
  %1080 = vst.msk [vmem:[#allocation2 + $0x170] sm:$0xff] %vm152, %v1047
  %1081 = vst.msk [vmem:[#allocation2 + $0x178] sm:$0xff] %vm152, %v1049
  %1082 = vst.msk [vmem:[#allocation2 + $0x100] sm:$0xff] %vm161, 0.0
  %1083 = vst.msk [vmem:[#allocation2 + $0x108] sm:$0xff] %vm161, 0.0
  %1084 = vst.msk [vmem:[#allocation2 + $0x110] sm:$0xff] %vm161, 0.0
  %1085 = vst.msk [vmem:[#allocation2 + $0x118] sm:$0xff] %vm161, 0.0
  %1086 = vst.msk [vmem:[#allocation2 + $0x120] sm:$0xff] %vm161, 0.0
  %1087 = vst.msk [vmem:[#allocation2 + $0x128] sm:$0xff] %vm161, 0.0
  %1088 = vst.msk [vmem:[#allocation2 + $0x130] sm:$0xff] %vm161, 0.0
  %1089 = vst.msk [vmem:[#allocation2 + $0x138] sm:$0xff] %vm161, 0.0
  %1090 = vst.msk [vmem:[#allocation2 + $0x140] sm:$0xff] %vm161, 0.0
  %1091 = vst.msk [vmem:[#allocation2 + $0x148] sm:$0xff] %vm161, 0.0
  %1092 = vst.msk [vmem:[#allocation2 + $0x150] sm:$0xff] %vm161, 0.0
  %1093 = vst.msk [vmem:[#allocation2 + $0x158] sm:$0xff] %vm161, 0.0
  %1094 = vst.msk [vmem:[#allocation2 + $0x160] sm:$0xff] %vm161, 0.0
  %1095 = vst.msk [vmem:[#allocation2 + $0x168] sm:$0xff] %vm161, 0.0
  %1096 = vst.msk [vmem:[#allocation2 + $0x170] sm:$0xff] %vm161, 0.0
  %1097 = vst.msk [vmem:[#allocation2 + $0x178] sm:$0xff] %vm161, 0.0
  %v1098 = vld [vmem:[#allocation2] sm:$0xff]
  %v1099 = vld [vmem:[#allocation2 + $0x8] sm:$0xff]
  %v1100 = vld [vmem:[#allocation2 + $0x10] sm:$0xff]
  %v1101 = vld [vmem:[#allocation2 + $0x18] sm:$0xff]
  %v1102 = vld [vmem:[#allocation2 + $0x20] sm:$0xff]
  %v1103 = vld [vmem:[#allocation2 + $0x28] sm:$0xff]
  %v1104 = vld [vmem:[#allocation2 + $0x30] sm:$0xff]
  %v1105 = vld [vmem:[#allocation2 + $0x38] sm:$0xff]
  %v1106 = vld [vmem:[#allocation2 + $0x40] sm:$0xff]
  %v1107 = vld [vmem:[#allocation2 + $0x48] sm:$0xff]
  %v1108 = vld [vmem:[#allocation2 + $0x50] sm:$0xff]
  %v1109 = vld [vmem:[#allocation2 + $0x58] sm:$0xff]
  %v1110 = vld [vmem:[#allocation2 + $0x60] sm:$0xff]
  %v1111 = vld [vmem:[#allocation2 + $0x68] sm:$0xff]
  %v1112 = vld [vmem:[#allocation2 + $0x70] sm:$0xff]
  %v1113 = vld [vmem:[#allocation2 + $0x78] sm:$0xff]
  %v1114 = vld [vmem:[#allocation2 + $0x80] sm:$0xff]
  %v1115 = vld [vmem:[#allocation2 + $0x88] sm:$0xff]
  %v1116 = vld [vmem:[#allocation2 + $0x90] sm:$0xff]
  %v1117 = vld [vmem:[#allocation2 + $0x98] sm:$0xff]
  %v1118 = vld [vmem:[#allocation2 + $0xa0] sm:$0xff]
  %v1119 = vld [vmem:[#allocation2 + $0xa8] sm:$0xff]
  %v1120 = vld [vmem:[#allocation2 + $0xb0] sm:$0xff]
  %v1121 = vld [vmem:[#allocation2 + $0xb8] sm:$0xff]
  %v1122 = vld [vmem:[#allocation2 + $0xc0] sm:$0xff]
  %v1123 = vld [vmem:[#allocation2 + $0xc8] sm:$0xff]
  %v1124 = vld [vmem:[#allocation2 + $0xd0] sm:$0xff]
  %v1125 = vld [vmem:[#allocation2 + $0xd8] sm:$0xff]
  %v1126 = vld [vmem:[#allocation2 + $0xe0] sm:$0xff]
  %v1127 = vld [vmem:[#allocation2 + $0xe8] sm:$0xff]
  %v1128 = vld [vmem:[#allocation2 + $0xf0] sm:$0xff]
  %v1129 = vld [vmem:[#allocation2 + $0xf8] sm:$0xff]
  %v1130 = vld [vmem:[#allocation2 + $0x100] sm:$0xff]
  %v1131 = vld [vmem:[#allocation2 + $0x108] sm:$0xff]
  %v1132 = vld [vmem:[#allocation2 + $0x110] sm:$0xff]
  %v1133 = vld [vmem:[#allocation2 + $0x118] sm:$0xff]
  %v1134 = vld [vmem:[#allocation2 + $0x120] sm:$0xff]
  %v1135 = vld [vmem:[#allocation2 + $0x128] sm:$0xff]
  %v1136 = vld [vmem:[#allocation2 + $0x130] sm:$0xff]
  %v1137 = vld [vmem:[#allocation2 + $0x138] sm:$0xff]
  %v1138 = vld [vmem:[#allocation2 + $0x140] sm:$0xff]
  %v1139 = vld [vmem:[#allocation2 + $0x148] sm:$0xff]
  %v1140 = vld [vmem:[#allocation2 + $0x150] sm:$0xff]
  %v1141 = vld [vmem:[#allocation2 + $0x158] sm:$0xff]
  %v1142 = vld [vmem:[#allocation2 + $0x160] sm:$0xff]
  %v1143 = vld [vmem:[#allocation2 + $0x168] sm:$0xff]
  %v1144 = vld [vmem:[#allocation2 + $0x170] sm:$0xff]
  %v1145 = vld [vmem:[#allocation2 + $0x178] sm:$0xff]
  %1146 = vmatprep.subr.mxu0 0.0
  %1147 = vmatpush1.msra.mxu0 %v1113
  %1148 = vmatprep.subr.mxu0 0.0
  %1149 = vmatpush1.msra.mxu0 %v1112
  %1150 = vmatprep.subr.mxu0 0.0
  %1151 = vmatpush1.msra.mxu0 %v1111
  %1152 = vmatprep.subr.mxu0 0.0
  %1153 = vmatpush1.msra.mxu0 %v1110
  %1154 = vmatprep.subr.mxu0 0.0
  %1155 = vmatpush1.msra.mxu0 %v1109
  %1156 = vmatprep.subr.mxu0 0.0
  %1157 = vmatpush1.msra.mxu0 %v1108
  %1158 = vmatprep.subr.mxu0 0.0
  %1159 = vmatpush1.msra.mxu0 %v1107
  %1160 = vmatprep.subr.mxu0 0.0
  %1161 = vmatpush1.msra.mxu0 %v1106
  %1162 = vmatprep.subr.mxu0 0.0
  %1163 = vmatpush1.msra.mxu0 %v1105
  %1164 = vmatprep.subr.mxu0 0.0
  %1165 = vmatpush1.msra.mxu0 %v1104
  %1166 = vmatprep.subr.mxu0 0.0
  %1167 = vmatpush1.msra.mxu0 %v1103
  %1168 = vmatprep.subr.mxu0 0.0
  %1169 = vmatpush1.msra.mxu0 %v1102
  %1170 = vmatprep.subr.mxu0 0.0
  %1171 = vmatpush1.msra.mxu0 %v1101
  %1172 = vmatprep.subr.mxu0 0.0
  %1173 = vmatpush1.msra.mxu0 %v1100
  %1174 = vmatprep.subr.mxu0 0.0
  %1175 = vmatpush1.msra.mxu0 %v1099
  %1176 = vmatprep.subr.mxu0 0.0
  %1177 = vmatpush1.msra.mxu0 %v1098
  %1178 = vmatprep.subr.mxu0 0.0
  %1179 = vmatpush2.msra.mxu0 %v1129
  %1180 = vmatprep.subr.mxu0 0.0
  %1181 = vmatpush2.msra.mxu0 %v1128
  %1182 = vmatprep.subr.mxu0 0.0
  %1183 = vmatpush2.msra.mxu0 %v1127
  %1184 = vmatprep.subr.mxu0 0.0
  %1185 = vmatpush2.msra.mxu0 %v1126
  %1186 = vmatprep.subr.mxu0 0.0
  %1187 = vmatpush2.msra.mxu0 %v1125
  %1188 = vmatprep.subr.mxu0 0.0
  %1189 = vmatpush2.msra.mxu0 %v1124
  %1190 = vmatprep.subr.mxu0 0.0
  %1191 = vmatpush2.msra.mxu0 %v1123
  %1192 = vmatprep.subr.mxu0 0.0
  %1193 = vmatpush2.msra.mxu0 %v1122
  %1194 = vmatprep.subr.mxu0 0.0
  %1195 = vmatpush2.msra.mxu0 %v1121
  %1196 = vmatprep.subr.mxu0 0.0
  %1197 = vmatpush2.msra.mxu0 %v1120
  %1198 = vmatprep.subr.mxu0 0.0
  %1199 = vmatpush2.msra.mxu0 %v1119
  %1200 = vmatprep.subr.mxu0 0.0
  %1201 = vmatpush2.msra.mxu0 %v1118
  %1202 = vmatprep.subr.mxu0 0.0
  %1203 = vmatpush2.msra.mxu0 %v1117
  %1204 = vmatprep.subr.mxu0 0.0
  %1205 = vmatpush2.msra.mxu0 %v1116
  %1206 = vmatprep.subr.mxu0 0.0
  %1207 = vmatpush2.msra.mxu0 %v1115
  %1208 = vmatprep.subr.mxu0 0.0
  %1209 = vmatpush2.msra.mxu0 %v1114
  %1210 = vmatprep.mubr.f32.mxu0 %v859
  %1211 = vmatmul.mubr.f32.gmra.mxu0 %v858
  %v1212 = vpop.f32.mrf.mxu0
  %v1213 = vadd.f32 0.0, %v1212
  %v1214 = vpop.f32.mrf.mxu0
  %1215 = vmatprep.mubr.f32.mxu0 %v862
  %1216 = vmatmul.mubr.f32.gmra.mxu0 %v861
  %v1217 = vpop.f32.mrf.mxu0
  %v1218 = vadd.f32 0.0, %v1217
  %v1219 = vpop.f32.mrf.mxu0
  %1220 = vmatprep.mubr.f32.mxu0 %v865
  %1221 = vmatmul.mubr.f32.gmra.mxu0 %v864
  %v1222 = vpop.f32.mrf.mxu0
  %v1223 = vadd.f32 0.0, %v1222
  %v1224 = vpop.f32.mrf.mxu0
  %1225 = vmatprep.mubr.f32.mxu0 %v868
  %1226 = vmatmul.mubr.f32.gmra.mxu0 %v867
  %v1227 = vpop.f32.mrf.mxu0
  %v1228 = vadd.f32 0.0, %v1227
  %v1229 = vpop.f32.mrf.mxu0
  %1230 = vmatprep.mubr.f32.mxu0 %v871
  %1231 = vmatmul.mubr.f32.gmra.mxu0 %v870
  %v1232 = vpop.f32.mrf.mxu0
  %v1233 = vadd.f32 0.0, %v1232
  %v1234 = vpop.f32.mrf.mxu0
  %1235 = vmatprep.mubr.f32.mxu0 %v874
  %1236 = vmatmul.mubr.f32.gmra.mxu0 %v873
  %v1237 = vpop.f32.mrf.mxu0
  %v1238 = vadd.f32 0.0, %v1237
  %v1239 = vpop.f32.mrf.mxu0
  %1240 = vmatprep.mubr.f32.mxu0 %v877
  %1241 = vmatmul.mubr.f32.gmra.mxu0 %v876
  %v1242 = vpop.f32.mrf.mxu0
  %v1243 = vadd.f32 0.0, %v1242
  %v1244 = vpop.f32.mrf.mxu0
  %1245 = vmatprep.mubr.f32.mxu0 %v880
  %1246 = vmatmul.mubr.f32.gmra.mxu0 %v879
  %v1247 = vpop.f32.mrf.mxu0
  %v1248 = vadd.f32 0.0, %v1247
  %v1249 = vpop.f32.mrf.mxu0
  %1250 = vmatprep.mubr.f32.mxu0 %v883
  %1251 = vmatmul.mubr.f32.gmra.mxu0 %v882
  %v1252 = vpop.f32.mrf.mxu0
  %v1253 = vadd.f32 0.0, %v1252
  %v1254 = vpop.f32.mrf.mxu0
  %1255 = vmatprep.mubr.f32.mxu0 %v886
  %1256 = vmatmul.mubr.f32.gmra.mxu0 %v885
  %v1257 = vpop.f32.mrf.mxu0
  %v1258 = vadd.f32 0.0, %v1257
  %v1259 = vpop.f32.mrf.mxu0
  %1260 = vmatprep.mubr.f32.mxu0 %v889
  %1261 = vmatmul.mubr.f32.gmra.mxu0 %v888
  %v1262 = vpop.f32.mrf.mxu0
  %v1263 = vadd.f32 0.0, %v1262
  %v1264 = vpop.f32.mrf.mxu0
  %1265 = vmatprep.mubr.f32.mxu0 %v892
  %1266 = vmatmul.mubr.f32.gmra.mxu0 %v891
  %v1267 = vpop.f32.mrf.mxu0
  %v1268 = vadd.f32 0.0, %v1267
  %v1269 = vpop.f32.mrf.mxu0
  %1270 = vmatprep.mubr.f32.mxu0 %v895
  %1271 = vmatmul.mubr.f32.gmra.mxu0 %v894
  %v1272 = vpop.f32.mrf.mxu0
  %v1273 = vadd.f32 0.0, %v1272
  %v1274 = vpop.f32.mrf.mxu0
  %1275 = vmatprep.mubr.f32.mxu0 %v898
  %1276 = vmatmul.mubr.f32.gmra.mxu0 %v897
  %v1277 = vpop.f32.mrf.mxu0
  %v1278 = vadd.f32 0.0, %v1277
  %v1279 = vpop.f32.mrf.mxu0
  %1280 = vmatprep.mubr.f32.mxu0 %v901
  %1281 = vmatmul.mubr.f32.gmra.mxu0 %v900
  %v1282 = vpop.f32.mrf.mxu0
  %v1283 = vadd.f32 0.0, %v1282
  %v1284 = vpop.f32.mrf.mxu0
  %1285 = vmatprep.mubr.f32.mxu0 %v904
  %1286 = vmatmul.mubr.f32.gmra.mxu0 %v903
  %v1287 = vpop.f32.mrf.mxu0
  %v1288 = vadd.f32 0.0, %v1287
  %v1289 = vpop.f32.mrf.mxu0
  %1290 = vdwg.mxu0
  %1291 = vmatprep.subr.mxu0 0.0
  %1292 = vmatpush1.msra.mxu0 %v1145
  %1293 = vmatprep.subr.mxu0 0.0
  %1294 = vmatpush1.msra.mxu0 %v1144
  %1295 = vmatprep.subr.mxu0 0.0
  %1296 = vmatpush1.msra.mxu0 %v1143
  %1297 = vmatprep.subr.mxu0 0.0
  %1298 = vmatpush1.msra.mxu0 %v1142
  %1299 = vmatprep.subr.mxu0 0.0
  %1300 = vmatpush1.msra.mxu0 %v1141
  %1301 = vmatprep.subr.mxu0 0.0
  %1302 = vmatpush1.msra.mxu0 %v1140
  %1303 = vmatprep.subr.mxu0 0.0
  %1304 = vmatpush1.msra.mxu0 %v1139
  %1305 = vmatprep.subr.mxu0 0.0
  %1306 = vmatpush1.msra.mxu0 %v1138
  %1307 = vmatprep.subr.mxu0 0.0
  %1308 = vmatpush1.msra.mxu0 %v1137
  %1309 = vmatprep.subr.mxu0 0.0
  %1310 = vmatpush1.msra.mxu0 %v1136
  %1311 = vmatprep.subr.mxu0 0.0
  %1312 = vmatpush1.msra.mxu0 %v1135
  %1313 = vmatprep.subr.mxu0 0.0
  %1314 = vmatpush1.msra.mxu0 %v1134
  %1315 = vmatprep.subr.mxu0 0.0
  %1316 = vmatpush1.msra.mxu0 %v1133
  %1317 = vmatprep.subr.mxu0 0.0
  %1318 = vmatpush1.msra.mxu0 %v1132
  %1319 = vmatprep.subr.mxu0 0.0
  %1320 = vmatpush1.msra.mxu0 %v1131
  %1321 = vmatprep.subr.mxu0 0.0
  %1322 = vmatpush1.msra.mxu0 %v1130
  %1323 = vmatprep.subr.mxu0 0.0
  %1324 = vmatpush2.msra.mxu0 0.0
  %1325 = vmatprep.subr.mxu0 0.0
  %1326 = vmatpush2.msra.mxu0 0.0
  %1327 = vmatprep.subr.mxu0 0.0
  %1328 = vmatpush2.msra.mxu0 0.0
  %1329 = vmatprep.subr.mxu0 0.0
  %1330 = vmatpush2.msra.mxu0 0.0
  %1331 = vmatprep.subr.mxu0 0.0
  %1332 = vmatpush2.msra.mxu0 0.0
  %1333 = vmatprep.subr.mxu0 0.0
  %1334 = vmatpush2.msra.mxu0 0.0
  %1335 = vmatprep.subr.mxu0 0.0
  %1336 = vmatpush2.msra.mxu0 0.0
  %1337 = vmatprep.subr.mxu0 0.0
  %1338 = vmatpush2.msra.mxu0 0.0
  %1339 = vmatprep.subr.mxu0 0.0
  %1340 = vmatpush2.msra.mxu0 0.0
  %1341 = vmatprep.subr.mxu0 0.0
  %1342 = vmatpush2.msra.mxu0 0.0
  %1343 = vmatprep.subr.mxu0 0.0
  %1344 = vmatpush2.msra.mxu0 0.0
  %1345 = vmatprep.subr.mxu0 0.0
  %1346 = vmatpush2.msra.mxu0 0.0
  %1347 = vmatprep.subr.mxu0 0.0
  %1348 = vmatpush2.msra.mxu0 0.0
  %1349 = vmatprep.subr.mxu0 0.0
  %1350 = vmatpush2.msra.mxu0 0.0
  %1351 = vmatprep.subr.mxu0 0.0
  %1352 = vmatpush2.msra.mxu0 0.0
  %1353 = vmatprep.subr.mxu0 0.0
  %1354 = vmatpush2.msra.mxu0 0.0
  %1355 = vmatprep.mubr.f32.mxu0 0.0
  %1356 = vmatmul.mubr.f32.gmra.mxu0 %v860
  %v1357 = vpop.f32.mrf.mxu0
  %v1358 = vadd.f32 %v1213, %v1357
  %v1359 = vpop.f32.mrf.mxu0
  %1360 = vmatprep.mubr.f32.mxu0 0.0
  %1361 = vmatmul.mubr.f32.gmra.mxu0 %v863
  %v1362 = vpop.f32.mrf.mxu0
  %v1363 = vadd.f32 %v1218, %v1362
  %v1364 = vpop.f32.mrf.mxu0
  %1365 = vmatprep.mubr.f32.mxu0 0.0
  %1366 = vmatmul.mubr.f32.gmra.mxu0 %v866
  %v1367 = vpop.f32.mrf.mxu0
  %v1368 = vadd.f32 %v1223, %v1367
  %v1369 = vpop.f32.mrf.mxu0
  %1370 = vmatprep.mubr.f32.mxu0 0.0
  %1371 = vmatmul.mubr.f32.gmra.mxu0 %v869
  %v1372 = vpop.f32.mrf.mxu0
  %v1373 = vadd.f32 %v1228, %v1372
  %v1374 = vpop.f32.mrf.mxu0
  %1375 = vmatprep.mubr.f32.mxu0 0.0
  %1376 = vmatmul.mubr.f32.gmra.mxu0 %v872
  %v1377 = vpop.f32.mrf.mxu0
  %v1378 = vadd.f32 %v1233, %v1377
  %v1379 = vpop.f32.mrf.mxu0
  %1380 = vmatprep.mubr.f32.mxu0 0.0
  %1381 = vmatmul.mubr.f32.gmra.mxu0 %v875
  %v1382 = vpop.f32.mrf.mxu0
  %v1383 = vadd.f32 %v1238, %v1382
  %v1384 = vpop.f32.mrf.mxu0
  %1385 = vmatprep.mubr.f32.mxu0 0.0
  %1386 = vmatmul.mubr.f32.gmra.mxu0 %v878
  %v1387 = vpop.f32.mrf.mxu0
  %v1388 = vadd.f32 %v1243, %v1387
  %v1389 = vpop.f32.mrf.mxu0
  %1390 = vmatprep.mubr.f32.mxu0 0.0
  %1391 = vmatmul.mubr.f32.gmra.mxu0 %v881
  %v1392 = vpop.f32.mrf.mxu0
  %v1393 = vadd.f32 %v1248, %v1392
  %v1394 = vpop.f32.mrf.mxu0
  %1395 = vmatprep.mubr.f32.mxu0 0.0
  %1396 = vmatmul.mubr.f32.gmra.mxu0 %v884
  %v1397 = vpop.f32.mrf.mxu0
  %v1398 = vadd.f32 %v1253, %v1397
  %v1399 = vpop.f32.mrf.mxu0
  %1400 = vmatprep.mubr.f32.mxu0 0.0
  %1401 = vmatmul.mubr.f32.gmra.mxu0 %v887
  %v1402 = vpop.f32.mrf.mxu0
  %v1403 = vadd.f32 %v1258, %v1402
  %v1404 = vpop.f32.mrf.mxu0
  %1405 = vmatprep.mubr.f32.mxu0 0.0
  %1406 = vmatmul.mubr.f32.gmra.mxu0 %v890
  %v1407 = vpop.f32.mrf.mxu0
  %v1408 = vadd.f32 %v1263, %v1407
  %v1409 = vpop.f32.mrf.mxu0
  %1410 = vmatprep.mubr.f32.mxu0 0.0
  %1411 = vmatmul.mubr.f32.gmra.mxu0 %v893
  %v1412 = vpop.f32.mrf.mxu0
  %v1413 = vadd.f32 %v1268, %v1412
  %v1414 = vpop.f32.mrf.mxu0
  %1415 = vmatprep.mubr.f32.mxu0 0.0
  %1416 = vmatmul.mubr.f32.gmra.mxu0 %v896
  %v1417 = vpop.f32.mrf.mxu0
  %v1418 = vadd.f32 %v1273, %v1417
  %v1419 = vpop.f32.mrf.mxu0
  %1420 = vmatprep.mubr.f32.mxu0 0.0
  %1421 = vmatmul.mubr.f32.gmra.mxu0 %v899
  %v1422 = vpop.f32.mrf.mxu0
  %v1423 = vadd.f32 %v1278, %v1422
  %v1424 = vpop.f32.mrf.mxu0
  %1425 = vmatprep.mubr.f32.mxu0 0.0
  %1426 = vmatmul.mubr.f32.gmra.mxu0 %v902
  %v1427 = vpop.f32.mrf.mxu0
  %v1428 = vadd.f32 %v1283, %v1427
  %v1429 = vpop.f32.mrf.mxu0
  %1430 = vmatprep.mubr.f32.mxu0 0.0
  %1431 = vmatmul.mubr.f32.gmra.mxu0 %v905
  %v1432 = vpop.f32.mrf.mxu0
  %v1433 = vadd.f32 %v1288, %v1432
  %v1434 = vpop.f32.mrf.mxu0
  %1435 = vdwg.mxu0
  %v1436 = vld [vmem:[%s6] sm:$0xff]
  %v1437 = vld [vmem:[%s6 + $0x8] sm:$0xff]
  %v1438 = vld [vmem:[%s6 + $0x10] sm:$0xff]
  %v1439 = vld [vmem:[%s6 + $0x18] sm:$0xff]
  %v1440 = vld [vmem:[%s6 + $0x20] sm:$0xff]
  %v1441 = vld [vmem:[%s6 + $0x28] sm:$0xff]
  %v1442 = vld [vmem:[%s6 + $0x30] sm:$0xff]
  %v1443 = vld [vmem:[%s6 + $0x38] sm:$0xff]
  %v1444 = vld [vmem:[%s6 + $0x40] sm:$0xff]
  %v1445 = vld [vmem:[%s6 + $0x48] sm:$0xff]
  %v1446 = vld [vmem:[%s6 + $0x50] sm:$0xff]
  %v1447 = vld [vmem:[%s6 + $0x58] sm:$0xff]
  %v1448 = vld [vmem:[%s6 + $0x60] sm:$0xff]
  %v1449 = vld [vmem:[%s6 + $0x68] sm:$0xff]
  %v1450 = vld [vmem:[%s6 + $0x70] sm:$0xff]
  %v1451 = vld [vmem:[%s6 + $0x78] sm:$0xff]
  %v1452 = vld [vmem:[%s7] sm:$0xff]
  %v1453 = vld [vmem:[%s7 + $0x8] sm:$0xff]
  %v1454 = vld [vmem:[%s7 + $0x10] sm:$0xff]
  %v1455 = vld [vmem:[%s7 + $0x18] sm:$0xff]
  %v1456 = vld [vmem:[%s7 + $0x20] sm:$0xff]
  %v1457 = vld [vmem:[%s7 + $0x28] sm:$0xff]
  %v1458 = vld [vmem:[%s7 + $0x30] sm:$0xff]
  %v1459 = vld [vmem:[%s7 + $0x38] sm:$0xff]
  %v1460 = vld [vmem:[%s7 + $0x40] sm:$0xff]
  %v1461 = vld [vmem:[%s7 + $0x48] sm:$0xff]
  %v1462 = vld [vmem:[%s7 + $0x50] sm:$0xff]
  %v1463 = vld [vmem:[%s7 + $0x58] sm:$0xff]
  %v1464 = vld [vmem:[%s7 + $0x60] sm:$0xff]
  %v1465 = vld [vmem:[%s7 + $0x68] sm:$0xff]
  %v1466 = vld [vmem:[%s7 + $0x70] sm:$0xff]
  %v1467 = vld [vmem:[%s7 + $0x78] sm:$0xff]
  %v1468 = vmul.f32 %v1358, %v424
  %v1469 = vmul.f32 %v1363, %v424
  %v1470 = vmul.f32 %v1368, %v424
  %v1471 = vmul.f32 %v1373, %v424
  %v1472 = vmul.f32 %v1378, %v424
  %v1473 = vmul.f32 %v1383, %v424
  %v1474 = vmul.f32 %v1388, %v424
  %v1475 = vmul.f32 %v1393, %v424
  %v1476 = vmul.f32 %v1398, %v424
  %v1477 = vmul.f32 %v1403, %v424
  %v1478 = vmul.f32 %v1408, %v424
  %v1479 = vmul.f32 %v1413, %v424
  %v1480 = vmul.f32 %v1418, %v424
  %v1481 = vmul.f32 %v1423, %v424
  %v1482 = vmul.f32 %v1428, %v424
  %v1483 = vmul.f32 %v1433, %v424
  %1484 = vadd.xlane.f32.xlu0 %v1468
  %v1485 = vpop.xlane.xlu0 %1484
  %1486 = vadd.xlane.f32.xlu0 %v1469
  %v1487 = vpop.xlane.xlu0 %1486
  %1488 = vadd.xlane.f32.xlu0 %v1470
  %v1489 = vpop.xlane.xlu0 %1488
  %1490 = vadd.xlane.f32.xlu0 %v1471
  %v1491 = vpop.xlane.xlu0 %1490
  %1492 = vadd.xlane.f32.xlu0 %v1472
  %v1493 = vpop.xlane.xlu0 %1492
  %1494 = vadd.xlane.f32.xlu0 %v1473
  %v1495 = vpop.xlane.xlu0 %1494
  %1496 = vadd.xlane.f32.xlu0 %v1474
  %v1497 = vpop.xlane.xlu0 %1496
  %1498 = vadd.xlane.f32.xlu0 %v1475
  %v1499 = vpop.xlane.xlu0 %1498
  %1500 = vadd.xlane.f32.xlu0 %v1476
  %v1501 = vpop.xlane.xlu0 %1500
  %1502 = vadd.xlane.f32.xlu0 %v1477
  %v1503 = vpop.xlane.xlu0 %1502
  %1504 = vadd.xlane.f32.xlu0 %v1478
  %v1505 = vpop.xlane.xlu0 %1504
  %1506 = vadd.xlane.f32.xlu0 %v1479
  %v1507 = vpop.xlane.xlu0 %1506
  %1508 = vadd.xlane.f32.xlu0 %v1480
  %v1509 = vpop.xlane.xlu0 %1508
  %1510 = vadd.xlane.f32.xlu0 %v1481
  %v1511 = vpop.xlane.xlu0 %1510
  %1512 = vadd.xlane.f32.xlu0 %v1482
  %v1513 = vpop.xlane.xlu0 %1512
  %1514 = vadd.xlane.f32.xlu0 %v1483
  %v1515 = vpop.xlane.xlu0 %1514
  %v1516 = vmul.f32 %v1485, 0.25
  %v1517 = vmul.f32 %v1487, 0.25
  %v1518 = vmul.f32 %v1489, 0.25
  %v1519 = vmul.f32 %v1491, 0.25
  %v1520 = vmul.f32 %v1493, 0.25
  %v1521 = vmul.f32 %v1495, 0.25
  %v1522 = vmul.f32 %v1497, 0.25
  %v1523 = vmul.f32 %v1499, 0.25
  %v1524 = vmul.f32 %v1501, 0.25
  %v1525 = vmul.f32 %v1503, 0.25
  %v1526 = vmul.f32 %v1505, 0.25
  %v1527 = vmul.f32 %v1507, 0.25
  %v1528 = vmul.f32 %v1509, 0.25
  %v1529 = vmul.f32 %v1511, 0.25
  %v1530 = vmul.f32 %v1513, 0.25
  %v1531 = vmul.f32 %v1515, 0.25
  %v1532 = vsub.f32 %v1358, %v1516
  %v1533 = vsub.f32 %v1363, %v1517
  %v1534 = vsub.f32 %v1368, %v1518
  %v1535 = vsub.f32 %v1373, %v1519
  %v1536 = vsub.f32 %v1378, %v1520
  %v1537 = vsub.f32 %v1383, %v1521
  %v1538 = vsub.f32 %v1388, %v1522
  %v1539 = vsub.f32 %v1393, %v1523
  %v1540 = vsub.f32 %v1398, %v1524
  %v1541 = vsub.f32 %v1403, %v1525
  %v1542 = vsub.f32 %v1408, %v1526
  %v1543 = vsub.f32 %v1413, %v1527
  %v1544 = vsub.f32 %v1418, %v1528
  %v1545 = vsub.f32 %v1423, %v1529
  %v1546 = vsub.f32 %v1428, %v1530
  %v1547 = vsub.f32 %v1433, %v1531
  %v1548 = vmul.f32 %v1532, %v424
  %v1549 = vmul.f32 %v1533, %v424
  %v1550 = vmul.f32 %v1534, %v424
  %v1551 = vmul.f32 %v1535, %v424
  %v1552 = vmul.f32 %v1536, %v424
  %v1553 = vmul.f32 %v1537, %v424
  %v1554 = vmul.f32 %v1538, %v424
  %v1555 = vmul.f32 %v1539, %v424
  %v1556 = vmul.f32 %v1540, %v424
  %v1557 = vmul.f32 %v1541, %v424
  %v1558 = vmul.f32 %v1542, %v424
  %v1559 = vmul.f32 %v1543, %v424
  %v1560 = vmul.f32 %v1544, %v424
  %v1561 = vmul.f32 %v1545, %v424
  %v1562 = vmul.f32 %v1546, %v424
  %v1563 = vmul.f32 %v1547, %v424
  %v1564 = vmul.f32 %v1548, %v1548
  %v1565 = vmul.f32 %v1549, %v1549
  %v1566 = vmul.f32 %v1550, %v1550
  %v1567 = vmul.f32 %v1551, %v1551
  %v1568 = vmul.f32 %v1552, %v1552
  %v1569 = vmul.f32 %v1553, %v1553
  %v1570 = vmul.f32 %v1554, %v1554
  %v1571 = vmul.f32 %v1555, %v1555
  %v1572 = vmul.f32 %v1556, %v1556
  %v1573 = vmul.f32 %v1557, %v1557
  %v1574 = vmul.f32 %v1558, %v1558
  %v1575 = vmul.f32 %v1559, %v1559
  %v1576 = vmul.f32 %v1560, %v1560
  %v1577 = vmul.f32 %v1561, %v1561
  %v1578 = vmul.f32 %v1562, %v1562
  %v1579 = vmul.f32 %v1563, %v1563
  %1580 = vadd.xlane.f32.xlu0 %v1564
  %v1581 = vpop.xlane.xlu0 %1580
  %1582 = vadd.xlane.f32.xlu0 %v1565
  %v1583 = vpop.xlane.xlu0 %1582
  %1584 = vadd.xlane.f32.xlu0 %v1566
  %v1585 = vpop.xlane.xlu0 %1584
  %1586 = vadd.xlane.f32.xlu0 %v1567
  %v1587 = vpop.xlane.xlu0 %1586
  %1588 = vadd.xlane.f32.xlu0 %v1568
  %v1589 = vpop.xlane.xlu0 %1588
  %1590 = vadd.xlane.f32.xlu0 %v1569
  %v1591 = vpop.xlane.xlu0 %1590
  %1592 = vadd.xlane.f32.xlu0 %v1570
  %v1593 = vpop.xlane.xlu0 %1592
  %1594 = vadd.xlane.f32.xlu0 %v1571
  %v1595 = vpop.xlane.xlu0 %1594
  %1596 = vadd.xlane.f32.xlu0 %v1572
  %v1597 = vpop.xlane.xlu0 %1596
  %1598 = vadd.xlane.f32.xlu0 %v1573
  %v1599 = vpop.xlane.xlu0 %1598
  %1600 = vadd.xlane.f32.xlu0 %v1574
  %v1601 = vpop.xlane.xlu0 %1600
  %1602 = vadd.xlane.f32.xlu0 %v1575
  %v1603 = vpop.xlane.xlu0 %1602
  %1604 = vadd.xlane.f32.xlu0 %v1576
  %v1605 = vpop.xlane.xlu0 %1604
  %1606 = vadd.xlane.f32.xlu0 %v1577
  %v1607 = vpop.xlane.xlu0 %1606
  %1608 = vadd.xlane.f32.xlu0 %v1578
  %v1609 = vpop.xlane.xlu0 %1608
  %1610 = vadd.xlane.f32.xlu0 %v1579
  %v1611 = vpop.xlane.xlu0 %1610
  %v1612 = vmul.f32 %v1581, 0.25
  %v1613 = vmul.f32 %v1583, 0.25
  %v1614 = vmul.f32 %v1585, 0.25
  %v1615 = vmul.f32 %v1587, 0.25
  %v1616 = vmul.f32 %v1589, 0.25
  %v1617 = vmul.f32 %v1591, 0.25
  %v1618 = vmul.f32 %v1593, 0.25
  %v1619 = vmul.f32 %v1595, 0.25
  %v1620 = vmul.f32 %v1597, 0.25
  %v1621 = vmul.f32 %v1599, 0.25
  %v1622 = vmul.f32 %v1601, 0.25
  %v1623 = vmul.f32 %v1603, 0.25
  %v1624 = vmul.f32 %v1605, 0.25
  %v1625 = vmul.f32 %v1607, 0.25
  %v1626 = vmul.f32 %v1609, 0.25
  %v1627 = vmul.f32 %v1611, 0.25
  %v1628 = vadd.f32 %v1612, 1e-05
  %v1629 = vadd.f32 %v1613, 1e-05
  %v1630 = vadd.f32 %v1614, 1e-05
  %v1631 = vadd.f32 %v1615, 1e-05
  %v1632 = vadd.f32 %v1616, 1e-05
  %v1633 = vadd.f32 %v1617, 1e-05
  %v1634 = vadd.f32 %v1618, 1e-05
  %v1635 = vadd.f32 %v1619, 1e-05
  %v1636 = vadd.f32 %v1620, 1e-05
  %v1637 = vadd.f32 %v1621, 1e-05
  %v1638 = vadd.f32 %v1622, 1e-05
  %v1639 = vadd.f32 %v1623, 1e-05
  %v1640 = vadd.f32 %v1624, 1e-05
  %v1641 = vadd.f32 %v1625, 1e-05
  %v1642 = vadd.f32 %v1626, 1e-05
  %v1643 = vadd.f32 %v1627, 1e-05
  %v1644 = vrsqrt.pop %v1628
  %v1645 = vrsqrt.pop %v1629
  %v1646 = vrsqrt.pop %v1630
  %v1647 = vrsqrt.pop %v1631
  %v1648 = vrsqrt.pop %v1632
  %v1649 = vrsqrt.pop %v1633
  %v1650 = vrsqrt.pop %v1634
  %v1651 = vrsqrt.pop %v1635
  %v1652 = vrsqrt.pop %v1636
  %v1653 = vrsqrt.pop %v1637
  %v1654 = vrsqrt.pop %v1638
  %v1655 = vrsqrt.pop %v1639
  %v1656 = vrsqrt.pop %v1640
  %v1657 = vrsqrt.pop %v1641
  %v1658 = vrsqrt.pop %v1642
  %v1659 = vrsqrt.pop %v1643
  %v1660 = vmul.f32 %v1644, %v1436
  %v1661 = vmul.f32 %v1645, %v1437
  %v1662 = vmul.f32 %v1646, %v1438
  %v1663 = vmul.f32 %v1647, %v1439
  %v1664 = vmul.f32 %v1648, %v1440
  %v1665 = vmul.f32 %v1649, %v1441
  %v1666 = vmul.f32 %v1650, %v1442
  %v1667 = vmul.f32 %v1651, %v1443
  %v1668 = vmul.f32 %v1652, %v1444
  %v1669 = vmul.f32 %v1653, %v1445
  %v1670 = vmul.f32 %v1654, %v1446
  %v1671 = vmul.f32 %v1655, %v1447
  %v1672 = vmul.f32 %v1656, %v1448
  %v1673 = vmul.f32 %v1657, %v1449
  %v1674 = vmul.f32 %v1658, %v1450
  %v1675 = vmul.f32 %v1659, %v1451
  %1677 = vset.pattern.permute.xlu0 0
  %1678 = vperm.xlu0 %1677, %v1660
  %v1679 = vpop.permute.xlu0 %1678
  %1682 = vset.pattern.permute.xlu0 0
  %1683 = vperm.xlu0 %1682, %v1661
  %v1684 = vpop.permute.xlu0 %1683
  %1687 = vset.pattern.permute.xlu0 0
  %1688 = vperm.xlu0 %1687, %v1662
  %v1689 = vpop.permute.xlu0 %1688
  %1692 = vset.pattern.permute.xlu0 0
  %1693 = vperm.xlu0 %1692, %v1663
  %v1694 = vpop.permute.xlu0 %1693
  %1697 = vset.pattern.permute.xlu0 0
  %1698 = vperm.xlu0 %1697, %v1664
  %v1699 = vpop.permute.xlu0 %1698
  %1702 = vset.pattern.permute.xlu0 0
  %1703 = vperm.xlu0 %1702, %v1665
  %v1704 = vpop.permute.xlu0 %1703
  %1707 = vset.pattern.permute.xlu0 0
  %1708 = vperm.xlu0 %1707, %v1666
  %v1709 = vpop.permute.xlu0 %1708
  %1712 = vset.pattern.permute.xlu0 0
  %1713 = vperm.xlu0 %1712, %v1667
  %v1714 = vpop.permute.xlu0 %1713
  %1717 = vset.pattern.permute.xlu0 0
  %1718 = vperm.xlu0 %1717, %v1668
  %v1719 = vpop.permute.xlu0 %1718
  %1722 = vset.pattern.permute.xlu0 0
  %1723 = vperm.xlu0 %1722, %v1669
  %v1724 = vpop.permute.xlu0 %1723
  %1727 = vset.pattern.permute.xlu0 0
  %1728 = vperm.xlu0 %1727, %v1670
  %v1729 = vpop.permute.xlu0 %1728
  %1732 = vset.pattern.permute.xlu0 0
  %1733 = vperm.xlu0 %1732, %v1671
  %v1734 = vpop.permute.xlu0 %1733
  %1737 = vset.pattern.permute.xlu0 0
  %1738 = vperm.xlu0 %1737, %v1672
  %v1739 = vpop.permute.xlu0 %1738
  %1742 = vset.pattern.permute.xlu0 0
  %1743 = vperm.xlu0 %1742, %v1673
  %v1744 = vpop.permute.xlu0 %1743
  %1747 = vset.pattern.permute.xlu0 0
  %1748 = vperm.xlu0 %1747, %v1674
  %v1749 = vpop.permute.xlu0 %1748
  %1752 = vset.pattern.permute.xlu0 0
  %1753 = vperm.xlu0 %1752, %v1675
  %v1754 = vpop.permute.xlu0 %1753
  %v1756 = vmul.f32 %v1548, %v1679
  %v1757 = vmul.f32 %v1549, %v1684
  %v1758 = vmul.f32 %v1550, %v1689
  %v1759 = vmul.f32 %v1551, %v1694
  %v1760 = vmul.f32 %v1552, %v1699
  %v1761 = vmul.f32 %v1553, %v1704
  %v1762 = vmul.f32 %v1554, %v1709
  %v1763 = vmul.f32 %v1555, %v1714
  %v1764 = vmul.f32 %v1556, %v1719
  %v1765 = vmul.f32 %v1557, %v1724
  %v1766 = vmul.f32 %v1558, %v1729
  %v1767 = vmul.f32 %v1559, %v1734
  %v1768 = vmul.f32 %v1560, %v1739
  %v1769 = vmul.f32 %v1561, %v1744
  %v1770 = vmul.f32 %v1562, %v1749
  %v1771 = vmul.f32 %v1563, %v1754
  %1773 = vset.pattern.permute.xlu0 0
  %1774 = vperm.xlu0 %1773, %v1452
  %v1775 = vpop.permute.xlu0 %1774
  %1778 = vset.pattern.permute.xlu0 0
  %1779 = vperm.xlu0 %1778, %v1453
  %v1780 = vpop.permute.xlu0 %1779
  %1783 = vset.pattern.permute.xlu0 0
  %1784 = vperm.xlu0 %1783, %v1454
  %v1785 = vpop.permute.xlu0 %1784
  %1788 = vset.pattern.permute.xlu0 0
  %1789 = vperm.xlu0 %1788, %v1455
  %v1790 = vpop.permute.xlu0 %1789
  %1793 = vset.pattern.permute.xlu0 0
  %1794 = vperm.xlu0 %1793, %v1456
  %v1795 = vpop.permute.xlu0 %1794
  %1798 = vset.pattern.permute.xlu0 0
  %1799 = vperm.xlu0 %1798, %v1457
  %v1800 = vpop.permute.xlu0 %1799
  %1803 = vset.pattern.permute.xlu0 0
  %1804 = vperm.xlu0 %1803, %v1458
  %v1805 = vpop.permute.xlu0 %1804
  %1808 = vset.pattern.permute.xlu0 0
  %1809 = vperm.xlu0 %1808, %v1459
  %v1810 = vpop.permute.xlu0 %1809
  %1813 = vset.pattern.permute.xlu0 0
  %1814 = vperm.xlu0 %1813, %v1460
  %v1815 = vpop.permute.xlu0 %1814
  %1818 = vset.pattern.permute.xlu0 0
  %1819 = vperm.xlu0 %1818, %v1461
  %v1820 = vpop.permute.xlu0 %1819
  %1823 = vset.pattern.permute.xlu0 0
  %1824 = vperm.xlu0 %1823, %v1462
  %v1825 = vpop.permute.xlu0 %1824
  %1828 = vset.pattern.permute.xlu0 0
  %1829 = vperm.xlu0 %1828, %v1463
  %v1830 = vpop.permute.xlu0 %1829
  %1833 = vset.pattern.permute.xlu0 0
  %1834 = vperm.xlu0 %1833, %v1464
  %v1835 = vpop.permute.xlu0 %1834
  %1838 = vset.pattern.permute.xlu0 0
  %1839 = vperm.xlu0 %1838, %v1465
  %v1840 = vpop.permute.xlu0 %1839
  %1843 = vset.pattern.permute.xlu0 0
  %1844 = vperm.xlu0 %1843, %v1466
  %v1845 = vpop.permute.xlu0 %1844
  %1848 = vset.pattern.permute.xlu0 0
  %1849 = vperm.xlu0 %1848, %v1467
  %v1850 = vpop.permute.xlu0 %1849
  %v1852 = vadd.f32 %v1756, %v1775
  %v1853 = vadd.f32 %v1757, %v1780
  %v1854 = vadd.f32 %v1758, %v1785
  %v1855 = vadd.f32 %v1759, %v1790
  %v1856 = vadd.f32 %v1760, %v1795
  %v1857 = vadd.f32 %v1761, %v1800
  %v1858 = vadd.f32 %v1762, %v1805
  %v1859 = vadd.f32 %v1763, %v1810
  %v1860 = vadd.f32 %v1764, %v1815
  %v1861 = vadd.f32 %v1765, %v1820
  %v1862 = vadd.f32 %v1766, %v1825
  %v1863 = vadd.f32 %v1767, %v1830
  %v1864 = vadd.f32 %v1768, %v1835
  %v1865 = vadd.f32 %v1769, %v1840
  %v1866 = vadd.f32 %v1770, %v1845
  %v1867 = vadd.f32 %v1771, %v1850
  %v1868 = vtanh.pop %v1852
  %v1869 = vtanh.pop %v1853
  %v1870 = vtanh.pop %v1854
  %v1871 = vtanh.pop %v1855
  %v1872 = vtanh.pop %v1856
  %v1873 = vtanh.pop %v1857
  %v1874 = vtanh.pop %v1858
  %v1875 = vtanh.pop %v1859
  %v1876 = vtanh.pop %v1860
  %v1877 = vtanh.pop %v1861
  %v1878 = vtanh.pop %v1862
  %v1879 = vtanh.pop %v1863
  %v1880 = vtanh.pop %v1864
  %v1881 = vtanh.pop %v1865
  %v1882 = vtanh.pop %v1866
  %v1883 = vtanh.pop %v1867
  %v1884 = vmul.f32 %v1868, %v424
  %v1885 = vmul.f32 %v1869, %v424
  %v1886 = vmul.f32 %v1870, %v424
  %v1887 = vmul.f32 %v1871, %v424
  %v1888 = vmul.f32 %v1872, %v424
  %v1889 = vmul.f32 %v1873, %v424
  %v1890 = vmul.f32 %v1874, %v424
  %v1891 = vmul.f32 %v1875, %v424
  %v1892 = vmul.f32 %v1876, %v424
  %v1893 = vmul.f32 %v1877, %v424
  %v1894 = vmul.f32 %v1878, %v424
  %v1895 = vmul.f32 %v1879, %v424
  %v1896 = vmul.f32 %v1880, %v424
  %v1897 = vmul.f32 %v1881, %v424
  %v1898 = vmul.f32 %v1882, %v424
  %v1899 = vmul.f32 %v1883, %v424
  %1900 = vst [vmem:[%s8] sm:$0xff] %v1884
  %1901 = vst [vmem:[%s8 + $0x8] sm:$0xff] %v1885
  %1902 = vst [vmem:[%s8 + $0x10] sm:$0xff] %v1886
  %1903 = vst [vmem:[%s8 + $0x18] sm:$0xff] %v1887
  %1904 = vst [vmem:[%s8 + $0x20] sm:$0xff] %v1888
  %1905 = vst [vmem:[%s8 + $0x28] sm:$0xff] %v1889
  %1906 = vst [vmem:[%s8 + $0x30] sm:$0xff] %v1890
  %1907 = vst [vmem:[%s8 + $0x38] sm:$0xff] %v1891
  %1908 = vst [vmem:[%s8 + $0x40] sm:$0xff] %v1892
  %1909 = vst [vmem:[%s8 + $0x48] sm:$0xff] %v1893
  %1910 = vst [vmem:[%s8 + $0x50] sm:$0xff] %v1894
  %1911 = vst [vmem:[%s8 + $0x58] sm:$0xff] %v1895
  %1912 = vst [vmem:[%s8 + $0x60] sm:$0xff] %v1896
  %1913 = vst [vmem:[%s8 + $0x68] sm:$0xff] %v1897
  %1914 = vst [vmem:[%s8 + $0x70] sm:$0xff] %v1898
  %1915 = vst [vmem:[%s8 + $0x78] sm:$0xff] %v1899
  // Predicated region
  $region34: #{unet1d_forward.13} parent=0 // pred_check
    _
  $region35: #{unet1d_forward.13} parent=0 // pred_check_branch
    %1917 = sbr.rel (0) target = $region37
  $region36: #{unet1d_forward.13} parent=0 // pred_region
    _
  $region37: #{unet1d_forward.13} parent=0 // pred_fallthru
    _
  // Predicated region
  $region38: #{unet1d_forward.13} parent=0 // pred_check
    _
  $region39: #{unet1d_forward.13} parent=0 // pred_check_branch
    %1919 = sbr.rel (0) target = $region41
  $region40: #{unet1d_forward.13} parent=0 // pred_region
    _
  $region41: #{unet1d_forward.13} parent=0 // pred_fallthru
    _

// kernel: unet1d_forward.14
$region0: #{unet1d_forward.14}
  #allocation0 [shape = 'u32[]', space=smem, size = 0x4, offset = 0x4, fixed_abs, tag = 'smem constant byte address 0x4 - core index']
  #allocation1 [shape = 'u32[144,128]{1,0:T(1,128)}', space=vmem, size = 0x12000, scoped, tag = 'internal scratch']
  #allocation2 [shape = 'f32[384,128]{1,0:T(8,128)}', space=vmem, size = 0x30000, scoped, tag = 'scratch operand']
  %s0 = inlined_call_operand.vmem [shape: f32[128,128], index: 0, kind: input, shape index: {}]
  %s1 = inlined_call_operand.vmem [shape: f32[64,128], index: 1, kind: input, shape index: {}]
  %s2 = inlined_call_operand.vmem [shape: f32[1,128], index: 2, kind: input, shape index: {}]
  %s3 = inlined_call_operand.vmem [shape: f32[64,384], index: 3, kind: input, shape index: {}]
  %s4 = inlined_call_operand.vmem [shape: f32[64,1], index: 4, kind: input, shape index: {}]
  %s5 = inlined_call_operand.vmem [shape: f32[64,384], index: 5, kind: input, shape index: {}]
  %s6 = inlined_call_operand.vmem [shape: f32[64,1], index: 6, kind: input, shape index: {}]
  %s7 = inlined_call_operand.vmem [shape: f32[64,1], index: 7, kind: input, shape index: {}]
  %s8 = inlined_call_operand.vmem [shape: f32[64,192], index: 8, kind: input, shape index: {}]
  %s9 = inlined_call_operand.vmem [shape: f32[64,1], index: 9, kind: input, shape index: {}]
  %s10 = inlined_call_operand.vmem [shape: f32[64,1], index: 10, kind: input, shape index: {}]
  %s11 = inlined_call_operand.vmem [shape: f32[64,128], index: 11, kind: output, shape index: {}]
  %s12 = sld [smem:[#allocation0]]
  $region54: #{unet1d_forward.14} parent=0
    _
  %s14 = ssub.s32 1, %s12
  %s15 = scalar_select 0, %s14, %s12
  // Predicated region
  $region2: #{unet1d_forward.14} parent=0 // pred_check
    _
  $region3: #{unet1d_forward.14} parent=0 // pred_check_branch
    %17 = sbr.rel (0) target = $region5
  $region4: #{unet1d_forward.14} parent=0 // pred_region
    _
  $region5: #{unet1d_forward.14} parent=0 // pred_fallthru
    _
  // Predicated region
  $region6: #{unet1d_forward.14} parent=0 // pred_check
    _
  $region7: #{unet1d_forward.14} parent=0 // pred_check_branch
    %19 = sbr.rel (0) target = $region9
  $region8: #{unet1d_forward.14} parent=0 // pred_region
    _
  $region9: #{unet1d_forward.14} parent=0 // pred_fallthru
    _
  // Predicated region
  $region10: #{unet1d_forward.14} parent=0 // pred_check
    _
  $region11: #{unet1d_forward.14} parent=0 // pred_check_branch
    %21 = sbr.rel (0) target = $region13
  $region12: #{unet1d_forward.14} parent=0 // pred_region
    _
  $region13: #{unet1d_forward.14} parent=0 // pred_fallthru
    _
  // Predicated region
  $region14: #{unet1d_forward.14} parent=0 // pred_check
    _
  $region15: #{unet1d_forward.14} parent=0 // pred_check_branch
    %23 = sbr.rel (0) target = $region17
  $region16: #{unet1d_forward.14} parent=0 // pred_region
    _
  $region17: #{unet1d_forward.14} parent=0 // pred_fallthru
    _
  // Predicated region
  $region18: #{unet1d_forward.14} parent=0 // pred_check
    _
  $region19: #{unet1d_forward.14} parent=0 // pred_check_branch
    %25 = sbr.rel (0) target = $region21
  $region20: #{unet1d_forward.14} parent=0 // pred_region
    _
  $region21: #{unet1d_forward.14} parent=0 // pred_fallthru
    _
  // Predicated region
  $region22: #{unet1d_forward.14} parent=0 // pred_check
    _
  $region23: #{unet1d_forward.14} parent=0 // pred_check_branch
    %27 = sbr.rel (0) target = $region25
  $region24: #{unet1d_forward.14} parent=0 // pred_region
    _
  $region25: #{unet1d_forward.14} parent=0 // pred_fallthru
    _
  // Predicated region
  $region26: #{unet1d_forward.14} parent=0 // pred_check
    _
  $region27: #{unet1d_forward.14} parent=0 // pred_check_branch
    %29 = sbr.rel (0) target = $region29
  $region28: #{unet1d_forward.14} parent=0 // pred_region
    _
  $region29: #{unet1d_forward.14} parent=0 // pred_fallthru
    _
  // Predicated region
  $region30: #{unet1d_forward.14} parent=0 // pred_check
    _
  $region31: #{unet1d_forward.14} parent=0 // pred_check_branch
    %31 = sbr.rel (0) target = $region33
  $region32: #{unet1d_forward.14} parent=0 // pred_region
    _
  $region33: #{unet1d_forward.14} parent=0 // pred_fallthru
    _
  // Predicated region
  $region34: #{unet1d_forward.14} parent=0 // pred_check
    _
  $region35: #{unet1d_forward.14} parent=0 // pred_check_branch
    %33 = sbr.rel (0) target = $region37
  $region36: #{unet1d_forward.14} parent=0 // pred_region
    _
  $region37: #{unet1d_forward.14} parent=0 // pred_fallthru
    _
  // Predicated region
  $region38: #{unet1d_forward.14} parent=0 // pred_check
    _
  $region39: #{unet1d_forward.14} parent=0 // pred_check_branch
    %35 = sbr.rel (0) target = $region41
  $region40: #{unet1d_forward.14} parent=0 // pred_region
    _
  $region41: #{unet1d_forward.14} parent=0 // pred_fallthru
    _
  // Predicated region
  $region42: #{unet1d_forward.14} parent=0 // pred_check
    _
  $region43: #{unet1d_forward.14} parent=0 // pred_check_branch
    %37 = sbr.rel (0) target = $region45
  $region44: #{unet1d_forward.14} parent=0 // pred_region
    _
  $region45: #{unet1d_forward.14} parent=0 // pred_fallthru
    _
  %v38 = vld [vmem:[%s2] sm:$0x1]
  %v39 = vld [vmem:[%s3] sm:$0xff]
  %v40 = vld [vmem:[%s3 + $0x8] sm:$0xff]
  %v41 = vld [vmem:[%s3 + $0x10] sm:$0xff]
  %v42 = vld [vmem:[%s3 + $0x18] sm:$0xff]
  %v43 = vld [vmem:[%s3 + $0x20] sm:$0xff]
  %v44 = vld [vmem:[%s3 + $0x28] sm:$0xff]
  %v45 = vld [vmem:[%s3 + $0x30] sm:$0xff]
  %v46 = vld [vmem:[%s3 + $0x38] sm:$0xff]
  %v47 = vld [vmem:[%s3 + $0x40] sm:$0xff]
  %v48 = vld [vmem:[%s3 + $0x48] sm:$0xff]
  %v49 = vld [vmem:[%s3 + $0x50] sm:$0xff]
  %v50 = vld [vmem:[%s3 + $0x58] sm:$0xff]
  %v51 = vld [vmem:[%s3 + $0x60] sm:$0xff]
  %v52 = vld [vmem:[%s3 + $0x68] sm:$0xff]
  %v53 = vld [vmem:[%s3 + $0x70] sm:$0xff]
  %v54 = vld [vmem:[%s3 + $0x78] sm:$0xff]
  %v55 = vld [vmem:[%s3 + $0x80] sm:$0xff]
  %v56 = vld [vmem:[%s3 + $0x88] sm:$0xff]
  %v57 = vld [vmem:[%s3 + $0x90] sm:$0xff]
  %v58 = vld [vmem:[%s3 + $0x98] sm:$0xff]
  %v59 = vld [vmem:[%s3 + $0xa0] sm:$0xff]
  %v60 = vld [vmem:[%s3 + $0xa8] sm:$0xff]
  %v61 = vld [vmem:[%s3 + $0xb0] sm:$0xff]
  %v62 = vld [vmem:[%s3 + $0xb8] sm:$0xff]
  %v63 = vld [vmem:[%s0] sm:$0xff]
  %v64 = vld [vmem:[%s0 + $0x8] sm:$0xff]
  %v65 = vld [vmem:[%s0 + $0x10] sm:$0xff]
  %v66 = vld [vmem:[%s0 + $0x18] sm:$0xff]
  %v67 = vld [vmem:[%s0 + $0x20] sm:$0xff]
  %v68 = vld [vmem:[%s0 + $0x28] sm:$0xff]
  %v69 = vld [vmem:[%s0 + $0x30] sm:$0xff]
  %v70 = vld [vmem:[%s0 + $0x38] sm:$0xff]
  %v71 = vld [vmem:[%s0 + $0x40] sm:$0xff]
  %v72 = vld [vmem:[%s0 + $0x48] sm:$0xff]
  %v73 = vld [vmem:[%s0 + $0x50] sm:$0xff]
  %v74 = vld [vmem:[%s0 + $0x58] sm:$0xff]
  %v75 = vld [vmem:[%s0 + $0x60] sm:$0xff]
  %v76 = vld [vmem:[%s0 + $0x68] sm:$0xff]
  %v77 = vld [vmem:[%s0 + $0x70] sm:$0xff]
  %v78 = vld [vmem:[%s0 + $0x78] sm:$0xff]
  %95 = vrot.lane.b32.xlu0 %v63, 1
  %v96 = vpop.permute.xlu0 %95
  %97 = vrot.lane.b32.xlu0 %v64, 1
  %v98 = vpop.permute.xlu0 %97
  %99 = vrot.lane.b32.xlu0 %v65, 1
  %v100 = vpop.permute.xlu0 %99
  %101 = vrot.lane.b32.xlu0 %v66, 1
  %v102 = vpop.permute.xlu0 %101
  %103 = vrot.lane.b32.xlu0 %v67, 1
  %v104 = vpop.permute.xlu0 %103
  %105 = vrot.lane.b32.xlu0 %v68, 1
  %v106 = vpop.permute.xlu0 %105
  %107 = vrot.lane.b32.xlu0 %v69, 1
  %v108 = vpop.permute.xlu0 %107
  %109 = vrot.lane.b32.xlu0 %v70, 1
  %v110 = vpop.permute.xlu0 %109
  %111 = vrot.lane.b32.xlu0 %v71, 1
  %v112 = vpop.permute.xlu0 %111
  %113 = vrot.lane.b32.xlu0 %v72, 1
  %v114 = vpop.permute.xlu0 %113
  %115 = vrot.lane.b32.xlu0 %v73, 1
  %v116 = vpop.permute.xlu0 %115
  %117 = vrot.lane.b32.xlu0 %v74, 1
  %v118 = vpop.permute.xlu0 %117
  %119 = vrot.lane.b32.xlu0 %v75, 1
  %v120 = vpop.permute.xlu0 %119
  %121 = vrot.lane.b32.xlu0 %v76, 1
  %v122 = vpop.permute.xlu0 %121
  %123 = vrot.lane.b32.xlu0 %v77, 1
  %v124 = vpop.permute.xlu0 %123
  %125 = vrot.lane.b32.xlu0 %v78, 1
  %v126 = vpop.permute.xlu0 %125
  %vm143 = vcmask 1047560
  %144 = vst.msk [vmem:[#allocation2] sm:$0xff] %vm143, %v96
  %145 = vst.msk [vmem:[#allocation2 + $0x8] sm:$0xff] %vm143, %v98
  %146 = vst.msk [vmem:[#allocation2 + $0x10] sm:$0xff] %vm143, %v100
  %147 = vst.msk [vmem:[#allocation2 + $0x18] sm:$0xff] %vm143, %v102
  %148 = vst.msk [vmem:[#allocation2 + $0x20] sm:$0xff] %vm143, %v104
  %149 = vst.msk [vmem:[#allocation2 + $0x28] sm:$0xff] %vm143, %v106
  %150 = vst.msk [vmem:[#allocation2 + $0x30] sm:$0xff] %vm143, %v108
  %151 = vst.msk [vmem:[#allocation2 + $0x38] sm:$0xff] %vm143, %v110
  %152 = vst.msk [vmem:[#allocation2 + $0x40] sm:$0xff] %vm143, %v112
  %153 = vst.msk [vmem:[#allocation2 + $0x48] sm:$0xff] %vm143, %v114
  %154 = vst.msk [vmem:[#allocation2 + $0x50] sm:$0xff] %vm143, %v116
  %155 = vst.msk [vmem:[#allocation2 + $0x58] sm:$0xff] %vm143, %v118
  %156 = vst.msk [vmem:[#allocation2 + $0x60] sm:$0xff] %vm143, %v120
  %157 = vst.msk [vmem:[#allocation2 + $0x68] sm:$0xff] %vm143, %v122
  %158 = vst.msk [vmem:[#allocation2 + $0x70] sm:$0xff] %vm143, %v124
  %159 = vst.msk [vmem:[#allocation2 + $0x78] sm:$0xff] %vm143, %v126
  %vm160 = vcmask 7168
  %161 = vst.msk [vmem:[#allocation2] sm:$0xff] %vm160, 0.0
  %162 = vst.msk [vmem:[#allocation2 + $0x8] sm:$0xff] %vm160, 0.0
  %163 = vst.msk [vmem:[#allocation2 + $0x10] sm:$0xff] %vm160, 0.0
  %164 = vst.msk [vmem:[#allocation2 + $0x18] sm:$0xff] %vm160, 0.0
  %165 = vst.msk [vmem:[#allocation2 + $0x20] sm:$0xff] %vm160, 0.0
  %166 = vst.msk [vmem:[#allocation2 + $0x28] sm:$0xff] %vm160, 0.0
  %167 = vst.msk [vmem:[#allocation2 + $0x30] sm:$0xff] %vm160, 0.0
  %168 = vst.msk [vmem:[#allocation2 + $0x38] sm:$0xff] %vm160, 0.0
  %169 = vst.msk [vmem:[#allocation2 + $0x40] sm:$0xff] %vm160, 0.0
  %170 = vst.msk [vmem:[#allocation2 + $0x48] sm:$0xff] %vm160, 0.0
  %171 = vst.msk [vmem:[#allocation2 + $0x50] sm:$0xff] %vm160, 0.0
  %172 = vst.msk [vmem:[#allocation2 + $0x58] sm:$0xff] %vm160, 0.0
  %173 = vst.msk [vmem:[#allocation2 + $0x60] sm:$0xff] %vm160, 0.0
  %174 = vst.msk [vmem:[#allocation2 + $0x68] sm:$0xff] %vm160, 0.0
  %175 = vst.msk [vmem:[#allocation2 + $0x70] sm:$0xff] %vm160, 0.0
  %176 = vst.msk [vmem:[#allocation2 + $0x78] sm:$0xff] %vm160, 0.0
  %177 = vst [vmem:[#allocation2 + $0x80] sm:$0xff] %v63
  %178 = vst [vmem:[#allocation2 + $0x88] sm:$0xff] %v64
  %179 = vst [vmem:[#allocation2 + $0x90] sm:$0xff] %v65
  %180 = vst [vmem:[#allocation2 + $0x98] sm:$0xff] %v66
  %181 = vst [vmem:[#allocation2 + $0xa0] sm:$0xff] %v67
  %182 = vst [vmem:[#allocation2 + $0xa8] sm:$0xff] %v68
  %183 = vst [vmem:[#allocation2 + $0xb0] sm:$0xff] %v69
  %184 = vst [vmem:[#allocation2 + $0xb8] sm:$0xff] %v70
  %185 = vst [vmem:[#allocation2 + $0xc0] sm:$0xff] %v71
  %186 = vst [vmem:[#allocation2 + $0xc8] sm:$0xff] %v72
  %187 = vst [vmem:[#allocation2 + $0xd0] sm:$0xff] %v73
  %188 = vst [vmem:[#allocation2 + $0xd8] sm:$0xff] %v74
  %189 = vst [vmem:[#allocation2 + $0xe0] sm:$0xff] %v75
  %190 = vst [vmem:[#allocation2 + $0xe8] sm:$0xff] %v76
  %191 = vst [vmem:[#allocation2 + $0xf0] sm:$0xff] %v77
  %192 = vst [vmem:[#allocation2 + $0xf8] sm:$0xff] %v78
  %193 = vrot.lane.b32.xlu0 %v63, 127
  %v194 = vpop.permute.xlu0 %193
  %195 = vrot.lane.b32.xlu0 %v64, 127
  %v196 = vpop.permute.xlu0 %195
  %197 = vrot.lane.b32.xlu0 %v65, 127
  %v198 = vpop.permute.xlu0 %197
  %199 = vrot.lane.b32.xlu0 %v66, 127
  %v200 = vpop.permute.xlu0 %199
  %201 = vrot.lane.b32.xlu0 %v67, 127
  %v202 = vpop.permute.xlu0 %201
  %203 = vrot.lane.b32.xlu0 %v68, 127
  %v204 = vpop.permute.xlu0 %203
  %205 = vrot.lane.b32.xlu0 %v69, 127
  %v206 = vpop.permute.xlu0 %205
  %207 = vrot.lane.b32.xlu0 %v70, 127
  %v208 = vpop.permute.xlu0 %207
  %209 = vrot.lane.b32.xlu0 %v71, 127
  %v210 = vpop.permute.xlu0 %209
  %211 = vrot.lane.b32.xlu0 %v72, 127
  %v212 = vpop.permute.xlu0 %211
  %213 = vrot.lane.b32.xlu0 %v73, 127
  %v214 = vpop.permute.xlu0 %213
  %215 = vrot.lane.b32.xlu0 %v74, 127
  %v216 = vpop.permute.xlu0 %215
  %217 = vrot.lane.b32.xlu0 %v75, 127
  %v218 = vpop.permute.xlu0 %217
  %219 = vrot.lane.b32.xlu0 %v76, 127
  %v220 = vpop.permute.xlu0 %219
  %221 = vrot.lane.b32.xlu0 %v77, 127
  %v222 = vpop.permute.xlu0 %221
  %223 = vrot.lane.b32.xlu0 %v78, 127
  %v224 = vpop.permute.xlu0 %223
  %vm241 = vcmask 1039360
  %242 = vst.msk [vmem:[#allocation2 + $0x100] sm:$0xff] %vm241, %v194
  %243 = vst.msk [vmem:[#allocation2 + $0x108] sm:$0xff] %vm241, %v196
  %244 = vst.msk [vmem:[#allocation2 + $0x110] sm:$0xff] %vm241, %v198
  %245 = vst.msk [vmem:[#allocation2 + $0x118] sm:$0xff] %vm241, %v200
  %246 = vst.msk [vmem:[#allocation2 + $0x120] sm:$0xff] %vm241, %v202
  %247 = vst.msk [vmem:[#allocation2 + $0x128] sm:$0xff] %vm241, %v204
  %248 = vst.msk [vmem:[#allocation2 + $0x130] sm:$0xff] %vm241, %v206
  %249 = vst.msk [vmem:[#allocation2 + $0x138] sm:$0xff] %vm241, %v208
  %250 = vst.msk [vmem:[#allocation2 + $0x140] sm:$0xff] %vm241, %v210
  %251 = vst.msk [vmem:[#allocation2 + $0x148] sm:$0xff] %vm241, %v212
  %252 = vst.msk [vmem:[#allocation2 + $0x150] sm:$0xff] %vm241, %v214
  %253 = vst.msk [vmem:[#allocation2 + $0x158] sm:$0xff] %vm241, %v216
  %254 = vst.msk [vmem:[#allocation2 + $0x160] sm:$0xff] %vm241, %v218
  %255 = vst.msk [vmem:[#allocation2 + $0x168] sm:$0xff] %vm241, %v220
  %256 = vst.msk [vmem:[#allocation2 + $0x170] sm:$0xff] %vm241, %v222
  %257 = vst.msk [vmem:[#allocation2 + $0x178] sm:$0xff] %vm241, %v224
  %vm258 = vcmask 1048568
  %259 = vst.msk [vmem:[#allocation2 + $0x100] sm:$0xff] %vm258, 0.0
  %260 = vst.msk [vmem:[#allocation2 + $0x108] sm:$0xff] %vm258, 0.0
  %261 = vst.msk [vmem:[#allocation2 + $0x110] sm:$0xff] %vm258, 0.0
  %262 = vst.msk [vmem:[#allocation2 + $0x118] sm:$0xff] %vm258, 0.0
  %263 = vst.msk [vmem:[#allocation2 + $0x120] sm:$0xff] %vm258, 0.0
  %264 = vst.msk [vmem:[#allocation2 + $0x128] sm:$0xff] %vm258, 0.0
  %265 = vst.msk [vmem:[#allocation2 + $0x130] sm:$0xff] %vm258, 0.0
  %266 = vst.msk [vmem:[#allocation2 + $0x138] sm:$0xff] %vm258, 0.0
  %267 = vst.msk [vmem:[#allocation2 + $0x140] sm:$0xff] %vm258, 0.0
  %268 = vst.msk [vmem:[#allocation2 + $0x148] sm:$0xff] %vm258, 0.0
  %269 = vst.msk [vmem:[#allocation2 + $0x150] sm:$0xff] %vm258, 0.0
  %270 = vst.msk [vmem:[#allocation2 + $0x158] sm:$0xff] %vm258, 0.0
  %271 = vst.msk [vmem:[#allocation2 + $0x160] sm:$0xff] %vm258, 0.0
  %272 = vst.msk [vmem:[#allocation2 + $0x168] sm:$0xff] %vm258, 0.0
  %273 = vst.msk [vmem:[#allocation2 + $0x170] sm:$0xff] %vm258, 0.0
  %274 = vst.msk [vmem:[#allocation2 + $0x178] sm:$0xff] %vm258, 0.0
  %v275 = vld [vmem:[#allocation2] sm:$0xff]
  %v276 = vld [vmem:[#allocation2 + $0x8] sm:$0xff]
  %v277 = vld [vmem:[#allocation2 + $0x10] sm:$0xff]
  %v278 = vld [vmem:[#allocation2 + $0x18] sm:$0xff]
  %v279 = vld [vmem:[#allocation2 + $0x20] sm:$0xff]
  %v280 = vld [vmem:[#allocation2 + $0x28] sm:$0xff]
  %v281 = vld [vmem:[#allocation2 + $0x30] sm:$0xff]
  %v282 = vld [vmem:[#allocation2 + $0x38] sm:$0xff]
  %v283 = vld [vmem:[#allocation2 + $0x40] sm:$0xff]
  %v284 = vld [vmem:[#allocation2 + $0x48] sm:$0xff]
  %v285 = vld [vmem:[#allocation2 + $0x50] sm:$0xff]
  %v286 = vld [vmem:[#allocation2 + $0x58] sm:$0xff]
  %v287 = vld [vmem:[#allocation2 + $0x60] sm:$0xff]
  %v288 = vld [vmem:[#allocation2 + $0x68] sm:$0xff]
  %v289 = vld [vmem:[#allocation2 + $0x70] sm:$0xff]
  %v290 = vld [vmem:[#allocation2 + $0x78] sm:$0xff]
  %v291 = vld [vmem:[#allocation2 + $0x80] sm:$0xff]
  %v292 = vld [vmem:[#allocation2 + $0x88] sm:$0xff]
  %v293 = vld [vmem:[#allocation2 + $0x90] sm:$0xff]
  %v294 = vld [vmem:[#allocation2 + $0x98] sm:$0xff]
  %v295 = vld [vmem:[#allocation2 + $0xa0] sm:$0xff]
  %v296 = vld [vmem:[#allocation2 + $0xa8] sm:$0xff]
  %v297 = vld [vmem:[#allocation2 + $0xb0] sm:$0xff]
  %v298 = vld [vmem:[#allocation2 + $0xb8] sm:$0xff]
  %v299 = vld [vmem:[#allocation2 + $0xc0] sm:$0xff]
  %v300 = vld [vmem:[#allocation2 + $0xc8] sm:$0xff]
  %v301 = vld [vmem:[#allocation2 + $0xd0] sm:$0xff]
  %v302 = vld [vmem:[#allocation2 + $0xd8] sm:$0xff]
  %v303 = vld [vmem:[#allocation2 + $0xe0] sm:$0xff]
  %v304 = vld [vmem:[#allocation2 + $0xe8] sm:$0xff]
  %v305 = vld [vmem:[#allocation2 + $0xf0] sm:$0xff]
  %v306 = vld [vmem:[#allocation2 + $0xf8] sm:$0xff]
  %v307 = vld [vmem:[#allocation2 + $0x100] sm:$0xff]
  %v308 = vld [vmem:[#allocation2 + $0x108] sm:$0xff]
  %v309 = vld [vmem:[#allocation2 + $0x110] sm:$0xff]
  %v310 = vld [vmem:[#allocation2 + $0x118] sm:$0xff]
  %v311 = vld [vmem:[#allocation2 + $0x120] sm:$0xff]
  %v312 = vld [vmem:[#allocation2 + $0x128] sm:$0xff]
  %v313 = vld [vmem:[#allocation2 + $0x130] sm:$0xff]
  %v314 = vld [vmem:[#allocation2 + $0x138] sm:$0xff]
  %v315 = vld [vmem:[#allocation2 + $0x140] sm:$0xff]
  %v316 = vld [vmem:[#allocation2 + $0x148] sm:$0xff]
  %v317 = vld [vmem:[#allocation2 + $0x150] sm:$0xff]
  %v318 = vld [vmem:[#allocation2 + $0x158] sm:$0xff]
  %v319 = vld [vmem:[#allocation2 + $0x160] sm:$0xff]
  %v320 = vld [vmem:[#allocation2 + $0x168] sm:$0xff]
  %v321 = vld [vmem:[#allocation2 + $0x170] sm:$0xff]
  %v322 = vld [vmem:[#allocation2 + $0x178] sm:$0xff]
  %v323 = vld [vmem:[%s4] sm:$0xff]
  %v324 = vld [vmem:[%s4 + $0x8] sm:$0xff]
  %v325 = vld [vmem:[%s4 + $0x10] sm:$0xff]
  %v326 = vld [vmem:[%s4 + $0x18] sm:$0xff]
  %v327 = vld [vmem:[%s4 + $0x20] sm:$0xff]
  %v328 = vld [vmem:[%s4 + $0x28] sm:$0xff]
  %v329 = vld [vmem:[%s4 + $0x30] sm:$0xff]
  %v330 = vld [vmem:[%s4 + $0x38] sm:$0xff]
  %332 = vset.pattern.permute.xlu0 0
  %333 = vperm.xlu0 %332, %v323
  %v334 = vpop.permute.xlu0 %333
  %337 = vset.pattern.permute.xlu0 0
  %338 = vperm.xlu0 %337, %v324
  %v339 = vpop.permute.xlu0 %338
  %342 = vset.pattern.permute.xlu0 0
  %343 = vperm.xlu0 %342, %v325
  %v344 = vpop.permute.xlu0 %343
  %347 = vset.pattern.permute.xlu0 0
  %348 = vperm.xlu0 %347, %v326
  %v349 = vpop.permute.xlu0 %348
  %352 = vset.pattern.permute.xlu0 0
  %353 = vperm.xlu0 %352, %v327
  %v354 = vpop.permute.xlu0 %353
  %357 = vset.pattern.permute.xlu0 0
  %358 = vperm.xlu0 %357, %v328
  %v359 = vpop.permute.xlu0 %358
  %362 = vset.pattern.permute.xlu0 0
  %363 = vperm.xlu0 %362, %v329
  %v364 = vpop.permute.xlu0 %363
  %367 = vset.pattern.permute.xlu0 0
  %368 = vperm.xlu0 %367, %v330
  %v369 = vpop.permute.xlu0 %368
  %371 = vmatprep.subr.mxu0 0.0
  %372 = vmatpush1.msra.mxu0 %v290
  %373 = vmatprep.subr.mxu0 0.0
  %374 = vmatpush1.msra.mxu0 %v289
  %375 = vmatprep.subr.mxu0 0.0
  %376 = vmatpush1.msra.mxu0 %v288
  %377 = vmatprep.subr.mxu0 0.0
  %378 = vmatpush1.msra.mxu0 %v287
  %379 = vmatprep.subr.mxu0 0.0
  %380 = vmatpush1.msra.mxu0 %v286
  %381 = vmatprep.subr.mxu0 0.0
  %382 = vmatpush1.msra.mxu0 %v285
  %383 = vmatprep.subr.mxu0 0.0
  %384 = vmatpush1.msra.mxu0 %v284
  %385 = vmatprep.subr.mxu0 0.0
  %386 = vmatpush1.msra.mxu0 %v283
  %387 = vmatprep.subr.mxu0 0.0
  %388 = vmatpush1.msra.mxu0 %v282
  %389 = vmatprep.subr.mxu0 0.0
  %390 = vmatpush1.msra.mxu0 %v281
  %391 = vmatprep.subr.mxu0 0.0
  %392 = vmatpush1.msra.mxu0 %v280
  %393 = vmatprep.subr.mxu0 0.0
  %394 = vmatpush1.msra.mxu0 %v279
  %395 = vmatprep.subr.mxu0 0.0
  %396 = vmatpush1.msra.mxu0 %v278
  %397 = vmatprep.subr.mxu0 0.0
  %398 = vmatpush1.msra.mxu0 %v277
  %399 = vmatprep.subr.mxu0 0.0
  %400 = vmatpush1.msra.mxu0 %v276
  %401 = vmatprep.subr.mxu0 0.0
  %402 = vmatpush1.msra.mxu0 %v275
  %403 = vmatprep.subr.mxu0 0.0
  %404 = vmatpush2.msra.mxu0 %v306
  %405 = vmatprep.subr.mxu0 0.0
  %406 = vmatpush2.msra.mxu0 %v305
  %407 = vmatprep.subr.mxu0 0.0
  %408 = vmatpush2.msra.mxu0 %v304
  %409 = vmatprep.subr.mxu0 0.0
  %410 = vmatpush2.msra.mxu0 %v303
  %411 = vmatprep.subr.mxu0 0.0
  %412 = vmatpush2.msra.mxu0 %v302
  %413 = vmatprep.subr.mxu0 0.0
  %414 = vmatpush2.msra.mxu0 %v301
  %415 = vmatprep.subr.mxu0 0.0
  %416 = vmatpush2.msra.mxu0 %v300
  %417 = vmatprep.subr.mxu0 0.0
  %418 = vmatpush2.msra.mxu0 %v299
  %419 = vmatprep.subr.mxu0 0.0
  %420 = vmatpush2.msra.mxu0 %v298
  %421 = vmatprep.subr.mxu0 0.0
  %422 = vmatpush2.msra.mxu0 %v297
  %423 = vmatprep.subr.mxu0 0.0
  %424 = vmatpush2.msra.mxu0 %v296
  %425 = vmatprep.subr.mxu0 0.0
  %426 = vmatpush2.msra.mxu0 %v295
  %427 = vmatprep.subr.mxu0 0.0
  %428 = vmatpush2.msra.mxu0 %v294
  %429 = vmatprep.subr.mxu0 0.0
  %430 = vmatpush2.msra.mxu0 %v293
  %431 = vmatprep.subr.mxu0 0.0
  %432 = vmatpush2.msra.mxu0 %v292
  %433 = vmatprep.subr.mxu0 0.0
  %434 = vmatpush2.msra.mxu0 %v291
  %435 = vmatprep.mubr.f32.mxu0 %v40
  %436 = vmatmul.mubr.f32.gmra.mxu0 %v39
  %v437 = vpop.f32.mrf.mxu0
  %v438 = vadd.f32 %v334, %v437
  %v439 = vpop.f32.mrf.mxu0
  %440 = vmatprep.mubr.f32.mxu0 %v43
  %441 = vmatmul.mubr.f32.gmra.mxu0 %v42
  %v442 = vpop.f32.mrf.mxu0
  %v443 = vadd.f32 %v339, %v442
  %v444 = vpop.f32.mrf.mxu0
  %445 = vmatprep.mubr.f32.mxu0 %v46
  %446 = vmatmul.mubr.f32.gmra.mxu0 %v45
  %v447 = vpop.f32.mrf.mxu0
  %v448 = vadd.f32 %v344, %v447
  %v449 = vpop.f32.mrf.mxu0
  %450 = vmatprep.mubr.f32.mxu0 %v49
  %451 = vmatmul.mubr.f32.gmra.mxu0 %v48
  %v452 = vpop.f32.mrf.mxu0
  %v453 = vadd.f32 %v349, %v452
  %v454 = vpop.f32.mrf.mxu0
  %455 = vmatprep.mubr.f32.mxu0 %v52
  %456 = vmatmul.mubr.f32.gmra.mxu0 %v51
  %v457 = vpop.f32.mrf.mxu0
  %v458 = vadd.f32 %v354, %v457
  %v459 = vpop.f32.mrf.mxu0
  %460 = vmatprep.mubr.f32.mxu0 %v55
  %461 = vmatmul.mubr.f32.gmra.mxu0 %v54
  %v462 = vpop.f32.mrf.mxu0
  %v463 = vadd.f32 %v359, %v462
  %v464 = vpop.f32.mrf.mxu0
  %465 = vmatprep.mubr.f32.mxu0 %v58
  %466 = vmatmul.mubr.f32.gmra.mxu0 %v57
  %v467 = vpop.f32.mrf.mxu0
  %v468 = vadd.f32 %v364, %v467
  %v469 = vpop.f32.mrf.mxu0
  %470 = vmatprep.mubr.f32.mxu0 %v61
  %471 = vmatmul.mubr.f32.gmra.mxu0 %v60
  %v472 = vpop.f32.mrf.mxu0
  %v473 = vadd.f32 %v369, %v472
  %v474 = vpop.f32.mrf.mxu0
  %475 = vdwg.mxu0
  %476 = vmatprep.subr.mxu0 0.0
  %477 = vmatpush1.msra.mxu0 %v322
  %478 = vmatprep.subr.mxu0 0.0
  %479 = vmatpush1.msra.mxu0 %v321
  %480 = vmatprep.subr.mxu0 0.0
  %481 = vmatpush1.msra.mxu0 %v320
  %482 = vmatprep.subr.mxu0 0.0
  %483 = vmatpush1.msra.mxu0 %v319
  %484 = vmatprep.subr.mxu0 0.0
  %485 = vmatpush1.msra.mxu0 %v318
  %486 = vmatprep.subr.mxu0 0.0
  %487 = vmatpush1.msra.mxu0 %v317
  %488 = vmatprep.subr.mxu0 0.0
  %489 = vmatpush1.msra.mxu0 %v316
  %490 = vmatprep.subr.mxu0 0.0
  %491 = vmatpush1.msra.mxu0 %v315
  %492 = vmatprep.subr.mxu0 0.0
  %493 = vmatpush1.msra.mxu0 %v314
  %494 = vmatprep.subr.mxu0 0.0
  %495 = vmatpush1.msra.mxu0 %v313
  %496 = vmatprep.subr.mxu0 0.0
  %497 = vmatpush1.msra.mxu0 %v312
  %498 = vmatprep.subr.mxu0 0.0
  %499 = vmatpush1.msra.mxu0 %v311
  %500 = vmatprep.subr.mxu0 0.0
  %501 = vmatpush1.msra.mxu0 %v310
  %502 = vmatprep.subr.mxu0 0.0
  %503 = vmatpush1.msra.mxu0 %v309
  %504 = vmatprep.subr.mxu0 0.0
  %505 = vmatpush1.msra.mxu0 %v308
  %506 = vmatprep.subr.mxu0 0.0
  %507 = vmatpush1.msra.mxu0 %v307
  %508 = vmatprep.subr.mxu0 0.0
  %509 = vmatpush2.msra.mxu0 0.0
  %510 = vmatprep.subr.mxu0 0.0
  %511 = vmatpush2.msra.mxu0 0.0
  %512 = vmatprep.subr.mxu0 0.0
  %513 = vmatpush2.msra.mxu0 0.0
  %514 = vmatprep.subr.mxu0 0.0
  %515 = vmatpush2.msra.mxu0 0.0
  %516 = vmatprep.subr.mxu0 0.0
  %517 = vmatpush2.msra.mxu0 0.0
  %518 = vmatprep.subr.mxu0 0.0
  %519 = vmatpush2.msra.mxu0 0.0
  %520 = vmatprep.subr.mxu0 0.0
  %521 = vmatpush2.msra.mxu0 0.0
  %522 = vmatprep.subr.mxu0 0.0
  %523 = vmatpush2.msra.mxu0 0.0
  %524 = vmatprep.subr.mxu0 0.0
  %525 = vmatpush2.msra.mxu0 0.0
  %526 = vmatprep.subr.mxu0 0.0
  %527 = vmatpush2.msra.mxu0 0.0
  %528 = vmatprep.subr.mxu0 0.0
  %529 = vmatpush2.msra.mxu0 0.0
  %530 = vmatprep.subr.mxu0 0.0
  %531 = vmatpush2.msra.mxu0 0.0
  %532 = vmatprep.subr.mxu0 0.0
  %533 = vmatpush2.msra.mxu0 0.0
  %534 = vmatprep.subr.mxu0 0.0
  %535 = vmatpush2.msra.mxu0 0.0
  %536 = vmatprep.subr.mxu0 0.0
  %537 = vmatpush2.msra.mxu0 0.0
  %538 = vmatprep.subr.mxu0 0.0
  %539 = vmatpush2.msra.mxu0 0.0
  %540 = vmatprep.mubr.f32.mxu0 0.0
  %541 = vmatmul.mubr.f32.gmra.mxu0 %v41
  %v542 = vpop.f32.mrf.mxu0
  %v543 = vadd.f32 %v438, %v542
  %v544 = vpop.f32.mrf.mxu0
  %545 = vmatprep.mubr.f32.mxu0 0.0
  %546 = vmatmul.mubr.f32.gmra.mxu0 %v44
  %v547 = vpop.f32.mrf.mxu0
  %v548 = vadd.f32 %v443, %v547
  %v549 = vpop.f32.mrf.mxu0
  %550 = vmatprep.mubr.f32.mxu0 0.0
  %551 = vmatmul.mubr.f32.gmra.mxu0 %v47
  %v552 = vpop.f32.mrf.mxu0
  %v553 = vadd.f32 %v448, %v552
  %v554 = vpop.f32.mrf.mxu0
  %555 = vmatprep.mubr.f32.mxu0 0.0
  %556 = vmatmul.mubr.f32.gmra.mxu0 %v50
  %v557 = vpop.f32.mrf.mxu0
  %v558 = vadd.f32 %v453, %v557
  %v559 = vpop.f32.mrf.mxu0
  %560 = vmatprep.mubr.f32.mxu0 0.0
  %561 = vmatmul.mubr.f32.gmra.mxu0 %v53
  %v562 = vpop.f32.mrf.mxu0
  %v563 = vadd.f32 %v458, %v562
  %v564 = vpop.f32.mrf.mxu0
  %565 = vmatprep.mubr.f32.mxu0 0.0
  %566 = vmatmul.mubr.f32.gmra.mxu0 %v56
  %v567 = vpop.f32.mrf.mxu0
  %v568 = vadd.f32 %v463, %v567
  %v569 = vpop.f32.mrf.mxu0
  %570 = vmatprep.mubr.f32.mxu0 0.0
  %571 = vmatmul.mubr.f32.gmra.mxu0 %v59
  %v572 = vpop.f32.mrf.mxu0
  %v573 = vadd.f32 %v468, %v572
  %v574 = vpop.f32.mrf.mxu0
  %575 = vmatprep.mubr.f32.mxu0 0.0
  %576 = vmatmul.mubr.f32.gmra.mxu0 %v62
  %v577 = vpop.f32.mrf.mxu0
  %v578 = vadd.f32 %v473, %v577
  %v579 = vpop.f32.mrf.mxu0
  %580 = vdwg.mxu0
  %v582 = vlaneseq
  %v583 = vshrl.u32 %v582, 7
  %v584 = vsub.s32 0, %v583
  %v585 = vrot.slane %v38, %v584
  %v587 = vmul.f32 %v543, %v585
  %v588 = vmul.f32 %v548, %v585
  %v589 = vmul.f32 %v553, %v585
  %v590 = vmul.f32 %v558, %v585
  %v591 = vmul.f32 %v563, %v585
  %v592 = vmul.f32 %v568, %v585
  %v593 = vmul.f32 %v573, %v585
  %v594 = vmul.f32 %v578, %v585
  %v595 = vld [vmem:[%s5] sm:$0xff]
  %v596 = vld [vmem:[%s5 + $0x8] sm:$0xff]
  %v597 = vld [vmem:[%s5 + $0x10] sm:$0xff]
  %v598 = vld [vmem:[%s5 + $0x18] sm:$0xff]
  %v599 = vld [vmem:[%s5 + $0x20] sm:$0xff]
  %v600 = vld [vmem:[%s5 + $0x28] sm:$0xff]
  %v601 = vld [vmem:[%s5 + $0x30] sm:$0xff]
  %v602 = vld [vmem:[%s5 + $0x38] sm:$0xff]
  %v603 = vld [vmem:[%s5 + $0x40] sm:$0xff]
  %v604 = vld [vmem:[%s5 + $0x48] sm:$0xff]
  %v605 = vld [vmem:[%s5 + $0x50] sm:$0xff]
  %v606 = vld [vmem:[%s5 + $0x58] sm:$0xff]
  %v607 = vld [vmem:[%s5 + $0x60] sm:$0xff]
  %v608 = vld [vmem:[%s5 + $0x68] sm:$0xff]
  %v609 = vld [vmem:[%s5 + $0x70] sm:$0xff]
  %v610 = vld [vmem:[%s5 + $0x78] sm:$0xff]
  %v611 = vld [vmem:[%s5 + $0x80] sm:$0xff]
  %v612 = vld [vmem:[%s5 + $0x88] sm:$0xff]
  %v613 = vld [vmem:[%s5 + $0x90] sm:$0xff]
  %v614 = vld [vmem:[%s5 + $0x98] sm:$0xff]
  %v615 = vld [vmem:[%s5 + $0xa0] sm:$0xff]
  %v616 = vld [vmem:[%s5 + $0xa8] sm:$0xff]
  %v617 = vld [vmem:[%s5 + $0xb0] sm:$0xff]
  %v618 = vld [vmem:[%s5 + $0xb8] sm:$0xff]
  %v619 = vld [vmem:[%s1] sm:$0xff]
  %v620 = vld [vmem:[%s1 + $0x8] sm:$0xff]
  %v621 = vld [vmem:[%s1 + $0x10] sm:$0xff]
  %v622 = vld [vmem:[%s1 + $0x18] sm:$0xff]
  %v623 = vld [vmem:[%s1 + $0x20] sm:$0xff]
  %v624 = vld [vmem:[%s1 + $0x28] sm:$0xff]
  %v625 = vld [vmem:[%s1 + $0x30] sm:$0xff]
  %v626 = vld [vmem:[%s1 + $0x38] sm:$0xff]
  %635 = vrot.lane.b32.xlu0 %v587, 1
  %v636 = vpop.permute.xlu0 %635
  %637 = vrot.lane.b32.xlu0 %v588, 1
  %v638 = vpop.permute.xlu0 %637
  %639 = vrot.lane.b32.xlu0 %v589, 1
  %v640 = vpop.permute.xlu0 %639
  %641 = vrot.lane.b32.xlu0 %v590, 1
  %v642 = vpop.permute.xlu0 %641
  %643 = vrot.lane.b32.xlu0 %v591, 1
  %v644 = vpop.permute.xlu0 %643
  %645 = vrot.lane.b32.xlu0 %v592, 1
  %v646 = vpop.permute.xlu0 %645
  %647 = vrot.lane.b32.xlu0 %v593, 1
  %v648 = vpop.permute.xlu0 %647
  %649 = vrot.lane.b32.xlu0 %v594, 1
  %v650 = vpop.permute.xlu0 %649
  %659 = vst.msk [vmem:[#allocation2] sm:$0xff] %vm143, %v636
  %660 = vst.msk [vmem:[#allocation2 + $0x8] sm:$0xff] %vm143, %v638
  %661 = vst.msk [vmem:[#allocation2 + $0x10] sm:$0xff] %vm143, %v640
  %662 = vst.msk [vmem:[#allocation2 + $0x18] sm:$0xff] %vm143, %v642
  %663 = vst.msk [vmem:[#allocation2 + $0x20] sm:$0xff] %vm143, %v644
  %664 = vst.msk [vmem:[#allocation2 + $0x28] sm:$0xff] %vm143, %v646
  %665 = vst.msk [vmem:[#allocation2 + $0x30] sm:$0xff] %vm143, %v648
  %666 = vst.msk [vmem:[#allocation2 + $0x38] sm:$0xff] %vm143, %v650
  %667 = vst.msk [vmem:[#allocation2] sm:$0xff] %vm160, 0.0
  %668 = vst.msk [vmem:[#allocation2 + $0x8] sm:$0xff] %vm160, 0.0
  %669 = vst.msk [vmem:[#allocation2 + $0x10] sm:$0xff] %vm160, 0.0
  %670 = vst.msk [vmem:[#allocation2 + $0x18] sm:$0xff] %vm160, 0.0
  %671 = vst.msk [vmem:[#allocation2 + $0x20] sm:$0xff] %vm160, 0.0
  %672 = vst.msk [vmem:[#allocation2 + $0x28] sm:$0xff] %vm160, 0.0
  %673 = vst.msk [vmem:[#allocation2 + $0x30] sm:$0xff] %vm160, 0.0
  %674 = vst.msk [vmem:[#allocation2 + $0x38] sm:$0xff] %vm160, 0.0
  %683 = vrot.lane.b32.xlu0 %v619, 1
  %v684 = vpop.permute.xlu0 %683
  %685 = vrot.lane.b32.xlu0 %v620, 1
  %v686 = vpop.permute.xlu0 %685
  %687 = vrot.lane.b32.xlu0 %v621, 1
  %v688 = vpop.permute.xlu0 %687
  %689 = vrot.lane.b32.xlu0 %v622, 1
  %v690 = vpop.permute.xlu0 %689
  %691 = vrot.lane.b32.xlu0 %v623, 1
  %v692 = vpop.permute.xlu0 %691
  %693 = vrot.lane.b32.xlu0 %v624, 1
  %v694 = vpop.permute.xlu0 %693
  %695 = vrot.lane.b32.xlu0 %v625, 1
  %v696 = vpop.permute.xlu0 %695
  %697 = vrot.lane.b32.xlu0 %v626, 1
  %v698 = vpop.permute.xlu0 %697
  %707 = vst.msk [vmem:[#allocation2 + $0x40] sm:$0xff] %vm143, %v684
  %708 = vst.msk [vmem:[#allocation2 + $0x48] sm:$0xff] %vm143, %v686
  %709 = vst.msk [vmem:[#allocation2 + $0x50] sm:$0xff] %vm143, %v688
  %710 = vst.msk [vmem:[#allocation2 + $0x58] sm:$0xff] %vm143, %v690
  %711 = vst.msk [vmem:[#allocation2 + $0x60] sm:$0xff] %vm143, %v692
  %712 = vst.msk [vmem:[#allocation2 + $0x68] sm:$0xff] %vm143, %v694
  %713 = vst.msk [vmem:[#allocation2 + $0x70] sm:$0xff] %vm143, %v696
  %714 = vst.msk [vmem:[#allocation2 + $0x78] sm:$0xff] %vm143, %v698
  %715 = vst.msk [vmem:[#allocation2 + $0x40] sm:$0xff] %vm160, 0.0
  %716 = vst.msk [vmem:[#allocation2 + $0x48] sm:$0xff] %vm160, 0.0
  %717 = vst.msk [vmem:[#allocation2 + $0x50] sm:$0xff] %vm160, 0.0
  %718 = vst.msk [vmem:[#allocation2 + $0x58] sm:$0xff] %vm160, 0.0
  %719 = vst.msk [vmem:[#allocation2 + $0x60] sm:$0xff] %vm160, 0.0
  %720 = vst.msk [vmem:[#allocation2 + $0x68] sm:$0xff] %vm160, 0.0
  %721 = vst.msk [vmem:[#allocation2 + $0x70] sm:$0xff] %vm160, 0.0
  %722 = vst.msk [vmem:[#allocation2 + $0x78] sm:$0xff] %vm160, 0.0
  %723 = vst [vmem:[#allocation2 + $0x80] sm:$0xff] %v587
  %724 = vst [vmem:[#allocation2 + $0x88] sm:$0xff] %v588
  %725 = vst [vmem:[#allocation2 + $0x90] sm:$0xff] %v589
  %726 = vst [vmem:[#allocation2 + $0x98] sm:$0xff] %v590
  %727 = vst [vmem:[#allocation2 + $0xa0] sm:$0xff] %v591
  %728 = vst [vmem:[#allocation2 + $0xa8] sm:$0xff] %v592
  %729 = vst [vmem:[#allocation2 + $0xb0] sm:$0xff] %v593
  %730 = vst [vmem:[#allocation2 + $0xb8] sm:$0xff] %v594
  %731 = vst [vmem:[#allocation2 + $0xc0] sm:$0xff] %v619
  %732 = vst [vmem:[#allocation2 + $0xc8] sm:$0xff] %v620
  %733 = vst [vmem:[#allocation2 + $0xd0] sm:$0xff] %v621
  %734 = vst [vmem:[#allocation2 + $0xd8] sm:$0xff] %v622
  %735 = vst [vmem:[#allocation2 + $0xe0] sm:$0xff] %v623
  %736 = vst [vmem:[#allocation2 + $0xe8] sm:$0xff] %v624
  %737 = vst [vmem:[#allocation2 + $0xf0] sm:$0xff] %v625
  %738 = vst [vmem:[#allocation2 + $0xf8] sm:$0xff] %v626
  %739 = vrot.lane.b32.xlu0 %v587, 127
  %v740 = vpop.permute.xlu0 %739
  %741 = vrot.lane.b32.xlu0 %v588, 127
  %v742 = vpop.permute.xlu0 %741
  %743 = vrot.lane.b32.xlu0 %v589, 127
  %v744 = vpop.permute.xlu0 %743
  %745 = vrot.lane.b32.xlu0 %v590, 127
  %v746 = vpop.permute.xlu0 %745
  %747 = vrot.lane.b32.xlu0 %v591, 127
  %v748 = vpop.permute.xlu0 %747
  %749 = vrot.lane.b32.xlu0 %v592, 127
  %v750 = vpop.permute.xlu0 %749
  %751 = vrot.lane.b32.xlu0 %v593, 127
  %v752 = vpop.permute.xlu0 %751
  %753 = vrot.lane.b32.xlu0 %v594, 127
  %v754 = vpop.permute.xlu0 %753
  %763 = vst.msk [vmem:[#allocation2 + $0x100] sm:$0xff] %vm241, %v740
  %764 = vst.msk [vmem:[#allocation2 + $0x108] sm:$0xff] %vm241, %v742
  %765 = vst.msk [vmem:[#allocation2 + $0x110] sm:$0xff] %vm241, %v744
  %766 = vst.msk [vmem:[#allocation2 + $0x118] sm:$0xff] %vm241, %v746
  %767 = vst.msk [vmem:[#allocation2 + $0x120] sm:$0xff] %vm241, %v748
  %768 = vst.msk [vmem:[#allocation2 + $0x128] sm:$0xff] %vm241, %v750
  %769 = vst.msk [vmem:[#allocation2 + $0x130] sm:$0xff] %vm241, %v752
  %770 = vst.msk [vmem:[#allocation2 + $0x138] sm:$0xff] %vm241, %v754
  %771 = vst.msk [vmem:[#allocation2 + $0x100] sm:$0xff] %vm258, 0.0
  %772 = vst.msk [vmem:[#allocation2 + $0x108] sm:$0xff] %vm258, 0.0
  %773 = vst.msk [vmem:[#allocation2 + $0x110] sm:$0xff] %vm258, 0.0
  %774 = vst.msk [vmem:[#allocation2 + $0x118] sm:$0xff] %vm258, 0.0
  %775 = vst.msk [vmem:[#allocation2 + $0x120] sm:$0xff] %vm258, 0.0
  %776 = vst.msk [vmem:[#allocation2 + $0x128] sm:$0xff] %vm258, 0.0
  %777 = vst.msk [vmem:[#allocation2 + $0x130] sm:$0xff] %vm258, 0.0
  %778 = vst.msk [vmem:[#allocation2 + $0x138] sm:$0xff] %vm258, 0.0
  %779 = vrot.lane.b32.xlu0 %v619, 127
  %v780 = vpop.permute.xlu0 %779
  %781 = vrot.lane.b32.xlu0 %v620, 127
  %v782 = vpop.permute.xlu0 %781
  %783 = vrot.lane.b32.xlu0 %v621, 127
  %v784 = vpop.permute.xlu0 %783
  %785 = vrot.lane.b32.xlu0 %v622, 127
  %v786 = vpop.permute.xlu0 %785
  %787 = vrot.lane.b32.xlu0 %v623, 127
  %v788 = vpop.permute.xlu0 %787
  %789 = vrot.lane.b32.xlu0 %v624, 127
  %v790 = vpop.permute.xlu0 %789
  %791 = vrot.lane.b32.xlu0 %v625, 127
  %v792 = vpop.permute.xlu0 %791
  %793 = vrot.lane.b32.xlu0 %v626, 127
  %v794 = vpop.permute.xlu0 %793
  %803 = vst.msk [vmem:[#allocation2 + $0x140] sm:$0xff] %vm241, %v780
  %804 = vst.msk [vmem:[#allocation2 + $0x148] sm:$0xff] %vm241, %v782
  %805 = vst.msk [vmem:[#allocation2 + $0x150] sm:$0xff] %vm241, %v784
  %806 = vst.msk [vmem:[#allocation2 + $0x158] sm:$0xff] %vm241, %v786
  %807 = vst.msk [vmem:[#allocation2 + $0x160] sm:$0xff] %vm241, %v788
  %808 = vst.msk [vmem:[#allocation2 + $0x168] sm:$0xff] %vm241, %v790
  %809 = vst.msk [vmem:[#allocation2 + $0x170] sm:$0xff] %vm241, %v792
  %810 = vst.msk [vmem:[#allocation2 + $0x178] sm:$0xff] %vm241, %v794
  %811 = vst.msk [vmem:[#allocation2 + $0x140] sm:$0xff] %vm258, 0.0
  %812 = vst.msk [vmem:[#allocation2 + $0x148] sm:$0xff] %vm258, 0.0
  %813 = vst.msk [vmem:[#allocation2 + $0x150] sm:$0xff] %vm258, 0.0
  %814 = vst.msk [vmem:[#allocation2 + $0x158] sm:$0xff] %vm258, 0.0
  %815 = vst.msk [vmem:[#allocation2 + $0x160] sm:$0xff] %vm258, 0.0
  %816 = vst.msk [vmem:[#allocation2 + $0x168] sm:$0xff] %vm258, 0.0
  %817 = vst.msk [vmem:[#allocation2 + $0x170] sm:$0xff] %vm258, 0.0
  %818 = vst.msk [vmem:[#allocation2 + $0x178] sm:$0xff] %vm258, 0.0
  %v819 = vld [vmem:[#allocation2] sm:$0xff]
  %v820 = vld [vmem:[#allocation2 + $0x8] sm:$0xff]
  %v821 = vld [vmem:[#allocation2 + $0x10] sm:$0xff]
  %v822 = vld [vmem:[#allocation2 + $0x18] sm:$0xff]
  %v823 = vld [vmem:[#allocation2 + $0x20] sm:$0xff]
  %v824 = vld [vmem:[#allocation2 + $0x28] sm:$0xff]
  %v825 = vld [vmem:[#allocation2 + $0x30] sm:$0xff]
  %v826 = vld [vmem:[#allocation2 + $0x38] sm:$0xff]
  %v827 = vld [vmem:[#allocation2 + $0x40] sm:$0xff]
  %v828 = vld [vmem:[#allocation2 + $0x48] sm:$0xff]
  %v829 = vld [vmem:[#allocation2 + $0x50] sm:$0xff]
  %v830 = vld [vmem:[#allocation2 + $0x58] sm:$0xff]
  %v831 = vld [vmem:[#allocation2 + $0x60] sm:$0xff]
  %v832 = vld [vmem:[#allocation2 + $0x68] sm:$0xff]
  %v833 = vld [vmem:[#allocation2 + $0x70] sm:$0xff]
  %v834 = vld [vmem:[#allocation2 + $0x78] sm:$0xff]
  %v835 = vld [vmem:[#allocation2 + $0x80] sm:$0xff]
  %v836 = vld [vmem:[#allocation2 + $0x88] sm:$0xff]
  %v837 = vld [vmem:[#allocation2 + $0x90] sm:$0xff]
  %v838 = vld [vmem:[#allocation2 + $0x98] sm:$0xff]
  %v839 = vld [vmem:[#allocation2 + $0xa0] sm:$0xff]
  %v840 = vld [vmem:[#allocation2 + $0xa8] sm:$0xff]
  %v841 = vld [vmem:[#allocation2 + $0xb0] sm:$0xff]
  %v842 = vld [vmem:[#allocation2 + $0xb8] sm:$0xff]
  %v843 = vld [vmem:[#allocation2 + $0xc0] sm:$0xff]
  %v844 = vld [vmem:[#allocation2 + $0xc8] sm:$0xff]
  %v845 = vld [vmem:[#allocation2 + $0xd0] sm:$0xff]
  %v846 = vld [vmem:[#allocation2 + $0xd8] sm:$0xff]
  %v847 = vld [vmem:[#allocation2 + $0xe0] sm:$0xff]
  %v848 = vld [vmem:[#allocation2 + $0xe8] sm:$0xff]
  %v849 = vld [vmem:[#allocation2 + $0xf0] sm:$0xff]
  %v850 = vld [vmem:[#allocation2 + $0xf8] sm:$0xff]
  %v851 = vld [vmem:[#allocation2 + $0x100] sm:$0xff]
  %v852 = vld [vmem:[#allocation2 + $0x108] sm:$0xff]
  %v853 = vld [vmem:[#allocation2 + $0x110] sm:$0xff]
  %v854 = vld [vmem:[#allocation2 + $0x118] sm:$0xff]
  %v855 = vld [vmem:[#allocation2 + $0x120] sm:$0xff]
  %v856 = vld [vmem:[#allocation2 + $0x128] sm:$0xff]
  %v857 = vld [vmem:[#allocation2 + $0x130] sm:$0xff]
  %v858 = vld [vmem:[#allocation2 + $0x138] sm:$0xff]
  %v859 = vld [vmem:[#allocation2 + $0x140] sm:$0xff]
  %v860 = vld [vmem:[#allocation2 + $0x148] sm:$0xff]
  %v861 = vld [vmem:[#allocation2 + $0x150] sm:$0xff]
  %v862 = vld [vmem:[#allocation2 + $0x158] sm:$0xff]
  %v863 = vld [vmem:[#allocation2 + $0x160] sm:$0xff]
  %v864 = vld [vmem:[#allocation2 + $0x168] sm:$0xff]
  %v865 = vld [vmem:[#allocation2 + $0x170] sm:$0xff]
  %v866 = vld [vmem:[#allocation2 + $0x178] sm:$0xff]
  %867 = vmatprep.subr.mxu0 0.0
  %868 = vmatpush1.msra.mxu0 %v834
  %869 = vmatprep.subr.mxu0 0.0
  %870 = vmatpush1.msra.mxu0 %v833
  %871 = vmatprep.subr.mxu0 0.0
  %872 = vmatpush1.msra.mxu0 %v832
  %873 = vmatprep.subr.mxu0 0.0
  %874 = vmatpush1.msra.mxu0 %v831
  %875 = vmatprep.subr.mxu0 0.0
  %876 = vmatpush1.msra.mxu0 %v830
  %877 = vmatprep.subr.mxu0 0.0
  %878 = vmatpush1.msra.mxu0 %v829
  %879 = vmatprep.subr.mxu0 0.0
  %880 = vmatpush1.msra.mxu0 %v828
  %881 = vmatprep.subr.mxu0 0.0
  %882 = vmatpush1.msra.mxu0 %v827
  %883 = vmatprep.subr.mxu0 0.0
  %884 = vmatpush1.msra.mxu0 %v826
  %885 = vmatprep.subr.mxu0 0.0
  %886 = vmatpush1.msra.mxu0 %v825
  %887 = vmatprep.subr.mxu0 0.0
  %888 = vmatpush1.msra.mxu0 %v824
  %889 = vmatprep.subr.mxu0 0.0
  %890 = vmatpush1.msra.mxu0 %v823
  %891 = vmatprep.subr.mxu0 0.0
  %892 = vmatpush1.msra.mxu0 %v822
  %893 = vmatprep.subr.mxu0 0.0
  %894 = vmatpush1.msra.mxu0 %v821
  %895 = vmatprep.subr.mxu0 0.0
  %896 = vmatpush1.msra.mxu0 %v820
  %897 = vmatprep.subr.mxu0 0.0
  %898 = vmatpush1.msra.mxu0 %v819
  %899 = vmatprep.subr.mxu0 0.0
  %900 = vmatpush2.msra.mxu0 %v850
  %901 = vmatprep.subr.mxu0 0.0
  %902 = vmatpush2.msra.mxu0 %v849
  %903 = vmatprep.subr.mxu0 0.0
  %904 = vmatpush2.msra.mxu0 %v848
  %905 = vmatprep.subr.mxu0 0.0
  %906 = vmatpush2.msra.mxu0 %v847
  %907 = vmatprep.subr.mxu0 0.0
  %908 = vmatpush2.msra.mxu0 %v846
  %909 = vmatprep.subr.mxu0 0.0
  %910 = vmatpush2.msra.mxu0 %v845
  %911 = vmatprep.subr.mxu0 0.0
  %912 = vmatpush2.msra.mxu0 %v844
  %913 = vmatprep.subr.mxu0 0.0
  %914 = vmatpush2.msra.mxu0 %v843
  %915 = vmatprep.subr.mxu0 0.0
  %916 = vmatpush2.msra.mxu0 %v842
  %917 = vmatprep.subr.mxu0 0.0
  %918 = vmatpush2.msra.mxu0 %v841
  %919 = vmatprep.subr.mxu0 0.0
  %920 = vmatpush2.msra.mxu0 %v840
  %921 = vmatprep.subr.mxu0 0.0
  %922 = vmatpush2.msra.mxu0 %v839
  %923 = vmatprep.subr.mxu0 0.0
  %924 = vmatpush2.msra.mxu0 %v838
  %925 = vmatprep.subr.mxu0 0.0
  %926 = vmatpush2.msra.mxu0 %v837
  %927 = vmatprep.subr.mxu0 0.0
  %928 = vmatpush2.msra.mxu0 %v836
  %929 = vmatprep.subr.mxu0 0.0
  %930 = vmatpush2.msra.mxu0 %v835
  %931 = vmatprep.mubr.f32.mxu0 %v596
  %932 = vmatmul.mubr.f32.gmra.mxu0 %v595
  %v933 = vpop.f32.mrf.mxu0
  %v934 = vadd.f32 0.0, %v933
  %v935 = vpop.f32.mrf.mxu0
  %936 = vmatprep.mubr.f32.mxu0 %v599
  %937 = vmatmul.mubr.f32.gmra.mxu0 %v598
  %v938 = vpop.f32.mrf.mxu0
  %v939 = vadd.f32 0.0, %v938
  %v940 = vpop.f32.mrf.mxu0
  %941 = vmatprep.mubr.f32.mxu0 %v602
  %942 = vmatmul.mubr.f32.gmra.mxu0 %v601
  %v943 = vpop.f32.mrf.mxu0
  %v944 = vadd.f32 0.0, %v943
  %v945 = vpop.f32.mrf.mxu0
  %946 = vmatprep.mubr.f32.mxu0 %v605
  %947 = vmatmul.mubr.f32.gmra.mxu0 %v604
  %v948 = vpop.f32.mrf.mxu0
  %v949 = vadd.f32 0.0, %v948
  %v950 = vpop.f32.mrf.mxu0
  %951 = vmatprep.mubr.f32.mxu0 %v608
  %952 = vmatmul.mubr.f32.gmra.mxu0 %v607
  %v953 = vpop.f32.mrf.mxu0
  %v954 = vadd.f32 0.0, %v953
  %v955 = vpop.f32.mrf.mxu0
  %956 = vmatprep.mubr.f32.mxu0 %v611
  %957 = vmatmul.mubr.f32.gmra.mxu0 %v610
  %v958 = vpop.f32.mrf.mxu0
  %v959 = vadd.f32 0.0, %v958
  %v960 = vpop.f32.mrf.mxu0
  %961 = vmatprep.mubr.f32.mxu0 %v614
  %962 = vmatmul.mubr.f32.gmra.mxu0 %v613
  %v963 = vpop.f32.mrf.mxu0
  %v964 = vadd.f32 0.0, %v963
  %v965 = vpop.f32.mrf.mxu0
  %966 = vmatprep.mubr.f32.mxu0 %v617
  %967 = vmatmul.mubr.f32.gmra.mxu0 %v616
  %v968 = vpop.f32.mrf.mxu0
  %v969 = vadd.f32 0.0, %v968
  %v970 = vpop.f32.mrf.mxu0
  %971 = vdwg.mxu0
  %972 = vmatprep.subr.mxu0 0.0
  %973 = vmatpush1.msra.mxu0 %v866
  %974 = vmatprep.subr.mxu0 0.0
  %975 = vmatpush1.msra.mxu0 %v865
  %976 = vmatprep.subr.mxu0 0.0
  %977 = vmatpush1.msra.mxu0 %v864
  %978 = vmatprep.subr.mxu0 0.0
  %979 = vmatpush1.msra.mxu0 %v863
  %980 = vmatprep.subr.mxu0 0.0
  %981 = vmatpush1.msra.mxu0 %v862
  %982 = vmatprep.subr.mxu0 0.0
  %983 = vmatpush1.msra.mxu0 %v861
  %984 = vmatprep.subr.mxu0 0.0
  %985 = vmatpush1.msra.mxu0 %v860
  %986 = vmatprep.subr.mxu0 0.0
  %987 = vmatpush1.msra.mxu0 %v859
  %988 = vmatprep.subr.mxu0 0.0
  %989 = vmatpush1.msra.mxu0 %v858
  %990 = vmatprep.subr.mxu0 0.0
  %991 = vmatpush1.msra.mxu0 %v857
  %992 = vmatprep.subr.mxu0 0.0
  %993 = vmatpush1.msra.mxu0 %v856
  %994 = vmatprep.subr.mxu0 0.0
  %995 = vmatpush1.msra.mxu0 %v855
  %996 = vmatprep.subr.mxu0 0.0
  %997 = vmatpush1.msra.mxu0 %v854
  %998 = vmatprep.subr.mxu0 0.0
  %999 = vmatpush1.msra.mxu0 %v853
  %1000 = vmatprep.subr.mxu0 0.0
  %1001 = vmatpush1.msra.mxu0 %v852
  %1002 = vmatprep.subr.mxu0 0.0
  %1003 = vmatpush1.msra.mxu0 %v851
  %1004 = vmatprep.subr.mxu0 0.0
  %1005 = vmatpush2.msra.mxu0 0.0
  %1006 = vmatprep.subr.mxu0 0.0
  %1007 = vmatpush2.msra.mxu0 0.0
  %1008 = vmatprep.subr.mxu0 0.0
  %1009 = vmatpush2.msra.mxu0 0.0
  %1010 = vmatprep.subr.mxu0 0.0
  %1011 = vmatpush2.msra.mxu0 0.0
  %1012 = vmatprep.subr.mxu0 0.0
  %1013 = vmatpush2.msra.mxu0 0.0
  %1014 = vmatprep.subr.mxu0 0.0
  %1015 = vmatpush2.msra.mxu0 0.0
  %1016 = vmatprep.subr.mxu0 0.0
  %1017 = vmatpush2.msra.mxu0 0.0
  %1018 = vmatprep.subr.mxu0 0.0
  %1019 = vmatpush2.msra.mxu0 0.0
  %1020 = vmatprep.subr.mxu0 0.0
  %1021 = vmatpush2.msra.mxu0 0.0
  %1022 = vmatprep.subr.mxu0 0.0
  %1023 = vmatpush2.msra.mxu0 0.0
  %1024 = vmatprep.subr.mxu0 0.0
  %1025 = vmatpush2.msra.mxu0 0.0
  %1026 = vmatprep.subr.mxu0 0.0
  %1027 = vmatpush2.msra.mxu0 0.0
  %1028 = vmatprep.subr.mxu0 0.0
  %1029 = vmatpush2.msra.mxu0 0.0
  %1030 = vmatprep.subr.mxu0 0.0
  %1031 = vmatpush2.msra.mxu0 0.0
  %1032 = vmatprep.subr.mxu0 0.0
  %1033 = vmatpush2.msra.mxu0 0.0
  %1034 = vmatprep.subr.mxu0 0.0
  %1035 = vmatpush2.msra.mxu0 0.0
  %1036 = vmatprep.mubr.f32.mxu0 0.0
  %1037 = vmatmul.mubr.f32.gmra.mxu0 %v597
  %v1038 = vpop.f32.mrf.mxu0
  %v1039 = vadd.f32 %v934, %v1038
  %v1040 = vpop.f32.mrf.mxu0
  %1041 = vmatprep.mubr.f32.mxu0 0.0
  %1042 = vmatmul.mubr.f32.gmra.mxu0 %v600
  %v1043 = vpop.f32.mrf.mxu0
  %v1044 = vadd.f32 %v939, %v1043
  %v1045 = vpop.f32.mrf.mxu0
  %1046 = vmatprep.mubr.f32.mxu0 0.0
  %1047 = vmatmul.mubr.f32.gmra.mxu0 %v603
  %v1048 = vpop.f32.mrf.mxu0
  %v1049 = vadd.f32 %v944, %v1048
  %v1050 = vpop.f32.mrf.mxu0
  %1051 = vmatprep.mubr.f32.mxu0 0.0
  %1052 = vmatmul.mubr.f32.gmra.mxu0 %v606
  %v1053 = vpop.f32.mrf.mxu0
  %v1054 = vadd.f32 %v949, %v1053
  %v1055 = vpop.f32.mrf.mxu0
  %1056 = vmatprep.mubr.f32.mxu0 0.0
  %1057 = vmatmul.mubr.f32.gmra.mxu0 %v609
  %v1058 = vpop.f32.mrf.mxu0
  %v1059 = vadd.f32 %v954, %v1058
  %v1060 = vpop.f32.mrf.mxu0
  %1061 = vmatprep.mubr.f32.mxu0 0.0
  %1062 = vmatmul.mubr.f32.gmra.mxu0 %v612
  %v1063 = vpop.f32.mrf.mxu0
  %v1064 = vadd.f32 %v959, %v1063
  %v1065 = vpop.f32.mrf.mxu0
  %1066 = vmatprep.mubr.f32.mxu0 0.0
  %1067 = vmatmul.mubr.f32.gmra.mxu0 %v615
  %v1068 = vpop.f32.mrf.mxu0
  %v1069 = vadd.f32 %v964, %v1068
  %v1070 = vpop.f32.mrf.mxu0
  %1071 = vmatprep.mubr.f32.mxu0 0.0
  %1072 = vmatmul.mubr.f32.gmra.mxu0 %v618
  %v1073 = vpop.f32.mrf.mxu0
  %v1074 = vadd.f32 %v969, %v1073
  %v1075 = vpop.f32.mrf.mxu0
  %1076 = vdwg.mxu0
  %v1077 = vld [vmem:[%s6] sm:$0xff]
  %v1078 = vld [vmem:[%s6 + $0x8] sm:$0xff]
  %v1079 = vld [vmem:[%s6 + $0x10] sm:$0xff]
  %v1080 = vld [vmem:[%s6 + $0x18] sm:$0xff]
  %v1081 = vld [vmem:[%s6 + $0x20] sm:$0xff]
  %v1082 = vld [vmem:[%s6 + $0x28] sm:$0xff]
  %v1083 = vld [vmem:[%s6 + $0x30] sm:$0xff]
  %v1084 = vld [vmem:[%s6 + $0x38] sm:$0xff]
  %v1085 = vld [vmem:[%s7] sm:$0xff]
  %v1086 = vld [vmem:[%s7 + $0x8] sm:$0xff]
  %v1087 = vld [vmem:[%s7 + $0x10] sm:$0xff]
  %v1088 = vld [vmem:[%s7 + $0x18] sm:$0xff]
  %v1089 = vld [vmem:[%s7 + $0x20] sm:$0xff]
  %v1090 = vld [vmem:[%s7 + $0x28] sm:$0xff]
  %v1091 = vld [vmem:[%s7 + $0x30] sm:$0xff]
  %v1092 = vld [vmem:[%s7 + $0x38] sm:$0xff]
  %v1093 = vmul.f32 %v1039, %v585
  %v1094 = vmul.f32 %v1044, %v585
  %v1095 = vmul.f32 %v1049, %v585
  %v1096 = vmul.f32 %v1054, %v585
  %v1097 = vmul.f32 %v1059, %v585
  %v1098 = vmul.f32 %v1064, %v585
  %v1099 = vmul.f32 %v1069, %v585
  %v1100 = vmul.f32 %v1074, %v585
  %1101 = vadd.xlane.f32.xlu0 %v1093
  %v1102 = vpop.xlane.xlu0 %1101
  %1103 = vadd.xlane.f32.xlu0 %v1094
  %v1104 = vpop.xlane.xlu0 %1103
  %1105 = vadd.xlane.f32.xlu0 %v1095
  %v1106 = vpop.xlane.xlu0 %1105
  %1107 = vadd.xlane.f32.xlu0 %v1096
  %v1108 = vpop.xlane.xlu0 %1107
  %1109 = vadd.xlane.f32.xlu0 %v1097
  %v1110 = vpop.xlane.xlu0 %1109
  %1111 = vadd.xlane.f32.xlu0 %v1098
  %v1112 = vpop.xlane.xlu0 %1111
  %1113 = vadd.xlane.f32.xlu0 %v1099
  %v1114 = vpop.xlane.xlu0 %1113
  %1115 = vadd.xlane.f32.xlu0 %v1100
  %v1116 = vpop.xlane.xlu0 %1115
  %v1117 = vmul.f32 %v1102, 0.1
  %v1118 = vmul.f32 %v1104, 0.1
  %v1119 = vmul.f32 %v1106, 0.1
  %v1120 = vmul.f32 %v1108, 0.1
  %v1121 = vmul.f32 %v1110, 0.1
  %v1122 = vmul.f32 %v1112, 0.1
  %v1123 = vmul.f32 %v1114, 0.1
  %v1124 = vmul.f32 %v1116, 0.1
  %v1125 = vsub.f32 %v1039, %v1117
  %v1126 = vsub.f32 %v1044, %v1118
  %v1127 = vsub.f32 %v1049, %v1119
  %v1128 = vsub.f32 %v1054, %v1120
  %v1129 = vsub.f32 %v1059, %v1121
  %v1130 = vsub.f32 %v1064, %v1122
  %v1131 = vsub.f32 %v1069, %v1123
  %v1132 = vsub.f32 %v1074, %v1124
  %v1133 = vmul.f32 %v1125, %v585
  %v1134 = vmul.f32 %v1126, %v585
  %v1135 = vmul.f32 %v1127, %v585
  %v1136 = vmul.f32 %v1128, %v585
  %v1137 = vmul.f32 %v1129, %v585
  %v1138 = vmul.f32 %v1130, %v585
  %v1139 = vmul.f32 %v1131, %v585
  %v1140 = vmul.f32 %v1132, %v585
  %v1141 = vmul.f32 %v1133, %v1133
  %v1142 = vmul.f32 %v1134, %v1134
  %v1143 = vmul.f32 %v1135, %v1135
  %v1144 = vmul.f32 %v1136, %v1136
  %v1145 = vmul.f32 %v1137, %v1137
  %v1146 = vmul.f32 %v1138, %v1138
  %v1147 = vmul.f32 %v1139, %v1139
  %v1148 = vmul.f32 %v1140, %v1140
  %1149 = vadd.xlane.f32.xlu0 %v1141
  %v1150 = vpop.xlane.xlu0 %1149
  %1151 = vadd.xlane.f32.xlu0 %v1142
  %v1152 = vpop.xlane.xlu0 %1151
  %1153 = vadd.xlane.f32.xlu0 %v1143
  %v1154 = vpop.xlane.xlu0 %1153
  %1155 = vadd.xlane.f32.xlu0 %v1144
  %v1156 = vpop.xlane.xlu0 %1155
  %1157 = vadd.xlane.f32.xlu0 %v1145
  %v1158 = vpop.xlane.xlu0 %1157
  %1159 = vadd.xlane.f32.xlu0 %v1146
  %v1160 = vpop.xlane.xlu0 %1159
  %1161 = vadd.xlane.f32.xlu0 %v1147
  %v1162 = vpop.xlane.xlu0 %1161
  %1163 = vadd.xlane.f32.xlu0 %v1148
  %v1164 = vpop.xlane.xlu0 %1163
  %v1165 = vmul.f32 %v1150, 0.1
  %v1166 = vmul.f32 %v1152, 0.1
  %v1167 = vmul.f32 %v1154, 0.1
  %v1168 = vmul.f32 %v1156, 0.1
  %v1169 = vmul.f32 %v1158, 0.1
  %v1170 = vmul.f32 %v1160, 0.1
  %v1171 = vmul.f32 %v1162, 0.1
  %v1172 = vmul.f32 %v1164, 0.1
  %v1173 = vadd.f32 %v1165, 1e-05
  %v1174 = vadd.f32 %v1166, 1e-05
  %v1175 = vadd.f32 %v1167, 1e-05
  %v1176 = vadd.f32 %v1168, 1e-05
  %v1177 = vadd.f32 %v1169, 1e-05
  %v1178 = vadd.f32 %v1170, 1e-05
  %v1179 = vadd.f32 %v1171, 1e-05
  %v1180 = vadd.f32 %v1172, 1e-05
  %v1181 = vrsqrt.pop %v1173
  %v1182 = vrsqrt.pop %v1174
  %v1183 = vrsqrt.pop %v1175
  %v1184 = vrsqrt.pop %v1176
  %v1185 = vrsqrt.pop %v1177
  %v1186 = vrsqrt.pop %v1178
  %v1187 = vrsqrt.pop %v1179
  %v1188 = vrsqrt.pop %v1180
  %v1189 = vmul.f32 %v1181, %v1077
  %v1190 = vmul.f32 %v1182, %v1078
  %v1191 = vmul.f32 %v1183, %v1079
  %v1192 = vmul.f32 %v1184, %v1080
  %v1193 = vmul.f32 %v1185, %v1081
  %v1194 = vmul.f32 %v1186, %v1082
  %v1195 = vmul.f32 %v1187, %v1083
  %v1196 = vmul.f32 %v1188, %v1084
  %1198 = vset.pattern.permute.xlu0 0
  %1199 = vperm.xlu0 %1198, %v1189
  %v1200 = vpop.permute.xlu0 %1199
  %1203 = vset.pattern.permute.xlu0 0
  %1204 = vperm.xlu0 %1203, %v1190
  %v1205 = vpop.permute.xlu0 %1204
  %1208 = vset.pattern.permute.xlu0 0
  %1209 = vperm.xlu0 %1208, %v1191
  %v1210 = vpop.permute.xlu0 %1209
  %1213 = vset.pattern.permute.xlu0 0
  %1214 = vperm.xlu0 %1213, %v1192
  %v1215 = vpop.permute.xlu0 %1214
  %1218 = vset.pattern.permute.xlu0 0
  %1219 = vperm.xlu0 %1218, %v1193
  %v1220 = vpop.permute.xlu0 %1219
  %1223 = vset.pattern.permute.xlu0 0
  %1224 = vperm.xlu0 %1223, %v1194
  %v1225 = vpop.permute.xlu0 %1224
  %1228 = vset.pattern.permute.xlu0 0
  %1229 = vperm.xlu0 %1228, %v1195
  %v1230 = vpop.permute.xlu0 %1229
  %1233 = vset.pattern.permute.xlu0 0
  %1234 = vperm.xlu0 %1233, %v1196
  %v1235 = vpop.permute.xlu0 %1234
  %v1237 = vmul.f32 %v1133, %v1200
  %v1238 = vmul.f32 %v1134, %v1205
  %v1239 = vmul.f32 %v1135, %v1210
  %v1240 = vmul.f32 %v1136, %v1215
  %v1241 = vmul.f32 %v1137, %v1220
  %v1242 = vmul.f32 %v1138, %v1225
  %v1243 = vmul.f32 %v1139, %v1230
  %v1244 = vmul.f32 %v1140, %v1235
  %1246 = vset.pattern.permute.xlu0 0
  %1247 = vperm.xlu0 %1246, %v1085
  %v1248 = vpop.permute.xlu0 %1247
  %1251 = vset.pattern.permute.xlu0 0
  %1252 = vperm.xlu0 %1251, %v1086
  %v1253 = vpop.permute.xlu0 %1252
  %1256 = vset.pattern.permute.xlu0 0
  %1257 = vperm.xlu0 %1256, %v1087
  %v1258 = vpop.permute.xlu0 %1257
  %1261 = vset.pattern.permute.xlu0 0
  %1262 = vperm.xlu0 %1261, %v1088
  %v1263 = vpop.permute.xlu0 %1262
  %1266 = vset.pattern.permute.xlu0 0
  %1267 = vperm.xlu0 %1266, %v1089
  %v1268 = vpop.permute.xlu0 %1267
  %1271 = vset.pattern.permute.xlu0 0
  %1272 = vperm.xlu0 %1271, %v1090
  %v1273 = vpop.permute.xlu0 %1272
  %1276 = vset.pattern.permute.xlu0 0
  %1277 = vperm.xlu0 %1276, %v1091
  %v1278 = vpop.permute.xlu0 %1277
  %1281 = vset.pattern.permute.xlu0 0
  %1282 = vperm.xlu0 %1281, %v1092
  %v1283 = vpop.permute.xlu0 %1282
  %v1285 = vadd.f32 %v1237, %v1248
  %v1286 = vadd.f32 %v1238, %v1253
  %v1287 = vadd.f32 %v1239, %v1258
  %v1288 = vadd.f32 %v1240, %v1263
  %v1289 = vadd.f32 %v1241, %v1268
  %v1290 = vadd.f32 %v1242, %v1273
  %v1291 = vadd.f32 %v1243, %v1278
  %v1292 = vadd.f32 %v1244, %v1283
  %v1293 = vtanh.pop %v1285
  %v1294 = vtanh.pop %v1286
  %v1295 = vtanh.pop %v1287
  %v1296 = vtanh.pop %v1288
  %v1297 = vtanh.pop %v1289
  %v1298 = vtanh.pop %v1290
  %v1299 = vtanh.pop %v1291
  %v1300 = vtanh.pop %v1292
  %v1301 = vmul.f32 %v1293, %v585
  %v1302 = vmul.f32 %v1294, %v585
  %v1303 = vmul.f32 %v1295, %v585
  %v1304 = vmul.f32 %v1296, %v585
  %v1305 = vmul.f32 %v1297, %v585
  %v1306 = vmul.f32 %v1298, %v585
  %v1307 = vmul.f32 %v1299, %v585
  %v1308 = vmul.f32 %v1300, %v585
  %v1309 = vld [vmem:[%s8] sm:$0xff]
  %v1310 = vld [vmem:[%s8 + $0x8] sm:$0xff]
  %v1311 = vld [vmem:[%s8 + $0x10] sm:$0xff]
  %v1312 = vld [vmem:[%s8 + $0x18] sm:$0xff]
  %v1313 = vld [vmem:[%s8 + $0x20] sm:$0xff]
  %v1314 = vld [vmem:[%s8 + $0x28] sm:$0xff]
  %v1315 = vld [vmem:[%s8 + $0x30] sm:$0xff]
  %v1316 = vld [vmem:[%s8 + $0x38] sm:$0xff]
  %v1317 = vld [vmem:[%s8 + $0x40] sm:$0xff]
  %v1318 = vld [vmem:[%s8 + $0x48] sm:$0xff]
  %v1319 = vld [vmem:[%s8 + $0x50] sm:$0xff]
  %v1320 = vld [vmem:[%s8 + $0x58] sm:$0xff]
  %v1321 = vld [vmem:[%s8 + $0x60] sm:$0xff]
  %v1322 = vld [vmem:[%s8 + $0x68] sm:$0xff]
  %v1323 = vld [vmem:[%s8 + $0x70] sm:$0xff]
  %v1324 = vld [vmem:[%s8 + $0x78] sm:$0xff]
  %1333 = vrot.lane.b32.xlu0 %v1301, 1
  %v1334 = vpop.permute.xlu0 %1333
  %1335 = vrot.lane.b32.xlu0 %v1302, 1
  %v1336 = vpop.permute.xlu0 %1335
  %1337 = vrot.lane.b32.xlu0 %v1303, 1
  %v1338 = vpop.permute.xlu0 %1337
  %1339 = vrot.lane.b32.xlu0 %v1304, 1
  %v1340 = vpop.permute.xlu0 %1339
  %1341 = vrot.lane.b32.xlu0 %v1305, 1
  %v1342 = vpop.permute.xlu0 %1341
  %1343 = vrot.lane.b32.xlu0 %v1306, 1
  %v1344 = vpop.permute.xlu0 %1343
  %1345 = vrot.lane.b32.xlu0 %v1307, 1
  %v1346 = vpop.permute.xlu0 %1345
  %1347 = vrot.lane.b32.xlu0 %v1308, 1
  %v1348 = vpop.permute.xlu0 %1347
  %1357 = vst.msk [vmem:[#allocation2] sm:$0xff] %vm143, %v1334
  %1358 = vst.msk [vmem:[#allocation2 + $0x8] sm:$0xff] %vm143, %v1336
  %1359 = vst.msk [vmem:[#allocation2 + $0x10] sm:$0xff] %vm143, %v1338
  %1360 = vst.msk [vmem:[#allocation2 + $0x18] sm:$0xff] %vm143, %v1340
  %1361 = vst.msk [vmem:[#allocation2 + $0x20] sm:$0xff] %vm143, %v1342
  %1362 = vst.msk [vmem:[#allocation2 + $0x28] sm:$0xff] %vm143, %v1344
  %1363 = vst.msk [vmem:[#allocation2 + $0x30] sm:$0xff] %vm143, %v1346
  %1364 = vst.msk [vmem:[#allocation2 + $0x38] sm:$0xff] %vm143, %v1348
  %1365 = vst.msk [vmem:[#allocation2] sm:$0xff] %vm160, 0.0
  %1366 = vst.msk [vmem:[#allocation2 + $0x8] sm:$0xff] %vm160, 0.0
  %1367 = vst.msk [vmem:[#allocation2 + $0x10] sm:$0xff] %vm160, 0.0
  %1368 = vst.msk [vmem:[#allocation2 + $0x18] sm:$0xff] %vm160, 0.0
  %1369 = vst.msk [vmem:[#allocation2 + $0x20] sm:$0xff] %vm160, 0.0
  %1370 = vst.msk [vmem:[#allocation2 + $0x28] sm:$0xff] %vm160, 0.0
  %1371 = vst.msk [vmem:[#allocation2 + $0x30] sm:$0xff] %vm160, 0.0
  %1372 = vst.msk [vmem:[#allocation2 + $0x38] sm:$0xff] %vm160, 0.0
  %1373 = vst [vmem:[#allocation2 + $0x40] sm:$0xff] %v1301
  %1374 = vst [vmem:[#allocation2 + $0x48] sm:$0xff] %v1302
  %1375 = vst [vmem:[#allocation2 + $0x50] sm:$0xff] %v1303
  %1376 = vst [vmem:[#allocation2 + $0x58] sm:$0xff] %v1304
  %1377 = vst [vmem:[#allocation2 + $0x60] sm:$0xff] %v1305
  %1378 = vst [vmem:[#allocation2 + $0x68] sm:$0xff] %v1306
  %1379 = vst [vmem:[#allocation2 + $0x70] sm:$0xff] %v1307
  %1380 = vst [vmem:[#allocation2 + $0x78] sm:$0xff] %v1308
  %1381 = vrot.lane.b32.xlu0 %v1301, 127
  %v1382 = vpop.permute.xlu0 %1381
  %1383 = vrot.lane.b32.xlu0 %v1302, 127
  %v1384 = vpop.permute.xlu0 %1383
  %1385 = vrot.lane.b32.xlu0 %v1303, 127
  %v1386 = vpop.permute.xlu0 %1385
  %1387 = vrot.lane.b32.xlu0 %v1304, 127
  %v1388 = vpop.permute.xlu0 %1387
  %1389 = vrot.lane.b32.xlu0 %v1305, 127
  %v1390 = vpop.permute.xlu0 %1389
  %1391 = vrot.lane.b32.xlu0 %v1306, 127
  %v1392 = vpop.permute.xlu0 %1391
  %1393 = vrot.lane.b32.xlu0 %v1307, 127
  %v1394 = vpop.permute.xlu0 %1393
  %1395 = vrot.lane.b32.xlu0 %v1308, 127
  %v1396 = vpop.permute.xlu0 %1395
  %1405 = vst.msk [vmem:[#allocation2 + $0x80] sm:$0xff] %vm241, %v1382
  %1406 = vst.msk [vmem:[#allocation2 + $0x88] sm:$0xff] %vm241, %v1384
  %1407 = vst.msk [vmem:[#allocation2 + $0x90] sm:$0xff] %vm241, %v1386
  %1408 = vst.msk [vmem:[#allocation2 + $0x98] sm:$0xff] %vm241, %v1388
  %1409 = vst.msk [vmem:[#allocation2 + $0xa0] sm:$0xff] %vm241, %v1390
  %1410 = vst.msk [vmem:[#allocation2 + $0xa8] sm:$0xff] %vm241, %v1392
  %1411 = vst.msk [vmem:[#allocation2 + $0xb0] sm:$0xff] %vm241, %v1394
  %1412 = vst.msk [vmem:[#allocation2 + $0xb8] sm:$0xff] %vm241, %v1396
  %1413 = vst.msk [vmem:[#allocation2 + $0x80] sm:$0xff] %vm258, 0.0
  %1414 = vst.msk [vmem:[#allocation2 + $0x88] sm:$0xff] %vm258, 0.0
  %1415 = vst.msk [vmem:[#allocation2 + $0x90] sm:$0xff] %vm258, 0.0
  %1416 = vst.msk [vmem:[#allocation2 + $0x98] sm:$0xff] %vm258, 0.0
  %1417 = vst.msk [vmem:[#allocation2 + $0xa0] sm:$0xff] %vm258, 0.0
  %1418 = vst.msk [vmem:[#allocation2 + $0xa8] sm:$0xff] %vm258, 0.0
  %1419 = vst.msk [vmem:[#allocation2 + $0xb0] sm:$0xff] %vm258, 0.0
  %1420 = vst.msk [vmem:[#allocation2 + $0xb8] sm:$0xff] %vm258, 0.0
  %v1421 = vld [vmem:[#allocation2] sm:$0xff]
  %v1422 = vld [vmem:[#allocation2 + $0x8] sm:$0xff]
  %v1423 = vld [vmem:[#allocation2 + $0x10] sm:$0xff]
  %v1424 = vld [vmem:[#allocation2 + $0x18] sm:$0xff]
  %v1425 = vld [vmem:[#allocation2 + $0x20] sm:$0xff]
  %v1426 = vld [vmem:[#allocation2 + $0x28] sm:$0xff]
  %v1427 = vld [vmem:[#allocation2 + $0x30] sm:$0xff]
  %v1428 = vld [vmem:[#allocation2 + $0x38] sm:$0xff]
  %v1429 = vld [vmem:[#allocation2 + $0x40] sm:$0xff]
  %v1430 = vld [vmem:[#allocation2 + $0x48] sm:$0xff]
  %v1431 = vld [vmem:[#allocation2 + $0x50] sm:$0xff]
  %v1432 = vld [vmem:[#allocation2 + $0x58] sm:$0xff]
  %v1433 = vld [vmem:[#allocation2 + $0x60] sm:$0xff]
  %v1434 = vld [vmem:[#allocation2 + $0x68] sm:$0xff]
  %v1435 = vld [vmem:[#allocation2 + $0x70] sm:$0xff]
  %v1436 = vld [vmem:[#allocation2 + $0x78] sm:$0xff]
  %v1437 = vld [vmem:[#allocation2 + $0x80] sm:$0xff]
  %v1438 = vld [vmem:[#allocation2 + $0x88] sm:$0xff]
  %v1439 = vld [vmem:[#allocation2 + $0x90] sm:$0xff]
  %v1440 = vld [vmem:[#allocation2 + $0x98] sm:$0xff]
  %v1441 = vld [vmem:[#allocation2 + $0xa0] sm:$0xff]
  %v1442 = vld [vmem:[#allocation2 + $0xa8] sm:$0xff]
  %v1443 = vld [vmem:[#allocation2 + $0xb0] sm:$0xff]
  %v1444 = vld [vmem:[#allocation2 + $0xb8] sm:$0xff]
  %vm1445 = vcmask 523264
  %v1447 = vsel %vm1445, %v1310, 0
  %v1450 = vsel %vm1445, %v1312, 0
  %v1453 = vsel %vm1445, %v1314, 0
  %v1456 = vsel %vm1445, %v1316, 0
  %v1459 = vsel %vm1445, %v1318, 0
  %v1462 = vsel %vm1445, %v1320, 0
  %v1465 = vsel %vm1445, %v1322, 0
  %v1468 = vsel %vm1445, %v1324, 0
  %1470 = vmatprep.subr.mxu0 0.0
  %1471 = vmatpush1.msra.mxu0 %v1436
  %1472 = vmatprep.subr.mxu0 0.0
  %1473 = vmatpush1.msra.mxu0 %v1435
  %1474 = vmatprep.subr.mxu0 0.0
  %1475 = vmatpush1.msra.mxu0 %v1434
  %1476 = vmatprep.subr.mxu0 0.0
  %1477 = vmatpush1.msra.mxu0 %v1433
  %1478 = vmatprep.subr.mxu0 0.0
  %1479 = vmatpush1.msra.mxu0 %v1432
  %1480 = vmatprep.subr.mxu0 0.0
  %1481 = vmatpush1.msra.mxu0 %v1431
  %1482 = vmatprep.subr.mxu0 0.0
  %1483 = vmatpush1.msra.mxu0 %v1430
  %1484 = vmatprep.subr.mxu0 0.0
  %1485 = vmatpush1.msra.mxu0 %v1429
  %1486 = vmatprep.subr.mxu0 0.0
  %1487 = vmatpush1.msra.mxu0 %v1428
  %1488 = vmatprep.subr.mxu0 0.0
  %1489 = vmatpush1.msra.mxu0 %v1427
  %1490 = vmatprep.subr.mxu0 0.0
  %1491 = vmatpush1.msra.mxu0 %v1426
  %1492 = vmatprep.subr.mxu0 0.0
  %1493 = vmatpush1.msra.mxu0 %v1425
  %1494 = vmatprep.subr.mxu0 0.0
  %1495 = vmatpush1.msra.mxu0 %v1424
  %1496 = vmatprep.subr.mxu0 0.0
  %1497 = vmatpush1.msra.mxu0 %v1423
  %1498 = vmatprep.subr.mxu0 0.0
  %1499 = vmatpush1.msra.mxu0 %v1422
  %1500 = vmatprep.subr.mxu0 0.0
  %1501 = vmatpush1.msra.mxu0 %v1421
  %1502 = vmatprep.subr.mxu0 0.0
  %1503 = vmatpush2.msra.mxu0 0.0
  %1504 = vmatprep.subr.mxu0 0.0
  %1505 = vmatpush2.msra.mxu0 0.0
  %1506 = vmatprep.subr.mxu0 0.0
  %1507 = vmatpush2.msra.mxu0 0.0
  %1508 = vmatprep.subr.mxu0 0.0
  %1509 = vmatpush2.msra.mxu0 0.0
  %1510 = vmatprep.subr.mxu0 0.0
  %1511 = vmatpush2.msra.mxu0 0.0
  %1512 = vmatprep.subr.mxu0 0.0
  %1513 = vmatpush2.msra.mxu0 0.0
  %1514 = vmatprep.subr.mxu0 0.0
  %1515 = vmatpush2.msra.mxu0 0.0
  %1516 = vmatprep.subr.mxu0 0.0
  %1517 = vmatpush2.msra.mxu0 0.0
  %1518 = vmatprep.subr.mxu0 0.0
  %1519 = vmatpush2.msra.mxu0 %v1444
  %1520 = vmatprep.subr.mxu0 0.0
  %1521 = vmatpush2.msra.mxu0 %v1443
  %1522 = vmatprep.subr.mxu0 0.0
  %1523 = vmatpush2.msra.mxu0 %v1442
  %1524 = vmatprep.subr.mxu0 0.0
  %1525 = vmatpush2.msra.mxu0 %v1441
  %1526 = vmatprep.subr.mxu0 0.0
  %1527 = vmatpush2.msra.mxu0 %v1440
  %1528 = vmatprep.subr.mxu0 0.0
  %1529 = vmatpush2.msra.mxu0 %v1439
  %1530 = vmatprep.subr.mxu0 0.0
  %1531 = vmatpush2.msra.mxu0 %v1438
  %1532 = vmatprep.subr.mxu0 0.0
  %1533 = vmatpush2.msra.mxu0 %v1437
  %1534 = vmatprep.mubr.f32.mxu0 %v1447
  %1535 = vmatmul.mubr.f32.gmra.mxu0 %v1309
  %v1536 = vpop.f32.mrf.mxu0
  %v1537 = vadd.f32 0.0, %v1536
  %v1538 = vpop.f32.mrf.mxu0
  %1539 = vmatprep.mubr.f32.mxu0 %v1450
  %1540 = vmatmul.mubr.f32.gmra.mxu0 %v1311
  %v1541 = vpop.f32.mrf.mxu0
  %v1542 = vadd.f32 0.0, %v1541
  %v1543 = vpop.f32.mrf.mxu0
  %1544 = vmatprep.mubr.f32.mxu0 %v1453
  %1545 = vmatmul.mubr.f32.gmra.mxu0 %v1313
  %v1546 = vpop.f32.mrf.mxu0
  %v1547 = vadd.f32 0.0, %v1546
  %v1548 = vpop.f32.mrf.mxu0
  %1549 = vmatprep.mubr.f32.mxu0 %v1456
  %1550 = vmatmul.mubr.f32.gmra.mxu0 %v1315
  %v1551 = vpop.f32.mrf.mxu0
  %v1552 = vadd.f32 0.0, %v1551
  %v1553 = vpop.f32.mrf.mxu0
  %1554 = vmatprep.mubr.f32.mxu0 %v1459
  %1555 = vmatmul.mubr.f32.gmra.mxu0 %v1317
  %v1556 = vpop.f32.mrf.mxu0
  %v1557 = vadd.f32 0.0, %v1556
  %v1558 = vpop.f32.mrf.mxu0
  %1559 = vmatprep.mubr.f32.mxu0 %v1462
  %1560 = vmatmul.mubr.f32.gmra.mxu0 %v1319
  %v1561 = vpop.f32.mrf.mxu0
  %v1562 = vadd.f32 0.0, %v1561
  %v1563 = vpop.f32.mrf.mxu0
  %1564 = vmatprep.mubr.f32.mxu0 %v1465
  %1565 = vmatmul.mubr.f32.gmra.mxu0 %v1321
  %v1566 = vpop.f32.mrf.mxu0
  %v1567 = vadd.f32 0.0, %v1566
  %v1568 = vpop.f32.mrf.mxu0
  %1569 = vmatprep.mubr.f32.mxu0 %v1468
  %1570 = vmatmul.mubr.f32.gmra.mxu0 %v1323
  %v1571 = vpop.f32.mrf.mxu0
  %v1572 = vadd.f32 0.0, %v1571
  %v1573 = vpop.f32.mrf.mxu0
  %1574 = vdwg.mxu0
  %v1575 = vld [vmem:[%s9] sm:$0xff]
  %v1576 = vld [vmem:[%s9 + $0x8] sm:$0xff]
  %v1577 = vld [vmem:[%s9 + $0x10] sm:$0xff]
  %v1578 = vld [vmem:[%s9 + $0x18] sm:$0xff]
  %v1579 = vld [vmem:[%s9 + $0x20] sm:$0xff]
  %v1580 = vld [vmem:[%s9 + $0x28] sm:$0xff]
  %v1581 = vld [vmem:[%s9 + $0x30] sm:$0xff]
  %v1582 = vld [vmem:[%s9 + $0x38] sm:$0xff]
  %v1583 = vld [vmem:[%s10] sm:$0xff]
  %v1584 = vld [vmem:[%s10 + $0x8] sm:$0xff]
  %v1585 = vld [vmem:[%s10 + $0x10] sm:$0xff]
  %v1586 = vld [vmem:[%s10 + $0x18] sm:$0xff]
  %v1587 = vld [vmem:[%s10 + $0x20] sm:$0xff]
  %v1588 = vld [vmem:[%s10 + $0x28] sm:$0xff]
  %v1589 = vld [vmem:[%s10 + $0x30] sm:$0xff]
  %v1590 = vld [vmem:[%s10 + $0x38] sm:$0xff]
  %v1591 = vmul.f32 %v1537, %v585
  %v1592 = vmul.f32 %v1542, %v585
  %v1593 = vmul.f32 %v1547, %v585
  %v1594 = vmul.f32 %v1552, %v585
  %v1595 = vmul.f32 %v1557, %v585
  %v1596 = vmul.f32 %v1562, %v585
  %v1597 = vmul.f32 %v1567, %v585
  %v1598 = vmul.f32 %v1572, %v585
  %1599 = vadd.xlane.f32.xlu0 %v1591
  %v1600 = vpop.xlane.xlu0 %1599
  %1601 = vadd.xlane.f32.xlu0 %v1592
  %v1602 = vpop.xlane.xlu0 %1601
  %1603 = vadd.xlane.f32.xlu0 %v1593
  %v1604 = vpop.xlane.xlu0 %1603
  %1605 = vadd.xlane.f32.xlu0 %v1594
  %v1606 = vpop.xlane.xlu0 %1605
  %1607 = vadd.xlane.f32.xlu0 %v1595
  %v1608 = vpop.xlane.xlu0 %1607
  %1609 = vadd.xlane.f32.xlu0 %v1596
  %v1610 = vpop.xlane.xlu0 %1609
  %1611 = vadd.xlane.f32.xlu0 %v1597
  %v1612 = vpop.xlane.xlu0 %1611
  %1613 = vadd.xlane.f32.xlu0 %v1598
  %v1614 = vpop.xlane.xlu0 %1613
  %v1615 = vmul.f32 %v1600, 0.1
  %v1616 = vmul.f32 %v1602, 0.1
  %v1617 = vmul.f32 %v1604, 0.1
  %v1618 = vmul.f32 %v1606, 0.1
  %v1619 = vmul.f32 %v1608, 0.1
  %v1620 = vmul.f32 %v1610, 0.1
  %v1621 = vmul.f32 %v1612, 0.1
  %v1622 = vmul.f32 %v1614, 0.1
  %v1623 = vsub.f32 %v1537, %v1615
  %v1624 = vsub.f32 %v1542, %v1616
  %v1625 = vsub.f32 %v1547, %v1617
  %v1626 = vsub.f32 %v1552, %v1618
  %v1627 = vsub.f32 %v1557, %v1619
  %v1628 = vsub.f32 %v1562, %v1620
  %v1629 = vsub.f32 %v1567, %v1621
  %v1630 = vsub.f32 %v1572, %v1622
  %v1631 = vmul.f32 %v1623, %v585
  %v1632 = vmul.f32 %v1624, %v585
  %v1633 = vmul.f32 %v1625, %v585
  %v1634 = vmul.f32 %v1626, %v585
  %v1635 = vmul.f32 %v1627, %v585
  %v1636 = vmul.f32 %v1628, %v585
  %v1637 = vmul.f32 %v1629, %v585
  %v1638 = vmul.f32 %v1630, %v585
  %v1639 = vmul.f32 %v1631, %v1631
  %v1640 = vmul.f32 %v1632, %v1632
  %v1641 = vmul.f32 %v1633, %v1633
  %v1642 = vmul.f32 %v1634, %v1634
  %v1643 = vmul.f32 %v1635, %v1635
  %v1644 = vmul.f32 %v1636, %v1636
  %v1645 = vmul.f32 %v1637, %v1637
  %v1646 = vmul.f32 %v1638, %v1638
  %1647 = vadd.xlane.f32.xlu0 %v1639
  %v1648 = vpop.xlane.xlu0 %1647
  %1649 = vadd.xlane.f32.xlu0 %v1640
  %v1650 = vpop.xlane.xlu0 %1649
  %1651 = vadd.xlane.f32.xlu0 %v1641
  %v1652 = vpop.xlane.xlu0 %1651
  %1653 = vadd.xlane.f32.xlu0 %v1642
  %v1654 = vpop.xlane.xlu0 %1653
  %1655 = vadd.xlane.f32.xlu0 %v1643
  %v1656 = vpop.xlane.xlu0 %1655
  %1657 = vadd.xlane.f32.xlu0 %v1644
  %v1658 = vpop.xlane.xlu0 %1657
  %1659 = vadd.xlane.f32.xlu0 %v1645
  %v1660 = vpop.xlane.xlu0 %1659
  %1661 = vadd.xlane.f32.xlu0 %v1646
  %v1662 = vpop.xlane.xlu0 %1661
  %v1663 = vmul.f32 %v1648, 0.1
  %v1664 = vmul.f32 %v1650, 0.1
  %v1665 = vmul.f32 %v1652, 0.1
  %v1666 = vmul.f32 %v1654, 0.1
  %v1667 = vmul.f32 %v1656, 0.1
  %v1668 = vmul.f32 %v1658, 0.1
  %v1669 = vmul.f32 %v1660, 0.1
  %v1670 = vmul.f32 %v1662, 0.1
  %v1671 = vadd.f32 %v1663, 1e-05
  %v1672 = vadd.f32 %v1664, 1e-05
  %v1673 = vadd.f32 %v1665, 1e-05
  %v1674 = vadd.f32 %v1666, 1e-05
  %v1675 = vadd.f32 %v1667, 1e-05
  %v1676 = vadd.f32 %v1668, 1e-05
  %v1677 = vadd.f32 %v1669, 1e-05
  %v1678 = vadd.f32 %v1670, 1e-05
  %v1679 = vrsqrt.pop %v1671
  %v1680 = vrsqrt.pop %v1672
  %v1681 = vrsqrt.pop %v1673
  %v1682 = vrsqrt.pop %v1674
  %v1683 = vrsqrt.pop %v1675
  %v1684 = vrsqrt.pop %v1676
  %v1685 = vrsqrt.pop %v1677
  %v1686 = vrsqrt.pop %v1678
  %v1687 = vmul.f32 %v1679, %v1575
  %v1688 = vmul.f32 %v1680, %v1576
  %v1689 = vmul.f32 %v1681, %v1577
  %v1690 = vmul.f32 %v1682, %v1578
  %v1691 = vmul.f32 %v1683, %v1579
  %v1692 = vmul.f32 %v1684, %v1580
  %v1693 = vmul.f32 %v1685, %v1581
  %v1694 = vmul.f32 %v1686, %v1582
  %1696 = vset.pattern.permute.xlu0 0
  %1697 = vperm.xlu0 %1696, %v1687
  %v1698 = vpop.permute.xlu0 %1697
  %1701 = vset.pattern.permute.xlu0 0
  %1702 = vperm.xlu0 %1701, %v1688
  %v1703 = vpop.permute.xlu0 %1702
  %1706 = vset.pattern.permute.xlu0 0
  %1707 = vperm.xlu0 %1706, %v1689
  %v1708 = vpop.permute.xlu0 %1707
  %1711 = vset.pattern.permute.xlu0 0
  %1712 = vperm.xlu0 %1711, %v1690
  %v1713 = vpop.permute.xlu0 %1712
  %1716 = vset.pattern.permute.xlu0 0
  %1717 = vperm.xlu0 %1716, %v1691
  %v1718 = vpop.permute.xlu0 %1717
  %1721 = vset.pattern.permute.xlu0 0
  %1722 = vperm.xlu0 %1721, %v1692
  %v1723 = vpop.permute.xlu0 %1722
  %1726 = vset.pattern.permute.xlu0 0
  %1727 = vperm.xlu0 %1726, %v1693
  %v1728 = vpop.permute.xlu0 %1727
  %1731 = vset.pattern.permute.xlu0 0
  %1732 = vperm.xlu0 %1731, %v1694
  %v1733 = vpop.permute.xlu0 %1732
  %v1735 = vmul.f32 %v1631, %v1698
  %v1736 = vmul.f32 %v1632, %v1703
  %v1737 = vmul.f32 %v1633, %v1708
  %v1738 = vmul.f32 %v1634, %v1713
  %v1739 = vmul.f32 %v1635, %v1718
  %v1740 = vmul.f32 %v1636, %v1723
  %v1741 = vmul.f32 %v1637, %v1728
  %v1742 = vmul.f32 %v1638, %v1733
  %1744 = vset.pattern.permute.xlu0 0
  %1745 = vperm.xlu0 %1744, %v1583
  %v1746 = vpop.permute.xlu0 %1745
  %1749 = vset.pattern.permute.xlu0 0
  %1750 = vperm.xlu0 %1749, %v1584
  %v1751 = vpop.permute.xlu0 %1750
  %1754 = vset.pattern.permute.xlu0 0
  %1755 = vperm.xlu0 %1754, %v1585
  %v1756 = vpop.permute.xlu0 %1755
  %1759 = vset.pattern.permute.xlu0 0
  %1760 = vperm.xlu0 %1759, %v1586
  %v1761 = vpop.permute.xlu0 %1760
  %1764 = vset.pattern.permute.xlu0 0
  %1765 = vperm.xlu0 %1764, %v1587
  %v1766 = vpop.permute.xlu0 %1765
  %1769 = vset.pattern.permute.xlu0 0
  %1770 = vperm.xlu0 %1769, %v1588
  %v1771 = vpop.permute.xlu0 %1770
  %1774 = vset.pattern.permute.xlu0 0
  %1775 = vperm.xlu0 %1774, %v1589
  %v1776 = vpop.permute.xlu0 %1775
  %1779 = vset.pattern.permute.xlu0 0
  %1780 = vperm.xlu0 %1779, %v1590
  %v1781 = vpop.permute.xlu0 %1780
  %v1783 = vadd.f32 %v1735, %v1746
  %v1784 = vadd.f32 %v1736, %v1751
  %v1785 = vadd.f32 %v1737, %v1756
  %v1786 = vadd.f32 %v1738, %v1761
  %v1787 = vadd.f32 %v1739, %v1766
  %v1788 = vadd.f32 %v1740, %v1771
  %v1789 = vadd.f32 %v1741, %v1776
  %v1790 = vadd.f32 %v1742, %v1781
  %v1791 = vtanh.pop %v1783
  %v1792 = vtanh.pop %v1784
  %v1793 = vtanh.pop %v1785
  %v1794 = vtanh.pop %v1786
  %v1795 = vtanh.pop %v1787
  %v1796 = vtanh.pop %v1788
  %v1797 = vtanh.pop %v1789
  %v1798 = vtanh.pop %v1790
  %v1799 = vmul.f32 %v1791, %v585
  %v1800 = vmul.f32 %v1792, %v585
  %v1801 = vmul.f32 %v1793, %v585
  %v1802 = vmul.f32 %v1794, %v585
  %v1803 = vmul.f32 %v1795, %v585
  %v1804 = vmul.f32 %v1796, %v585
  %v1805 = vmul.f32 %v1797, %v585
  %v1806 = vmul.f32 %v1798, %v585
  %1807 = vst [vmem:[%s11] sm:$0xff] %v1799
  %1808 = vst [vmem:[%s11 + $0x8] sm:$0xff] %v1800
  %1809 = vst [vmem:[%s11 + $0x10] sm:$0xff] %v1801
  %1810 = vst [vmem:[%s11 + $0x18] sm:$0xff] %v1802
  %1811 = vst [vmem:[%s11 + $0x20] sm:$0xff] %v1803
  %1812 = vst [vmem:[%s11 + $0x28] sm:$0xff] %v1804
  %1813 = vst [vmem:[%s11 + $0x30] sm:$0xff] %v1805
  %1814 = vst [vmem:[%s11 + $0x38] sm:$0xff] %v1806
  // Predicated region
  $region46: #{unet1d_forward.14} parent=0 // pred_check
    _
  $region47: #{unet1d_forward.14} parent=0 // pred_check_branch
    %1816 = sbr.rel (0) target = $region49
  $region48: #{unet1d_forward.14} parent=0 // pred_region
    _
  $region49: #{unet1d_forward.14} parent=0 // pred_fallthru
    _
  // Predicated region
  $region50: #{unet1d_forward.14} parent=0 // pred_check
    _
  $region51: #{unet1d_forward.14} parent=0 // pred_check_branch
    %1818 = sbr.rel (0) target = $region53
  $region52: #{unet1d_forward.14} parent=0 // pred_region
    _
  $region53: #{unet1d_forward.14} parent=0 // pred_fallthru
    _

// kernel: unet1d_forward.15
$region0: #{unet1d_forward.15}
  #allocation0 [shape = 'u32[]', space=smem, size = 0x4, offset = 0x4, fixed_abs, tag = 'smem constant byte address 0x4 - core index']
  #allocation1 [shape = 'u32[144,128]{1,0:T(1,128)}', space=vmem, size = 0x12000, scoped, tag = 'internal scratch']
  #allocation2 [shape = 'f32[192,128]{1,0:T(8,128)}', space=vmem, size = 0x18000, scoped, tag = 'scratch operand']
  %s0 = inlined_call_operand.vmem [shape: f32[64,128], index: 0, kind: input, shape index: {}]
  %s1 = inlined_call_operand.vmem [shape: f32[32,128], index: 1, kind: input, shape index: {}]
  %s2 = inlined_call_operand.vmem [shape: f32[1,128], index: 2, kind: input, shape index: {}]
  %s3 = inlined_call_operand.vmem [shape: f32[32,128], index: 3, kind: input, shape index: {}]
  %s4 = inlined_call_operand.vmem [shape: f32[32,1], index: 4, kind: input, shape index: {}]
  %s5 = inlined_call_operand.vmem [shape: f32[32,192], index: 5, kind: input, shape index: {}]
  %s6 = inlined_call_operand.vmem [shape: f32[32,1], index: 6, kind: input, shape index: {}]
  %s7 = inlined_call_operand.vmem [shape: f32[32,1], index: 7, kind: input, shape index: {}]
  %s8 = inlined_call_operand.vmem [shape: f32[32,96], index: 8, kind: input, shape index: {}]
  %s9 = inlined_call_operand.vmem [shape: f32[32,1], index: 9, kind: input, shape index: {}]
  %s10 = inlined_call_operand.vmem [shape: f32[32,1], index: 10, kind: input, shape index: {}]
  %s11 = inlined_call_operand.vmem [shape: f32[32,128], index: 11, kind: output, shape index: {}]
  %s12 = sld [smem:[#allocation0]]
  $region54: #{unet1d_forward.15} parent=0
    _
  %s14 = ssub.s32 1, %s12
  %s15 = scalar_select 0, %s14, %s12
  // Predicated region
  $region2: #{unet1d_forward.15} parent=0 // pred_check
    _
  $region3: #{unet1d_forward.15} parent=0 // pred_check_branch
    %17 = sbr.rel (0) target = $region5
  $region4: #{unet1d_forward.15} parent=0 // pred_region
    _
  $region5: #{unet1d_forward.15} parent=0 // pred_fallthru
    _
  // Predicated region
  $region6: #{unet1d_forward.15} parent=0 // pred_check
    _
  $region7: #{unet1d_forward.15} parent=0 // pred_check_branch
    %19 = sbr.rel (0) target = $region9
  $region8: #{unet1d_forward.15} parent=0 // pred_region
    _
  $region9: #{unet1d_forward.15} parent=0 // pred_fallthru
    _
  // Predicated region
  $region10: #{unet1d_forward.15} parent=0 // pred_check
    _
  $region11: #{unet1d_forward.15} parent=0 // pred_check_branch
    %21 = sbr.rel (0) target = $region13
  $region12: #{unet1d_forward.15} parent=0 // pred_region
    _
  $region13: #{unet1d_forward.15} parent=0 // pred_fallthru
    _
  // Predicated region
  $region14: #{unet1d_forward.15} parent=0 // pred_check
    _
  $region15: #{unet1d_forward.15} parent=0 // pred_check_branch
    %23 = sbr.rel (0) target = $region17
  $region16: #{unet1d_forward.15} parent=0 // pred_region
    _
  $region17: #{unet1d_forward.15} parent=0 // pred_fallthru
    _
  // Predicated region
  $region18: #{unet1d_forward.15} parent=0 // pred_check
    _
  $region19: #{unet1d_forward.15} parent=0 // pred_check_branch
    %25 = sbr.rel (0) target = $region21
  $region20: #{unet1d_forward.15} parent=0 // pred_region
    _
  $region21: #{unet1d_forward.15} parent=0 // pred_fallthru
    _
  // Predicated region
  $region22: #{unet1d_forward.15} parent=0 // pred_check
    _
  $region23: #{unet1d_forward.15} parent=0 // pred_check_branch
    %27 = sbr.rel (0) target = $region25
  $region24: #{unet1d_forward.15} parent=0 // pred_region
    _
  $region25: #{unet1d_forward.15} parent=0 // pred_fallthru
    _
  // Predicated region
  $region26: #{unet1d_forward.15} parent=0 // pred_check
    _
  $region27: #{unet1d_forward.15} parent=0 // pred_check_branch
    %29 = sbr.rel (0) target = $region29
  $region28: #{unet1d_forward.15} parent=0 // pred_region
    _
  $region29: #{unet1d_forward.15} parent=0 // pred_fallthru
    _
  // Predicated region
  $region30: #{unet1d_forward.15} parent=0 // pred_check
    _
  $region31: #{unet1d_forward.15} parent=0 // pred_check_branch
    %31 = sbr.rel (0) target = $region33
  $region32: #{unet1d_forward.15} parent=0 // pred_region
    _
  $region33: #{unet1d_forward.15} parent=0 // pred_fallthru
    _
  // Predicated region
  $region34: #{unet1d_forward.15} parent=0 // pred_check
    _
  $region35: #{unet1d_forward.15} parent=0 // pred_check_branch
    %33 = sbr.rel (0) target = $region37
  $region36: #{unet1d_forward.15} parent=0 // pred_region
    _
  $region37: #{unet1d_forward.15} parent=0 // pred_fallthru
    _
  // Predicated region
  $region38: #{unet1d_forward.15} parent=0 // pred_check
    _
  $region39: #{unet1d_forward.15} parent=0 // pred_check_branch
    %35 = sbr.rel (0) target = $region41
  $region40: #{unet1d_forward.15} parent=0 // pred_region
    _
  $region41: #{unet1d_forward.15} parent=0 // pred_fallthru
    _
  // Predicated region
  $region42: #{unet1d_forward.15} parent=0 // pred_check
    _
  $region43: #{unet1d_forward.15} parent=0 // pred_check_branch
    %37 = sbr.rel (0) target = $region45
  $region44: #{unet1d_forward.15} parent=0 // pred_region
    _
  $region45: #{unet1d_forward.15} parent=0 // pred_fallthru
    _
  %v38 = vld [vmem:[%s2] sm:$0x1]
  %v39 = vld [vmem:[%s3] sm:$0xff]
  %v40 = vld [vmem:[%s3 + $0x8] sm:$0xff]
  %v41 = vld [vmem:[%s3 + $0x10] sm:$0xff]
  %v42 = vld [vmem:[%s3 + $0x18] sm:$0xff]
  %v43 = vld [vmem:[%s0] sm:$0xff]
  %v44 = vld [vmem:[%s0 + $0x8] sm:$0xff]
  %v45 = vld [vmem:[%s0 + $0x10] sm:$0xff]
  %v46 = vld [vmem:[%s0 + $0x18] sm:$0xff]
  %v47 = vld [vmem:[%s0 + $0x20] sm:$0xff]
  %v48 = vld [vmem:[%s0 + $0x28] sm:$0xff]
  %v49 = vld [vmem:[%s0 + $0x30] sm:$0xff]
  %v50 = vld [vmem:[%s0 + $0x38] sm:$0xff]
  %59 = vrot.lane.b32.xlu0 %v43, 1
  %v60 = vpop.permute.xlu0 %59
  %61 = vrot.lane.b32.xlu0 %v44, 1
  %v62 = vpop.permute.xlu0 %61
  %63 = vrot.lane.b32.xlu0 %v45, 1
  %v64 = vpop.permute.xlu0 %63
  %65 = vrot.lane.b32.xlu0 %v46, 1
  %v66 = vpop.permute.xlu0 %65
  %67 = vrot.lane.b32.xlu0 %v47, 1
  %v68 = vpop.permute.xlu0 %67
  %69 = vrot.lane.b32.xlu0 %v48, 1
  %v70 = vpop.permute.xlu0 %69
  %71 = vrot.lane.b32.xlu0 %v49, 1
  %v72 = vpop.permute.xlu0 %71
  %73 = vrot.lane.b32.xlu0 %v50, 1
  %v74 = vpop.permute.xlu0 %73
  %vm83 = vcmask 1047560
  %84 = vst.msk [vmem:[#allocation2] sm:$0xff] %vm83, %v60
  %85 = vst.msk [vmem:[#allocation2 + $0x8] sm:$0xff] %vm83, %v62
  %86 = vst.msk [vmem:[#allocation2 + $0x10] sm:$0xff] %vm83, %v64
  %87 = vst.msk [vmem:[#allocation2 + $0x18] sm:$0xff] %vm83, %v66
  %88 = vst.msk [vmem:[#allocation2 + $0x20] sm:$0xff] %vm83, %v68
  %89 = vst.msk [vmem:[#allocation2 + $0x28] sm:$0xff] %vm83, %v70
  %90 = vst.msk [vmem:[#allocation2 + $0x30] sm:$0xff] %vm83, %v72
  %91 = vst.msk [vmem:[#allocation2 + $0x38] sm:$0xff] %vm83, %v74
  %vm92 = vcmask 7168
  %93 = vst.msk [vmem:[#allocation2] sm:$0xff] %vm92, 0.0
  %94 = vst.msk [vmem:[#allocation2 + $0x8] sm:$0xff] %vm92, 0.0
  %95 = vst.msk [vmem:[#allocation2 + $0x10] sm:$0xff] %vm92, 0.0
  %96 = vst.msk [vmem:[#allocation2 + $0x18] sm:$0xff] %vm92, 0.0
  %97 = vst.msk [vmem:[#allocation2 + $0x20] sm:$0xff] %vm92, 0.0
  %98 = vst.msk [vmem:[#allocation2 + $0x28] sm:$0xff] %vm92, 0.0
  %99 = vst.msk [vmem:[#allocation2 + $0x30] sm:$0xff] %vm92, 0.0
  %100 = vst.msk [vmem:[#allocation2 + $0x38] sm:$0xff] %vm92, 0.0
  %101 = vst [vmem:[#allocation2 + $0x40] sm:$0xff] %v43
  %102 = vst [vmem:[#allocation2 + $0x48] sm:$0xff] %v44
  %103 = vst [vmem:[#allocation2 + $0x50] sm:$0xff] %v45
  %104 = vst [vmem:[#allocation2 + $0x58] sm:$0xff] %v46
  %105 = vst [vmem:[#allocation2 + $0x60] sm:$0xff] %v47
  %106 = vst [vmem:[#allocation2 + $0x68] sm:$0xff] %v48
  %107 = vst [vmem:[#allocation2 + $0x70] sm:$0xff] %v49
  %108 = vst [vmem:[#allocation2 + $0x78] sm:$0xff] %v50
  %v109 = vld [vmem:[#allocation2] sm:$0xff]
  %v110 = vld [vmem:[#allocation2 + $0x8] sm:$0xff]
  %v111 = vld [vmem:[#allocation2 + $0x10] sm:$0xff]
  %v112 = vld [vmem:[#allocation2 + $0x18] sm:$0xff]
  %v113 = vld [vmem:[#allocation2 + $0x20] sm:$0xff]
  %v114 = vld [vmem:[#allocation2 + $0x28] sm:$0xff]
  %v115 = vld [vmem:[#allocation2 + $0x30] sm:$0xff]
  %v116 = vld [vmem:[#allocation2 + $0x38] sm:$0xff]
  %v117 = vld [vmem:[#allocation2 + $0x40] sm:$0xff]
  %v118 = vld [vmem:[#allocation2 + $0x48] sm:$0xff]
  %v119 = vld [vmem:[#allocation2 + $0x50] sm:$0xff]
  %v120 = vld [vmem:[#allocation2 + $0x58] sm:$0xff]
  %v121 = vld [vmem:[#allocation2 + $0x60] sm:$0xff]
  %v122 = vld [vmem:[#allocation2 + $0x68] sm:$0xff]
  %v123 = vld [vmem:[#allocation2 + $0x70] sm:$0xff]
  %v124 = vld [vmem:[#allocation2 + $0x78] sm:$0xff]
  %v125 = vld [vmem:[%s4] sm:$0xff]
  %v126 = vld [vmem:[%s4 + $0x8] sm:$0xff]
  %v127 = vld [vmem:[%s4 + $0x10] sm:$0xff]
  %v128 = vld [vmem:[%s4 + $0x18] sm:$0xff]
  %130 = vset.pattern.permute.xlu0 0
  %131 = vperm.xlu0 %130, %v125
  %v132 = vpop.permute.xlu0 %131
  %135 = vset.pattern.permute.xlu0 0
  %136 = vperm.xlu0 %135, %v126
  %v137 = vpop.permute.xlu0 %136
  %140 = vset.pattern.permute.xlu0 0
  %141 = vperm.xlu0 %140, %v127
  %v142 = vpop.permute.xlu0 %141
  %145 = vset.pattern.permute.xlu0 0
  %146 = vperm.xlu0 %145, %v128
  %v147 = vpop.permute.xlu0 %146
  %149 = vmatprep.subr.mxu0 0.0
  %150 = vmatpush1.msra.mxu0 %v124
  %151 = vmatprep.subr.mxu0 0.0
  %152 = vmatpush1.msra.mxu0 %v123
  %153 = vmatprep.subr.mxu0 0.0
  %154 = vmatpush1.msra.mxu0 %v122
  %155 = vmatprep.subr.mxu0 0.0
  %156 = vmatpush1.msra.mxu0 %v121
  %157 = vmatprep.subr.mxu0 0.0
  %158 = vmatpush1.msra.mxu0 %v120
  %159 = vmatprep.subr.mxu0 0.0
  %160 = vmatpush1.msra.mxu0 %v119
  %161 = vmatprep.subr.mxu0 0.0
  %162 = vmatpush1.msra.mxu0 %v118
  %163 = vmatprep.subr.mxu0 0.0
  %164 = vmatpush1.msra.mxu0 %v117
  %165 = vmatprep.subr.mxu0 0.0
  %166 = vmatpush1.msra.mxu0 %v116
  %167 = vmatprep.subr.mxu0 0.0
  %168 = vmatpush1.msra.mxu0 %v115
  %169 = vmatprep.subr.mxu0 0.0
  %170 = vmatpush1.msra.mxu0 %v114
  %171 = vmatprep.subr.mxu0 0.0
  %172 = vmatpush1.msra.mxu0 %v113
  %173 = vmatprep.subr.mxu0 0.0
  %174 = vmatpush1.msra.mxu0 %v112
  %175 = vmatprep.subr.mxu0 0.0
  %176 = vmatpush1.msra.mxu0 %v111
  %177 = vmatprep.subr.mxu0 0.0
  %178 = vmatpush1.msra.mxu0 %v110
  %179 = vmatprep.subr.mxu0 0.0
  %180 = vmatpush1.msra.mxu0 %v109
  %181 = vmatprep.subr.mxu0 0.0
  %182 = vmatpush2.msra.mxu0 0.0
  %183 = vmatprep.subr.mxu0 0.0
  %184 = vmatpush2.msra.mxu0 0.0
  %185 = vmatprep.subr.mxu0 0.0
  %186 = vmatpush2.msra.mxu0 0.0
  %187 = vmatprep.subr.mxu0 0.0
  %188 = vmatpush2.msra.mxu0 0.0
  %189 = vmatprep.subr.mxu0 0.0
  %190 = vmatpush2.msra.mxu0 0.0
  %191 = vmatprep.subr.mxu0 0.0
  %192 = vmatpush2.msra.mxu0 0.0
  %193 = vmatprep.subr.mxu0 0.0
  %194 = vmatpush2.msra.mxu0 0.0
  %195 = vmatprep.subr.mxu0 0.0
  %196 = vmatpush2.msra.mxu0 0.0
  %197 = vmatprep.subr.mxu0 0.0
  %198 = vmatpush2.msra.mxu0 0.0
  %199 = vmatprep.subr.mxu0 0.0
  %200 = vmatpush2.msra.mxu0 0.0
  %201 = vmatprep.subr.mxu0 0.0
  %202 = vmatpush2.msra.mxu0 0.0
  %203 = vmatprep.subr.mxu0 0.0
  %204 = vmatpush2.msra.mxu0 0.0
  %205 = vmatprep.subr.mxu0 0.0
  %206 = vmatpush2.msra.mxu0 0.0
  %207 = vmatprep.subr.mxu0 0.0
  %208 = vmatpush2.msra.mxu0 0.0
  %209 = vmatprep.subr.mxu0 0.0
  %210 = vmatpush2.msra.mxu0 0.0
  %211 = vmatprep.subr.mxu0 0.0
  %212 = vmatpush2.msra.mxu0 0.0
  %213 = vmatprep.mubr.f32.mxu0 0.0
  %214 = vmatmul.mubr.f32.gmra.mxu0 %v39
  %v215 = vpop.f32.mrf.mxu0
  %v216 = vadd.f32 %v132, %v215
  %v217 = vpop.f32.mrf.mxu0
  %218 = vmatprep.mubr.f32.mxu0 0.0
  %219 = vmatmul.mubr.f32.gmra.mxu0 %v40
  %v220 = vpop.f32.mrf.mxu0
  %v221 = vadd.f32 %v137, %v220
  %v222 = vpop.f32.mrf.mxu0
  %223 = vmatprep.mubr.f32.mxu0 0.0
  %224 = vmatmul.mubr.f32.gmra.mxu0 %v41
  %v225 = vpop.f32.mrf.mxu0
  %v226 = vadd.f32 %v142, %v225
  %v227 = vpop.f32.mrf.mxu0
  %228 = vmatprep.mubr.f32.mxu0 0.0
  %229 = vmatmul.mubr.f32.gmra.mxu0 %v42
  %v230 = vpop.f32.mrf.mxu0
  %v231 = vadd.f32 %v147, %v230
  %v232 = vpop.f32.mrf.mxu0
  %233 = vdwg.mxu0
  %v235 = vlaneseq
  %v236 = vshrl.u32 %v235, 7
  %v237 = vsub.s32 0, %v236
  %v238 = vrot.slane %v38, %v237
  %v240 = vmul.f32 %v216, %v238
  %v241 = vmul.f32 %v221, %v238
  %v242 = vmul.f32 %v226, %v238
  %v243 = vmul.f32 %v231, %v238
  %v244 = vld [vmem:[%s5] sm:$0xff]
  %v245 = vld [vmem:[%s5 + $0x8] sm:$0xff]
  %v246 = vld [vmem:[%s5 + $0x10] sm:$0xff]
  %v247 = vld [vmem:[%s5 + $0x18] sm:$0xff]
  %v248 = vld [vmem:[%s5 + $0x20] sm:$0xff]
  %v249 = vld [vmem:[%s5 + $0x28] sm:$0xff]
  %v250 = vld [vmem:[%s5 + $0x30] sm:$0xff]
  %v251 = vld [vmem:[%s5 + $0x38] sm:$0xff]
  %v252 = vld [vmem:[%s1] sm:$0xff]
  %v253 = vld [vmem:[%s1 + $0x8] sm:$0xff]
  %v254 = vld [vmem:[%s1 + $0x10] sm:$0xff]
  %v255 = vld [vmem:[%s1 + $0x18] sm:$0xff]
  %260 = vrot.lane.b32.xlu0 %v240, 1
  %v261 = vpop.permute.xlu0 %260
  %262 = vrot.lane.b32.xlu0 %v241, 1
  %v263 = vpop.permute.xlu0 %262
  %264 = vrot.lane.b32.xlu0 %v242, 1
  %v265 = vpop.permute.xlu0 %264
  %266 = vrot.lane.b32.xlu0 %v243, 1
  %v267 = vpop.permute.xlu0 %266
  %272 = vst.msk [vmem:[#allocation2] sm:$0xff] %vm83, %v261
  %273 = vst.msk [vmem:[#allocation2 + $0x8] sm:$0xff] %vm83, %v263
  %274 = vst.msk [vmem:[#allocation2 + $0x10] sm:$0xff] %vm83, %v265
  %275 = vst.msk [vmem:[#allocation2 + $0x18] sm:$0xff] %vm83, %v267
  %276 = vst.msk [vmem:[#allocation2] sm:$0xff] %vm92, 0.0
  %277 = vst.msk [vmem:[#allocation2 + $0x8] sm:$0xff] %vm92, 0.0
  %278 = vst.msk [vmem:[#allocation2 + $0x10] sm:$0xff] %vm92, 0.0
  %279 = vst.msk [vmem:[#allocation2 + $0x18] sm:$0xff] %vm92, 0.0
  %284 = vrot.lane.b32.xlu0 %v252, 1
  %v285 = vpop.permute.xlu0 %284
  %286 = vrot.lane.b32.xlu0 %v253, 1
  %v287 = vpop.permute.xlu0 %286
  %288 = vrot.lane.b32.xlu0 %v254, 1
  %v289 = vpop.permute.xlu0 %288
  %290 = vrot.lane.b32.xlu0 %v255, 1
  %v291 = vpop.permute.xlu0 %290
  %296 = vst.msk [vmem:[#allocation2 + $0x20] sm:$0xff] %vm83, %v285
  %297 = vst.msk [vmem:[#allocation2 + $0x28] sm:$0xff] %vm83, %v287
  %298 = vst.msk [vmem:[#allocation2 + $0x30] sm:$0xff] %vm83, %v289
  %299 = vst.msk [vmem:[#allocation2 + $0x38] sm:$0xff] %vm83, %v291
  %300 = vst.msk [vmem:[#allocation2 + $0x20] sm:$0xff] %vm92, 0.0
  %301 = vst.msk [vmem:[#allocation2 + $0x28] sm:$0xff] %vm92, 0.0
  %302 = vst.msk [vmem:[#allocation2 + $0x30] sm:$0xff] %vm92, 0.0
  %303 = vst.msk [vmem:[#allocation2 + $0x38] sm:$0xff] %vm92, 0.0
  %304 = vst [vmem:[#allocation2 + $0x40] sm:$0xff] %v240
  %305 = vst [vmem:[#allocation2 + $0x48] sm:$0xff] %v241
  %306 = vst [vmem:[#allocation2 + $0x50] sm:$0xff] %v242
  %307 = vst [vmem:[#allocation2 + $0x58] sm:$0xff] %v243
  %308 = vst [vmem:[#allocation2 + $0x60] sm:$0xff] %v252
  %309 = vst [vmem:[#allocation2 + $0x68] sm:$0xff] %v253
  %310 = vst [vmem:[#allocation2 + $0x70] sm:$0xff] %v254
  %311 = vst [vmem:[#allocation2 + $0x78] sm:$0xff] %v255
  %312 = vrot.lane.b32.xlu0 %v240, 127
  %v313 = vpop.permute.xlu0 %312
  %314 = vrot.lane.b32.xlu0 %v241, 127
  %v315 = vpop.permute.xlu0 %314
  %316 = vrot.lane.b32.xlu0 %v242, 127
  %v317 = vpop.permute.xlu0 %316
  %318 = vrot.lane.b32.xlu0 %v243, 127
  %v319 = vpop.permute.xlu0 %318
  %vm324 = vcmask 1039360
  %325 = vst.msk [vmem:[#allocation2 + $0x80] sm:$0xff] %vm324, %v313
  %326 = vst.msk [vmem:[#allocation2 + $0x88] sm:$0xff] %vm324, %v315
  %327 = vst.msk [vmem:[#allocation2 + $0x90] sm:$0xff] %vm324, %v317
  %328 = vst.msk [vmem:[#allocation2 + $0x98] sm:$0xff] %vm324, %v319
  %vm329 = vcmask 1048568
  %330 = vst.msk [vmem:[#allocation2 + $0x80] sm:$0xff] %vm329, 0.0
  %331 = vst.msk [vmem:[#allocation2 + $0x88] sm:$0xff] %vm329, 0.0
  %332 = vst.msk [vmem:[#allocation2 + $0x90] sm:$0xff] %vm329, 0.0
  %333 = vst.msk [vmem:[#allocation2 + $0x98] sm:$0xff] %vm329, 0.0
  %334 = vrot.lane.b32.xlu0 %v252, 127
  %v335 = vpop.permute.xlu0 %334
  %336 = vrot.lane.b32.xlu0 %v253, 127
  %v337 = vpop.permute.xlu0 %336
  %338 = vrot.lane.b32.xlu0 %v254, 127
  %v339 = vpop.permute.xlu0 %338
  %340 = vrot.lane.b32.xlu0 %v255, 127
  %v341 = vpop.permute.xlu0 %340
  %346 = vst.msk [vmem:[#allocation2 + $0xa0] sm:$0xff] %vm324, %v335
  %347 = vst.msk [vmem:[#allocation2 + $0xa8] sm:$0xff] %vm324, %v337
  %348 = vst.msk [vmem:[#allocation2 + $0xb0] sm:$0xff] %vm324, %v339
  %349 = vst.msk [vmem:[#allocation2 + $0xb8] sm:$0xff] %vm324, %v341
  %350 = vst.msk [vmem:[#allocation2 + $0xa0] sm:$0xff] %vm329, 0.0
  %351 = vst.msk [vmem:[#allocation2 + $0xa8] sm:$0xff] %vm329, 0.0
  %352 = vst.msk [vmem:[#allocation2 + $0xb0] sm:$0xff] %vm329, 0.0
  %353 = vst.msk [vmem:[#allocation2 + $0xb8] sm:$0xff] %vm329, 0.0
  %v354 = vld [vmem:[#allocation2] sm:$0xff]
  %v355 = vld [vmem:[#allocation2 + $0x8] sm:$0xff]
  %v356 = vld [vmem:[#allocation2 + $0x10] sm:$0xff]
  %v357 = vld [vmem:[#allocation2 + $0x18] sm:$0xff]
  %v358 = vld [vmem:[#allocation2 + $0x20] sm:$0xff]
  %v359 = vld [vmem:[#allocation2 + $0x28] sm:$0xff]
  %v360 = vld [vmem:[#allocation2 + $0x30] sm:$0xff]
  %v361 = vld [vmem:[#allocation2 + $0x38] sm:$0xff]
  %v362 = vld [vmem:[#allocation2 + $0x40] sm:$0xff]
  %v363 = vld [vmem:[#allocation2 + $0x48] sm:$0xff]
  %v364 = vld [vmem:[#allocation2 + $0x50] sm:$0xff]
  %v365 = vld [vmem:[#allocation2 + $0x58] sm:$0xff]
  %v366 = vld [vmem:[#allocation2 + $0x60] sm:$0xff]
  %v367 = vld [vmem:[#allocation2 + $0x68] sm:$0xff]
  %v368 = vld [vmem:[#allocation2 + $0x70] sm:$0xff]
  %v369 = vld [vmem:[#allocation2 + $0x78] sm:$0xff]
  %v370 = vld [vmem:[#allocation2 + $0x80] sm:$0xff]
  %v371 = vld [vmem:[#allocation2 + $0x88] sm:$0xff]
  %v372 = vld [vmem:[#allocation2 + $0x90] sm:$0xff]
  %v373 = vld [vmem:[#allocation2 + $0x98] sm:$0xff]
  %v374 = vld [vmem:[#allocation2 + $0xa0] sm:$0xff]
  %v375 = vld [vmem:[#allocation2 + $0xa8] sm:$0xff]
  %v376 = vld [vmem:[#allocation2 + $0xb0] sm:$0xff]
  %v377 = vld [vmem:[#allocation2 + $0xb8] sm:$0xff]
  %vm378 = vcmask 523264
  %v380 = vsel %vm378, %v245, 0
  %v383 = vsel %vm378, %v247, 0
  %v386 = vsel %vm378, %v249, 0
  %v389 = vsel %vm378, %v251, 0
  %391 = vmatprep.subr.mxu0 0.0
  %392 = vmatpush1.msra.mxu0 %v369
  %393 = vmatprep.subr.mxu0 0.0
  %394 = vmatpush1.msra.mxu0 %v368
  %395 = vmatprep.subr.mxu0 0.0
  %396 = vmatpush1.msra.mxu0 %v367
  %397 = vmatprep.subr.mxu0 0.0
  %398 = vmatpush1.msra.mxu0 %v366
  %399 = vmatprep.subr.mxu0 0.0
  %400 = vmatpush1.msra.mxu0 %v365
  %401 = vmatprep.subr.mxu0 0.0
  %402 = vmatpush1.msra.mxu0 %v364
  %403 = vmatprep.subr.mxu0 0.0
  %404 = vmatpush1.msra.mxu0 %v363
  %405 = vmatprep.subr.mxu0 0.0
  %406 = vmatpush1.msra.mxu0 %v362
  %407 = vmatprep.subr.mxu0 0.0
  %408 = vmatpush1.msra.mxu0 %v361
  %409 = vmatprep.subr.mxu0 0.0
  %410 = vmatpush1.msra.mxu0 %v360
  %411 = vmatprep.subr.mxu0 0.0
  %412 = vmatpush1.msra.mxu0 %v359
  %413 = vmatprep.subr.mxu0 0.0
  %414 = vmatpush1.msra.mxu0 %v358
  %415 = vmatprep.subr.mxu0 0.0
  %416 = vmatpush1.msra.mxu0 %v357
  %417 = vmatprep.subr.mxu0 0.0
  %418 = vmatpush1.msra.mxu0 %v356
  %419 = vmatprep.subr.mxu0 0.0
  %420 = vmatpush1.msra.mxu0 %v355
  %421 = vmatprep.subr.mxu0 0.0
  %422 = vmatpush1.msra.mxu0 %v354
  %423 = vmatprep.subr.mxu0 0.0
  %424 = vmatpush2.msra.mxu0 0.0
  %425 = vmatprep.subr.mxu0 0.0
  %426 = vmatpush2.msra.mxu0 0.0
  %427 = vmatprep.subr.mxu0 0.0
  %428 = vmatpush2.msra.mxu0 0.0
  %429 = vmatprep.subr.mxu0 0.0
  %430 = vmatpush2.msra.mxu0 0.0
  %431 = vmatprep.subr.mxu0 0.0
  %432 = vmatpush2.msra.mxu0 0.0
  %433 = vmatprep.subr.mxu0 0.0
  %434 = vmatpush2.msra.mxu0 0.0
  %435 = vmatprep.subr.mxu0 0.0
  %436 = vmatpush2.msra.mxu0 0.0
  %437 = vmatprep.subr.mxu0 0.0
  %438 = vmatpush2.msra.mxu0 0.0
  %439 = vmatprep.subr.mxu0 0.0
  %440 = vmatpush2.msra.mxu0 %v377
  %441 = vmatprep.subr.mxu0 0.0
  %442 = vmatpush2.msra.mxu0 %v376
  %443 = vmatprep.subr.mxu0 0.0
  %444 = vmatpush2.msra.mxu0 %v375
  %445 = vmatprep.subr.mxu0 0.0
  %446 = vmatpush2.msra.mxu0 %v374
  %447 = vmatprep.subr.mxu0 0.0
  %448 = vmatpush2.msra.mxu0 %v373
  %449 = vmatprep.subr.mxu0 0.0
  %450 = vmatpush2.msra.mxu0 %v372
  %451 = vmatprep.subr.mxu0 0.0
  %452 = vmatpush2.msra.mxu0 %v371
  %453 = vmatprep.subr.mxu0 0.0
  %454 = vmatpush2.msra.mxu0 %v370
  %455 = vmatprep.mubr.f32.mxu0 %v380
  %456 = vmatmul.mubr.f32.gmra.mxu0 %v244
  %v457 = vpop.f32.mrf.mxu0
  %v458 = vadd.f32 0.0, %v457
  %v459 = vpop.f32.mrf.mxu0
  %460 = vmatprep.mubr.f32.mxu0 %v383
  %461 = vmatmul.mubr.f32.gmra.mxu0 %v246
  %v462 = vpop.f32.mrf.mxu0
  %v463 = vadd.f32 0.0, %v462
  %v464 = vpop.f32.mrf.mxu0
  %465 = vmatprep.mubr.f32.mxu0 %v386
  %466 = vmatmul.mubr.f32.gmra.mxu0 %v248
  %v467 = vpop.f32.mrf.mxu0
  %v468 = vadd.f32 0.0, %v467
  %v469 = vpop.f32.mrf.mxu0
  %470 = vmatprep.mubr.f32.mxu0 %v389
  %471 = vmatmul.mubr.f32.gmra.mxu0 %v250
  %v472 = vpop.f32.mrf.mxu0
  %v473 = vadd.f32 0.0, %v472
  %v474 = vpop.f32.mrf.mxu0
  %475 = vdwg.mxu0
  %v476 = vld [vmem:[%s6] sm:$0xff]
  %v477 = vld [vmem:[%s6 + $0x8] sm:$0xff]
  %v478 = vld [vmem:[%s6 + $0x10] sm:$0xff]
  %v479 = vld [vmem:[%s6 + $0x18] sm:$0xff]
  %v480 = vld [vmem:[%s7] sm:$0xff]
  %v481 = vld [vmem:[%s7 + $0x8] sm:$0xff]
  %v482 = vld [vmem:[%s7 + $0x10] sm:$0xff]
  %v483 = vld [vmem:[%s7 + $0x18] sm:$0xff]
  %v484 = vmul.f32 %v458, %v238
  %v485 = vmul.f32 %v463, %v238
  %v486 = vmul.f32 %v468, %v238
  %v487 = vmul.f32 %v473, %v238
  %488 = vadd.xlane.f32.xlu0 %v484
  %v489 = vpop.xlane.xlu0 %488
  %490 = vadd.xlane.f32.xlu0 %v485
  %v491 = vpop.xlane.xlu0 %490
  %492 = vadd.xlane.f32.xlu0 %v486
  %v493 = vpop.xlane.xlu0 %492
  %494 = vadd.xlane.f32.xlu0 %v487
  %v495 = vpop.xlane.xlu0 %494
  %v496 = vmul.f32 %v489, 0.05
  %v497 = vmul.f32 %v491, 0.05
  %v498 = vmul.f32 %v493, 0.05
  %v499 = vmul.f32 %v495, 0.05
  %v500 = vsub.f32 %v458, %v496
  %v501 = vsub.f32 %v463, %v497
  %v502 = vsub.f32 %v468, %v498
  %v503 = vsub.f32 %v473, %v499
  %v504 = vmul.f32 %v500, %v238
  %v505 = vmul.f32 %v501, %v238
  %v506 = vmul.f32 %v502, %v238
  %v507 = vmul.f32 %v503, %v238
  %v508 = vmul.f32 %v504, %v504
  %v509 = vmul.f32 %v505, %v505
  %v510 = vmul.f32 %v506, %v506
  %v511 = vmul.f32 %v507, %v507
  %512 = vadd.xlane.f32.xlu0 %v508
  %v513 = vpop.xlane.xlu0 %512
  %514 = vadd.xlane.f32.xlu0 %v509
  %v515 = vpop.xlane.xlu0 %514
  %516 = vadd.xlane.f32.xlu0 %v510
  %v517 = vpop.xlane.xlu0 %516
  %518 = vadd.xlane.f32.xlu0 %v511
  %v519 = vpop.xlane.xlu0 %518
  %v520 = vmul.f32 %v513, 0.05
  %v521 = vmul.f32 %v515, 0.05
  %v522 = vmul.f32 %v517, 0.05
  %v523 = vmul.f32 %v519, 0.05
  %v524 = vadd.f32 %v520, 1e-05
  %v525 = vadd.f32 %v521, 1e-05
  %v526 = vadd.f32 %v522, 1e-05
  %v527 = vadd.f32 %v523, 1e-05
  %v528 = vrsqrt.pop %v524
  %v529 = vrsqrt.pop %v525
  %v530 = vrsqrt.pop %v526
  %v531 = vrsqrt.pop %v527
  %v532 = vmul.f32 %v528, %v476
  %v533 = vmul.f32 %v529, %v477
  %v534 = vmul.f32 %v530, %v478
  %v535 = vmul.f32 %v531, %v479
  %537 = vset.pattern.permute.xlu0 0
  %538 = vperm.xlu0 %537, %v532
  %v539 = vpop.permute.xlu0 %538
  %542 = vset.pattern.permute.xlu0 0
  %543 = vperm.xlu0 %542, %v533
  %v544 = vpop.permute.xlu0 %543
  %547 = vset.pattern.permute.xlu0 0
  %548 = vperm.xlu0 %547, %v534
  %v549 = vpop.permute.xlu0 %548
  %552 = vset.pattern.permute.xlu0 0
  %553 = vperm.xlu0 %552, %v535
  %v554 = vpop.permute.xlu0 %553
  %v556 = vmul.f32 %v504, %v539
  %v557 = vmul.f32 %v505, %v544
  %v558 = vmul.f32 %v506, %v549
  %v559 = vmul.f32 %v507, %v554
  %561 = vset.pattern.permute.xlu0 0
  %562 = vperm.xlu0 %561, %v480
  %v563 = vpop.permute.xlu0 %562
  %566 = vset.pattern.permute.xlu0 0
  %567 = vperm.xlu0 %566, %v481
  %v568 = vpop.permute.xlu0 %567
  %571 = vset.pattern.permute.xlu0 0
  %572 = vperm.xlu0 %571, %v482
  %v573 = vpop.permute.xlu0 %572
  %576 = vset.pattern.permute.xlu0 0
  %577 = vperm.xlu0 %576, %v483
  %v578 = vpop.permute.xlu0 %577
  %v580 = vadd.f32 %v556, %v563
  %v581 = vadd.f32 %v557, %v568
  %v582 = vadd.f32 %v558, %v573
  %v583 = vadd.f32 %v559, %v578
  %v584 = vtanh.pop %v580
  %v585 = vtanh.pop %v581
  %v586 = vtanh.pop %v582
  %v587 = vtanh.pop %v583
  %v588 = vmul.f32 %v584, %v238
  %v589 = vmul.f32 %v585, %v238
  %v590 = vmul.f32 %v586, %v238
  %v591 = vmul.f32 %v587, %v238
  %v592 = vld [vmem:[%s8] sm:$0xff]
  %v593 = vld [vmem:[%s8 + $0x8] sm:$0xff]
  %v594 = vld [vmem:[%s8 + $0x10] sm:$0xff]
  %v595 = vld [vmem:[%s8 + $0x18] sm:$0xff]
  %600 = vrot.lane.b32.xlu0 %v588, 1
  %v601 = vpop.permute.xlu0 %600
  %602 = vrot.lane.b32.xlu0 %v589, 1
  %v603 = vpop.permute.xlu0 %602
  %604 = vrot.lane.b32.xlu0 %v590, 1
  %v605 = vpop.permute.xlu0 %604
  %606 = vrot.lane.b32.xlu0 %v591, 1
  %v607 = vpop.permute.xlu0 %606
  %612 = vst.msk [vmem:[#allocation2] sm:$0xff] %vm83, %v601
  %613 = vst.msk [vmem:[#allocation2 + $0x8] sm:$0xff] %vm83, %v603
  %614 = vst.msk [vmem:[#allocation2 + $0x10] sm:$0xff] %vm83, %v605
  %615 = vst.msk [vmem:[#allocation2 + $0x18] sm:$0xff] %vm83, %v607
  %616 = vst.msk [vmem:[#allocation2] sm:$0xff] %vm92, 0.0
  %617 = vst.msk [vmem:[#allocation2 + $0x8] sm:$0xff] %vm92, 0.0
  %618 = vst.msk [vmem:[#allocation2 + $0x10] sm:$0xff] %vm92, 0.0
  %619 = vst.msk [vmem:[#allocation2 + $0x18] sm:$0xff] %vm92, 0.0
  %620 = vst [vmem:[#allocation2 + $0x20] sm:$0xff] %v588
  %621 = vst [vmem:[#allocation2 + $0x28] sm:$0xff] %v589
  %622 = vst [vmem:[#allocation2 + $0x30] sm:$0xff] %v590
  %623 = vst [vmem:[#allocation2 + $0x38] sm:$0xff] %v591
  %624 = vrot.lane.b32.xlu0 %v588, 127
  %v625 = vpop.permute.xlu0 %624
  %626 = vrot.lane.b32.xlu0 %v589, 127
  %v627 = vpop.permute.xlu0 %626
  %628 = vrot.lane.b32.xlu0 %v590, 127
  %v629 = vpop.permute.xlu0 %628
  %630 = vrot.lane.b32.xlu0 %v591, 127
  %v631 = vpop.permute.xlu0 %630
  %636 = vst.msk [vmem:[#allocation2 + $0x40] sm:$0xff] %vm324, %v625
  %637 = vst.msk [vmem:[#allocation2 + $0x48] sm:$0xff] %vm324, %v627
  %638 = vst.msk [vmem:[#allocation2 + $0x50] sm:$0xff] %vm324, %v629
  %639 = vst.msk [vmem:[#allocation2 + $0x58] sm:$0xff] %vm324, %v631
  %640 = vst.msk [vmem:[#allocation2 + $0x40] sm:$0xff] %vm329, 0.0
  %641 = vst.msk [vmem:[#allocation2 + $0x48] sm:$0xff] %vm329, 0.0
  %642 = vst.msk [vmem:[#allocation2 + $0x50] sm:$0xff] %vm329, 0.0
  %643 = vst.msk [vmem:[#allocation2 + $0x58] sm:$0xff] %vm329, 0.0
  %v644 = vld [vmem:[#allocation2] sm:$0xff]
  %v645 = vld [vmem:[#allocation2 + $0x8] sm:$0xff]
  %v646 = vld [vmem:[#allocation2 + $0x10] sm:$0xff]
  %v647 = vld [vmem:[#allocation2 + $0x18] sm:$0xff]
  %v648 = vld [vmem:[#allocation2 + $0x20] sm:$0xff]
  %v649 = vld [vmem:[#allocation2 + $0x28] sm:$0xff]
  %v650 = vld [vmem:[#allocation2 + $0x30] sm:$0xff]
  %v651 = vld [vmem:[#allocation2 + $0x38] sm:$0xff]
  %v652 = vld [vmem:[#allocation2 + $0x40] sm:$0xff]
  %v653 = vld [vmem:[#allocation2 + $0x48] sm:$0xff]
  %v654 = vld [vmem:[#allocation2 + $0x50] sm:$0xff]
  %v655 = vld [vmem:[#allocation2 + $0x58] sm:$0xff]
  %vm656 = vcmask 785408
  %v658 = vsel %vm656, %v592, 0
  %v661 = vsel %vm656, %v593, 0
  %v664 = vsel %vm656, %v594, 0
  %v667 = vsel %vm656, %v595, 0
  %669 = vmatprep.subr.mxu0 0.0
  %670 = vmatpush1.msra.mxu0 0.0
  %671 = vmatprep.subr.mxu0 0.0
  %672 = vmatpush1.msra.mxu0 0.0
  %673 = vmatprep.subr.mxu0 0.0
  %674 = vmatpush1.msra.mxu0 0.0
  %675 = vmatprep.subr.mxu0 0.0
  %676 = vmatpush1.msra.mxu0 0.0
  %677 = vmatprep.subr.mxu0 0.0
  %678 = vmatpush1.msra.mxu0 %v655
  %679 = vmatprep.subr.mxu0 0.0
  %680 = vmatpush1.msra.mxu0 %v654
  %681 = vmatprep.subr.mxu0 0.0
  %682 = vmatpush1.msra.mxu0 %v653
  %683 = vmatprep.subr.mxu0 0.0
  %684 = vmatpush1.msra.mxu0 %v652
  %685 = vmatprep.subr.mxu0 0.0
  %686 = vmatpush1.msra.mxu0 %v651
  %687 = vmatprep.subr.mxu0 0.0
  %688 = vmatpush1.msra.mxu0 %v650
  %689 = vmatprep.subr.mxu0 0.0
  %690 = vmatpush1.msra.mxu0 %v649
  %691 = vmatprep.subr.mxu0 0.0
  %692 = vmatpush1.msra.mxu0 %v648
  %693 = vmatprep.subr.mxu0 0.0
  %694 = vmatpush1.msra.mxu0 %v647
  %695 = vmatprep.subr.mxu0 0.0
  %696 = vmatpush1.msra.mxu0 %v646
  %697 = vmatprep.subr.mxu0 0.0
  %698 = vmatpush1.msra.mxu0 %v645
  %699 = vmatprep.subr.mxu0 0.0
  %700 = vmatpush1.msra.mxu0 %v644
  %701 = vmatprep.subr.mxu0 0.0
  %702 = vmatpush2.msra.mxu0 0.0
  %703 = vmatprep.subr.mxu0 0.0
  %704 = vmatpush2.msra.mxu0 0.0
  %705 = vmatprep.subr.mxu0 0.0
  %706 = vmatpush2.msra.mxu0 0.0
  %707 = vmatprep.subr.mxu0 0.0
  %708 = vmatpush2.msra.mxu0 0.0
  %709 = vmatprep.subr.mxu0 0.0
  %710 = vmatpush2.msra.mxu0 0.0
  %711 = vmatprep.subr.mxu0 0.0
  %712 = vmatpush2.msra.mxu0 0.0
  %713 = vmatprep.subr.mxu0 0.0
  %714 = vmatpush2.msra.mxu0 0.0
  %715 = vmatprep.subr.mxu0 0.0
  %716 = vmatpush2.msra.mxu0 0.0
  %717 = vmatprep.subr.mxu0 0.0
  %718 = vmatpush2.msra.mxu0 0.0
  %719 = vmatprep.subr.mxu0 0.0
  %720 = vmatpush2.msra.mxu0 0.0
  %721 = vmatprep.subr.mxu0 0.0
  %722 = vmatpush2.msra.mxu0 0.0
  %723 = vmatprep.subr.mxu0 0.0
  %724 = vmatpush2.msra.mxu0 0.0
  %725 = vmatprep.subr.mxu0 0.0
  %726 = vmatpush2.msra.mxu0 0.0
  %727 = vmatprep.subr.mxu0 0.0
  %728 = vmatpush2.msra.mxu0 0.0
  %729 = vmatprep.subr.mxu0 0.0
  %730 = vmatpush2.msra.mxu0 0.0
  %731 = vmatprep.subr.mxu0 0.0
  %732 = vmatpush2.msra.mxu0 0.0
  %733 = vmatprep.mubr.f32.mxu0 0.0
  %734 = vmatmul.mubr.f32.gmra.mxu0 %v658
  %v735 = vpop.f32.mrf.mxu0
  %v736 = vadd.f32 0.0, %v735
  %v737 = vpop.f32.mrf.mxu0
  %738 = vmatprep.mubr.f32.mxu0 0.0
  %739 = vmatmul.mubr.f32.gmra.mxu0 %v661
  %v740 = vpop.f32.mrf.mxu0
  %v741 = vadd.f32 0.0, %v740
  %v742 = vpop.f32.mrf.mxu0
  %743 = vmatprep.mubr.f32.mxu0 0.0
  %744 = vmatmul.mubr.f32.gmra.mxu0 %v664
  %v745 = vpop.f32.mrf.mxu0
  %v746 = vadd.f32 0.0, %v745
  %v747 = vpop.f32.mrf.mxu0
  %748 = vmatprep.mubr.f32.mxu0 0.0
  %749 = vmatmul.mubr.f32.gmra.mxu0 %v667
  %v750 = vpop.f32.mrf.mxu0
  %v751 = vadd.f32 0.0, %v750
  %v752 = vpop.f32.mrf.mxu0
  %753 = vdwg.mxu0
  %v754 = vld [vmem:[%s9] sm:$0xff]
  %v755 = vld [vmem:[%s9 + $0x8] sm:$0xff]
  %v756 = vld [vmem:[%s9 + $0x10] sm:$0xff]
  %v757 = vld [vmem:[%s9 + $0x18] sm:$0xff]
  %v758 = vld [vmem:[%s10] sm:$0xff]
  %v759 = vld [vmem:[%s10 + $0x8] sm:$0xff]
  %v760 = vld [vmem:[%s10 + $0x10] sm:$0xff]
  %v761 = vld [vmem:[%s10 + $0x18] sm:$0xff]
  %v762 = vmul.f32 %v736, %v238
  %v763 = vmul.f32 %v741, %v238
  %v764 = vmul.f32 %v746, %v238
  %v765 = vmul.f32 %v751, %v238
  %766 = vadd.xlane.f32.xlu0 %v762
  %v767 = vpop.xlane.xlu0 %766
  %768 = vadd.xlane.f32.xlu0 %v763
  %v769 = vpop.xlane.xlu0 %768
  %770 = vadd.xlane.f32.xlu0 %v764
  %v771 = vpop.xlane.xlu0 %770
  %772 = vadd.xlane.f32.xlu0 %v765
  %v773 = vpop.xlane.xlu0 %772
  %v774 = vmul.f32 %v767, 0.05
  %v775 = vmul.f32 %v769, 0.05
  %v776 = vmul.f32 %v771, 0.05
  %v777 = vmul.f32 %v773, 0.05
  %v778 = vsub.f32 %v736, %v774
  %v779 = vsub.f32 %v741, %v775
  %v780 = vsub.f32 %v746, %v776
  %v781 = vsub.f32 %v751, %v777
  %v782 = vmul.f32 %v778, %v238
  %v783 = vmul.f32 %v779, %v238
  %v784 = vmul.f32 %v780, %v238
  %v785 = vmul.f32 %v781, %v238
  %v786 = vmul.f32 %v782, %v782
  %v787 = vmul.f32 %v783, %v783
  %v788 = vmul.f32 %v784, %v784
  %v789 = vmul.f32 %v785, %v785
  %790 = vadd.xlane.f32.xlu0 %v786
  %v791 = vpop.xlane.xlu0 %790
  %792 = vadd.xlane.f32.xlu0 %v787
  %v793 = vpop.xlane.xlu0 %792
  %794 = vadd.xlane.f32.xlu0 %v788
  %v795 = vpop.xlane.xlu0 %794
  %796 = vadd.xlane.f32.xlu0 %v789
  %v797 = vpop.xlane.xlu0 %796
  %v798 = vmul.f32 %v791, 0.05
  %v799 = vmul.f32 %v793, 0.05
  %v800 = vmul.f32 %v795, 0.05
  %v801 = vmul.f32 %v797, 0.05
  %v802 = vadd.f32 %v798, 1e-05
  %v803 = vadd.f32 %v799, 1e-05
  %v804 = vadd.f32 %v800, 1e-05
  %v805 = vadd.f32 %v801, 1e-05
  %v806 = vrsqrt.pop %v802
  %v807 = vrsqrt.pop %v803
  %v808 = vrsqrt.pop %v804
  %v809 = vrsqrt.pop %v805
  %v810 = vmul.f32 %v806, %v754
  %v811 = vmul.f32 %v807, %v755
  %v812 = vmul.f32 %v808, %v756
  %v813 = vmul.f32 %v809, %v757
  %815 = vset.pattern.permute.xlu0 0
  %816 = vperm.xlu0 %815, %v810
  %v817 = vpop.permute.xlu0 %816
  %820 = vset.pattern.permute.xlu0 0
  %821 = vperm.xlu0 %820, %v811
  %v822 = vpop.permute.xlu0 %821
  %825 = vset.pattern.permute.xlu0 0
  %826 = vperm.xlu0 %825, %v812
  %v827 = vpop.permute.xlu0 %826
  %830 = vset.pattern.permute.xlu0 0
  %831 = vperm.xlu0 %830, %v813
  %v832 = vpop.permute.xlu0 %831
  %v834 = vmul.f32 %v782, %v817
  %v835 = vmul.f32 %v783, %v822
  %v836 = vmul.f32 %v784, %v827
  %v837 = vmul.f32 %v785, %v832
  %839 = vset.pattern.permute.xlu0 0
  %840 = vperm.xlu0 %839, %v758
  %v841 = vpop.permute.xlu0 %840
  %844 = vset.pattern.permute.xlu0 0
  %845 = vperm.xlu0 %844, %v759
  %v846 = vpop.permute.xlu0 %845
  %849 = vset.pattern.permute.xlu0 0
  %850 = vperm.xlu0 %849, %v760
  %v851 = vpop.permute.xlu0 %850
  %854 = vset.pattern.permute.xlu0 0
  %855 = vperm.xlu0 %854, %v761
  %v856 = vpop.permute.xlu0 %855
  %v858 = vadd.f32 %v834, %v841
  %v859 = vadd.f32 %v835, %v846
  %v860 = vadd.f32 %v836, %v851
  %v861 = vadd.f32 %v837, %v856
  %v862 = vtanh.pop %v858
  %v863 = vtanh.pop %v859
  %v864 = vtanh.pop %v860
  %v865 = vtanh.pop %v861
  %v866 = vmul.f32 %v862, %v238
  %v867 = vmul.f32 %v863, %v238
  %v868 = vmul.f32 %v864, %v238
  %v869 = vmul.f32 %v865, %v238
  %870 = vst [vmem:[%s11] sm:$0xff] %v866
  %871 = vst [vmem:[%s11 + $0x8] sm:$0xff] %v867
  %872 = vst [vmem:[%s11 + $0x10] sm:$0xff] %v868
  %873 = vst [vmem:[%s11 + $0x18] sm:$0xff] %v869
  // Predicated region
  $region46: #{unet1d_forward.15} parent=0 // pred_check
    _
  $region47: #{unet1d_forward.15} parent=0 // pred_check_branch
    %875 = sbr.rel (0) target = $region49
  $region48: #{unet1d_forward.15} parent=0 // pred_region
    _
  $region49: #{unet1d_forward.15} parent=0 // pred_fallthru
    _
  // Predicated region
  $region50: #{unet1d_forward.15} parent=0 // pred_check
    _
  $region51: #{unet1d_forward.15} parent=0 // pred_check_branch
    %877 = sbr.rel (0) target = $region53
  $region52: #{unet1d_forward.15} parent=0 // pred_region
    _
  $region53: #{unet1d_forward.15} parent=0 // pred_fallthru
    _

// kernel: unet1d_forward.16
$region0: #{unet1d_forward.16}
  #allocation0 [shape = 'u32[]', space=smem, size = 0x4, offset = 0x4, fixed_abs, tag = 'smem constant byte address 0x4 - core index']
  #allocation1 [shape = 'u32[144,128]{1,0:T(1,128)}', space=vmem, size = 0x12000, scoped, tag = 'internal scratch']
  #allocation2 [shape = 'f32[96,128]{1,0:T(8,128)}', space=vmem, size = 0xc000, scoped, tag = 'scratch operand']
  %s0 = inlined_call_operand.vmem [shape: f32[32,128], index: 0, kind: input, shape index: {}]
  %s1 = inlined_call_operand.vmem [shape: f32[16,128], index: 1, kind: input, shape index: {}]
  %s2 = inlined_call_operand.vmem [shape: f32[1,128], index: 2, kind: input, shape index: {}]
  %s3 = inlined_call_operand.vmem [shape: f32[16,64], index: 3, kind: input, shape index: {}]
  %s4 = inlined_call_operand.vmem [shape: f32[16,1], index: 4, kind: input, shape index: {}]
  %s5 = inlined_call_operand.vmem [shape: f32[16,96], index: 5, kind: input, shape index: {}]
  %s6 = inlined_call_operand.vmem [shape: f32[16,1], index: 6, kind: input, shape index: {}]
  %s7 = inlined_call_operand.vmem [shape: f32[16,1], index: 7, kind: input, shape index: {}]
  %s8 = inlined_call_operand.vmem [shape: f32[16,48], index: 8, kind: input, shape index: {}]
  %s9 = inlined_call_operand.vmem [shape: f32[16,1], index: 9, kind: input, shape index: {}]
  %s10 = inlined_call_operand.vmem [shape: f32[16,1], index: 10, kind: input, shape index: {}]
  %s11 = inlined_call_operand.vmem [shape: f32[16,128], index: 11, kind: output, shape index: {}]
  %s12 = sld [smem:[#allocation0]]
  $region54: #{unet1d_forward.16} parent=0
    _
  %s14 = ssub.s32 1, %s12
  %s15 = scalar_select 0, %s14, %s12
  // Predicated region
  $region2: #{unet1d_forward.16} parent=0 // pred_check
    _
  $region3: #{unet1d_forward.16} parent=0 // pred_check_branch
    %17 = sbr.rel (0) target = $region5
  $region4: #{unet1d_forward.16} parent=0 // pred_region
    _
  $region5: #{unet1d_forward.16} parent=0 // pred_fallthru
    _
  // Predicated region
  $region6: #{unet1d_forward.16} parent=0 // pred_check
    _
  $region7: #{unet1d_forward.16} parent=0 // pred_check_branch
    %19 = sbr.rel (0) target = $region9
  $region8: #{unet1d_forward.16} parent=0 // pred_region
    _
  $region9: #{unet1d_forward.16} parent=0 // pred_fallthru
    _
  // Predicated region
  $region10: #{unet1d_forward.16} parent=0 // pred_check
    _
  $region11: #{unet1d_forward.16} parent=0 // pred_check_branch
    %21 = sbr.rel (0) target = $region13
  $region12: #{unet1d_forward.16} parent=0 // pred_region
    _
  $region13: #{unet1d_forward.16} parent=0 // pred_fallthru
    _
  // Predicated region
  $region14: #{unet1d_forward.16} parent=0 // pred_check
    _
  $region15: #{unet1d_forward.16} parent=0 // pred_check_branch
    %23 = sbr.rel (0) target = $region17
  $region16: #{unet1d_forward.16} parent=0 // pred_region
    _
  $region17: #{unet1d_forward.16} parent=0 // pred_fallthru
    _
  // Predicated region
  $region18: #{unet1d_forward.16} parent=0 // pred_check
    _
  $region19: #{unet1d_forward.16} parent=0 // pred_check_branch
    %25 = sbr.rel (0) target = $region21
  $region20: #{unet1d_forward.16} parent=0 // pred_region
    _
  $region21: #{unet1d_forward.16} parent=0 // pred_fallthru
    _
  // Predicated region
  $region22: #{unet1d_forward.16} parent=0 // pred_check
    _
  $region23: #{unet1d_forward.16} parent=0 // pred_check_branch
    %27 = sbr.rel (0) target = $region25
  $region24: #{unet1d_forward.16} parent=0 // pred_region
    _
  $region25: #{unet1d_forward.16} parent=0 // pred_fallthru
    _
  // Predicated region
  $region26: #{unet1d_forward.16} parent=0 // pred_check
    _
  $region27: #{unet1d_forward.16} parent=0 // pred_check_branch
    %29 = sbr.rel (0) target = $region29
  $region28: #{unet1d_forward.16} parent=0 // pred_region
    _
  $region29: #{unet1d_forward.16} parent=0 // pred_fallthru
    _
  // Predicated region
  $region30: #{unet1d_forward.16} parent=0 // pred_check
    _
  $region31: #{unet1d_forward.16} parent=0 // pred_check_branch
    %31 = sbr.rel (0) target = $region33
  $region32: #{unet1d_forward.16} parent=0 // pred_region
    _
  $region33: #{unet1d_forward.16} parent=0 // pred_fallthru
    _
  // Predicated region
  $region34: #{unet1d_forward.16} parent=0 // pred_check
    _
  $region35: #{unet1d_forward.16} parent=0 // pred_check_branch
    %33 = sbr.rel (0) target = $region37
  $region36: #{unet1d_forward.16} parent=0 // pred_region
    _
  $region37: #{unet1d_forward.16} parent=0 // pred_fallthru
    _
  // Predicated region
  $region38: #{unet1d_forward.16} parent=0 // pred_check
    _
  $region39: #{unet1d_forward.16} parent=0 // pred_check_branch
    %35 = sbr.rel (0) target = $region41
  $region40: #{unet1d_forward.16} parent=0 // pred_region
    _
  $region41: #{unet1d_forward.16} parent=0 // pred_fallthru
    _
  // Predicated region
  $region42: #{unet1d_forward.16} parent=0 // pred_check
    _
  $region43: #{unet1d_forward.16} parent=0 // pred_check_branch
    %37 = sbr.rel (0) target = $region45
  $region44: #{unet1d_forward.16} parent=0 // pred_region
    _
  $region45: #{unet1d_forward.16} parent=0 // pred_fallthru
    _
  %v38 = vld [vmem:[%s2] sm:$0x1]
  %v39 = vld [vmem:[%s3] sm:$0xff]
  %v40 = vld [vmem:[%s3 + $0x8] sm:$0xff]
  %v41 = vld [vmem:[%s0] sm:$0xff]
  %v42 = vld [vmem:[%s0 + $0x8] sm:$0xff]
  %v43 = vld [vmem:[%s0 + $0x10] sm:$0xff]
  %v44 = vld [vmem:[%s0 + $0x18] sm:$0xff]
  %49 = vrot.lane.b32.xlu0 %v41, 1
  %v50 = vpop.permute.xlu0 %49
  %51 = vrot.lane.b32.xlu0 %v42, 1
  %v52 = vpop.permute.xlu0 %51
  %53 = vrot.lane.b32.xlu0 %v43, 1
  %v54 = vpop.permute.xlu0 %53
  %55 = vrot.lane.b32.xlu0 %v44, 1
  %v56 = vpop.permute.xlu0 %55
  %vm61 = vcmask 1047560
  %62 = vst.msk [vmem:[#allocation2] sm:$0xff] %vm61, %v50
  %63 = vst.msk [vmem:[#allocation2 + $0x8] sm:$0xff] %vm61, %v52
  %64 = vst.msk [vmem:[#allocation2 + $0x10] sm:$0xff] %vm61, %v54
  %65 = vst.msk [vmem:[#allocation2 + $0x18] sm:$0xff] %vm61, %v56
  %vm66 = vcmask 7168
  %67 = vst.msk [vmem:[#allocation2] sm:$0xff] %vm66, 0.0
  %68 = vst.msk [vmem:[#allocation2 + $0x8] sm:$0xff] %vm66, 0.0
  %69 = vst.msk [vmem:[#allocation2 + $0x10] sm:$0xff] %vm66, 0.0
  %70 = vst.msk [vmem:[#allocation2 + $0x18] sm:$0xff] %vm66, 0.0
  %71 = vst [vmem:[#allocation2 + $0x20] sm:$0xff] %v41
  %72 = vst [vmem:[#allocation2 + $0x28] sm:$0xff] %v42
  %73 = vst [vmem:[#allocation2 + $0x30] sm:$0xff] %v43
  %74 = vst [vmem:[#allocation2 + $0x38] sm:$0xff] %v44
  %v75 = vld [vmem:[#allocation2] sm:$0xff]
  %v76 = vld [vmem:[#allocation2 + $0x8] sm:$0xff]
  %v77 = vld [vmem:[#allocation2 + $0x10] sm:$0xff]
  %v78 = vld [vmem:[#allocation2 + $0x18] sm:$0xff]
  %v79 = vld [vmem:[#allocation2 + $0x20] sm:$0xff]
  %v80 = vld [vmem:[#allocation2 + $0x28] sm:$0xff]
  %v81 = vld [vmem:[#allocation2 + $0x30] sm:$0xff]
  %v82 = vld [vmem:[#allocation2 + $0x38] sm:$0xff]
  %v83 = vld [vmem:[%s4] sm:$0xff]
  %v84 = vld [vmem:[%s4 + $0x8] sm:$0xff]
  %86 = vset.pattern.permute.xlu0 0
  %87 = vperm.xlu0 %86, %v83
  %v88 = vpop.permute.xlu0 %87
  %91 = vset.pattern.permute.xlu0 0
  %92 = vperm.xlu0 %91, %v84
  %v93 = vpop.permute.xlu0 %92
  %vm95 = vcmask 523264
  %v97 = vsel %vm95, %v39, 0
  %v100 = vsel %vm95, %v40, 0
  %102 = vmatprep.subr.mxu0 0.0
  %103 = vmatpush1.msra.mxu0 0.0
  %104 = vmatprep.subr.mxu0 0.0
  %105 = vmatpush1.msra.mxu0 0.0
  %106 = vmatprep.subr.mxu0 0.0
  %107 = vmatpush1.msra.mxu0 0.0
  %108 = vmatprep.subr.mxu0 0.0
  %109 = vmatpush1.msra.mxu0 0.0
  %110 = vmatprep.subr.mxu0 0.0
  %111 = vmatpush1.msra.mxu0 0.0
  %112 = vmatprep.subr.mxu0 0.0
  %113 = vmatpush1.msra.mxu0 0.0
  %114 = vmatprep.subr.mxu0 0.0
  %115 = vmatpush1.msra.mxu0 0.0
  %116 = vmatprep.subr.mxu0 0.0
  %117 = vmatpush1.msra.mxu0 0.0
  %118 = vmatprep.subr.mxu0 0.0
  %119 = vmatpush1.msra.mxu0 %v82
  %120 = vmatprep.subr.mxu0 0.0
  %121 = vmatpush1.msra.mxu0 %v81
  %122 = vmatprep.subr.mxu0 0.0
  %123 = vmatpush1.msra.mxu0 %v80
  %124 = vmatprep.subr.mxu0 0.0
  %125 = vmatpush1.msra.mxu0 %v79
  %126 = vmatprep.subr.mxu0 0.0
  %127 = vmatpush1.msra.mxu0 %v78
  %128 = vmatprep.subr.mxu0 0.0
  %129 = vmatpush1.msra.mxu0 %v77
  %130 = vmatprep.subr.mxu0 0.0
  %131 = vmatpush1.msra.mxu0 %v76
  %132 = vmatprep.subr.mxu0 0.0
  %133 = vmatpush1.msra.mxu0 %v75
  %134 = vmatprep.subr.mxu0 0.0
  %135 = vmatpush2.msra.mxu0 0.0
  %136 = vmatprep.subr.mxu0 0.0
  %137 = vmatpush2.msra.mxu0 0.0
  %138 = vmatprep.subr.mxu0 0.0
  %139 = vmatpush2.msra.mxu0 0.0
  %140 = vmatprep.subr.mxu0 0.0
  %141 = vmatpush2.msra.mxu0 0.0
  %142 = vmatprep.subr.mxu0 0.0
  %143 = vmatpush2.msra.mxu0 0.0
  %144 = vmatprep.subr.mxu0 0.0
  %145 = vmatpush2.msra.mxu0 0.0
  %146 = vmatprep.subr.mxu0 0.0
  %147 = vmatpush2.msra.mxu0 0.0
  %148 = vmatprep.subr.mxu0 0.0
  %149 = vmatpush2.msra.mxu0 0.0
  %150 = vmatprep.subr.mxu0 0.0
  %151 = vmatpush2.msra.mxu0 0.0
  %152 = vmatprep.subr.mxu0 0.0
  %153 = vmatpush2.msra.mxu0 0.0
  %154 = vmatprep.subr.mxu0 0.0
  %155 = vmatpush2.msra.mxu0 0.0
  %156 = vmatprep.subr.mxu0 0.0
  %157 = vmatpush2.msra.mxu0 0.0
  %158 = vmatprep.subr.mxu0 0.0
  %159 = vmatpush2.msra.mxu0 0.0
  %160 = vmatprep.subr.mxu0 0.0
  %161 = vmatpush2.msra.mxu0 0.0
  %162 = vmatprep.subr.mxu0 0.0
  %163 = vmatpush2.msra.mxu0 0.0
  %164 = vmatprep.subr.mxu0 0.0
  %165 = vmatpush2.msra.mxu0 0.0
  %166 = vmatprep.mubr.f32.mxu0 0.0
  %167 = vmatmul.mubr.f32.gmra.mxu0 %v97
  %v168 = vpop.f32.mrf.mxu0
  %v169 = vadd.f32 %v88, %v168
  %v170 = vpop.f32.mrf.mxu0
  %171 = vmatprep.mubr.f32.mxu0 0.0
  %172 = vmatmul.mubr.f32.gmra.mxu0 %v100
  %v173 = vpop.f32.mrf.mxu0
  %v174 = vadd.f32 %v93, %v173
  %v175 = vpop.f32.mrf.mxu0
  %176 = vdwg.mxu0
  %v178 = vlaneseq
  %v179 = vshrl.u32 %v178, 7
  %v180 = vsub.s32 0, %v179
  %v181 = vrot.slane %v38, %v180
  %v183 = vmul.f32 %v169, %v181
  %v184 = vmul.f32 %v174, %v181
  %v185 = vld [vmem:[%s5] sm:$0xff]
  %v186 = vld [vmem:[%s5 + $0x8] sm:$0xff]
  %v187 = vld [vmem:[%s1] sm:$0xff]
  %v188 = vld [vmem:[%s1 + $0x8] sm:$0xff]
  %191 = vrot.lane.b32.xlu0 %v183, 1
  %v192 = vpop.permute.xlu0 %191
  %193 = vrot.lane.b32.xlu0 %v184, 1
  %v194 = vpop.permute.xlu0 %193
  %197 = vst.msk [vmem:[#allocation2] sm:$0xff] %vm61, %v192
  %198 = vst.msk [vmem:[#allocation2 + $0x8] sm:$0xff] %vm61, %v194
  %199 = vst.msk [vmem:[#allocation2] sm:$0xff] %vm66, 0.0
  %200 = vst.msk [vmem:[#allocation2 + $0x8] sm:$0xff] %vm66, 0.0
  %203 = vrot.lane.b32.xlu0 %v187, 1
  %v204 = vpop.permute.xlu0 %203
  %205 = vrot.lane.b32.xlu0 %v188, 1
  %v206 = vpop.permute.xlu0 %205
  %209 = vst.msk [vmem:[#allocation2 + $0x10] sm:$0xff] %vm61, %v204
  %210 = vst.msk [vmem:[#allocation2 + $0x18] sm:$0xff] %vm61, %v206
  %211 = vst.msk [vmem:[#allocation2 + $0x10] sm:$0xff] %vm66, 0.0
  %212 = vst.msk [vmem:[#allocation2 + $0x18] sm:$0xff] %vm66, 0.0
  %213 = vst [vmem:[#allocation2 + $0x20] sm:$0xff] %v183
  %214 = vst [vmem:[#allocation2 + $0x28] sm:$0xff] %v184
  %215 = vst [vmem:[#allocation2 + $0x30] sm:$0xff] %v187
  %216 = vst [vmem:[#allocation2 + $0x38] sm:$0xff] %v188
  %217 = vrot.lane.b32.xlu0 %v183, 127
  %v218 = vpop.permute.xlu0 %217
  %219 = vrot.lane.b32.xlu0 %v184, 127
  %v220 = vpop.permute.xlu0 %219
  %vm223 = vcmask 1039360
  %224 = vst.msk [vmem:[#allocation2 + $0x40] sm:$0xff] %vm223, %v218
  %225 = vst.msk [vmem:[#allocation2 + $0x48] sm:$0xff] %vm223, %v220
  %vm226 = vcmask 1048568
  %227 = vst.msk [vmem:[#allocation2 + $0x40] sm:$0xff] %vm226, 0.0
  %228 = vst.msk [vmem:[#allocation2 + $0x48] sm:$0xff] %vm226, 0.0
  %229 = vrot.lane.b32.xlu0 %v187, 127
  %v230 = vpop.permute.xlu0 %229
  %231 = vrot.lane.b32.xlu0 %v188, 127
  %v232 = vpop.permute.xlu0 %231
  %235 = vst.msk [vmem:[#allocation2 + $0x50] sm:$0xff] %vm223, %v230
  %236 = vst.msk [vmem:[#allocation2 + $0x58] sm:$0xff] %vm223, %v232
  %237 = vst.msk [vmem:[#allocation2 + $0x50] sm:$0xff] %vm226, 0.0
  %238 = vst.msk [vmem:[#allocation2 + $0x58] sm:$0xff] %vm226, 0.0
  %v239 = vld [vmem:[#allocation2] sm:$0xff]
  %v240 = vld [vmem:[#allocation2 + $0x8] sm:$0xff]
  %v241 = vld [vmem:[#allocation2 + $0x10] sm:$0xff]
  %v242 = vld [vmem:[#allocation2 + $0x18] sm:$0xff]
  %v243 = vld [vmem:[#allocation2 + $0x20] sm:$0xff]
  %v244 = vld [vmem:[#allocation2 + $0x28] sm:$0xff]
  %v245 = vld [vmem:[#allocation2 + $0x30] sm:$0xff]
  %v246 = vld [vmem:[#allocation2 + $0x38] sm:$0xff]
  %v247 = vld [vmem:[#allocation2 + $0x40] sm:$0xff]
  %v248 = vld [vmem:[#allocation2 + $0x48] sm:$0xff]
  %v249 = vld [vmem:[#allocation2 + $0x50] sm:$0xff]
  %v250 = vld [vmem:[#allocation2 + $0x58] sm:$0xff]
  %vm251 = vcmask 785408
  %v253 = vsel %vm251, %v185, 0
  %v256 = vsel %vm251, %v186, 0
  %258 = vmatprep.subr.mxu0 0.0
  %259 = vmatpush1.msra.mxu0 0.0
  %260 = vmatprep.subr.mxu0 0.0
  %261 = vmatpush1.msra.mxu0 0.0
  %262 = vmatprep.subr.mxu0 0.0
  %263 = vmatpush1.msra.mxu0 0.0
  %264 = vmatprep.subr.mxu0 0.0
  %265 = vmatpush1.msra.mxu0 0.0
  %266 = vmatprep.subr.mxu0 0.0
  %267 = vmatpush1.msra.mxu0 %v250
  %268 = vmatprep.subr.mxu0 0.0
  %269 = vmatpush1.msra.mxu0 %v249
  %270 = vmatprep.subr.mxu0 0.0
  %271 = vmatpush1.msra.mxu0 %v248
  %272 = vmatprep.subr.mxu0 0.0
  %273 = vmatpush1.msra.mxu0 %v247
  %274 = vmatprep.subr.mxu0 0.0
  %275 = vmatpush1.msra.mxu0 %v246
  %276 = vmatprep.subr.mxu0 0.0
  %277 = vmatpush1.msra.mxu0 %v245
  %278 = vmatprep.subr.mxu0 0.0
  %279 = vmatpush1.msra.mxu0 %v244
  %280 = vmatprep.subr.mxu0 0.0
  %281 = vmatpush1.msra.mxu0 %v243
  %282 = vmatprep.subr.mxu0 0.0
  %283 = vmatpush1.msra.mxu0 %v242
  %284 = vmatprep.subr.mxu0 0.0
  %285 = vmatpush1.msra.mxu0 %v241
  %286 = vmatprep.subr.mxu0 0.0
  %287 = vmatpush1.msra.mxu0 %v240
  %288 = vmatprep.subr.mxu0 0.0
  %289 = vmatpush1.msra.mxu0 %v239
  %290 = vmatprep.subr.mxu0 0.0
  %291 = vmatpush2.msra.mxu0 0.0
  %292 = vmatprep.subr.mxu0 0.0
  %293 = vmatpush2.msra.mxu0 0.0
  %294 = vmatprep.subr.mxu0 0.0
  %295 = vmatpush2.msra.mxu0 0.0
  %296 = vmatprep.subr.mxu0 0.0
  %297 = vmatpush2.msra.mxu0 0.0
  %298 = vmatprep.subr.mxu0 0.0
  %299 = vmatpush2.msra.mxu0 0.0
  %300 = vmatprep.subr.mxu0 0.0
  %301 = vmatpush2.msra.mxu0 0.0
  %302 = vmatprep.subr.mxu0 0.0
  %303 = vmatpush2.msra.mxu0 0.0
  %304 = vmatprep.subr.mxu0 0.0
  %305 = vmatpush2.msra.mxu0 0.0
  %306 = vmatprep.subr.mxu0 0.0
  %307 = vmatpush2.msra.mxu0 0.0
  %308 = vmatprep.subr.mxu0 0.0
  %309 = vmatpush2.msra.mxu0 0.0
  %310 = vmatprep.subr.mxu0 0.0
  %311 = vmatpush2.msra.mxu0 0.0
  %312 = vmatprep.subr.mxu0 0.0
  %313 = vmatpush2.msra.mxu0 0.0
  %314 = vmatprep.subr.mxu0 0.0
  %315 = vmatpush2.msra.mxu0 0.0
  %316 = vmatprep.subr.mxu0 0.0
  %317 = vmatpush2.msra.mxu0 0.0
  %318 = vmatprep.subr.mxu0 0.0
  %319 = vmatpush2.msra.mxu0 0.0
  %320 = vmatprep.subr.mxu0 0.0
  %321 = vmatpush2.msra.mxu0 0.0
  %322 = vmatprep.mubr.f32.mxu0 0.0
  %323 = vmatmul.mubr.f32.gmra.mxu0 %v253
  %v324 = vpop.f32.mrf.mxu0
  %v325 = vadd.f32 0.0, %v324
  %v326 = vpop.f32.mrf.mxu0
  %327 = vmatprep.mubr.f32.mxu0 0.0
  %328 = vmatmul.mubr.f32.gmra.mxu0 %v256
  %v329 = vpop.f32.mrf.mxu0
  %v330 = vadd.f32 0.0, %v329
  %v331 = vpop.f32.mrf.mxu0
  %332 = vdwg.mxu0
  %v333 = vld [vmem:[%s6] sm:$0xff]
  %v334 = vld [vmem:[%s6 + $0x8] sm:$0xff]
  %v335 = vld [vmem:[%s7] sm:$0xff]
  %v336 = vld [vmem:[%s7 + $0x8] sm:$0xff]
  %v337 = vmul.f32 %v325, %v181
  %v338 = vmul.f32 %v330, %v181
  %339 = vadd.xlane.f32.xlu0 %v337
  %v340 = vpop.xlane.xlu0 %339
  %341 = vadd.xlane.f32.xlu0 %v338
  %v342 = vpop.xlane.xlu0 %341
  %v343 = vmul.f32 %v340, 0.025
  %v344 = vmul.f32 %v342, 0.025
  %v345 = vsub.f32 %v325, %v343
  %v346 = vsub.f32 %v330, %v344
  %v347 = vmul.f32 %v345, %v181
  %v348 = vmul.f32 %v346, %v181
  %v349 = vmul.f32 %v347, %v347
  %v350 = vmul.f32 %v348, %v348
  %351 = vadd.xlane.f32.xlu0 %v349
  %v352 = vpop.xlane.xlu0 %351
  %353 = vadd.xlane.f32.xlu0 %v350
  %v354 = vpop.xlane.xlu0 %353
  %v355 = vmul.f32 %v352, 0.025
  %v356 = vmul.f32 %v354, 0.025
  %v357 = vadd.f32 %v355, 1e-05
  %v358 = vadd.f32 %v356, 1e-05
  %v359 = vrsqrt.pop %v357
  %v360 = vrsqrt.pop %v358
  %v361 = vmul.f32 %v359, %v333
  %v362 = vmul.f32 %v360, %v334
  %364 = vset.pattern.permute.xlu0 0
  %365 = vperm.xlu0 %364, %v361
  %v366 = vpop.permute.xlu0 %365
  %369 = vset.pattern.permute.xlu0 0
  %370 = vperm.xlu0 %369, %v362
  %v371 = vpop.permute.xlu0 %370
  %v373 = vmul.f32 %v347, %v366
  %v374 = vmul.f32 %v348, %v371
  %376 = vset.pattern.permute.xlu0 0
  %377 = vperm.xlu0 %376, %v335
  %v378 = vpop.permute.xlu0 %377
  %381 = vset.pattern.permute.xlu0 0
  %382 = vperm.xlu0 %381, %v336
  %v383 = vpop.permute.xlu0 %382
  %v385 = vadd.f32 %v373, %v378
  %v386 = vadd.f32 %v374, %v383
  %v387 = vtanh.pop %v385
  %v388 = vtanh.pop %v386
  %v389 = vmul.f32 %v387, %v181
  %v390 = vmul.f32 %v388, %v181
  %v391 = vld [vmem:[%s8] sm:$0xff]
  %v392 = vld [vmem:[%s8 + $0x8] sm:$0xff]
  %395 = vrot.lane.b32.xlu0 %v389, 1
  %v396 = vpop.permute.xlu0 %395
  %397 = vrot.lane.b32.xlu0 %v390, 1
  %v398 = vpop.permute.xlu0 %397
  %401 = vst.msk [vmem:[#allocation2] sm:$0xff] %vm61, %v396
  %402 = vst.msk [vmem:[#allocation2 + $0x8] sm:$0xff] %vm61, %v398
  %403 = vst.msk [vmem:[#allocation2] sm:$0xff] %vm66, 0.0
  %404 = vst.msk [vmem:[#allocation2 + $0x8] sm:$0xff] %vm66, 0.0
  %405 = vst [vmem:[#allocation2 + $0x10] sm:$0xff] %v389
  %406 = vst [vmem:[#allocation2 + $0x18] sm:$0xff] %v390
  %407 = vrot.lane.b32.xlu0 %v389, 127
  %v408 = vpop.permute.xlu0 %407
  %409 = vrot.lane.b32.xlu0 %v390, 127
  %v410 = vpop.permute.xlu0 %409
  %413 = vst.msk [vmem:[#allocation2 + $0x20] sm:$0xff] %vm223, %v408
  %414 = vst.msk [vmem:[#allocation2 + $0x28] sm:$0xff] %vm223, %v410
  %415 = vst.msk [vmem:[#allocation2 + $0x20] sm:$0xff] %vm226, 0.0
  %416 = vst.msk [vmem:[#allocation2 + $0x28] sm:$0xff] %vm226, 0.0
  %v417 = vld [vmem:[#allocation2] sm:$0xff]
  %v418 = vld [vmem:[#allocation2 + $0x8] sm:$0xff]
  %v419 = vld [vmem:[#allocation2 + $0x10] sm:$0xff]
  %v420 = vld [vmem:[#allocation2 + $0x18] sm:$0xff]
  %v421 = vld [vmem:[#allocation2 + $0x20] sm:$0xff]
  %v422 = vld [vmem:[#allocation2 + $0x28] sm:$0xff]
  %vm423 = vcmask 392192
  %v425 = vsel %vm423, %v391, 0
  %v428 = vsel %vm423, %v392, 0
  %430 = vmatprep.subr.mxu0 0.0
  %431 = vmatpush1.msra.mxu0 0.0
  %432 = vmatprep.subr.mxu0 0.0
  %433 = vmatpush1.msra.mxu0 0.0
  %434 = vmatprep.subr.mxu0 0.0
  %435 = vmatpush1.msra.mxu0 0.0
  %436 = vmatprep.subr.mxu0 0.0
  %437 = vmatpush1.msra.mxu0 0.0
  %438 = vmatprep.subr.mxu0 0.0
  %439 = vmatpush1.msra.mxu0 0.0
  %440 = vmatprep.subr.mxu0 0.0
  %441 = vmatpush1.msra.mxu0 0.0
  %442 = vmatprep.subr.mxu0 0.0
  %443 = vmatpush1.msra.mxu0 0.0
  %444 = vmatprep.subr.mxu0 0.0
  %445 = vmatpush1.msra.mxu0 0.0
  %446 = vmatprep.subr.mxu0 0.0
  %447 = vmatpush1.msra.mxu0 0.0
  %448 = vmatprep.subr.mxu0 0.0
  %449 = vmatpush1.msra.mxu0 0.0
  %450 = vmatprep.subr.mxu0 0.0
  %451 = vmatpush1.msra.mxu0 %v422
  %452 = vmatprep.subr.mxu0 0.0
  %453 = vmatpush1.msra.mxu0 %v421
  %454 = vmatprep.subr.mxu0 0.0
  %455 = vmatpush1.msra.mxu0 %v420
  %456 = vmatprep.subr.mxu0 0.0
  %457 = vmatpush1.msra.mxu0 %v419
  %458 = vmatprep.subr.mxu0 0.0
  %459 = vmatpush1.msra.mxu0 %v418
  %460 = vmatprep.subr.mxu0 0.0
  %461 = vmatpush1.msra.mxu0 %v417
  %462 = vmatprep.subr.mxu0 0.0
  %463 = vmatpush2.msra.mxu0 0.0
  %464 = vmatprep.subr.mxu0 0.0
  %465 = vmatpush2.msra.mxu0 0.0
  %466 = vmatprep.subr.mxu0 0.0
  %467 = vmatpush2.msra.mxu0 0.0
  %468 = vmatprep.subr.mxu0 0.0
  %469 = vmatpush2.msra.mxu0 0.0
  %470 = vmatprep.subr.mxu0 0.0
  %471 = vmatpush2.msra.mxu0 0.0
  %472 = vmatprep.subr.mxu0 0.0
  %473 = vmatpush2.msra.mxu0 0.0
  %474 = vmatprep.subr.mxu0 0.0
  %475 = vmatpush2.msra.mxu0 0.0
  %476 = vmatprep.subr.mxu0 0.0
  %477 = vmatpush2.msra.mxu0 0.0
  %478 = vmatprep.subr.mxu0 0.0
  %479 = vmatpush2.msra.mxu0 0.0
  %480 = vmatprep.subr.mxu0 0.0
  %481 = vmatpush2.msra.mxu0 0.0
  %482 = vmatprep.subr.mxu0 0.0
  %483 = vmatpush2.msra.mxu0 0.0
  %484 = vmatprep.subr.mxu0 0.0
  %485 = vmatpush2.msra.mxu0 0.0
  %486 = vmatprep.subr.mxu0 0.0
  %487 = vmatpush2.msra.mxu0 0.0
  %488 = vmatprep.subr.mxu0 0.0
  %489 = vmatpush2.msra.mxu0 0.0
  %490 = vmatprep.subr.mxu0 0.0
  %491 = vmatpush2.msra.mxu0 0.0
  %492 = vmatprep.subr.mxu0 0.0
  %493 = vmatpush2.msra.mxu0 0.0
  %494 = vmatprep.mubr.f32.mxu0 0.0
  %495 = vmatmul.mubr.f32.gmra.mxu0 %v425
  %v496 = vpop.f32.mrf.mxu0
  %v497 = vadd.f32 0.0, %v496
  %v498 = vpop.f32.mrf.mxu0
  %499 = vmatprep.mubr.f32.mxu0 0.0
  %500 = vmatmul.mubr.f32.gmra.mxu0 %v428
  %v501 = vpop.f32.mrf.mxu0
  %v502 = vadd.f32 0.0, %v501
  %v503 = vpop.f32.mrf.mxu0
  %504 = vdwg.mxu0
  %v505 = vld [vmem:[%s9] sm:$0xff]
  %v506 = vld [vmem:[%s9 + $0x8] sm:$0xff]
  %v507 = vld [vmem:[%s10] sm:$0xff]
  %v508 = vld [vmem:[%s10 + $0x8] sm:$0xff]
  %v509 = vmul.f32 %v497, %v181
  %v510 = vmul.f32 %v502, %v181
  %511 = vadd.xlane.f32.xlu0 %v509
  %v512 = vpop.xlane.xlu0 %511
  %513 = vadd.xlane.f32.xlu0 %v510
  %v514 = vpop.xlane.xlu0 %513
  %v515 = vmul.f32 %v512, 0.025
  %v516 = vmul.f32 %v514, 0.025
  %v517 = vsub.f32 %v497, %v515
  %v518 = vsub.f32 %v502, %v516
  %v519 = vmul.f32 %v517, %v181
  %v520 = vmul.f32 %v518, %v181
  %v521 = vmul.f32 %v519, %v519
  %v522 = vmul.f32 %v520, %v520
  %523 = vadd.xlane.f32.xlu0 %v521
  %v524 = vpop.xlane.xlu0 %523
  %525 = vadd.xlane.f32.xlu0 %v522
  %v526 = vpop.xlane.xlu0 %525
  %v527 = vmul.f32 %v524, 0.025
  %v528 = vmul.f32 %v526, 0.025
  %v529 = vadd.f32 %v527, 1e-05
  %v530 = vadd.f32 %v528, 1e-05
  %v531 = vrsqrt.pop %v529
  %v532 = vrsqrt.pop %v530
  %v533 = vmul.f32 %v531, %v505
  %v534 = vmul.f32 %v532, %v506
  %536 = vset.pattern.permute.xlu0 0
  %537 = vperm.xlu0 %536, %v533
  %v538 = vpop.permute.xlu0 %537
  %541 = vset.pattern.permute.xlu0 0
  %542 = vperm.xlu0 %541, %v534
  %v543 = vpop.permute.xlu0 %542
  %v545 = vmul.f32 %v519, %v538
  %v546 = vmul.f32 %v520, %v543
  %548 = vset.pattern.permute.xlu0 0
  %549 = vperm.xlu0 %548, %v507
  %v550 = vpop.permute.xlu0 %549
  %553 = vset.pattern.permute.xlu0 0
  %554 = vperm.xlu0 %553, %v508
  %v555 = vpop.permute.xlu0 %554
  %v557 = vadd.f32 %v545, %v550
  %v558 = vadd.f32 %v546, %v555
  %v559 = vtanh.pop %v557
  %v560 = vtanh.pop %v558
  %v561 = vmul.f32 %v559, %v181
  %v562 = vmul.f32 %v560, %v181
  %563 = vst [vmem:[%s11] sm:$0xff] %v561
  %564 = vst [vmem:[%s11 + $0x8] sm:$0xff] %v562
  // Predicated region
  $region46: #{unet1d_forward.16} parent=0 // pred_check
    _
  $region47: #{unet1d_forward.16} parent=0 // pred_check_branch
    %566 = sbr.rel (0) target = $region49
  $region48: #{unet1d_forward.16} parent=0 // pred_region
    _
  $region49: #{unet1d_forward.16} parent=0 // pred_fallthru
    _
  // Predicated region
  $region50: #{unet1d_forward.16} parent=0 // pred_check
    _
  $region51: #{unet1d_forward.16} parent=0 // pred_check_branch
    %568 = sbr.rel (0) target = $region53
  $region52: #{unet1d_forward.16} parent=0 // pred_region
    _
  $region53: #{unet1d_forward.16} parent=0 // pred_fallthru
    _

// kernel: unet1d_forward.17
$region0: #{unet1d_forward.17}
  #allocation0 [shape = 'u32[]', space=smem, size = 0x4, offset = 0x4, fixed_abs, tag = 'smem constant byte address 0x4 - core index']
  #allocation1 [shape = 'u32[144,128]{1,0:T(1,128)}', space=vmem, size = 0x12000, scoped, tag = 'internal scratch']
  #allocation2 [shape = 'f32[48,128]{1,0:T(8,128)}', space=vmem, size = 0x6000, scoped, tag = 'scratch operand']
  %s0 = inlined_call_operand.vmem [shape: f32[16,128], index: 0, kind: input, shape index: {}]
  %s1 = inlined_call_operand.vmem [shape: f32[8,128], index: 1, kind: input, shape index: {}]
  %s2 = inlined_call_operand.vmem [shape: f32[1,128], index: 2, kind: input, shape index: {}]
  %s3 = inlined_call_operand.vmem [shape: f32[8,32], index: 3, kind: input, shape index: {}]
  %s4 = inlined_call_operand.vmem [shape: f32[8,1], index: 4, kind: input, shape index: {}]
  %s5 = inlined_call_operand.vmem [shape: f32[8,48], index: 5, kind: input, shape index: {}]
  %s6 = inlined_call_operand.vmem [shape: f32[8,1], index: 6, kind: input, shape index: {}]
  %s7 = inlined_call_operand.vmem [shape: f32[8,1], index: 7, kind: input, shape index: {}]
  %s8 = inlined_call_operand.vmem [shape: f32[8,24], index: 8, kind: input, shape index: {}]
  %s9 = inlined_call_operand.vmem [shape: f32[8,1], index: 9, kind: input, shape index: {}]
  %s10 = inlined_call_operand.vmem [shape: f32[8,1], index: 10, kind: input, shape index: {}]
  %s11 = inlined_call_operand.vmem [shape: f32[4,8], index: 11, kind: input, shape index: {}]
  %s12 = inlined_call_operand.vmem [shape: f32[4,1], index: 12, kind: input, shape index: {}]
  %s13 = inlined_call_operand.vmem [shape: f32[4,128], index: 13, kind: output, shape index: {}]
  %s14 = sld [smem:[#allocation0]]
  $region62: #{unet1d_forward.17} parent=0
    _
  %s16 = ssub.s32 1, %s14
  %s17 = scalar_select 0, %s16, %s14
  // Predicated region
  $region2: #{unet1d_forward.17} parent=0 // pred_check
    _
  $region3: #{unet1d_forward.17} parent=0 // pred_check_branch
    %19 = sbr.rel (0) target = $region5
  $region4: #{unet1d_forward.17} parent=0 // pred_region
    _
  $region5: #{unet1d_forward.17} parent=0 // pred_fallthru
    _
  // Predicated region
  $region6: #{unet1d_forward.17} parent=0 // pred_check
    _
  $region7: #{unet1d_forward.17} parent=0 // pred_check_branch
    %21 = sbr.rel (0) target = $region9
  $region8: #{unet1d_forward.17} parent=0 // pred_region
    _
  $region9: #{unet1d_forward.17} parent=0 // pred_fallthru
    _
  // Predicated region
  $region10: #{unet1d_forward.17} parent=0 // pred_check
    _
  $region11: #{unet1d_forward.17} parent=0 // pred_check_branch
    %23 = sbr.rel (0) target = $region13
  $region12: #{unet1d_forward.17} parent=0 // pred_region
    _
  $region13: #{unet1d_forward.17} parent=0 // pred_fallthru
    _
  // Predicated region
  $region14: #{unet1d_forward.17} parent=0 // pred_check
    _
  $region15: #{unet1d_forward.17} parent=0 // pred_check_branch
    %25 = sbr.rel (0) target = $region17
  $region16: #{unet1d_forward.17} parent=0 // pred_region
    _
  $region17: #{unet1d_forward.17} parent=0 // pred_fallthru
    _
  // Predicated region
  $region18: #{unet1d_forward.17} parent=0 // pred_check
    _
  $region19: #{unet1d_forward.17} parent=0 // pred_check_branch
    %27 = sbr.rel (0) target = $region21
  $region20: #{unet1d_forward.17} parent=0 // pred_region
    _
  $region21: #{unet1d_forward.17} parent=0 // pred_fallthru
    _
  // Predicated region
  $region22: #{unet1d_forward.17} parent=0 // pred_check
    _
  $region23: #{unet1d_forward.17} parent=0 // pred_check_branch
    %29 = sbr.rel (0) target = $region25
  $region24: #{unet1d_forward.17} parent=0 // pred_region
    _
  $region25: #{unet1d_forward.17} parent=0 // pred_fallthru
    _
  // Predicated region
  $region26: #{unet1d_forward.17} parent=0 // pred_check
    _
  $region27: #{unet1d_forward.17} parent=0 // pred_check_branch
    %31 = sbr.rel (0) target = $region29
  $region28: #{unet1d_forward.17} parent=0 // pred_region
    _
  $region29: #{unet1d_forward.17} parent=0 // pred_fallthru
    _
  // Predicated region
  $region30: #{unet1d_forward.17} parent=0 // pred_check
    _
  $region31: #{unet1d_forward.17} parent=0 // pred_check_branch
    %33 = sbr.rel (0) target = $region33
  $region32: #{unet1d_forward.17} parent=0 // pred_region
    _
  $region33: #{unet1d_forward.17} parent=0 // pred_fallthru
    _
  // Predicated region
  $region34: #{unet1d_forward.17} parent=0 // pred_check
    _
  $region35: #{unet1d_forward.17} parent=0 // pred_check_branch
    %35 = sbr.rel (0) target = $region37
  $region36: #{unet1d_forward.17} parent=0 // pred_region
    _
  $region37: #{unet1d_forward.17} parent=0 // pred_fallthru
    _
  // Predicated region
  $region38: #{unet1d_forward.17} parent=0 // pred_check
    _
  $region39: #{unet1d_forward.17} parent=0 // pred_check_branch
    %37 = sbr.rel (0) target = $region41
  $region40: #{unet1d_forward.17} parent=0 // pred_region
    _
  $region41: #{unet1d_forward.17} parent=0 // pred_fallthru
    _
  // Predicated region
  $region42: #{unet1d_forward.17} parent=0 // pred_check
    _
  $region43: #{unet1d_forward.17} parent=0 // pred_check_branch
    %39 = sbr.rel (0) target = $region45
  $region44: #{unet1d_forward.17} parent=0 // pred_region
    _
  $region45: #{unet1d_forward.17} parent=0 // pred_fallthru
    _
  // Predicated region
  $region46: #{unet1d_forward.17} parent=0 // pred_check
    _
  $region47: #{unet1d_forward.17} parent=0 // pred_check_branch
    %41 = sbr.rel (0) target = $region49
  $region48: #{unet1d_forward.17} parent=0 // pred_region
    _
  $region49: #{unet1d_forward.17} parent=0 // pred_fallthru
    _
  // Predicated region
  $region50: #{unet1d_forward.17} parent=0 // pred_check
    _
  $region51: #{unet1d_forward.17} parent=0 // pred_check_branch
    %43 = sbr.rel (0) target = $region53
  $region52: #{unet1d_forward.17} parent=0 // pred_region
    _
  $region53: #{unet1d_forward.17} parent=0 // pred_fallthru
    _
  %v44 = vld [vmem:[%s2] sm:$0x1]
  %v45 = vld [vmem:[%s3] sm:$0xff]
  %v46 = vld [vmem:[%s0] sm:$0xff]
  %v47 = vld [vmem:[%s0 + $0x8] sm:$0xff]
  %50 = vrot.lane.b32.xlu0 %v46, 1
  %v51 = vpop.permute.xlu0 %50
  %52 = vrot.lane.b32.xlu0 %v47, 1
  %v53 = vpop.permute.xlu0 %52
  %vm56 = vcmask 1047560
  %57 = vst.msk [vmem:[#allocation2] sm:$0xff] %vm56, %v51
  %58 = vst.msk [vmem:[#allocation2 + $0x8] sm:$0xff] %vm56, %v53
  %vm59 = vcmask 7168
  %60 = vst.msk [vmem:[#allocation2] sm:$0xff] %vm59, 0.0
  %61 = vst.msk [vmem:[#allocation2 + $0x8] sm:$0xff] %vm59, 0.0
  %62 = vst [vmem:[#allocation2 + $0x10] sm:$0xff] %v46
  %63 = vst [vmem:[#allocation2 + $0x18] sm:$0xff] %v47
  %v64 = vld [vmem:[#allocation2] sm:$0xff]
  %v65 = vld [vmem:[#allocation2 + $0x8] sm:$0xff]
  %v66 = vld [vmem:[#allocation2 + $0x10] sm:$0xff]
  %v67 = vld [vmem:[#allocation2 + $0x18] sm:$0xff]
  %v68 = vld [vmem:[%s4] sm:$0xff]
  %70 = vset.pattern.permute.xlu0 0
  %71 = vperm.xlu0 %70, %v68
  %v72 = vpop.permute.xlu0 %71
  %vm74 = vcmask 261120
  %v76 = vsel %vm74, %v45, 0
  %78 = vmatprep.subr.mxu0 0.0
  %79 = vmatpush1.msra.mxu0 0.0
  %80 = vmatprep.subr.mxu0 0.0
  %81 = vmatpush1.msra.mxu0 0.0
  %82 = vmatprep.subr.mxu0 0.0
  %83 = vmatpush1.msra.mxu0 0.0
  %84 = vmatprep.subr.mxu0 0.0
  %85 = vmatpush1.msra.mxu0 0.0
  %86 = vmatprep.subr.mxu0 0.0
  %87 = vmatpush1.msra.mxu0 0.0
  %88 = vmatprep.subr.mxu0 0.0
  %89 = vmatpush1.msra.mxu0 0.0
  %90 = vmatprep.subr.mxu0 0.0
  %91 = vmatpush1.msra.mxu0 0.0
  %92 = vmatprep.subr.mxu0 0.0
  %93 = vmatpush1.msra.mxu0 0.0
  %94 = vmatprep.subr.mxu0 0.0
  %95 = vmatpush1.msra.mxu0 0.0
  %96 = vmatprep.subr.mxu0 0.0
  %97 = vmatpush1.msra.mxu0 0.0
  %98 = vmatprep.subr.mxu0 0.0
  %99 = vmatpush1.msra.mxu0 0.0
  %100 = vmatprep.subr.mxu0 0.0
  %101 = vmatpush1.msra.mxu0 0.0
  %102 = vmatprep.subr.mxu0 0.0
  %103 = vmatpush1.msra.mxu0 %v67
  %104 = vmatprep.subr.mxu0 0.0
  %105 = vmatpush1.msra.mxu0 %v66
  %106 = vmatprep.subr.mxu0 0.0
  %107 = vmatpush1.msra.mxu0 %v65
  %108 = vmatprep.subr.mxu0 0.0
  %109 = vmatpush1.msra.mxu0 %v64
  %110 = vmatprep.subr.mxu0 0.0
  %111 = vmatpush2.msra.mxu0 0.0
  %112 = vmatprep.subr.mxu0 0.0
  %113 = vmatpush2.msra.mxu0 0.0
  %114 = vmatprep.subr.mxu0 0.0
  %115 = vmatpush2.msra.mxu0 0.0
  %116 = vmatprep.subr.mxu0 0.0
  %117 = vmatpush2.msra.mxu0 0.0
  %118 = vmatprep.subr.mxu0 0.0
  %119 = vmatpush2.msra.mxu0 0.0
  %120 = vmatprep.subr.mxu0 0.0
  %121 = vmatpush2.msra.mxu0 0.0
  %122 = vmatprep.subr.mxu0 0.0
  %123 = vmatpush2.msra.mxu0 0.0
  %124 = vmatprep.subr.mxu0 0.0
  %125 = vmatpush2.msra.mxu0 0.0
  %126 = vmatprep.subr.mxu0 0.0
  %127 = vmatpush2.msra.mxu0 0.0
  %128 = vmatprep.subr.mxu0 0.0
  %129 = vmatpush2.msra.mxu0 0.0
  %130 = vmatprep.subr.mxu0 0.0
  %131 = vmatpush2.msra.mxu0 0.0
  %132 = vmatprep.subr.mxu0 0.0
  %133 = vmatpush2.msra.mxu0 0.0
  %134 = vmatprep.subr.mxu0 0.0
  %135 = vmatpush2.msra.mxu0 0.0
  %136 = vmatprep.subr.mxu0 0.0
  %137 = vmatpush2.msra.mxu0 0.0
  %138 = vmatprep.subr.mxu0 0.0
  %139 = vmatpush2.msra.mxu0 0.0
  %140 = vmatprep.subr.mxu0 0.0
  %141 = vmatpush2.msra.mxu0 0.0
  %142 = vmatprep.mubr.f32.mxu0 0.0
  %143 = vmatmul.mubr.f32.gmra.mxu0 %v76
  %v144 = vpop.f32.mrf.mxu0
  %v145 = vadd.f32 %v72, %v144
  %v146 = vpop.f32.mrf.mxu0
  %147 = vdwg.mxu0
  %v149 = vlaneseq
  %v150 = vshrl.u32 %v149, 7
  %v151 = vsub.s32 0, %v150
  %v152 = vrot.slane %v44, %v151
  %v154 = vmul.f32 %v145, %v152
  %v155 = vld [vmem:[%s5] sm:$0xff]
  %v156 = vld [vmem:[%s1] sm:$0xff]
  %158 = vrot.lane.b32.xlu0 %v154, 1
  %v159 = vpop.permute.xlu0 %158
  %161 = vst.msk [vmem:[#allocation2] sm:$0xff] %vm56, %v159
  %162 = vst.msk [vmem:[#allocation2] sm:$0xff] %vm59, 0.0
  %164 = vrot.lane.b32.xlu0 %v156, 1
  %v165 = vpop.permute.xlu0 %164
  %167 = vst.msk [vmem:[#allocation2 + $0x8] sm:$0xff] %vm56, %v165
  %168 = vst.msk [vmem:[#allocation2 + $0x8] sm:$0xff] %vm59, 0.0
  %169 = vst [vmem:[#allocation2 + $0x10] sm:$0xff] %v154
  %170 = vst [vmem:[#allocation2 + $0x18] sm:$0xff] %v156
  %171 = vrot.lane.b32.xlu0 %v154, 127
  %v172 = vpop.permute.xlu0 %171
  %vm174 = vcmask 1039360
  %175 = vst.msk [vmem:[#allocation2 + $0x20] sm:$0xff] %vm174, %v172
  %vm176 = vcmask 1048568
  %177 = vst.msk [vmem:[#allocation2 + $0x20] sm:$0xff] %vm176, 0.0
  %178 = vrot.lane.b32.xlu0 %v156, 127
  %v179 = vpop.permute.xlu0 %178
  %181 = vst.msk [vmem:[#allocation2 + $0x28] sm:$0xff] %vm174, %v179
  %182 = vst.msk [vmem:[#allocation2 + $0x28] sm:$0xff] %vm176, 0.0
  %v183 = vld [vmem:[#allocation2] sm:$0xff]
  %v184 = vld [vmem:[#allocation2 + $0x8] sm:$0xff]
  %v185 = vld [vmem:[#allocation2 + $0x10] sm:$0xff]
  %v186 = vld [vmem:[#allocation2 + $0x18] sm:$0xff]
  %v187 = vld [vmem:[#allocation2 + $0x20] sm:$0xff]
  %v188 = vld [vmem:[#allocation2 + $0x28] sm:$0xff]
  %vm189 = vcmask 392192
  %v191 = vsel %vm189, %v155, 0
  %193 = vmatprep.subr.mxu0 0.0
  %194 = vmatpush1.msra.mxu0 0.0
  %195 = vmatprep.subr.mxu0 0.0
  %196 = vmatpush1.msra.mxu0 0.0
  %197 = vmatprep.subr.mxu0 0.0
  %198 = vmatpush1.msra.mxu0 0.0
  %199 = vmatprep.subr.mxu0 0.0
  %200 = vmatpush1.msra.mxu0 0.0
  %201 = vmatprep.subr.mxu0 0.0
  %202 = vmatpush1.msra.mxu0 0.0
  %203 = vmatprep.subr.mxu0 0.0
  %204 = vmatpush1.msra.mxu0 0.0
  %205 = vmatprep.subr.mxu0 0.0
  %206 = vmatpush1.msra.mxu0 0.0
  %207 = vmatprep.subr.mxu0 0.0
  %208 = vmatpush1.msra.mxu0 0.0
  %209 = vmatprep.subr.mxu0 0.0
  %210 = vmatpush1.msra.mxu0 0.0
  %211 = vmatprep.subr.mxu0 0.0
  %212 = vmatpush1.msra.mxu0 0.0
  %213 = vmatprep.subr.mxu0 0.0
  %214 = vmatpush1.msra.mxu0 %v188
  %215 = vmatprep.subr.mxu0 0.0
  %216 = vmatpush1.msra.mxu0 %v187
  %217 = vmatprep.subr.mxu0 0.0
  %218 = vmatpush1.msra.mxu0 %v186
  %219 = vmatprep.subr.mxu0 0.0
  %220 = vmatpush1.msra.mxu0 %v185
  %221 = vmatprep.subr.mxu0 0.0
  %222 = vmatpush1.msra.mxu0 %v184
  %223 = vmatprep.subr.mxu0 0.0
  %224 = vmatpush1.msra.mxu0 %v183
  %225 = vmatprep.subr.mxu0 0.0
  %226 = vmatpush2.msra.mxu0 0.0
  %227 = vmatprep.subr.mxu0 0.0
  %228 = vmatpush2.msra.mxu0 0.0
  %229 = vmatprep.subr.mxu0 0.0
  %230 = vmatpush2.msra.mxu0 0.0
  %231 = vmatprep.subr.mxu0 0.0
  %232 = vmatpush2.msra.mxu0 0.0
  %233 = vmatprep.subr.mxu0 0.0
  %234 = vmatpush2.msra.mxu0 0.0
  %235 = vmatprep.subr.mxu0 0.0
  %236 = vmatpush2.msra.mxu0 0.0
  %237 = vmatprep.subr.mxu0 0.0
  %238 = vmatpush2.msra.mxu0 0.0
  %239 = vmatprep.subr.mxu0 0.0
  %240 = vmatpush2.msra.mxu0 0.0
  %241 = vmatprep.subr.mxu0 0.0
  %242 = vmatpush2.msra.mxu0 0.0
  %243 = vmatprep.subr.mxu0 0.0
  %244 = vmatpush2.msra.mxu0 0.0
  %245 = vmatprep.subr.mxu0 0.0
  %246 = vmatpush2.msra.mxu0 0.0
  %247 = vmatprep.subr.mxu0 0.0
  %248 = vmatpush2.msra.mxu0 0.0
  %249 = vmatprep.subr.mxu0 0.0
  %250 = vmatpush2.msra.mxu0 0.0
  %251 = vmatprep.subr.mxu0 0.0
  %252 = vmatpush2.msra.mxu0 0.0
  %253 = vmatprep.subr.mxu0 0.0
  %254 = vmatpush2.msra.mxu0 0.0
  %255 = vmatprep.subr.mxu0 0.0
  %256 = vmatpush2.msra.mxu0 0.0
  %257 = vmatprep.mubr.f32.mxu0 0.0
  %258 = vmatmul.mubr.f32.gmra.mxu0 %v191
  %v259 = vpop.f32.mrf.mxu0
  %v260 = vadd.f32 0.0, %v259
  %v261 = vpop.f32.mrf.mxu0
  %262 = vdwg.mxu0
  %v263 = vld [vmem:[%s6] sm:$0xff]
  %v264 = vld [vmem:[%s7] sm:$0xff]
  %v265 = vmul.f32 %v260, %v152
  %266 = vadd.xlane.f32.xlu0 %v265
  %v267 = vpop.xlane.xlu0 %266
  %v268 = vmul.f32 %v267, 0.0125
  %v269 = vsub.f32 %v260, %v268
  %v270 = vmul.f32 %v269, %v152
  %v271 = vmul.f32 %v270, %v270
  %272 = vadd.xlane.f32.xlu0 %v271
  %v273 = vpop.xlane.xlu0 %272
  %v274 = vmul.f32 %v273, 0.0125
  %v275 = vadd.f32 %v274, 1e-05
  %v276 = vrsqrt.pop %v275
  %v277 = vmul.f32 %v276, %v263
  %279 = vset.pattern.permute.xlu0 0
  %280 = vperm.xlu0 %279, %v277
  %v281 = vpop.permute.xlu0 %280
  %v283 = vmul.f32 %v270, %v281
  %285 = vset.pattern.permute.xlu0 0
  %286 = vperm.xlu0 %285, %v264
  %v287 = vpop.permute.xlu0 %286
  %v289 = vadd.f32 %v283, %v287
  %v290 = vtanh.pop %v289
  %v291 = vmul.f32 %v290, %v152
  %v292 = vld [vmem:[%s8] sm:$0xff]
  %294 = vrot.lane.b32.xlu0 %v291, 1
  %v295 = vpop.permute.xlu0 %294
  %297 = vst.msk [vmem:[#allocation2] sm:$0xff] %vm56, %v295
  %298 = vst.msk [vmem:[#allocation2] sm:$0xff] %vm59, 0.0
  %299 = vst [vmem:[#allocation2 + $0x8] sm:$0xff] %v291
  %300 = vrot.lane.b32.xlu0 %v291, 127
  %v301 = vpop.permute.xlu0 %300
  %303 = vst.msk [vmem:[#allocation2 + $0x10] sm:$0xff] %vm174, %v301
  %304 = vst.msk [vmem:[#allocation2 + $0x10] sm:$0xff] %vm176, 0.0
  %v305 = vld [vmem:[#allocation2] sm:$0xff]
  %v306 = vld [vmem:[#allocation2 + $0x8] sm:$0xff]
  %v307 = vld [vmem:[#allocation2 + $0x10] sm:$0xff]
  %vm308 = vcmask 195584
  %v310 = vsel %vm308, %v292, 0
  %312 = vmatprep.subr.mxu0 0.0
  %313 = vmatpush1.msra.mxu0 0.0
  %314 = vmatprep.subr.mxu0 0.0
  %315 = vmatpush1.msra.mxu0 0.0
  %316 = vmatprep.subr.mxu0 0.0
  %317 = vmatpush1.msra.mxu0 0.0
  %318 = vmatprep.subr.mxu0 0.0
  %319 = vmatpush1.msra.mxu0 0.0
  %320 = vmatprep.subr.mxu0 0.0
  %321 = vmatpush1.msra.mxu0 0.0
  %322 = vmatprep.subr.mxu0 0.0
  %323 = vmatpush1.msra.mxu0 0.0
  %324 = vmatprep.subr.mxu0 0.0
  %325 = vmatpush1.msra.mxu0 0.0
  %326 = vmatprep.subr.mxu0 0.0
  %327 = vmatpush1.msra.mxu0 0.0
  %328 = vmatprep.subr.mxu0 0.0
  %329 = vmatpush1.msra.mxu0 0.0
  %330 = vmatprep.subr.mxu0 0.0
  %331 = vmatpush1.msra.mxu0 0.0
  %332 = vmatprep.subr.mxu0 0.0
  %333 = vmatpush1.msra.mxu0 0.0
  %334 = vmatprep.subr.mxu0 0.0
  %335 = vmatpush1.msra.mxu0 0.0
  %336 = vmatprep.subr.mxu0 0.0
  %337 = vmatpush1.msra.mxu0 0.0
  %338 = vmatprep.subr.mxu0 0.0
  %339 = vmatpush1.msra.mxu0 %v307
  %340 = vmatprep.subr.mxu0 0.0
  %341 = vmatpush1.msra.mxu0 %v306
  %342 = vmatprep.subr.mxu0 0.0
  %343 = vmatpush1.msra.mxu0 %v305
  %344 = vmatprep.subr.mxu0 0.0
  %345 = vmatpush2.msra.mxu0 0.0
  %346 = vmatprep.subr.mxu0 0.0
  %347 = vmatpush2.msra.mxu0 0.0
  %348 = vmatprep.subr.mxu0 0.0
  %349 = vmatpush2.msra.mxu0 0.0
  %350 = vmatprep.subr.mxu0 0.0
  %351 = vmatpush2.msra.mxu0 0.0
  %352 = vmatprep.subr.mxu0 0.0
  %353 = vmatpush2.msra.mxu0 0.0
  %354 = vmatprep.subr.mxu0 0.0
  %355 = vmatpush2.msra.mxu0 0.0
  %356 = vmatprep.subr.mxu0 0.0
  %357 = vmatpush2.msra.mxu0 0.0
  %358 = vmatprep.subr.mxu0 0.0
  %359 = vmatpush2.msra.mxu0 0.0
  %360 = vmatprep.subr.mxu0 0.0
  %361 = vmatpush2.msra.mxu0 0.0
  %362 = vmatprep.subr.mxu0 0.0
  %363 = vmatpush2.msra.mxu0 0.0
  %364 = vmatprep.subr.mxu0 0.0
  %365 = vmatpush2.msra.mxu0 0.0
  %366 = vmatprep.subr.mxu0 0.0
  %367 = vmatpush2.msra.mxu0 0.0
  %368 = vmatprep.subr.mxu0 0.0
  %369 = vmatpush2.msra.mxu0 0.0
  %370 = vmatprep.subr.mxu0 0.0
  %371 = vmatpush2.msra.mxu0 0.0
  %372 = vmatprep.subr.mxu0 0.0
  %373 = vmatpush2.msra.mxu0 0.0
  %374 = vmatprep.subr.mxu0 0.0
  %375 = vmatpush2.msra.mxu0 0.0
  %376 = vmatprep.mubr.f32.mxu0 0.0
  %377 = vmatmul.mubr.f32.gmra.mxu0 %v310
  %v378 = vpop.f32.mrf.mxu0
  %v379 = vadd.f32 0.0, %v378
  %v380 = vpop.f32.mrf.mxu0
  %381 = vdwg.mxu0
  %v382 = vld [vmem:[%s9] sm:$0xff]
  %v383 = vld [vmem:[%s10] sm:$0xff]
  %v384 = vmul.f32 %v379, %v152
  %385 = vadd.xlane.f32.xlu0 %v384
  %v386 = vpop.xlane.xlu0 %385
  %v387 = vmul.f32 %v386, 0.0125
  %v388 = vsub.f32 %v379, %v387
  %v389 = vmul.f32 %v388, %v152
  %v390 = vmul.f32 %v389, %v389
  %391 = vadd.xlane.f32.xlu0 %v390
  %v392 = vpop.xlane.xlu0 %391
  %v393 = vmul.f32 %v392, 0.0125
  %v394 = vadd.f32 %v393, 1e-05
  %v395 = vrsqrt.pop %v394
  %v396 = vmul.f32 %v395, %v382
  %398 = vset.pattern.permute.xlu0 0
  %399 = vperm.xlu0 %398, %v396
  %v400 = vpop.permute.xlu0 %399
  %v402 = vmul.f32 %v389, %v400
  %404 = vset.pattern.permute.xlu0 0
  %405 = vperm.xlu0 %404, %v383
  %v406 = vpop.permute.xlu0 %405
  %v408 = vadd.f32 %v402, %v406
  %v409 = vtanh.pop %v408
  %v410 = vmul.f32 %v409, %v152
  %v411 = vld [vmem:[%s11] sm:$0xf]
  %v412 = vld [vmem:[%s12] sm:$0xf]
  %414 = vset.pattern.permute.xlu0 0
  %415 = vperm.xlu0 %414, %v412
  %v416 = vpop.permute.xlu0 %415
  %vm418 = vcmask 64512
  %v420 = vsel %vm418, %v411, 0
  %422 = vmatprep.subr.mxu0 0.0
  %423 = vmatpush1.msra.mxu0 0.0
  %424 = vmatprep.subr.mxu0 0.0
  %425 = vmatpush1.msra.mxu0 0.0
  %426 = vmatprep.subr.mxu0 0.0
  %427 = vmatpush1.msra.mxu0 0.0
  %428 = vmatprep.subr.mxu0 0.0
  %429 = vmatpush1.msra.mxu0 0.0
  %430 = vmatprep.subr.mxu0 0.0
  %431 = vmatpush1.msra.mxu0 0.0
  %432 = vmatprep.subr.mxu0 0.0
  %433 = vmatpush1.msra.mxu0 0.0
  %434 = vmatprep.subr.mxu0 0.0
  %435 = vmatpush1.msra.mxu0 0.0
  %436 = vmatprep.subr.mxu0 0.0
  %437 = vmatpush1.msra.mxu0 0.0
  %438 = vmatprep.subr.mxu0 0.0
  %439 = vmatpush1.msra.mxu0 0.0
  %440 = vmatprep.subr.mxu0 0.0
  %441 = vmatpush1.msra.mxu0 0.0
  %442 = vmatprep.subr.mxu0 0.0
  %443 = vmatpush1.msra.mxu0 0.0
  %444 = vmatprep.subr.mxu0 0.0
  %445 = vmatpush1.msra.mxu0 0.0
  %446 = vmatprep.subr.mxu0 0.0
  %447 = vmatpush1.msra.mxu0 0.0
  %448 = vmatprep.subr.mxu0 0.0
  %449 = vmatpush1.msra.mxu0 0.0
  %450 = vmatprep.subr.mxu0 0.0
  %451 = vmatpush1.msra.mxu0 0.0
  %452 = vmatprep.subr.mxu0 0.0
  %453 = vmatpush1.msra.mxu0 %v410
  %454 = vmatprep.subr.mxu0 0.0
  %455 = vmatpush2.msra.mxu0 0.0
  %456 = vmatprep.subr.mxu0 0.0
  %457 = vmatpush2.msra.mxu0 0.0
  %458 = vmatprep.subr.mxu0 0.0
  %459 = vmatpush2.msra.mxu0 0.0
  %460 = vmatprep.subr.mxu0 0.0
  %461 = vmatpush2.msra.mxu0 0.0
  %462 = vmatprep.subr.mxu0 0.0
  %463 = vmatpush2.msra.mxu0 0.0
  %464 = vmatprep.subr.mxu0 0.0
  %465 = vmatpush2.msra.mxu0 0.0
  %466 = vmatprep.subr.mxu0 0.0
  %467 = vmatpush2.msra.mxu0 0.0
  %468 = vmatprep.subr.mxu0 0.0
  %469 = vmatpush2.msra.mxu0 0.0
  %470 = vmatprep.subr.mxu0 0.0
  %471 = vmatpush2.msra.mxu0 0.0
  %472 = vmatprep.subr.mxu0 0.0
  %473 = vmatpush2.msra.mxu0 0.0
  %474 = vmatprep.subr.mxu0 0.0
  %475 = vmatpush2.msra.mxu0 0.0
  %476 = vmatprep.subr.mxu0 0.0
  %477 = vmatpush2.msra.mxu0 0.0
  %478 = vmatprep.subr.mxu0 0.0
  %479 = vmatpush2.msra.mxu0 0.0
  %480 = vmatprep.subr.mxu0 0.0
  %481 = vmatpush2.msra.mxu0 0.0
  %482 = vmatprep.subr.mxu0 0.0
  %483 = vmatpush2.msra.mxu0 0.0
  %484 = vmatprep.subr.mxu0 0.0
  %485 = vmatpush2.msra.mxu0 0.0
  %486 = vmatprep.mubr.f32.mxu0 0.0
  %487 = vmatmul.mubr.f32.gmra.mxu0 %v420
  %v488 = vpop.f32.mrf.mxu0
  %v489 = vadd.f32 %v416, %v488
  %v490 = vpop.f32.mrf.mxu0
  %491 = vdwg.mxu0
  %492 = vst [vmem:[%s13] sm:$0xf] %v489
  // Predicated region
  $region54: #{unet1d_forward.17} parent=0 // pred_check
    _
  $region55: #{unet1d_forward.17} parent=0 // pred_check_branch
    %494 = sbr.rel (0) target = $region57
  $region56: #{unet1d_forward.17} parent=0 // pred_region
    _
  $region57: #{unet1d_forward.17} parent=0 // pred_fallthru
    _
  // Predicated region
  $region58: #{unet1d_forward.17} parent=0 // pred_check
    _
  $region59: #{unet1d_forward.17} parent=0 // pred_check_branch
    %496 = sbr.rel (0) target = $region61
  $region60: #{unet1d_forward.17} parent=0 // pred_region
    _
  $region61: #{unet1d_forward.17} parent=0 // pred_fallthru
    _

</llo_original>
